<compile_context>
chip_gen: v5e
topology: v5e:2x2
jax: 0.10.0
libtpu: 0.0.40
codegen_flags: <defaults>
</compile_context>

<pallas_src>
import functools

import jax
import jax.numpy as jnp
from jax.experimental import pallas as pl
from jax.experimental.pallas import tpu as pltpu


# ----------------------------- Pallas kernel --------------------------------

def _conv3_relu(h, wm_ref, w0_ref, wp_ref, b_ref, bpad):
    """Conv1d(k=3, s=1, p=1) + ReLU on a position-major (L*bpad, Cin) slab.

    Row r = l*bpad + b.  Tap shifts are +/- bpad rows (sublane-tile aligned);
    out-of-range taps are explicit zero blocks, so no boundary masks are needed.
    """
    rows, cin = h.shape
    zeros = jnp.zeros((bpad, cin), h.dtype)
    h_prev = jnp.concatenate([zeros, h[:rows - bpad, :]], axis=0)   # tap at l-1
    h_next = jnp.concatenate([h[bpad:, :], zeros], axis=0)          # tap at l+1
    out = (jnp.dot(h_prev, wm_ref[...], preferred_element_type=jnp.float32)
           + jnp.dot(h, w0_ref[...], preferred_element_type=jnp.float32)
           + jnp.dot(h_next, wp_ref[...], preferred_element_type=jnp.float32)
           + b_ref[...])
    return jnp.maximum(out, 0.0)


def encoder_kernel(x_ref,
                   w1m_ref, w10_ref, w1p_ref, b1_ref,
                   w2m_ref, w20_ref, w2p_ref, b2_ref,
                   w3m_ref, w30_ref, w3p_ref, b3_ref,
                   wfc_hbm_ref, bfc_ref,
                   out_ref,
                   wfc_vmem, dma_sem,
                   *, length, bpad, n_chunks):
    # Kick off the chunked FC-weight HBM->VMEM DMAs immediately; they overlap the
    # three conv layers and the earlier FC partial matmuls.
    k_rows = wfc_vmem.shape[0]
    chunk_rows = k_rows // n_chunks
    copies = []
    for c in range(n_chunks):
        cp = pltpu.make_async_copy(
            wfc_hbm_ref.at[pl.ds(c * chunk_rows, chunk_rows), :],
            wfc_vmem.at[pl.ds(c * chunk_rows, chunk_rows), :],
            dma_sem.at[c])
        cp.start()
        copies.append(cp)

    # Three conv layers, each = three aligned-tap MXU matmuls + bias + ReLU.
    h = x_ref[...]                                                  # (L*bpad, Cin)
    h = _conv3_relu(h, w1m_ref, w10_ref, w1p_ref, b1_ref, bpad)     # (L*bpad, 64)
    h = _conv3_relu(h, w2m_ref, w20_ref, w2p_ref, b2_ref, bpad)     # (L*bpad, 128)
    h = _conv3_relu(h, w3m_ref, w30_ref, w3p_ref, b3_ref, bpad)     # (L*bpad, 256)

    # FC head: per-position MXU accumulation -- no (B, 8192) flatten intermediate.
    # Row block l of the slab (an aligned (bpad, 256) tile) multiplies FC-weight rows
    # [l*256, (l+1)*256).  Waits are per DMA chunk, just before that chunk is needed.
    c3 = h.shape[1]
    outc = out_ref.shape[1]
    l_per_chunk = length // n_chunks
    acc = jnp.zeros((bpad, outc), jnp.float32)
    for c in range(n_chunks):
        copies[c].wait()
        for li in range(l_per_chunk):
            l = c * l_per_chunk + li
            acc = acc + jnp.dot(h[l * bpad:(l + 1) * bpad, :],
                                wfc_vmem[l * c3:(l + 1) * c3, :],
                                preferred_element_type=jnp.float32)
    out_ref[...] = acc + bfc_ref[...]


# ------------------------------- Wrapper -------------------------------------

def cnn_encoder_forward(x_ncl, params):
    """x_ncl: (B, Cin, L) float32 (PyTorch NCL layout). Returns (mean, log_var)."""
    B, c_in, L = x_ncl.shape
    latent = params["fc_mean_b"].shape[0]
    assert params["fc_mean_w"].shape[1] == 256 * L, "fc in_features must equal 256*L"

    bpad = ((B + 7) // 8) * 8                      # pad batch to a sublane multiple

    # --- layout & weight permutations (plain JAX glue, outside the kernel) ---
    # Position-major slab: row r = l*bpad + b ; pad-batch rows are zero.
    x_lbc = jnp.transpose(x_ncl, (2, 0, 1))                        # (L, B, Cin)
    x_lbc = jnp.pad(x_lbc, ((0, 0), (0, bpad - B), (0, 0)))
    x_slab = x_lbc.reshape(L * bpad, c_in)                         # (L*bpad, Cin)

    def conv_taps(w):   # torch (Cout, Cin, 3) -> three (Cin, Cout) tap weights
        return tuple(jnp.transpose(w[:, :, k], (1, 0)) for k in range(3))

    w1m, w10, w1p = conv_taps(params["conv1_w"]); b1 = params["conv1_b"][None, :]
    w2m, w20, w2p = conv_taps(params["conv2_w"]); b2 = params["conv2_b"][None, :]
    w3m, w30, w3p = conv_taps(params["conv3_w"]); b3 = params["conv3_b"][None, :]

    def fc_w(w):
        # torch (latent, 8192), flatten idx c*L + l  ->  (L*256, latent), row = l*256 + c
        return jnp.transpose(w.reshape(latent, 256, L), (2, 1, 0)).reshape(L * 256, latent)

    wfc = jnp.concatenate([fc_w(params["fc_mean_w"]), fc_w(params["fc_log_var_w"])],
                          axis=-1)                                  # (L*256, 2*latent)
    bfc = jnp.concatenate([params["fc_mean_b"], params["fc_log_var_b"]])[None, :]

    n_chunks = 4 if L % 4 == 0 else 1              # K-chunks are multiples of 256 rows

    vmem = pl.BlockSpec(memory_space=pltpu.MemorySpace.VMEM)
    hbm = pl.BlockSpec(memory_space=pl.ANY)        # wfc stays in HBM; DMA'd in-kernel

    out = pl.pallas_call(
        functools.partial(encoder_kernel, length=L, bpad=bpad, n_chunks=n_chunks),
        out_shape=jax.ShapeDtypeStruct((bpad, 2 * latent), jnp.float32),
        in_specs=[vmem] * 13 + [hbm, vmem],
        out_specs=vmem,
        scratch_shapes=[pltpu.VMEM((L * 256, 2 * latent), jnp.float32),
                        pltpu.SemaphoreType.DMA((n_chunks,))],
    )(x_slab,
      w1m, w10, w1p, b1,
      w2m, w20, w2p, b2,
      w3m, w30, w3p, b3,
      wfc, bfc)

    return out[:B, :latent], out[:B, latent:]


# --------------------------- Pure-JAX reference -------------------------------

def reference_forward(x_ncl, params):
    def conv1d(x, w, b):  # x: (B, Cin, L), w: (Cout, Cin, 3)
        xp = jnp.pad(x, ((0, 0), (0, 0), (1, 1)))
        out = sum(jnp.einsum("bcl,oc->bol", xp[:, :, k:k + x.shape[2]], w[:, :, k])
                  for k in range(3))
        return out + b[None, :, None]

    h = jax.nn.relu(conv1d(x_ncl, params["conv1_w"], params["conv1_b"]))
    h = jax.nn.relu(conv1d(h, params["conv2_w"], params["conv2_b"]))
    h = jax.nn.relu(conv1d(h, params["conv3_w"], params["conv3_b"]))
    flat = h.reshape(h.shape[0], -1)                 # (B, 256*L), c-major like torch
    mean = flat @ params["fc_mean_w"].T + params["fc_mean_b"]
    log_var = flat @ params["fc_log_var_w"].T + params["fc_log_var_b"]
    return mean, log_var


# --------------------------------- Main ---------------------------------------

if __name__ == "__main__":
    B, C_IN, L = 2, 4, 32          # L = 32 required by fc in_features = 8192 = 256*32
    LATENT = 32

    key = jax.random.PRNGKey(0)
    ks = jax.random.split(key, 11)
    scale = 0.05
    params = {
        "conv1_w": scale * jax.random.normal(ks[0], (64, C_IN, 3), jnp.float32),
        "conv1_b": scale * jax.random.normal(ks[1], (64,), jnp.float32),
        "conv2_w": scale * jax.random.normal(ks[2], (128, 64, 3), jnp.float32),
        "conv2_b": scale * jax.random.normal(ks[3], (128,), jnp.float32),
        "conv3_w": scale * jax.random.normal(ks[4], (256, 128, 3), jnp.float32),
        "conv3_b": scale * jax.random.normal(ks[5], (256,), jnp.float32),
        "fc_mean_w": scale * jax.random.normal(ks[6], (LATENT, 8192), jnp.float32),
        "fc_mean_b": scale * jax.random.normal(ks[7], (LATENT,), jnp.float32),
        "fc_log_var_w": scale * jax.random.normal(ks[8], (LATENT, 8192), jnp.float32),
        "fc_log_var_b": scale * jax.random.normal(ks[9], (LATENT,), jnp.float32),
    }
    x = jax.random.normal(ks[10], (B, C_IN, L), jnp.float32)   # PyTorch NCL layout

    fwd = jax.jit(cnn_encoder_forward)
    mean, log_var = jax.block_until_ready(fwd(x, params))
    ref_mean, ref_log_var = reference_forward(x, params)

    assert mean.shape == (B, LATENT) and log_var.shape == (B, LATENT)
    assert jnp.allclose(mean, ref_mean, atol=5e-4, rtol=5e-4)
    assert jnp.allclose(log_var, ref_log_var, atol=5e-4, rtol=5e-4)
    print("KERNEL_OK")
</pallas_src>

<mosaic_0001>
module attributes {stable_mosaic.version = 11 : i64} {
  func.func @encoder_kernel(%arg0: memref<256x4xf32, #tpu.memory_space<vmem>>, %arg1: memref<4x64xf32, #tpu.memory_space<vmem>>, %arg2: memref<4x64xf32, #tpu.memory_space<vmem>>, %arg3: memref<4x64xf32, #tpu.memory_space<vmem>>, %arg4: memref<1x64xf32, #tpu.memory_space<vmem>>, %arg5: memref<64x128xf32, #tpu.memory_space<vmem>>, %arg6: memref<64x128xf32, #tpu.memory_space<vmem>>, %arg7: memref<64x128xf32, #tpu.memory_space<vmem>>, %arg8: memref<1x128xf32, #tpu.memory_space<vmem>>, %arg9: memref<128x256xf32, #tpu.memory_space<vmem>>, %arg10: memref<128x256xf32, #tpu.memory_space<vmem>>, %arg11: memref<128x256xf32, #tpu.memory_space<vmem>>, %arg12: memref<1x256xf32, #tpu.memory_space<vmem>>, %arg13: memref<8192x64xf32, #tpu.memory_space<any>>, %arg14: memref<1x64xf32, #tpu.memory_space<vmem>>, %arg15: memref<8x64xf32, #tpu.memory_space<vmem>>, %arg16: memref<8192x64xf32, #tpu.memory_space<vmem>>, %arg17: memref<4x!tpu.dma_semaphore, #tpu.memory_space<semaphore_mem>>) attributes {dimension_semantics = [], scalar_prefetch = 0 : i64, scratch_operands = 2 : i64, tpu.core_type = #tpu.core_type<tc>} {
    %c0_i32 = arith.constant 0 : i32
    %c0_i32_0 = arith.constant 0 : i32
    %c0_i32_1 = arith.constant 0 : i32
    %0 = tpu.memref_slice %arg13[%c0_i32_0, %c0_i32_1] : memref<8192x64xf32, #tpu.memory_space<any>> -> memref<2048x64xf32, #tpu.memory_space<any>>
    %c0_i32_2 = arith.constant 0 : i32
    %c0_i32_3 = arith.constant 0 : i32
    %1 = tpu.memref_slice %arg16[%c0_i32_2, %c0_i32_3] : memref<8192x64xf32, #tpu.memory_space<vmem>> -> memref<2048x64xf32, #tpu.memory_space<vmem>>
    %2 = tpu.memref_slice %arg17[%c0_i32] : memref<4x!tpu.dma_semaphore, #tpu.memory_space<semaphore_mem>> -> memref<1x!tpu.dma_semaphore, #tpu.memory_space<semaphore_mem>>
    %3 = tpu.memref_squeeze %2 : memref<1x!tpu.dma_semaphore, #tpu.memory_space<semaphore_mem>> -> memref<!tpu.dma_semaphore, #tpu.memory_space<semaphore_mem>>
    tpu.enqueue_dma source(%0 : memref<2048x64xf32, #tpu.memory_space<any>>) target(%1 : memref<2048x64xf32, #tpu.memory_space<vmem>>) target_semaphore(%3 : memref<!tpu.dma_semaphore, #tpu.memory_space<semaphore_mem>>)
    %c1_i32 = arith.constant 1 : i32
    %c2048_i32 = arith.constant 2048 : i32
    %c0_i32_4 = arith.constant 0 : i32
    %4 = tpu.memref_slice %arg13[%c2048_i32, %c0_i32_4] : memref<8192x64xf32, #tpu.memory_space<any>> -> memref<2048x64xf32, #tpu.memory_space<any>>
    %c2048_i32_5 = arith.constant 2048 : i32
    %c0_i32_6 = arith.constant 0 : i32
    %5 = tpu.memref_slice %arg16[%c2048_i32_5, %c0_i32_6] : memref<8192x64xf32, #tpu.memory_space<vmem>> -> memref<2048x64xf32, #tpu.memory_space<vmem>>
    %6 = tpu.memref_slice %arg17[%c1_i32] : memref<4x!tpu.dma_semaphore, #tpu.memory_space<semaphore_mem>> -> memref<1x!tpu.dma_semaphore, #tpu.memory_space<semaphore_mem>>
    %7 = tpu.memref_squeeze %6 : memref<1x!tpu.dma_semaphore, #tpu.memory_space<semaphore_mem>> -> memref<!tpu.dma_semaphore, #tpu.memory_space<semaphore_mem>>
    tpu.enqueue_dma source(%4 : memref<2048x64xf32, #tpu.memory_space<any>>) target(%5 : memref<2048x64xf32, #tpu.memory_space<vmem>>) target_semaphore(%7 : memref<!tpu.dma_semaphore, #tpu.memory_space<semaphore_mem>>)
    %c2_i32 = arith.constant 2 : i32
    %c4096_i32 = arith.constant 4096 : i32
    %c0_i32_7 = arith.constant 0 : i32
    %8 = tpu.memref_slice %arg13[%c4096_i32, %c0_i32_7] : memref<8192x64xf32, #tpu.memory_space<any>> -> memref<2048x64xf32, #tpu.memory_space<any>>
    %c4096_i32_8 = arith.constant 4096 : i32
    %c0_i32_9 = arith.constant 0 : i32
    %9 = tpu.memref_slice %arg16[%c4096_i32_8, %c0_i32_9] : memref<8192x64xf32, #tpu.memory_space<vmem>> -> memref<2048x64xf32, #tpu.memory_space<vmem>>
    %10 = tpu.memref_slice %arg17[%c2_i32] : memref<4x!tpu.dma_semaphore, #tpu.memory_space<semaphore_mem>> -> memref<1x!tpu.dma_semaphore, #tpu.memory_space<semaphore_mem>>
    %11 = tpu.memref_squeeze %10 : memref<1x!tpu.dma_semaphore, #tpu.memory_space<semaphore_mem>> -> memref<!tpu.dma_semaphore, #tpu.memory_space<semaphore_mem>>
    tpu.enqueue_dma source(%8 : memref<2048x64xf32, #tpu.memory_space<any>>) target(%9 : memref<2048x64xf32, #tpu.memory_space<vmem>>) target_semaphore(%11 : memref<!tpu.dma_semaphore, #tpu.memory_space<semaphore_mem>>)
    %c3_i32 = arith.constant 3 : i32
    %c6144_i32 = arith.constant 6144 : i32
    %c0_i32_10 = arith.constant 0 : i32
    %12 = tpu.memref_slice %arg13[%c6144_i32, %c0_i32_10] : memref<8192x64xf32, #tpu.memory_space<any>> -> memref<2048x64xf32, #tpu.memory_space<any>>
    %c6144_i32_11 = arith.constant 6144 : i32
    %c0_i32_12 = arith.constant 0 : i32
    %13 = tpu.memref_slice %arg16[%c6144_i32_11, %c0_i32_12] : memref<8192x64xf32, #tpu.memory_space<vmem>> -> memref<2048x64xf32, #tpu.memory_space<vmem>>
    %14 = tpu.memref_slice %arg17[%c3_i32] : memref<4x!tpu.dma_semaphore, #tpu.memory_space<semaphore_mem>> -> memref<1x!tpu.dma_semaphore, #tpu.memory_space<semaphore_mem>>
    %15 = tpu.memref_squeeze %14 : memref<1x!tpu.dma_semaphore, #tpu.memory_space<semaphore_mem>> -> memref<!tpu.dma_semaphore, #tpu.memory_space<semaphore_mem>>
    tpu.enqueue_dma source(%12 : memref<2048x64xf32, #tpu.memory_space<any>>) target(%13 : memref<2048x64xf32, #tpu.memory_space<vmem>>) target_semaphore(%15 : memref<!tpu.dma_semaphore, #tpu.memory_space<semaphore_mem>>)
    %c0 = arith.constant 0 : index
    %c0_13 = arith.constant 0 : index
    %16 = vector.load %arg0[%c0, %c0_13] : memref<256x4xf32, #tpu.memory_space<vmem>>, vector<256x4xf32>
    %cst = arith.constant 0.000000e+00 : f32
    %17 = vector.broadcast %cst : f32 to vector<8x4xf32>
    %18 = vector.extract_strided_slice %16 {offsets = [0, 0], sizes = [248, 4], strides = [1, 1]} : vector<256x4xf32> to vector<248x4xf32>
    %19 = tpu.concatenate %17, %18 in 0 : vector<8x4xf32>, vector<248x4xf32> -> vector<256x4xf32>
    %20 = vector.extract_strided_slice %16 {offsets = [8, 0], sizes = [248, 4], strides = [1, 1]} : vector<256x4xf32> to vector<248x4xf32>
    %21 = tpu.concatenate %20, %17 in 0 : vector<248x4xf32>, vector<8x4xf32> -> vector<256x4xf32>
    %c0_14 = arith.constant 0 : index
    %c0_15 = arith.constant 0 : index
    %22 = vector.load %arg1[%c0_14, %c0_15] : memref<4x64xf32, #tpu.memory_space<vmem>>, vector<4x64xf32>
    %cst_16 = arith.constant dense<0.000000e+00> : vector<256x64xf32>
    %23 = tpu.matmul %19, %22, %cst_16 {dimension_numbers = #tpu.dot_dimension_numbers<[1], [0], [0], [1], [0, 0, 1, 1], [], []>} : vector<256x4xf32>, vector<4x64xf32>, vector<256x64xf32> -> vector<256x64xf32>
    %c0_17 = arith.constant 0 : index
    %c0_18 = arith.constant 0 : index
    %24 = vector.load %arg2[%c0_17, %c0_18] : memref<4x64xf32, #tpu.memory_space<vmem>>, vector<4x64xf32>
    %cst_19 = arith.constant dense<0.000000e+00> : vector<256x64xf32>
    %25 = tpu.matmul %16, %24, %cst_19 {dimension_numbers = #tpu.dot_dimension_numbers<[1], [0], [0], [1], [0, 0, 1, 1], [], []>} : vector<256x4xf32>, vector<4x64xf32>, vector<256x64xf32> -> vector<256x64xf32>
    %26 = arith.addf %23, %25 : vector<256x64xf32>
    %c0_20 = arith.constant 0 : index
    %c0_21 = arith.constant 0 : index
    %27 = vector.load %arg3[%c0_20, %c0_21] : memref<4x64xf32, #tpu.memory_space<vmem>>, vector<4x64xf32>
    %cst_22 = arith.constant dense<0.000000e+00> : vector<256x64xf32>
    %28 = tpu.matmul %21, %27, %cst_22 {dimension_numbers = #tpu.dot_dimension_numbers<[1], [0], [0], [1], [0, 0, 1, 1], [], []>} : vector<256x4xf32>, vector<4x64xf32>, vector<256x64xf32> -> vector<256x64xf32>
    %29 = arith.addf %26, %28 : vector<256x64xf32>
    %c0_23 = arith.constant 0 : index
    %c0_24 = arith.constant 0 : index
    %30 = vector.load %arg4[%c0_23, %c0_24] : memref<1x64xf32, #tpu.memory_space<vmem>>, vector<1x64xf32>
    %31 = vector.broadcast %30 : vector<1x64xf32> to vector<256x64xf32>
    %32 = arith.addf %29, %31 : vector<256x64xf32>
    %cst_25 = arith.constant 0.000000e+00 : f32
    %33 = vector.broadcast %cst_25 : f32 to vector<256x64xf32>
    %34 = arith.maximumf %32, %33 : vector<256x64xf32>
    %cst_26 = arith.constant 0.000000e+00 : f32
    %35 = vector.broadcast %cst_26 : f32 to vector<8x64xf32>
    %36 = vector.extract_strided_slice %34 {offsets = [0, 0], sizes = [248, 64], strides = [1, 1]} : vector<256x64xf32> to vector<248x64xf32>
    %37 = tpu.concatenate %35, %36 in 0 : vector<8x64xf32>, vector<248x64xf32> -> vector<256x64xf32>
    %38 = vector.extract_strided_slice %34 {offsets = [8, 0], sizes = [248, 64], strides = [1, 1]} : vector<256x64xf32> to vector<248x64xf32>
    %39 = tpu.concatenate %38, %35 in 0 : vector<248x64xf32>, vector<8x64xf32> -> vector<256x64xf32>
    %c0_27 = arith.constant 0 : index
    %c0_28 = arith.constant 0 : index
    %40 = vector.load %arg5[%c0_27, %c0_28] : memref<64x128xf32, #tpu.memory_space<vmem>>, vector<64x128xf32>
    %cst_29 = arith.constant dense<0.000000e+00> : vector<256x128xf32>
    %41 = tpu.matmul %37, %40, %cst_29 {dimension_numbers = #tpu.dot_dimension_numbers<[1], [0], [0], [1], [0, 0, 1, 1], [], []>} : vector<256x64xf32>, vector<64x128xf32>, vector<256x128xf32> -> vector<256x128xf32>
    %c0_30 = arith.constant 0 : index
    %c0_31 = arith.constant 0 : index
    %42 = vector.load %arg6[%c0_30, %c0_31] : memref<64x128xf32, #tpu.memory_space<vmem>>, vector<64x128xf32>
    %cst_32 = arith.constant dense<0.000000e+00> : vector<256x128xf32>
    %43 = tpu.matmul %34, %42, %cst_32 {dimension_numbers = #tpu.dot_dimension_numbers<[1], [0], [0], [1], [0, 0, 1, 1], [], []>} : vector<256x64xf32>, vector<64x128xf32>, vector<256x128xf32> -> vector<256x128xf32>
    %44 = arith.addf %41, %43 : vector<256x128xf32>
    %c0_33 = arith.constant 0 : index
    %c0_34 = arith.constant 0 : index
    %45 = vector.load %arg7[%c0_33, %c0_34] : memref<64x128xf32, #tpu.memory_space<vmem>>, vector<64x128xf32>
    %cst_35 = arith.constant dense<0.000000e+00> : vector<256x128xf32>
    %46 = tpu.matmul %39, %45, %cst_35 {dimension_numbers = #tpu.dot_dimension_numbers<[1], [0], [0], [1], [0, 0, 1, 1], [], []>} : vector<256x64xf32>, vector<64x128xf32>, vector<256x128xf32> -> vector<256x128xf32>
    %47 = arith.addf %44, %46 : vector<256x128xf32>
    %c0_36 = arith.constant 0 : index
    %c0_37 = arith.constant 0 : index
    %48 = vector.load %arg8[%c0_36, %c0_37] : memref<1x128xf32, #tpu.memory_space<vmem>>, vector<1x128xf32>
    %49 = vector.broadcast %48 : vector<1x128xf32> to vector<256x128xf32>
    %50 = arith.addf %47, %49 : vector<256x128xf32>
    %cst_38 = arith.constant 0.000000e+00 : f32
    %51 = vector.broadcast %cst_38 : f32 to vector<256x128xf32>
    %52 = arith.maximumf %50, %51 : vector<256x128xf32>
    %cst_39 = arith.constant 0.000000e+00 : f32
    %53 = vector.broadcast %cst_39 : f32 to vector<8x128xf32>
    %54 = vector.extract_strided_slice %52 {offsets = [0, 0], sizes = [248, 128], strides = [1, 1]} : vector<256x128xf32> to vector<248x128xf32>
    %55 = tpu.concatenate %53, %54 in 0 : vector<8x128xf32>, vector<248x128xf32> -> vector<256x128xf32>
    %56 = vector.extract_strided_slice %52 {offsets = [8, 0], sizes = [248, 128], strides = [1, 1]} : vector<256x128xf32> to vector<248x128xf32>
    %57 = tpu.concatenate %56, %53 in 0 : vector<248x128xf32>, vector<8x128xf32> -> vector<256x128xf32>
    %c0_40 = arith.constant 0 : index
    %c0_41 = arith.constant 0 : index
    %58 = vector.load %arg9[%c0_40, %c0_41] : memref<128x256xf32, #tpu.memory_space<vmem>>, vector<128x256xf32>
    %cst_42 = arith.constant dense<0.000000e+00> : vector<256x256xf32>
    %59 = tpu.matmul %55, %58, %cst_42 {dimension_numbers = #tpu.dot_dimension_numbers<[1], [0], [0], [1], [0, 0, 1, 1], [], []>} : vector<256x128xf32>, vector<128x256xf32>, vector<256x256xf32> -> vector<256x256xf32>
    %c0_43 = arith.constant 0 : index
    %c0_44 = arith.constant 0 : index
    %60 = vector.load %arg10[%c0_43, %c0_44] : memref<128x256xf32, #tpu.memory_space<vmem>>, vector<128x256xf32>
    %cst_45 = arith.constant dense<0.000000e+00> : vector<256x256xf32>
    %61 = tpu.matmul %52, %60, %cst_45 {dimension_numbers = #tpu.dot_dimension_numbers<[1], [0], [0], [1], [0, 0, 1, 1], [], []>} : vector<256x128xf32>, vector<128x256xf32>, vector<256x256xf32> -> vector<256x256xf32>
    %62 = arith.addf %59, %61 : vector<256x256xf32>
    %c0_46 = arith.constant 0 : index
    %c0_47 = arith.constant 0 : index
    %63 = vector.load %arg11[%c0_46, %c0_47] : memref<128x256xf32, #tpu.memory_space<vmem>>, vector<128x256xf32>
    %cst_48 = arith.constant dense<0.000000e+00> : vector<256x256xf32>
    %64 = tpu.matmul %57, %63, %cst_48 {dimension_numbers = #tpu.dot_dimension_numbers<[1], [0], [0], [1], [0, 0, 1, 1], [], []>} : vector<256x128xf32>, vector<128x256xf32>, vector<256x256xf32> -> vector<256x256xf32>
    %65 = arith.addf %62, %64 : vector<256x256xf32>
    %c0_49 = arith.constant 0 : index
    %c0_50 = arith.constant 0 : index
    %66 = vector.load %arg12[%c0_49, %c0_50] : memref<1x256xf32, #tpu.memory_space<vmem>>, vector<1x256xf32>
    %67 = vector.broadcast %66 : vector<1x256xf32> to vector<256x256xf32>
    %68 = arith.addf %65, %67 : vector<256x256xf32>
    %cst_51 = arith.constant 0.000000e+00 : f32
    %69 = vector.broadcast %cst_51 : f32 to vector<256x256xf32>
    %70 = arith.maximumf %68, %69 : vector<256x256xf32>
    %cst_52 = arith.constant 0.000000e+00 : f32
    %71 = vector.broadcast %cst_52 : f32 to vector<8x64xf32>
    %c0_i32_53 = arith.constant 0 : i32
    %c0_i32_54 = arith.constant 0 : i32
    %c0_i32_55 = arith.constant 0 : i32
    %72 = tpu.memref_slice %arg13[%c0_i32_54, %c0_i32_55] : memref<8192x64xf32, #tpu.memory_space<any>> -> memref<2048x64xf32, #tpu.memory_space<any>>
    %c0_i32_56 = arith.constant 0 : i32
    %c0_i32_57 = arith.constant 0 : i32
    %73 = tpu.memref_slice %arg16[%c0_i32_56, %c0_i32_57] : memref<8192x64xf32, #tpu.memory_space<vmem>> -> memref<2048x64xf32, #tpu.memory_space<vmem>>
    %74 = tpu.memref_slice %arg17[%c0_i32_53] : memref<4x!tpu.dma_semaphore, #tpu.memory_space<semaphore_mem>> -> memref<1x!tpu.dma_semaphore, #tpu.memory_space<semaphore_mem>>
    %75 = tpu.memref_squeeze %74 : memref<1x!tpu.dma_semaphore, #tpu.memory_space<semaphore_mem>> -> memref<!tpu.dma_semaphore, #tpu.memory_space<semaphore_mem>>
    tpu.wait_dma2 semaphore(%75 : memref<!tpu.dma_semaphore, #tpu.memory_space<semaphore_mem>>) src(%72 : memref<2048x64xf32, #tpu.memory_space<any>>) dst(%73 : memref<2048x64xf32, #tpu.memory_space<vmem>>)
    %76 = vector.extract_strided_slice %70 {offsets = [0, 0], sizes = [8, 256], strides = [1, 1]} : vector<256x256xf32> to vector<8x256xf32>
    %c0_58 = arith.constant 0 : index
    %c0_59 = arith.constant 0 : index
    %77 = vector.load %arg16[%c0_58, %c0_59] : memref<8192x64xf32, #tpu.memory_space<vmem>>, vector<256x64xf32>
    %cst_60 = arith.constant dense<0.000000e+00> : vector<8x64xf32>
    %78 = tpu.matmul %76, %77, %cst_60 {dimension_numbers = #tpu.dot_dimension_numbers<[1], [0], [0], [1], [0, 0, 1, 1], [], []>} : vector<8x256xf32>, vector<256x64xf32>, vector<8x64xf32> -> vector<8x64xf32>
    %79 = arith.addf %71, %78 : vector<8x64xf32>
    %80 = vector.extract_strided_slice %70 {offsets = [8, 0], sizes = [8, 256], strides = [1, 1]} : vector<256x256xf32> to vector<8x256xf32>
    %c256 = arith.constant 256 : index
    %c0_61 = arith.constant 0 : index
    %81 = vector.load %arg16[%c256, %c0_61] : memref<8192x64xf32, #tpu.memory_space<vmem>>, vector<256x64xf32>
    %cst_62 = arith.constant dense<0.000000e+00> : vector<8x64xf32>
    %82 = tpu.matmul %80, %81, %cst_62 {dimension_numbers = #tpu.dot_dimension_numbers<[1], [0], [0], [1], [0, 0, 1, 1], [], []>} : vector<8x256xf32>, vector<256x64xf32>, vector<8x64xf32> -> vector<8x64xf32>
    %83 = arith.addf %79, %82 : vector<8x64xf32>
    %84 = vector.extract_strided_slice %70 {offsets = [16, 0], sizes = [8, 256], strides = [1, 1]} : vector<256x256xf32> to vector<8x256xf32>
    %c512 = arith.constant 512 : index
    %c0_63 = arith.constant 0 : index
    %85 = vector.load %arg16[%c512, %c0_63] : memref<8192x64xf32, #tpu.memory_space<vmem>>, vector<256x64xf32>
    %cst_64 = arith.constant dense<0.000000e+00> : vector<8x64xf32>
    %86 = tpu.matmul %84, %85, %cst_64 {dimension_numbers = #tpu.dot_dimension_numbers<[1], [0], [0], [1], [0, 0, 1, 1], [], []>} : vector<8x256xf32>, vector<256x64xf32>, vector<8x64xf32> -> vector<8x64xf32>
    %87 = arith.addf %83, %86 : vector<8x64xf32>
    %88 = vector.extract_strided_slice %70 {offsets = [24, 0], sizes = [8, 256], strides = [1, 1]} : vector<256x256xf32> to vector<8x256xf32>
    %c768 = arith.constant 768 : index
    %c0_65 = arith.constant 0 : index
    %89 = vector.load %arg16[%c768, %c0_65] : memref<8192x64xf32, #tpu.memory_space<vmem>>, vector<256x64xf32>
    %cst_66 = arith.constant dense<0.000000e+00> : vector<8x64xf32>
    %90 = tpu.matmul %88, %89, %cst_66 {dimension_numbers = #tpu.dot_dimension_numbers<[1], [0], [0], [1], [0, 0, 1, 1], [], []>} : vector<8x256xf32>, vector<256x64xf32>, vector<8x64xf32> -> vector<8x64xf32>
    %91 = arith.addf %87, %90 : vector<8x64xf32>
    %92 = vector.extract_strided_slice %70 {offsets = [32, 0], sizes = [8, 256], strides = [1, 1]} : vector<256x256xf32> to vector<8x256xf32>
    %c1024 = arith.constant 1024 : index
    %c0_67 = arith.constant 0 : index
    %93 = vector.load %arg16[%c1024, %c0_67] : memref<8192x64xf32, #tpu.memory_space<vmem>>, vector<256x64xf32>
    %cst_68 = arith.constant dense<0.000000e+00> : vector<8x64xf32>
    %94 = tpu.matmul %92, %93, %cst_68 {dimension_numbers = #tpu.dot_dimension_numbers<[1], [0], [0], [1], [0, 0, 1, 1], [], []>} : vector<8x256xf32>, vector<256x64xf32>, vector<8x64xf32> -> vector<8x64xf32>
    %95 = arith.addf %91, %94 : vector<8x64xf32>
    %96 = vector.extract_strided_slice %70 {offsets = [40, 0], sizes = [8, 256], strides = [1, 1]} : vector<256x256xf32> to vector<8x256xf32>
    %c1280 = arith.constant 1280 : index
    %c0_69 = arith.constant 0 : index
    %97 = vector.load %arg16[%c1280, %c0_69] : memref<8192x64xf32, #tpu.memory_space<vmem>>, vector<256x64xf32>
    %cst_70 = arith.constant dense<0.000000e+00> : vector<8x64xf32>
    %98 = tpu.matmul %96, %97, %cst_70 {dimension_numbers = #tpu.dot_dimension_numbers<[1], [0], [0], [1], [0, 0, 1, 1], [], []>} : vector<8x256xf32>, vector<256x64xf32>, vector<8x64xf32> -> vector<8x64xf32>
    %99 = arith.addf %95, %98 : vector<8x64xf32>
    %100 = vector.extract_strided_slice %70 {offsets = [48, 0], sizes = [8, 256], strides = [1, 1]} : vector<256x256xf32> to vector<8x256xf32>
    %c1536 = arith.constant 1536 : index
    %c0_71 = arith.constant 0 : index
    %101 = vector.load %arg16[%c1536, %c0_71] : memref<8192x64xf32, #tpu.memory_space<vmem>>, vector<256x64xf32>
    %cst_72 = arith.constant dense<0.000000e+00> : vector<8x64xf32>
    %102 = tpu.matmul %100, %101, %cst_72 {dimension_numbers = #tpu.dot_dimension_numbers<[1], [0], [0], [1], [0, 0, 1, 1], [], []>} : vector<8x256xf32>, vector<256x64xf32>, vector<8x64xf32> -> vector<8x64xf32>
    %103 = arith.addf %99, %102 : vector<8x64xf32>
    %104 = vector.extract_strided_slice %70 {offsets = [56, 0], sizes = [8, 256], strides = [1, 1]} : vector<256x256xf32> to vector<8x256xf32>
    %c1792 = arith.constant 1792 : index
    %c0_73 = arith.constant 0 : index
    %105 = vector.load %arg16[%c1792, %c0_73] : memref<8192x64xf32, #tpu.memory_space<vmem>>, vector<256x64xf32>
    %cst_74 = arith.constant dense<0.000000e+00> : vector<8x64xf32>
    %106 = tpu.matmul %104, %105, %cst_74 {dimension_numbers = #tpu.dot_dimension_numbers<[1], [0], [0], [1], [0, 0, 1, 1], [], []>} : vector<8x256xf32>, vector<256x64xf32>, vector<8x64xf32> -> vector<8x64xf32>
    %107 = arith.addf %103, %106 : vector<8x64xf32>
    %c1_i32_75 = arith.constant 1 : i32
    %c2048_i32_76 = arith.constant 2048 : i32
    %c0_i32_77 = arith.constant 0 : i32
    %108 = tpu.memref_slice %arg13[%c2048_i32_76, %c0_i32_77] : memref<8192x64xf32, #tpu.memory_space<any>> -> memref<2048x64xf32, #tpu.memory_space<any>>
    %c2048_i32_78 = arith.constant 2048 : i32
    %c0_i32_79 = arith.constant 0 : i32
    %109 = tpu.memref_slice %arg16[%c2048_i32_78, %c0_i32_79] : memref<8192x64xf32, #tpu.memory_space<vmem>> -> memref<2048x64xf32, #tpu.memory_space<vmem>>
    %110 = tpu.memref_slice %arg17[%c1_i32_75] : memref<4x!tpu.dma_semaphore, #tpu.memory_space<semaphore_mem>> -> memref<1x!tpu.dma_semaphore, #tpu.memory_space<semaphore_mem>>
    %111 = tpu.memref_squeeze %110 : memref<1x!tpu.dma_semaphore, #tpu.memory_space<semaphore_mem>> -> memref<!tpu.dma_semaphore, #tpu.memory_space<semaphore_mem>>
    tpu.wait_dma2 semaphore(%111 : memref<!tpu.dma_semaphore, #tpu.memory_space<semaphore_mem>>) src(%108 : memref<2048x64xf32, #tpu.memory_space<any>>) dst(%109 : memref<2048x64xf32, #tpu.memory_space<vmem>>)
    %112 = vector.extract_strided_slice %70 {offsets = [64, 0], sizes = [8, 256], strides = [1, 1]} : vector<256x256xf32> to vector<8x256xf32>
    %c2048 = arith.constant 2048 : index
    %c0_80 = arith.constant 0 : index
    %113 = vector.load %arg16[%c2048, %c0_80] : memref<8192x64xf32, #tpu.memory_space<vmem>>, vector<256x64xf32>
    %cst_81 = arith.constant dense<0.000000e+00> : vector<8x64xf32>
    %114 = tpu.matmul %112, %113, %cst_81 {dimension_numbers = #tpu.dot_dimension_numbers<[1], [0], [0], [1], [0, 0, 1, 1], [], []>} : vector<8x256xf32>, vector<256x64xf32>, vector<8x64xf32> -> vector<8x64xf32>
    %115 = arith.addf %107, %114 : vector<8x64xf32>
    %116 = vector.extract_strided_slice %70 {offsets = [72, 0], sizes = [8, 256], strides = [1, 1]} : vector<256x256xf32> to vector<8x256xf32>
    %c2304 = arith.constant 2304 : index
    %c0_82 = arith.constant 0 : index
    %117 = vector.load %arg16[%c2304, %c0_82] : memref<8192x64xf32, #tpu.memory_space<vmem>>, vector<256x64xf32>
    %cst_83 = arith.constant dense<0.000000e+00> : vector<8x64xf32>
    %118 = tpu.matmul %116, %117, %cst_83 {dimension_numbers = #tpu.dot_dimension_numbers<[1], [0], [0], [1], [0, 0, 1, 1], [], []>} : vector<8x256xf32>, vector<256x64xf32>, vector<8x64xf32> -> vector<8x64xf32>
    %119 = arith.addf %115, %118 : vector<8x64xf32>
    %120 = vector.extract_strided_slice %70 {offsets = [80, 0], sizes = [8, 256], strides = [1, 1]} : vector<256x256xf32> to vector<8x256xf32>
    %c2560 = arith.constant 2560 : index
    %c0_84 = arith.constant 0 : index
    %121 = vector.load %arg16[%c2560, %c0_84] : memref<8192x64xf32, #tpu.memory_space<vmem>>, vector<256x64xf32>
    %cst_85 = arith.constant dense<0.000000e+00> : vector<8x64xf32>
    %122 = tpu.matmul %120, %121, %cst_85 {dimension_numbers = #tpu.dot_dimension_numbers<[1], [0], [0], [1], [0, 0, 1, 1], [], []>} : vector<8x256xf32>, vector<256x64xf32>, vector<8x64xf32> -> vector<8x64xf32>
    %123 = arith.addf %119, %122 : vector<8x64xf32>
    %124 = vector.extract_strided_slice %70 {offsets = [88, 0], sizes = [8, 256], strides = [1, 1]} : vector<256x256xf32> to vector<8x256xf32>
    %c2816 = arith.constant 2816 : index
    %c0_86 = arith.constant 0 : index
    %125 = vector.load %arg16[%c2816, %c0_86] : memref<8192x64xf32, #tpu.memory_space<vmem>>, vector<256x64xf32>
    %cst_87 = arith.constant dense<0.000000e+00> : vector<8x64xf32>
    %126 = tpu.matmul %124, %125, %cst_87 {dimension_numbers = #tpu.dot_dimension_numbers<[1], [0], [0], [1], [0, 0, 1, 1], [], []>} : vector<8x256xf32>, vector<256x64xf32>, vector<8x64xf32> -> vector<8x64xf32>
    %127 = arith.addf %123, %126 : vector<8x64xf32>
    %128 = vector.extract_strided_slice %70 {offsets = [96, 0], sizes = [8, 256], strides = [1, 1]} : vector<256x256xf32> to vector<8x256xf32>
    %c3072 = arith.constant 3072 : index
    %c0_88 = arith.constant 0 : index
    %129 = vector.load %arg16[%c3072, %c0_88] : memref<8192x64xf32, #tpu.memory_space<vmem>>, vector<256x64xf32>
    %cst_89 = arith.constant dense<0.000000e+00> : vector<8x64xf32>
    %130 = tpu.matmul %128, %129, %cst_89 {dimension_numbers = #tpu.dot_dimension_numbers<[1], [0], [0], [1], [0, 0, 1, 1], [], []>} : vector<8x256xf32>, vector<256x64xf32>, vector<8x64xf32> -> vector<8x64xf32>
    %131 = arith.addf %127, %130 : vector<8x64xf32>
    %132 = vector.extract_strided_slice %70 {offsets = [104, 0], sizes = [8, 256], strides = [1, 1]} : vector<256x256xf32> to vector<8x256xf32>
    %c3328 = arith.constant 3328 : index
    %c0_90 = arith.constant 0 : index
    %133 = vector.load %arg16[%c3328, %c0_90] : memref<8192x64xf32, #tpu.memory_space<vmem>>, vector<256x64xf32>
    %cst_91 = arith.constant dense<0.000000e+00> : vector<8x64xf32>
    %134 = tpu.matmul %132, %133, %cst_91 {dimension_numbers = #tpu.dot_dimension_numbers<[1], [0], [0], [1], [0, 0, 1, 1], [], []>} : vector<8x256xf32>, vector<256x64xf32>, vector<8x64xf32> -> vector<8x64xf32>
    %135 = arith.addf %131, %134 : vector<8x64xf32>
    %136 = vector.extract_strided_slice %70 {offsets = [112, 0], sizes = [8, 256], strides = [1, 1]} : vector<256x256xf32> to vector<8x256xf32>
    %c3584 = arith.constant 3584 : index
    %c0_92 = arith.constant 0 : index
    %137 = vector.load %arg16[%c3584, %c0_92] : memref<8192x64xf32, #tpu.memory_space<vmem>>, vector<256x64xf32>
    %cst_93 = arith.constant dense<0.000000e+00> : vector<8x64xf32>
    %138 = tpu.matmul %136, %137, %cst_93 {dimension_numbers = #tpu.dot_dimension_numbers<[1], [0], [0], [1], [0, 0, 1, 1], [], []>} : vector<8x256xf32>, vector<256x64xf32>, vector<8x64xf32> -> vector<8x64xf32>
    %139 = arith.addf %135, %138 : vector<8x64xf32>
    %140 = vector.extract_strided_slice %70 {offsets = [120, 0], sizes = [8, 256], strides = [1, 1]} : vector<256x256xf32> to vector<8x256xf32>
    %c3840 = arith.constant 3840 : index
    %c0_94 = arith.constant 0 : index
    %141 = vector.load %arg16[%c3840, %c0_94] : memref<8192x64xf32, #tpu.memory_space<vmem>>, vector<256x64xf32>
    %cst_95 = arith.constant dense<0.000000e+00> : vector<8x64xf32>
    %142 = tpu.matmul %140, %141, %cst_95 {dimension_numbers = #tpu.dot_dimension_numbers<[1], [0], [0], [1], [0, 0, 1, 1], [], []>} : vector<8x256xf32>, vector<256x64xf32>, vector<8x64xf32> -> vector<8x64xf32>
    %143 = arith.addf %139, %142 : vector<8x64xf32>
    %c2_i32_96 = arith.constant 2 : i32
    %c4096_i32_97 = arith.constant 4096 : i32
    %c0_i32_98 = arith.constant 0 : i32
    %144 = tpu.memref_slice %arg13[%c4096_i32_97, %c0_i32_98] : memref<8192x64xf32, #tpu.memory_space<any>> -> memref<2048x64xf32, #tpu.memory_space<any>>
    %c4096_i32_99 = arith.constant 4096 : i32
    %c0_i32_100 = arith.constant 0 : i32
    %145 = tpu.memref_slice %arg16[%c4096_i32_99, %c0_i32_100] : memref<8192x64xf32, #tpu.memory_space<vmem>> -> memref<2048x64xf32, #tpu.memory_space<vmem>>
    %146 = tpu.memref_slice %arg17[%c2_i32_96] : memref<4x!tpu.dma_semaphore, #tpu.memory_space<semaphore_mem>> -> memref<1x!tpu.dma_semaphore, #tpu.memory_space<semaphore_mem>>
    %147 = tpu.memref_squeeze %146 : memref<1x!tpu.dma_semaphore, #tpu.memory_space<semaphore_mem>> -> memref<!tpu.dma_semaphore, #tpu.memory_space<semaphore_mem>>
    tpu.wait_dma2 semaphore(%147 : memref<!tpu.dma_semaphore, #tpu.memory_space<semaphore_mem>>) src(%144 : memref<2048x64xf32, #tpu.memory_space<any>>) dst(%145 : memref<2048x64xf32, #tpu.memory_space<vmem>>)
    %148 = vector.extract_strided_slice %70 {offsets = [128, 0], sizes = [8, 256], strides = [1, 1]} : vector<256x256xf32> to vector<8x256xf32>
    %c4096 = arith.constant 4096 : index
    %c0_101 = arith.constant 0 : index
    %149 = vector.load %arg16[%c4096, %c0_101] : memref<8192x64xf32, #tpu.memory_space<vmem>>, vector<256x64xf32>
    %cst_102 = arith.constant dense<0.000000e+00> : vector<8x64xf32>
    %150 = tpu.matmul %148, %149, %cst_102 {dimension_numbers = #tpu.dot_dimension_numbers<[1], [0], [0], [1], [0, 0, 1, 1], [], []>} : vector<8x256xf32>, vector<256x64xf32>, vector<8x64xf32> -> vector<8x64xf32>
    %151 = arith.addf %143, %150 : vector<8x64xf32>
    %152 = vector.extract_strided_slice %70 {offsets = [136, 0], sizes = [8, 256], strides = [1, 1]} : vector<256x256xf32> to vector<8x256xf32>
    %c4352 = arith.constant 4352 : index
    %c0_103 = arith.constant 0 : index
    %153 = vector.load %arg16[%c4352, %c0_103] : memref<8192x64xf32, #tpu.memory_space<vmem>>, vector<256x64xf32>
    %cst_104 = arith.constant dense<0.000000e+00> : vector<8x64xf32>
    %154 = tpu.matmul %152, %153, %cst_104 {dimension_numbers = #tpu.dot_dimension_numbers<[1], [0], [0], [1], [0, 0, 1, 1], [], []>} : vector<8x256xf32>, vector<256x64xf32>, vector<8x64xf32> -> vector<8x64xf32>
    %155 = arith.addf %151, %154 : vector<8x64xf32>
    %156 = vector.extract_strided_slice %70 {offsets = [144, 0], sizes = [8, 256], strides = [1, 1]} : vector<256x256xf32> to vector<8x256xf32>
    %c4608 = arith.constant 4608 : index
    %c0_105 = arith.constant 0 : index
    %157 = vector.load %arg16[%c4608, %c0_105] : memref<8192x64xf32, #tpu.memory_space<vmem>>, vector<256x64xf32>
    %cst_106 = arith.constant dense<0.000000e+00> : vector<8x64xf32>
    %158 = tpu.matmul %156, %157, %cst_106 {dimension_numbers = #tpu.dot_dimension_numbers<[1], [0], [0], [1], [0, 0, 1, 1], [], []>} : vector<8x256xf32>, vector<256x64xf32>, vector<8x64xf32> -> vector<8x64xf32>
    %159 = arith.addf %155, %158 : vector<8x64xf32>
    %160 = vector.extract_strided_slice %70 {offsets = [152, 0], sizes = [8, 256], strides = [1, 1]} : vector<256x256xf32> to vector<8x256xf32>
    %c4864 = arith.constant 4864 : index
    %c0_107 = arith.constant 0 : index
    %161 = vector.load %arg16[%c4864, %c0_107] : memref<8192x64xf32, #tpu.memory_space<vmem>>, vector<256x64xf32>
    %cst_108 = arith.constant dense<0.000000e+00> : vector<8x64xf32>
    %162 = tpu.matmul %160, %161, %cst_108 {dimension_numbers = #tpu.dot_dimension_numbers<[1], [0], [0], [1], [0, 0, 1, 1], [], []>} : vector<8x256xf32>, vector<256x64xf32>, vector<8x64xf32> -> vector<8x64xf32>
    %163 = arith.addf %159, %162 : vector<8x64xf32>
    %164 = vector.extract_strided_slice %70 {offsets = [160, 0], sizes = [8, 256], strides = [1, 1]} : vector<256x256xf32> to vector<8x256xf32>
    %c5120 = arith.constant 5120 : index
    %c0_109 = arith.constant 0 : index
    %165 = vector.load %arg16[%c5120, %c0_109] : memref<8192x64xf32, #tpu.memory_space<vmem>>, vector<256x64xf32>
    %cst_110 = arith.constant dense<0.000000e+00> : vector<8x64xf32>
    %166 = tpu.matmul %164, %165, %cst_110 {dimension_numbers = #tpu.dot_dimension_numbers<[1], [0], [0], [1], [0, 0, 1, 1], [], []>} : vector<8x256xf32>, vector<256x64xf32>, vector<8x64xf32> -> vector<8x64xf32>
    %167 = arith.addf %163, %166 : vector<8x64xf32>
    %168 = vector.extract_strided_slice %70 {offsets = [168, 0], sizes = [8, 256], strides = [1, 1]} : vector<256x256xf32> to vector<8x256xf32>
    %c5376 = arith.constant 5376 : index
    %c0_111 = arith.constant 0 : index
    %169 = vector.load %arg16[%c5376, %c0_111] : memref<8192x64xf32, #tpu.memory_space<vmem>>, vector<256x64xf32>
    %cst_112 = arith.constant dense<0.000000e+00> : vector<8x64xf32>
    %170 = tpu.matmul %168, %169, %cst_112 {dimension_numbers = #tpu.dot_dimension_numbers<[1], [0], [0], [1], [0, 0, 1, 1], [], []>} : vector<8x256xf32>, vector<256x64xf32>, vector<8x64xf32> -> vector<8x64xf32>
    %171 = arith.addf %167, %170 : vector<8x64xf32>
    %172 = vector.extract_strided_slice %70 {offsets = [176, 0], sizes = [8, 256], strides = [1, 1]} : vector<256x256xf32> to vector<8x256xf32>
    %c5632 = arith.constant 5632 : index
    %c0_113 = arith.constant 0 : index
    %173 = vector.load %arg16[%c5632, %c0_113] : memref<8192x64xf32, #tpu.memory_space<vmem>>, vector<256x64xf32>
    %cst_114 = arith.constant dense<0.000000e+00> : vector<8x64xf32>
    %174 = tpu.matmul %172, %173, %cst_114 {dimension_numbers = #tpu.dot_dimension_numbers<[1], [0], [0], [1], [0, 0, 1, 1], [], []>} : vector<8x256xf32>, vector<256x64xf32>, vector<8x64xf32> -> vector<8x64xf32>
    %175 = arith.addf %171, %174 : vector<8x64xf32>
    %176 = vector.extract_strided_slice %70 {offsets = [184, 0], sizes = [8, 256], strides = [1, 1]} : vector<256x256xf32> to vector<8x256xf32>
    %c5888 = arith.constant 5888 : index
    %c0_115 = arith.constant 0 : index
    %177 = vector.load %arg16[%c5888, %c0_115] : memref<8192x64xf32, #tpu.memory_space<vmem>>, vector<256x64xf32>
    %cst_116 = arith.constant dense<0.000000e+00> : vector<8x64xf32>
    %178 = tpu.matmul %176, %177, %cst_116 {dimension_numbers = #tpu.dot_dimension_numbers<[1], [0], [0], [1], [0, 0, 1, 1], [], []>} : vector<8x256xf32>, vector<256x64xf32>, vector<8x64xf32> -> vector<8x64xf32>
    %179 = arith.addf %175, %178 : vector<8x64xf32>
    %c3_i32_117 = arith.constant 3 : i32
    %c6144_i32_118 = arith.constant 6144 : i32
    %c0_i32_119 = arith.constant 0 : i32
    %180 = tpu.memref_slice %arg13[%c6144_i32_118, %c0_i32_119] : memref<8192x64xf32, #tpu.memory_space<any>> -> memref<2048x64xf32, #tpu.memory_space<any>>
    %c6144_i32_120 = arith.constant 6144 : i32
    %c0_i32_121 = arith.constant 0 : i32
    %181 = tpu.memref_slice %arg16[%c6144_i32_120, %c0_i32_121] : memref<8192x64xf32, #tpu.memory_space<vmem>> -> memref<2048x64xf32, #tpu.memory_space<vmem>>
    %182 = tpu.memref_slice %arg17[%c3_i32_117] : memref<4x!tpu.dma_semaphore, #tpu.memory_space<semaphore_mem>> -> memref<1x!tpu.dma_semaphore, #tpu.memory_space<semaphore_mem>>
    %183 = tpu.memref_squeeze %182 : memref<1x!tpu.dma_semaphore, #tpu.memory_space<semaphore_mem>> -> memref<!tpu.dma_semaphore, #tpu.memory_space<semaphore_mem>>
    tpu.wait_dma2 semaphore(%183 : memref<!tpu.dma_semaphore, #tpu.memory_space<semaphore_mem>>) src(%180 : memref<2048x64xf32, #tpu.memory_space<any>>) dst(%181 : memref<2048x64xf32, #tpu.memory_space<vmem>>)
    %184 = vector.extract_strided_slice %70 {offsets = [192, 0], sizes = [8, 256], strides = [1, 1]} : vector<256x256xf32> to vector<8x256xf32>
    %c6144 = arith.constant 6144 : index
    %c0_122 = arith.constant 0 : index
    %185 = vector.load %arg16[%c6144, %c0_122] : memref<8192x64xf32, #tpu.memory_space<vmem>>, vector<256x64xf32>
    %cst_123 = arith.constant dense<0.000000e+00> : vector<8x64xf32>
    %186 = tpu.matmul %184, %185, %cst_123 {dimension_numbers = #tpu.dot_dimension_numbers<[1], [0], [0], [1], [0, 0, 1, 1], [], []>} : vector<8x256xf32>, vector<256x64xf32>, vector<8x64xf32> -> vector<8x64xf32>
    %187 = arith.addf %179, %186 : vector<8x64xf32>
    %188 = vector.extract_strided_slice %70 {offsets = [200, 0], sizes = [8, 256], strides = [1, 1]} : vector<256x256xf32> to vector<8x256xf32>
    %c6400 = arith.constant 6400 : index
    %c0_124 = arith.constant 0 : index
    %189 = vector.load %arg16[%c6400, %c0_124] : memref<8192x64xf32, #tpu.memory_space<vmem>>, vector<256x64xf32>
    %cst_125 = arith.constant dense<0.000000e+00> : vector<8x64xf32>
    %190 = tpu.matmul %188, %189, %cst_125 {dimension_numbers = #tpu.dot_dimension_numbers<[1], [0], [0], [1], [0, 0, 1, 1], [], []>} : vector<8x256xf32>, vector<256x64xf32>, vector<8x64xf32> -> vector<8x64xf32>
    %191 = arith.addf %187, %190 : vector<8x64xf32>
    %192 = vector.extract_strided_slice %70 {offsets = [208, 0], sizes = [8, 256], strides = [1, 1]} : vector<256x256xf32> to vector<8x256xf32>
    %c6656 = arith.constant 6656 : index
    %c0_126 = arith.constant 0 : index
    %193 = vector.load %arg16[%c6656, %c0_126] : memref<8192x64xf32, #tpu.memory_space<vmem>>, vector<256x64xf32>
    %cst_127 = arith.constant dense<0.000000e+00> : vector<8x64xf32>
    %194 = tpu.matmul %192, %193, %cst_127 {dimension_numbers = #tpu.dot_dimension_numbers<[1], [0], [0], [1], [0, 0, 1, 1], [], []>} : vector<8x256xf32>, vector<256x64xf32>, vector<8x64xf32> -> vector<8x64xf32>
    %195 = arith.addf %191, %194 : vector<8x64xf32>
    %196 = vector.extract_strided_slice %70 {offsets = [216, 0], sizes = [8, 256], strides = [1, 1]} : vector<256x256xf32> to vector<8x256xf32>
    %c6912 = arith.constant 6912 : index
    %c0_128 = arith.constant 0 : index
    %197 = vector.load %arg16[%c6912, %c0_128] : memref<8192x64xf32, #tpu.memory_space<vmem>>, vector<256x64xf32>
    %cst_129 = arith.constant dense<0.000000e+00> : vector<8x64xf32>
    %198 = tpu.matmul %196, %197, %cst_129 {dimension_numbers = #tpu.dot_dimension_numbers<[1], [0], [0], [1], [0, 0, 1, 1], [], []>} : vector<8x256xf32>, vector<256x64xf32>, vector<8x64xf32> -> vector<8x64xf32>
    %199 = arith.addf %195, %198 : vector<8x64xf32>
    %200 = vector.extract_strided_slice %70 {offsets = [224, 0], sizes = [8, 256], strides = [1, 1]} : vector<256x256xf32> to vector<8x256xf32>
    %c7168 = arith.constant 7168 : index
    %c0_130 = arith.constant 0 : index
    %201 = vector.load %arg16[%c7168, %c0_130] : memref<8192x64xf32, #tpu.memory_space<vmem>>, vector<256x64xf32>
    %cst_131 = arith.constant dense<0.000000e+00> : vector<8x64xf32>
    %202 = tpu.matmul %200, %201, %cst_131 {dimension_numbers = #tpu.dot_dimension_numbers<[1], [0], [0], [1], [0, 0, 1, 1], [], []>} : vector<8x256xf32>, vector<256x64xf32>, vector<8x64xf32> -> vector<8x64xf32>
    %203 = arith.addf %199, %202 : vector<8x64xf32>
    %204 = vector.extract_strided_slice %70 {offsets = [232, 0], sizes = [8, 256], strides = [1, 1]} : vector<256x256xf32> to vector<8x256xf32>
    %c7424 = arith.constant 7424 : index
    %c0_132 = arith.constant 0 : index
    %205 = vector.load %arg16[%c7424, %c0_132] : memref<8192x64xf32, #tpu.memory_space<vmem>>, vector<256x64xf32>
    %cst_133 = arith.constant dense<0.000000e+00> : vector<8x64xf32>
    %206 = tpu.matmul %204, %205, %cst_133 {dimension_numbers = #tpu.dot_dimension_numbers<[1], [0], [0], [1], [0, 0, 1, 1], [], []>} : vector<8x256xf32>, vector<256x64xf32>, vector<8x64xf32> -> vector<8x64xf32>
    %207 = arith.addf %203, %206 : vector<8x64xf32>
    %208 = vector.extract_strided_slice %70 {offsets = [240, 0], sizes = [8, 256], strides = [1, 1]} : vector<256x256xf32> to vector<8x256xf32>
    %c7680 = arith.constant 7680 : index
    %c0_134 = arith.constant 0 : index
    %209 = vector.load %arg16[%c7680, %c0_134] : memref<8192x64xf32, #tpu.memory_space<vmem>>, vector<256x64xf32>
    %cst_135 = arith.constant dense<0.000000e+00> : vector<8x64xf32>
    %210 = tpu.matmul %208, %209, %cst_135 {dimension_numbers = #tpu.dot_dimension_numbers<[1], [0], [0], [1], [0, 0, 1, 1], [], []>} : vector<8x256xf32>, vector<256x64xf32>, vector<8x64xf32> -> vector<8x64xf32>
    %211 = arith.addf %207, %210 : vector<8x64xf32>
    %212 = vector.extract_strided_slice %70 {offsets = [248, 0], sizes = [8, 256], strides = [1, 1]} : vector<256x256xf32> to vector<8x256xf32>
    %c7936 = arith.constant 7936 : index
    %c0_136 = arith.constant 0 : index
    %213 = vector.load %arg16[%c7936, %c0_136] : memref<8192x64xf32, #tpu.memory_space<vmem>>, vector<256x64xf32>
    %cst_137 = arith.constant dense<0.000000e+00> : vector<8x64xf32>
    %214 = tpu.matmul %212, %213, %cst_137 {dimension_numbers = #tpu.dot_dimension_numbers<[1], [0], [0], [1], [0, 0, 1, 1], [], []>} : vector<8x256xf32>, vector<256x64xf32>, vector<8x64xf32> -> vector<8x64xf32>
    %215 = arith.addf %211, %214 : vector<8x64xf32>
    %c0_138 = arith.constant 0 : index
    %c0_139 = arith.constant 0 : index
    %216 = vector.load %arg14[%c0_138, %c0_139] : memref<1x64xf32, #tpu.memory_space<vmem>>, vector<1x64xf32>
    %217 = vector.broadcast %216 : vector<1x64xf32> to vector<8x64xf32>
    %218 = arith.addf %215, %217 : vector<8x64xf32>
    %c0_140 = arith.constant 0 : index
    %c0_141 = arith.constant 0 : index
    %219 = vector.load %arg15[%c0_140, %c0_141] : memref<8x64xf32, #tpu.memory_space<vmem>>, vector<8x64xf32>
    tpu.vector_store %arg15[%c0_140, %c0_141], %218 {strides = array<i32>} : memref<8x64xf32, #tpu.memory_space<vmem>>, vector<8x64xf32>,
    return
  }
}

</mosaic_0001>

<llo_original>
// kernel: cnn_encoder_forward.1
$region0: #{cnn_encoder_forward.1}
  #allocation0 [shape = 'u32[]', space=smem, size = 0x4, offset = 0x4, fixed_abs, tag = 'smem constant byte address 0x4 - core index']
  #allocation1 [shape = 'u32[72,128]{1,0:T(1,128)}', space=vmem, size = 0x9000, scoped, tag = 'internal scratch']
  #allocation2 [shape = 'f32[8192,64]{1,0:T(8,128)}', space=vmem, size = 0x400000, scoped, tag = 'scratch operand']
  #allocation3 [shape = 's32[4]{0}', space=sflag, size = 0x10, scoped, tag = 'scratch operand']
  #allocation4 [shape = 's32[]', space=sflag, size = 0x4, offset = 0, fixed_abs, tag = 'sflag constant byte address 0x0 - dummy sync flag']
  #allocation5 [shape = 's32[]', space=sflag, size = 0x4, offset = 0, fixed_abs, tag = 'sflag constant byte address 0x0 - dummy sync flag']
  #allocation6 [shape = 's32[]', space=sflag, size = 0x4, offset = 0, fixed_abs, tag = 'sflag constant byte address 0x0 - dummy sync flag']
  #allocation7 [shape = 's32[]', space=sflag, size = 0x4, offset = 0, fixed_abs, tag = 'sflag constant byte address 0x0 - dummy sync flag']
  %s0 = inlined_call_operand.vmem [shape: f32[256,4], index: 0, kind: input, shape index: {}]
  %s1 = inlined_call_operand.vmem [shape: f32[4,64], index: 1, kind: input, shape index: {}]
  %s2 = inlined_call_operand.vmem [shape: f32[4,64], index: 2, kind: input, shape index: {}]
  %s3 = inlined_call_operand.vmem [shape: f32[4,64], index: 3, kind: input, shape index: {}]
  %s4 = inlined_call_operand.vmem [shape: f32[1,64], index: 4, kind: input, shape index: {}]
  %s5 = inlined_call_operand.vmem [shape: f32[64,128], index: 5, kind: input, shape index: {}]
  %s6 = inlined_call_operand.vmem [shape: f32[64,128], index: 6, kind: input, shape index: {}]
  %s7 = inlined_call_operand.vmem [shape: f32[64,128], index: 7, kind: input, shape index: {}]
  %s8 = inlined_call_operand.vmem [shape: f32[1,128], index: 8, kind: input, shape index: {}]
  %s9 = inlined_call_operand.vmem [shape: f32[128,256], index: 9, kind: input, shape index: {}]
  %s10 = inlined_call_operand.vmem [shape: f32[128,256], index: 10, kind: input, shape index: {}]
  %s11 = inlined_call_operand.vmem [shape: f32[128,256], index: 11, kind: input, shape index: {}]
  %s12 = inlined_call_operand.vmem [shape: f32[1,256], index: 12, kind: input, shape index: {}]
  %s13 = inlined_call_operand.vmem [shape: f32[8192,64], index: 13, kind: input, shape index: {}]
  %s14 = inlined_call_operand.vmem [shape: f32[1,64], index: 14, kind: input, shape index: {}]
  %s15 = inlined_call_operand.vmem [shape: f32[8,64], index: 15, kind: output, shape index: {}]
  %s16 = sld [smem:[#allocation0]]
  $region142: #{cnn_encoder_forward.1} parent=0
    _
  %s18 = ssub.s32 1, %s16
  %s19 = scalar_select 0, %s18, %s16
  // Predicated region
  $region2: #{cnn_encoder_forward.1} parent=0 // pred_check
    _
  $region3: #{cnn_encoder_forward.1} parent=0 // pred_check_branch
    %21 = sbr.rel (0) target = $region5
  $region4: #{cnn_encoder_forward.1} parent=0 // pred_region
    _
  $region5: #{cnn_encoder_forward.1} parent=0 // pred_fallthru
    _
  // Predicated region
  $region6: #{cnn_encoder_forward.1} parent=0 // pred_check
    _
  $region7: #{cnn_encoder_forward.1} parent=0 // pred_check_branch
    %23 = sbr.rel (0) target = $region9
  $region8: #{cnn_encoder_forward.1} parent=0 // pred_region
    _
  $region9: #{cnn_encoder_forward.1} parent=0 // pred_fallthru
    _
  // Predicated region
  $region10: #{cnn_encoder_forward.1} parent=0 // pred_check
    _
  $region11: #{cnn_encoder_forward.1} parent=0 // pred_check_branch
    %25 = sbr.rel (0) target = $region13
  $region12: #{cnn_encoder_forward.1} parent=0 // pred_region
    _
  $region13: #{cnn_encoder_forward.1} parent=0 // pred_fallthru
    _
  // Predicated region
  $region14: #{cnn_encoder_forward.1} parent=0 // pred_check
    _
  $region15: #{cnn_encoder_forward.1} parent=0 // pred_check_branch
    %27 = sbr.rel (0) target = $region17
  $region16: #{cnn_encoder_forward.1} parent=0 // pred_region
    _
  $region17: #{cnn_encoder_forward.1} parent=0 // pred_fallthru
    _
  // Predicated region
  $region18: #{cnn_encoder_forward.1} parent=0 // pred_check
    _
  $region19: #{cnn_encoder_forward.1} parent=0 // pred_check_branch
    %29 = sbr.rel (0) target = $region21
  $region20: #{cnn_encoder_forward.1} parent=0 // pred_region
    _
  $region21: #{cnn_encoder_forward.1} parent=0 // pred_fallthru
    _
  // Predicated region
  $region22: #{cnn_encoder_forward.1} parent=0 // pred_check
    _
  $region23: #{cnn_encoder_forward.1} parent=0 // pred_check_branch
    %31 = sbr.rel (0) target = $region25
  $region24: #{cnn_encoder_forward.1} parent=0 // pred_region
    _
  $region25: #{cnn_encoder_forward.1} parent=0 // pred_fallthru
    _
  // Predicated region
  $region26: #{cnn_encoder_forward.1} parent=0 // pred_check
    _
  $region27: #{cnn_encoder_forward.1} parent=0 // pred_check_branch
    %33 = sbr.rel (0) target = $region29
  $region28: #{cnn_encoder_forward.1} parent=0 // pred_region
    _
  $region29: #{cnn_encoder_forward.1} parent=0 // pred_fallthru
    _
  // Predicated region
  $region30: #{cnn_encoder_forward.1} parent=0 // pred_check
    _
  $region31: #{cnn_encoder_forward.1} parent=0 // pred_check_branch
    %35 = sbr.rel (0) target = $region33
  $region32: #{cnn_encoder_forward.1} parent=0 // pred_region
    _
  $region33: #{cnn_encoder_forward.1} parent=0 // pred_fallthru
    _
  // Predicated region
  $region34: #{cnn_encoder_forward.1} parent=0 // pred_check
    _
  $region35: #{cnn_encoder_forward.1} parent=0 // pred_check_branch
    %37 = sbr.rel (0) target = $region37
  $region36: #{cnn_encoder_forward.1} parent=0 // pred_region
    _
  $region37: #{cnn_encoder_forward.1} parent=0 // pred_fallthru
    _
  // Predicated region
  $region38: #{cnn_encoder_forward.1} parent=0 // pred_check
    _
  $region39: #{cnn_encoder_forward.1} parent=0 // pred_check_branch
    %39 = sbr.rel (0) target = $region41
  $region40: #{cnn_encoder_forward.1} parent=0 // pred_region
    _
  $region41: #{cnn_encoder_forward.1} parent=0 // pred_fallthru
    _
  // Predicated region
  $region42: #{cnn_encoder_forward.1} parent=0 // pred_check
    _
  $region43: #{cnn_encoder_forward.1} parent=0 // pred_check_branch
    %41 = sbr.rel (0) target = $region45
  $region44: #{cnn_encoder_forward.1} parent=0 // pred_region
    _
  $region45: #{cnn_encoder_forward.1} parent=0 // pred_fallthru
    _
  // Predicated region
  $region46: #{cnn_encoder_forward.1} parent=0 // pred_check
    _
  $region47: #{cnn_encoder_forward.1} parent=0 // pred_check_branch
    %43 = sbr.rel (0) target = $region49
  $region48: #{cnn_encoder_forward.1} parent=0 // pred_region
    _
  $region49: #{cnn_encoder_forward.1} parent=0 // pred_fallthru
    _
  // Predicated region
  $region50: #{cnn_encoder_forward.1} parent=0 // pred_check
    _
  $region51: #{cnn_encoder_forward.1} parent=0 // pred_check_branch
    %45 = sbr.rel (0) target = $region53
  $region52: #{cnn_encoder_forward.1} parent=0 // pred_region
    _
  $region53: #{cnn_encoder_forward.1} parent=0 // pred_fallthru
    _
  // Predicated region
  $region54: #{cnn_encoder_forward.1} parent=0 // pred_check
    _
  $region55: #{cnn_encoder_forward.1} parent=0 // pred_check_branch
    %47 = sbr.rel (0) target = $region57
  $region56: #{cnn_encoder_forward.1} parent=0 // pred_region
    _
  $region57: #{cnn_encoder_forward.1} parent=0 // pred_fallthru
    _
  // Predicated region
  $region58: #{cnn_encoder_forward.1} parent=0 // pred_check
    _
  $region59: #{cnn_encoder_forward.1} parent=0 // pred_check_branch
    %49 = sbr.rel (0) target = $region61
  $region60: #{cnn_encoder_forward.1} parent=0 // pred_region
    loop: start=0, step=1, limit=1
    $region62: #{cnn_encoder_forward.1} parent=60 // loop_pre_header
      _
    $region63: #{cnn_encoder_forward.1} parent=60 // loop_header
      %s51 = sphi 0, %s55
      %p52 = scmp.ge.s32.totalorder %s51, 1
      %s56 = sphi %s13, %s13
      %s57 = sphi [#allocation2], [#allocation2]
    $region64: #{cnn_encoder_forward.1} parent=60 // loop_header_branch
      %54 = sbr.rel (%p52) target = $region68
    $region65: #{cnn_encoder_forward.1} parent=60 // loop_body
      %v58 = vld [vmem:[%s56] sm:$0xff]
      %59 = vst [vmem:[%s57] sm:$0xff] %v58
      %v60 = vld [vmem:[%s56 + $0x8] sm:$0xff]
      %61 = vst [vmem:[%s57 + $0x8] sm:$0xff] %v60
      %v62 = vld [vmem:[%s56 + $0x10] sm:$0xff]
      %63 = vst [vmem:[%s57 + $0x10] sm:$0xff] %v62
      %v64 = vld [vmem:[%s56 + $0x18] sm:$0xff]
      %65 = vst [vmem:[%s57 + $0x18] sm:$0xff] %v64
      %v66 = vld [vmem:[%s56 + $0x20] sm:$0xff]
      %67 = vst [vmem:[%s57 + $0x20] sm:$0xff] %v66
      %v68 = vld [vmem:[%s56 + $0x28] sm:$0xff]
      %69 = vst [vmem:[%s57 + $0x28] sm:$0xff] %v68
      %v70 = vld [vmem:[%s56 + $0x30] sm:$0xff]
      %71 = vst [vmem:[%s57 + $0x30] sm:$0xff] %v70
      %v72 = vld [vmem:[%s56 + $0x38] sm:$0xff]
      %73 = vst [vmem:[%s57 + $0x38] sm:$0xff] %v72
      %v74 = vld [vmem:[%s56 + $0x40] sm:$0xff]
      %75 = vst [vmem:[%s57 + $0x40] sm:$0xff] %v74
      %v76 = vld [vmem:[%s56 + $0x48] sm:$0xff]
      %77 = vst [vmem:[%s57 + $0x48] sm:$0xff] %v76
      %v78 = vld [vmem:[%s56 + $0x50] sm:$0xff]
      %79 = vst [vmem:[%s57 + $0x50] sm:$0xff] %v78
      %v80 = vld [vmem:[%s56 + $0x58] sm:$0xff]
      %81 = vst [vmem:[%s57 + $0x58] sm:$0xff] %v80
      %v82 = vld [vmem:[%s56 + $0x60] sm:$0xff]
      %83 = vst [vmem:[%s57 + $0x60] sm:$0xff] %v82
      %v84 = vld [vmem:[%s56 + $0x68] sm:$0xff]
      %85 = vst [vmem:[%s57 + $0x68] sm:$0xff] %v84
      %v86 = vld [vmem:[%s56 + $0x70] sm:$0xff]
      %87 = vst [vmem:[%s57 + $0x70] sm:$0xff] %v86
      %v88 = vld [vmem:[%s56 + $0x78] sm:$0xff]
      %89 = vst [vmem:[%s57 + $0x78] sm:$0xff] %v88
      %v90 = vld [vmem:[%s56 + $0x80] sm:$0xff]
      %91 = vst [vmem:[%s57 + $0x80] sm:$0xff] %v90
      %v92 = vld [vmem:[%s56 + $0x88] sm:$0xff]
      %93 = vst [vmem:[%s57 + $0x88] sm:$0xff] %v92
      %v94 = vld [vmem:[%s56 + $0x90] sm:$0xff]
      %95 = vst [vmem:[%s57 + $0x90] sm:$0xff] %v94
      %v96 = vld [vmem:[%s56 + $0x98] sm:$0xff]
      %97 = vst [vmem:[%s57 + $0x98] sm:$0xff] %v96
      %v98 = vld [vmem:[%s56 + $0xa0] sm:$0xff]
      %99 = vst [vmem:[%s57 + $0xa0] sm:$0xff] %v98
      %v100 = vld [vmem:[%s56 + $0xa8] sm:$0xff]
      %101 = vst [vmem:[%s57 + $0xa8] sm:$0xff] %v100
      %v102 = vld [vmem:[%s56 + $0xb0] sm:$0xff]
      %103 = vst [vmem:[%s57 + $0xb0] sm:$0xff] %v102
      %v104 = vld [vmem:[%s56 + $0xb8] sm:$0xff]
      %105 = vst [vmem:[%s57 + $0xb8] sm:$0xff] %v104
      %v106 = vld [vmem:[%s56 + $0xc0] sm:$0xff]
      %107 = vst [vmem:[%s57 + $0xc0] sm:$0xff] %v106
      %v108 = vld [vmem:[%s56 + $0xc8] sm:$0xff]
      %109 = vst [vmem:[%s57 + $0xc8] sm:$0xff] %v108
      %v110 = vld [vmem:[%s56 + $0xd0] sm:$0xff]
      %111 = vst [vmem:[%s57 + $0xd0] sm:$0xff] %v110
      %v112 = vld [vmem:[%s56 + $0xd8] sm:$0xff]
      %113 = vst [vmem:[%s57 + $0xd8] sm:$0xff] %v112
      %v114 = vld [vmem:[%s56 + $0xe0] sm:$0xff]
      %115 = vst [vmem:[%s57 + $0xe0] sm:$0xff] %v114
      %v116 = vld [vmem:[%s56 + $0xe8] sm:$0xff]
      %117 = vst [vmem:[%s57 + $0xe8] sm:$0xff] %v116
      %v118 = vld [vmem:[%s56 + $0xf0] sm:$0xff]
      %119 = vst [vmem:[%s57 + $0xf0] sm:$0xff] %v118
      %v120 = vld [vmem:[%s56 + $0xf8] sm:$0xff]
      %121 = vst [vmem:[%s57 + $0xf8] sm:$0xff] %v120
      %v122 = vld [vmem:[%s56 + $0x100] sm:$0xff]
      %123 = vst [vmem:[%s57 + $0x100] sm:$0xff] %v122
      %v124 = vld [vmem:[%s56 + $0x108] sm:$0xff]
      %125 = vst [vmem:[%s57 + $0x108] sm:$0xff] %v124
      %v126 = vld [vmem:[%s56 + $0x110] sm:$0xff]
      %127 = vst [vmem:[%s57 + $0x110] sm:$0xff] %v126
      %v128 = vld [vmem:[%s56 + $0x118] sm:$0xff]
      %129 = vst [vmem:[%s57 + $0x118] sm:$0xff] %v128
      %v130 = vld [vmem:[%s56 + $0x120] sm:$0xff]
      %131 = vst [vmem:[%s57 + $0x120] sm:$0xff] %v130
      %v132 = vld [vmem:[%s56 + $0x128] sm:$0xff]
      %133 = vst [vmem:[%s57 + $0x128] sm:$0xff] %v132
      %v134 = vld [vmem:[%s56 + $0x130] sm:$0xff]
      %135 = vst [vmem:[%s57 + $0x130] sm:$0xff] %v134
      %v136 = vld [vmem:[%s56 + $0x138] sm:$0xff]
      %137 = vst [vmem:[%s57 + $0x138] sm:$0xff] %v136
      %v138 = vld [vmem:[%s56 + $0x140] sm:$0xff]
      %139 = vst [vmem:[%s57 + $0x140] sm:$0xff] %v138
      %v140 = vld [vmem:[%s56 + $0x148] sm:$0xff]
      %141 = vst [vmem:[%s57 + $0x148] sm:$0xff] %v140
      %v142 = vld [vmem:[%s56 + $0x150] sm:$0xff]
      %143 = vst [vmem:[%s57 + $0x150] sm:$0xff] %v142
      %v144 = vld [vmem:[%s56 + $0x158] sm:$0xff]
      %145 = vst [vmem:[%s57 + $0x158] sm:$0xff] %v144
      %v146 = vld [vmem:[%s56 + $0x160] sm:$0xff]
      %147 = vst [vmem:[%s57 + $0x160] sm:$0xff] %v146
      %v148 = vld [vmem:[%s56 + $0x168] sm:$0xff]
      %149 = vst [vmem:[%s57 + $0x168] sm:$0xff] %v148
      %v150 = vld [vmem:[%s56 + $0x170] sm:$0xff]
      %151 = vst [vmem:[%s57 + $0x170] sm:$0xff] %v150
      %v152 = vld [vmem:[%s56 + $0x178] sm:$0xff]
      %153 = vst [vmem:[%s57 + $0x178] sm:$0xff] %v152
      %v154 = vld [vmem:[%s56 + $0x180] sm:$0xff]
      %155 = vst [vmem:[%s57 + $0x180] sm:$0xff] %v154
      %v156 = vld [vmem:[%s56 + $0x188] sm:$0xff]
      %157 = vst [vmem:[%s57 + $0x188] sm:$0xff] %v156
      %v158 = vld [vmem:[%s56 + $0x190] sm:$0xff]
      %159 = vst [vmem:[%s57 + $0x190] sm:$0xff] %v158
      %v160 = vld [vmem:[%s56 + $0x198] sm:$0xff]
      %161 = vst [vmem:[%s57 + $0x198] sm:$0xff] %v160
      %v162 = vld [vmem:[%s56 + $0x1a0] sm:$0xff]
      %163 = vst [vmem:[%s57 + $0x1a0] sm:$0xff] %v162
      %v164 = vld [vmem:[%s56 + $0x1a8] sm:$0xff]
      %165 = vst [vmem:[%s57 + $0x1a8] sm:$0xff] %v164
      %v166 = vld [vmem:[%s56 + $0x1b0] sm:$0xff]
      %167 = vst [vmem:[%s57 + $0x1b0] sm:$0xff] %v166
      %v168 = vld [vmem:[%s56 + $0x1b8] sm:$0xff]
      %169 = vst [vmem:[%s57 + $0x1b8] sm:$0xff] %v168
      %v170 = vld [vmem:[%s56 + $0x1c0] sm:$0xff]
      %171 = vst [vmem:[%s57 + $0x1c0] sm:$0xff] %v170
      %v172 = vld [vmem:[%s56 + $0x1c8] sm:$0xff]
      %173 = vst [vmem:[%s57 + $0x1c8] sm:$0xff] %v172
      %v174 = vld [vmem:[%s56 + $0x1d0] sm:$0xff]
      %175 = vst [vmem:[%s57 + $0x1d0] sm:$0xff] %v174
      %v176 = vld [vmem:[%s56 + $0x1d8] sm:$0xff]
      %177 = vst [vmem:[%s57 + $0x1d8] sm:$0xff] %v176
      %v178 = vld [vmem:[%s56 + $0x1e0] sm:$0xff]
      %179 = vst [vmem:[%s57 + $0x1e0] sm:$0xff] %v178
      %v180 = vld [vmem:[%s56 + $0x1e8] sm:$0xff]
      %181 = vst [vmem:[%s57 + $0x1e8] sm:$0xff] %v180
      %v182 = vld [vmem:[%s56 + $0x1f0] sm:$0xff]
      %183 = vst [vmem:[%s57 + $0x1f0] sm:$0xff] %v182
      %v184 = vld [vmem:[%s56 + $0x1f8] sm:$0xff]
      %185 = vst [vmem:[%s57 + $0x1f8] sm:$0xff] %v184
      %v186 = vld [vmem:[%s56 + $0x200] sm:$0xff]
      %187 = vst [vmem:[%s57 + $0x200] sm:$0xff] %v186
      %v188 = vld [vmem:[%s56 + $0x208] sm:$0xff]
      %189 = vst [vmem:[%s57 + $0x208] sm:$0xff] %v188
      %v190 = vld [vmem:[%s56 + $0x210] sm:$0xff]
      %191 = vst [vmem:[%s57 + $0x210] sm:$0xff] %v190
      %v192 = vld [vmem:[%s56 + $0x218] sm:$0xff]
      %193 = vst [vmem:[%s57 + $0x218] sm:$0xff] %v192
      %v194 = vld [vmem:[%s56 + $0x220] sm:$0xff]
      %195 = vst [vmem:[%s57 + $0x220] sm:$0xff] %v194
      %v196 = vld [vmem:[%s56 + $0x228] sm:$0xff]
      %197 = vst [vmem:[%s57 + $0x228] sm:$0xff] %v196
      %v198 = vld [vmem:[%s56 + $0x230] sm:$0xff]
      %199 = vst [vmem:[%s57 + $0x230] sm:$0xff] %v198
      %v200 = vld [vmem:[%s56 + $0x238] sm:$0xff]
      %201 = vst [vmem:[%s57 + $0x238] sm:$0xff] %v200
      %v202 = vld [vmem:[%s56 + $0x240] sm:$0xff]
      %203 = vst [vmem:[%s57 + $0x240] sm:$0xff] %v202
      %v204 = vld [vmem:[%s56 + $0x248] sm:$0xff]
      %205 = vst [vmem:[%s57 + $0x248] sm:$0xff] %v204
      %v206 = vld [vmem:[%s56 + $0x250] sm:$0xff]
      %207 = vst [vmem:[%s57 + $0x250] sm:$0xff] %v206
      %v208 = vld [vmem:[%s56 + $0x258] sm:$0xff]
      %209 = vst [vmem:[%s57 + $0x258] sm:$0xff] %v208
      %v210 = vld [vmem:[%s56 + $0x260] sm:$0xff]
      %211 = vst [vmem:[%s57 + $0x260] sm:$0xff] %v210
      %v212 = vld [vmem:[%s56 + $0x268] sm:$0xff]
      %213 = vst [vmem:[%s57 + $0x268] sm:$0xff] %v212
      %v214 = vld [vmem:[%s56 + $0x270] sm:$0xff]
      %215 = vst [vmem:[%s57 + $0x270] sm:$0xff] %v214
      %v216 = vld [vmem:[%s56 + $0x278] sm:$0xff]
      %217 = vst [vmem:[%s57 + $0x278] sm:$0xff] %v216
      %v218 = vld [vmem:[%s56 + $0x280] sm:$0xff]
      %219 = vst [vmem:[%s57 + $0x280] sm:$0xff] %v218
      %v220 = vld [vmem:[%s56 + $0x288] sm:$0xff]
      %221 = vst [vmem:[%s57 + $0x288] sm:$0xff] %v220
      %v222 = vld [vmem:[%s56 + $0x290] sm:$0xff]
      %223 = vst [vmem:[%s57 + $0x290] sm:$0xff] %v222
      %v224 = vld [vmem:[%s56 + $0x298] sm:$0xff]
      %225 = vst [vmem:[%s57 + $0x298] sm:$0xff] %v224
      %v226 = vld [vmem:[%s56 + $0x2a0] sm:$0xff]
      %227 = vst [vmem:[%s57 + $0x2a0] sm:$0xff] %v226
      %v228 = vld [vmem:[%s56 + $0x2a8] sm:$0xff]
      %229 = vst [vmem:[%s57 + $0x2a8] sm:$0xff] %v228
      %v230 = vld [vmem:[%s56 + $0x2b0] sm:$0xff]
      %231 = vst [vmem:[%s57 + $0x2b0] sm:$0xff] %v230
      %v232 = vld [vmem:[%s56 + $0x2b8] sm:$0xff]
      %233 = vst [vmem:[%s57 + $0x2b8] sm:$0xff] %v232
      %v234 = vld [vmem:[%s56 + $0x2c0] sm:$0xff]
      %235 = vst [vmem:[%s57 + $0x2c0] sm:$0xff] %v234
      %v236 = vld [vmem:[%s56 + $0x2c8] sm:$0xff]
      %237 = vst [vmem:[%s57 + $0x2c8] sm:$0xff] %v236
      %v238 = vld [vmem:[%s56 + $0x2d0] sm:$0xff]
      %239 = vst [vmem:[%s57 + $0x2d0] sm:$0xff] %v238
      %v240 = vld [vmem:[%s56 + $0x2d8] sm:$0xff]
      %241 = vst [vmem:[%s57 + $0x2d8] sm:$0xff] %v240
      %v242 = vld [vmem:[%s56 + $0x2e0] sm:$0xff]
      %243 = vst [vmem:[%s57 + $0x2e0] sm:$0xff] %v242
      %v244 = vld [vmem:[%s56 + $0x2e8] sm:$0xff]
      %245 = vst [vmem:[%s57 + $0x2e8] sm:$0xff] %v244
      %v246 = vld [vmem:[%s56 + $0x2f0] sm:$0xff]
      %247 = vst [vmem:[%s57 + $0x2f0] sm:$0xff] %v246
      %v248 = vld [vmem:[%s56 + $0x2f8] sm:$0xff]
      %249 = vst [vmem:[%s57 + $0x2f8] sm:$0xff] %v248
      %v250 = vld [vmem:[%s56 + $0x300] sm:$0xff]
      %251 = vst [vmem:[%s57 + $0x300] sm:$0xff] %v250
      %v252 = vld [vmem:[%s56 + $0x308] sm:$0xff]
      %253 = vst [vmem:[%s57 + $0x308] sm:$0xff] %v252
      %v254 = vld [vmem:[%s56 + $0x310] sm:$0xff]
      %255 = vst [vmem:[%s57 + $0x310] sm:$0xff] %v254
      %v256 = vld [vmem:[%s56 + $0x318] sm:$0xff]
      %257 = vst [vmem:[%s57 + $0x318] sm:$0xff] %v256
      %v258 = vld [vmem:[%s56 + $0x320] sm:$0xff]
      %259 = vst [vmem:[%s57 + $0x320] sm:$0xff] %v258
      %v260 = vld [vmem:[%s56 + $0x328] sm:$0xff]
      %261 = vst [vmem:[%s57 + $0x328] sm:$0xff] %v260
      %v262 = vld [vmem:[%s56 + $0x330] sm:$0xff]
      %263 = vst [vmem:[%s57 + $0x330] sm:$0xff] %v262
      %v264 = vld [vmem:[%s56 + $0x338] sm:$0xff]
      %265 = vst [vmem:[%s57 + $0x338] sm:$0xff] %v264
      %v266 = vld [vmem:[%s56 + $0x340] sm:$0xff]
      %267 = vst [vmem:[%s57 + $0x340] sm:$0xff] %v266
      %v268 = vld [vmem:[%s56 + $0x348] sm:$0xff]
      %269 = vst [vmem:[%s57 + $0x348] sm:$0xff] %v268
      %v270 = vld [vmem:[%s56 + $0x350] sm:$0xff]
      %271 = vst [vmem:[%s57 + $0x350] sm:$0xff] %v270
      %v272 = vld [vmem:[%s56 + $0x358] sm:$0xff]
      %273 = vst [vmem:[%s57 + $0x358] sm:$0xff] %v272
      %v274 = vld [vmem:[%s56 + $0x360] sm:$0xff]
      %275 = vst [vmem:[%s57 + $0x360] sm:$0xff] %v274
      %v276 = vld [vmem:[%s56 + $0x368] sm:$0xff]
      %277 = vst [vmem:[%s57 + $0x368] sm:$0xff] %v276
      %v278 = vld [vmem:[%s56 + $0x370] sm:$0xff]
      %279 = vst [vmem:[%s57 + $0x370] sm:$0xff] %v278
      %v280 = vld [vmem:[%s56 + $0x378] sm:$0xff]
      %281 = vst [vmem:[%s57 + $0x378] sm:$0xff] %v280
      %v282 = vld [vmem:[%s56 + $0x380] sm:$0xff]
      %283 = vst [vmem:[%s57 + $0x380] sm:$0xff] %v282
      %v284 = vld [vmem:[%s56 + $0x388] sm:$0xff]
      %285 = vst [vmem:[%s57 + $0x388] sm:$0xff] %v284
      %v286 = vld [vmem:[%s56 + $0x390] sm:$0xff]
      %287 = vst [vmem:[%s57 + $0x390] sm:$0xff] %v286
      %v288 = vld [vmem:[%s56 + $0x398] sm:$0xff]
      %289 = vst [vmem:[%s57 + $0x398] sm:$0xff] %v288
      %v290 = vld [vmem:[%s56 + $0x3a0] sm:$0xff]
      %291 = vst [vmem:[%s57 + $0x3a0] sm:$0xff] %v290
      %v292 = vld [vmem:[%s56 + $0x3a8] sm:$0xff]
      %293 = vst [vmem:[%s57 + $0x3a8] sm:$0xff] %v292
      %v294 = vld [vmem:[%s56 + $0x3b0] sm:$0xff]
      %295 = vst [vmem:[%s57 + $0x3b0] sm:$0xff] %v294
      %v296 = vld [vmem:[%s56 + $0x3b8] sm:$0xff]
      %297 = vst [vmem:[%s57 + $0x3b8] sm:$0xff] %v296
      %v298 = vld [vmem:[%s56 + $0x3c0] sm:$0xff]
      %299 = vst [vmem:[%s57 + $0x3c0] sm:$0xff] %v298
      %v300 = vld [vmem:[%s56 + $0x3c8] sm:$0xff]
      %301 = vst [vmem:[%s57 + $0x3c8] sm:$0xff] %v300
      %v302 = vld [vmem:[%s56 + $0x3d0] sm:$0xff]
      %303 = vst [vmem:[%s57 + $0x3d0] sm:$0xff] %v302
      %v304 = vld [vmem:[%s56 + $0x3d8] sm:$0xff]
      %305 = vst [vmem:[%s57 + $0x3d8] sm:$0xff] %v304
      %v306 = vld [vmem:[%s56 + $0x3e0] sm:$0xff]
      %307 = vst [vmem:[%s57 + $0x3e0] sm:$0xff] %v306
      %v308 = vld [vmem:[%s56 + $0x3e8] sm:$0xff]
      %309 = vst [vmem:[%s57 + $0x3e8] sm:$0xff] %v308
      %v310 = vld [vmem:[%s56 + $0x3f0] sm:$0xff]
      %311 = vst [vmem:[%s57 + $0x3f0] sm:$0xff] %v310
      %v312 = vld [vmem:[%s56 + $0x3f8] sm:$0xff]
      %313 = vst [vmem:[%s57 + $0x3f8] sm:$0xff] %v312
      %v314 = vld [vmem:[%s56 + $0x400] sm:$0xff]
      %315 = vst [vmem:[%s57 + $0x400] sm:$0xff] %v314
      %v316 = vld [vmem:[%s56 + $0x408] sm:$0xff]
      %317 = vst [vmem:[%s57 + $0x408] sm:$0xff] %v316
      %v318 = vld [vmem:[%s56 + $0x410] sm:$0xff]
      %319 = vst [vmem:[%s57 + $0x410] sm:$0xff] %v318
      %v320 = vld [vmem:[%s56 + $0x418] sm:$0xff]
      %321 = vst [vmem:[%s57 + $0x418] sm:$0xff] %v320
      %v322 = vld [vmem:[%s56 + $0x420] sm:$0xff]
      %323 = vst [vmem:[%s57 + $0x420] sm:$0xff] %v322
      %v324 = vld [vmem:[%s56 + $0x428] sm:$0xff]
      %325 = vst [vmem:[%s57 + $0x428] sm:$0xff] %v324
      %v326 = vld [vmem:[%s56 + $0x430] sm:$0xff]
      %327 = vst [vmem:[%s57 + $0x430] sm:$0xff] %v326
      %v328 = vld [vmem:[%s56 + $0x438] sm:$0xff]
      %329 = vst [vmem:[%s57 + $0x438] sm:$0xff] %v328
      %v330 = vld [vmem:[%s56 + $0x440] sm:$0xff]
      %331 = vst [vmem:[%s57 + $0x440] sm:$0xff] %v330
      %v332 = vld [vmem:[%s56 + $0x448] sm:$0xff]
      %333 = vst [vmem:[%s57 + $0x448] sm:$0xff] %v332
      %v334 = vld [vmem:[%s56 + $0x450] sm:$0xff]
      %335 = vst [vmem:[%s57 + $0x450] sm:$0xff] %v334
      %v336 = vld [vmem:[%s56 + $0x458] sm:$0xff]
      %337 = vst [vmem:[%s57 + $0x458] sm:$0xff] %v336
      %v338 = vld [vmem:[%s56 + $0x460] sm:$0xff]
      %339 = vst [vmem:[%s57 + $0x460] sm:$0xff] %v338
      %v340 = vld [vmem:[%s56 + $0x468] sm:$0xff]
      %341 = vst [vmem:[%s57 + $0x468] sm:$0xff] %v340
      %v342 = vld [vmem:[%s56 + $0x470] sm:$0xff]
      %343 = vst [vmem:[%s57 + $0x470] sm:$0xff] %v342
      %v344 = vld [vmem:[%s56 + $0x478] sm:$0xff]
      %345 = vst [vmem:[%s57 + $0x478] sm:$0xff] %v344
      %v346 = vld [vmem:[%s56 + $0x480] sm:$0xff]
      %347 = vst [vmem:[%s57 + $0x480] sm:$0xff] %v346
      %v348 = vld [vmem:[%s56 + $0x488] sm:$0xff]
      %349 = vst [vmem:[%s57 + $0x488] sm:$0xff] %v348
      %v350 = vld [vmem:[%s56 + $0x490] sm:$0xff]
      %351 = vst [vmem:[%s57 + $0x490] sm:$0xff] %v350
      %v352 = vld [vmem:[%s56 + $0x498] sm:$0xff]
      %353 = vst [vmem:[%s57 + $0x498] sm:$0xff] %v352
      %v354 = vld [vmem:[%s56 + $0x4a0] sm:$0xff]
      %355 = vst [vmem:[%s57 + $0x4a0] sm:$0xff] %v354
      %v356 = vld [vmem:[%s56 + $0x4a8] sm:$0xff]
      %357 = vst [vmem:[%s57 + $0x4a8] sm:$0xff] %v356
      %v358 = vld [vmem:[%s56 + $0x4b0] sm:$0xff]
      %359 = vst [vmem:[%s57 + $0x4b0] sm:$0xff] %v358
      %v360 = vld [vmem:[%s56 + $0x4b8] sm:$0xff]
      %361 = vst [vmem:[%s57 + $0x4b8] sm:$0xff] %v360
      %v362 = vld [vmem:[%s56 + $0x4c0] sm:$0xff]
      %363 = vst [vmem:[%s57 + $0x4c0] sm:$0xff] %v362
      %v364 = vld [vmem:[%s56 + $0x4c8] sm:$0xff]
      %365 = vst [vmem:[%s57 + $0x4c8] sm:$0xff] %v364
      %v366 = vld [vmem:[%s56 + $0x4d0] sm:$0xff]
      %367 = vst [vmem:[%s57 + $0x4d0] sm:$0xff] %v366
      %v368 = vld [vmem:[%s56 + $0x4d8] sm:$0xff]
      %369 = vst [vmem:[%s57 + $0x4d8] sm:$0xff] %v368
      %v370 = vld [vmem:[%s56 + $0x4e0] sm:$0xff]
      %371 = vst [vmem:[%s57 + $0x4e0] sm:$0xff] %v370
      %v372 = vld [vmem:[%s56 + $0x4e8] sm:$0xff]
      %373 = vst [vmem:[%s57 + $0x4e8] sm:$0xff] %v372
      %v374 = vld [vmem:[%s56 + $0x4f0] sm:$0xff]
      %375 = vst [vmem:[%s57 + $0x4f0] sm:$0xff] %v374
      %v376 = vld [vmem:[%s56 + $0x4f8] sm:$0xff]
      %377 = vst [vmem:[%s57 + $0x4f8] sm:$0xff] %v376
      %v378 = vld [vmem:[%s56 + $0x500] sm:$0xff]
      %379 = vst [vmem:[%s57 + $0x500] sm:$0xff] %v378
      %v380 = vld [vmem:[%s56 + $0x508] sm:$0xff]
      %381 = vst [vmem:[%s57 + $0x508] sm:$0xff] %v380
      %v382 = vld [vmem:[%s56 + $0x510] sm:$0xff]
      %383 = vst [vmem:[%s57 + $0x510] sm:$0xff] %v382
      %v384 = vld [vmem:[%s56 + $0x518] sm:$0xff]
      %385 = vst [vmem:[%s57 + $0x518] sm:$0xff] %v384
      %v386 = vld [vmem:[%s56 + $0x520] sm:$0xff]
      %387 = vst [vmem:[%s57 + $0x520] sm:$0xff] %v386
      %v388 = vld [vmem:[%s56 + $0x528] sm:$0xff]
      %389 = vst [vmem:[%s57 + $0x528] sm:$0xff] %v388
      %v390 = vld [vmem:[%s56 + $0x530] sm:$0xff]
      %391 = vst [vmem:[%s57 + $0x530] sm:$0xff] %v390
      %v392 = vld [vmem:[%s56 + $0x538] sm:$0xff]
      %393 = vst [vmem:[%s57 + $0x538] sm:$0xff] %v392
      %v394 = vld [vmem:[%s56 + $0x540] sm:$0xff]
      %395 = vst [vmem:[%s57 + $0x540] sm:$0xff] %v394
      %v396 = vld [vmem:[%s56 + $0x548] sm:$0xff]
      %397 = vst [vmem:[%s57 + $0x548] sm:$0xff] %v396
      %v398 = vld [vmem:[%s56 + $0x550] sm:$0xff]
      %399 = vst [vmem:[%s57 + $0x550] sm:$0xff] %v398
      %v400 = vld [vmem:[%s56 + $0x558] sm:$0xff]
      %401 = vst [vmem:[%s57 + $0x558] sm:$0xff] %v400
      %v402 = vld [vmem:[%s56 + $0x560] sm:$0xff]
      %403 = vst [vmem:[%s57 + $0x560] sm:$0xff] %v402
      %v404 = vld [vmem:[%s56 + $0x568] sm:$0xff]
      %405 = vst [vmem:[%s57 + $0x568] sm:$0xff] %v404
      %v406 = vld [vmem:[%s56 + $0x570] sm:$0xff]
      %407 = vst [vmem:[%s57 + $0x570] sm:$0xff] %v406
      %v408 = vld [vmem:[%s56 + $0x578] sm:$0xff]
      %409 = vst [vmem:[%s57 + $0x578] sm:$0xff] %v408
      %v410 = vld [vmem:[%s56 + $0x580] sm:$0xff]
      %411 = vst [vmem:[%s57 + $0x580] sm:$0xff] %v410
      %v412 = vld [vmem:[%s56 + $0x588] sm:$0xff]
      %413 = vst [vmem:[%s57 + $0x588] sm:$0xff] %v412
      %v414 = vld [vmem:[%s56 + $0x590] sm:$0xff]
      %415 = vst [vmem:[%s57 + $0x590] sm:$0xff] %v414
      %v416 = vld [vmem:[%s56 + $0x598] sm:$0xff]
      %417 = vst [vmem:[%s57 + $0x598] sm:$0xff] %v416
      %v418 = vld [vmem:[%s56 + $0x5a0] sm:$0xff]
      %419 = vst [vmem:[%s57 + $0x5a0] sm:$0xff] %v418
      %v420 = vld [vmem:[%s56 + $0x5a8] sm:$0xff]
      %421 = vst [vmem:[%s57 + $0x5a8] sm:$0xff] %v420
      %v422 = vld [vmem:[%s56 + $0x5b0] sm:$0xff]
      %423 = vst [vmem:[%s57 + $0x5b0] sm:$0xff] %v422
      %v424 = vld [vmem:[%s56 + $0x5b8] sm:$0xff]
      %425 = vst [vmem:[%s57 + $0x5b8] sm:$0xff] %v424
      %v426 = vld [vmem:[%s56 + $0x5c0] sm:$0xff]
      %427 = vst [vmem:[%s57 + $0x5c0] sm:$0xff] %v426
      %v428 = vld [vmem:[%s56 + $0x5c8] sm:$0xff]
      %429 = vst [vmem:[%s57 + $0x5c8] sm:$0xff] %v428
      %v430 = vld [vmem:[%s56 + $0x5d0] sm:$0xff]
      %431 = vst [vmem:[%s57 + $0x5d0] sm:$0xff] %v430
      %v432 = vld [vmem:[%s56 + $0x5d8] sm:$0xff]
      %433 = vst [vmem:[%s57 + $0x5d8] sm:$0xff] %v432
      %v434 = vld [vmem:[%s56 + $0x5e0] sm:$0xff]
      %435 = vst [vmem:[%s57 + $0x5e0] sm:$0xff] %v434
      %v436 = vld [vmem:[%s56 + $0x5e8] sm:$0xff]
      %437 = vst [vmem:[%s57 + $0x5e8] sm:$0xff] %v436
      %v438 = vld [vmem:[%s56 + $0x5f0] sm:$0xff]
      %439 = vst [vmem:[%s57 + $0x5f0] sm:$0xff] %v438
      %v440 = vld [vmem:[%s56 + $0x5f8] sm:$0xff]
      %441 = vst [vmem:[%s57 + $0x5f8] sm:$0xff] %v440
      %v442 = vld [vmem:[%s56 + $0x600] sm:$0xff]
      %443 = vst [vmem:[%s57 + $0x600] sm:$0xff] %v442
      %v444 = vld [vmem:[%s56 + $0x608] sm:$0xff]
      %445 = vst [vmem:[%s57 + $0x608] sm:$0xff] %v444
      %v446 = vld [vmem:[%s56 + $0x610] sm:$0xff]
      %447 = vst [vmem:[%s57 + $0x610] sm:$0xff] %v446
      %v448 = vld [vmem:[%s56 + $0x618] sm:$0xff]
      %449 = vst [vmem:[%s57 + $0x618] sm:$0xff] %v448
      %v450 = vld [vmem:[%s56 + $0x620] sm:$0xff]
      %451 = vst [vmem:[%s57 + $0x620] sm:$0xff] %v450
      %v452 = vld [vmem:[%s56 + $0x628] sm:$0xff]
      %453 = vst [vmem:[%s57 + $0x628] sm:$0xff] %v452
      %v454 = vld [vmem:[%s56 + $0x630] sm:$0xff]
      %455 = vst [vmem:[%s57 + $0x630] sm:$0xff] %v454
      %v456 = vld [vmem:[%s56 + $0x638] sm:$0xff]
      %457 = vst [vmem:[%s57 + $0x638] sm:$0xff] %v456
      %v458 = vld [vmem:[%s56 + $0x640] sm:$0xff]
      %459 = vst [vmem:[%s57 + $0x640] sm:$0xff] %v458
      %v460 = vld [vmem:[%s56 + $0x648] sm:$0xff]
      %461 = vst [vmem:[%s57 + $0x648] sm:$0xff] %v460
      %v462 = vld [vmem:[%s56 + $0x650] sm:$0xff]
      %463 = vst [vmem:[%s57 + $0x650] sm:$0xff] %v462
      %v464 = vld [vmem:[%s56 + $0x658] sm:$0xff]
      %465 = vst [vmem:[%s57 + $0x658] sm:$0xff] %v464
      %v466 = vld [vmem:[%s56 + $0x660] sm:$0xff]
      %467 = vst [vmem:[%s57 + $0x660] sm:$0xff] %v466
      %v468 = vld [vmem:[%s56 + $0x668] sm:$0xff]
      %469 = vst [vmem:[%s57 + $0x668] sm:$0xff] %v468
      %v470 = vld [vmem:[%s56 + $0x670] sm:$0xff]
      %471 = vst [vmem:[%s57 + $0x670] sm:$0xff] %v470
      %v472 = vld [vmem:[%s56 + $0x678] sm:$0xff]
      %473 = vst [vmem:[%s57 + $0x678] sm:$0xff] %v472
      %v474 = vld [vmem:[%s56 + $0x680] sm:$0xff]
      %475 = vst [vmem:[%s57 + $0x680] sm:$0xff] %v474
      %v476 = vld [vmem:[%s56 + $0x688] sm:$0xff]
      %477 = vst [vmem:[%s57 + $0x688] sm:$0xff] %v476
      %v478 = vld [vmem:[%s56 + $0x690] sm:$0xff]
      %479 = vst [vmem:[%s57 + $0x690] sm:$0xff] %v478
      %v480 = vld [vmem:[%s56 + $0x698] sm:$0xff]
      %481 = vst [vmem:[%s57 + $0x698] sm:$0xff] %v480
      %v482 = vld [vmem:[%s56 + $0x6a0] sm:$0xff]
      %483 = vst [vmem:[%s57 + $0x6a0] sm:$0xff] %v482
      %v484 = vld [vmem:[%s56 + $0x6a8] sm:$0xff]
      %485 = vst [vmem:[%s57 + $0x6a8] sm:$0xff] %v484
      %v486 = vld [vmem:[%s56 + $0x6b0] sm:$0xff]
      %487 = vst [vmem:[%s57 + $0x6b0] sm:$0xff] %v486
      %v488 = vld [vmem:[%s56 + $0x6b8] sm:$0xff]
      %489 = vst [vmem:[%s57 + $0x6b8] sm:$0xff] %v488
      %v490 = vld [vmem:[%s56 + $0x6c0] sm:$0xff]
      %491 = vst [vmem:[%s57 + $0x6c0] sm:$0xff] %v490
      %v492 = vld [vmem:[%s56 + $0x6c8] sm:$0xff]
      %493 = vst [vmem:[%s57 + $0x6c8] sm:$0xff] %v492
      %v494 = vld [vmem:[%s56 + $0x6d0] sm:$0xff]
      %495 = vst [vmem:[%s57 + $0x6d0] sm:$0xff] %v494
      %v496 = vld [vmem:[%s56 + $0x6d8] sm:$0xff]
      %497 = vst [vmem:[%s57 + $0x6d8] sm:$0xff] %v496
      %v498 = vld [vmem:[%s56 + $0x6e0] sm:$0xff]
      %499 = vst [vmem:[%s57 + $0x6e0] sm:$0xff] %v498
      %v500 = vld [vmem:[%s56 + $0x6e8] sm:$0xff]
      %501 = vst [vmem:[%s57 + $0x6e8] sm:$0xff] %v500
      %v502 = vld [vmem:[%s56 + $0x6f0] sm:$0xff]
      %503 = vst [vmem:[%s57 + $0x6f0] sm:$0xff] %v502
      %v504 = vld [vmem:[%s56 + $0x6f8] sm:$0xff]
      %505 = vst [vmem:[%s57 + $0x6f8] sm:$0xff] %v504
      %v506 = vld [vmem:[%s56 + $0x700] sm:$0xff]
      %507 = vst [vmem:[%s57 + $0x700] sm:$0xff] %v506
      %v508 = vld [vmem:[%s56 + $0x708] sm:$0xff]
      %509 = vst [vmem:[%s57 + $0x708] sm:$0xff] %v508
      %v510 = vld [vmem:[%s56 + $0x710] sm:$0xff]
      %511 = vst [vmem:[%s57 + $0x710] sm:$0xff] %v510
      %v512 = vld [vmem:[%s56 + $0x718] sm:$0xff]
      %513 = vst [vmem:[%s57 + $0x718] sm:$0xff] %v512
      %v514 = vld [vmem:[%s56 + $0x720] sm:$0xff]
      %515 = vst [vmem:[%s57 + $0x720] sm:$0xff] %v514
      %v516 = vld [vmem:[%s56 + $0x728] sm:$0xff]
      %517 = vst [vmem:[%s57 + $0x728] sm:$0xff] %v516
      %v518 = vld [vmem:[%s56 + $0x730] sm:$0xff]
      %519 = vst [vmem:[%s57 + $0x730] sm:$0xff] %v518
      %v520 = vld [vmem:[%s56 + $0x738] sm:$0xff]
      %521 = vst [vmem:[%s57 + $0x738] sm:$0xff] %v520
      %v522 = vld [vmem:[%s56 + $0x740] sm:$0xff]
      %523 = vst [vmem:[%s57 + $0x740] sm:$0xff] %v522
      %v524 = vld [vmem:[%s56 + $0x748] sm:$0xff]
      %525 = vst [vmem:[%s57 + $0x748] sm:$0xff] %v524
      %v526 = vld [vmem:[%s56 + $0x750] sm:$0xff]
      %527 = vst [vmem:[%s57 + $0x750] sm:$0xff] %v526
      %v528 = vld [vmem:[%s56 + $0x758] sm:$0xff]
      %529 = vst [vmem:[%s57 + $0x758] sm:$0xff] %v528
      %v530 = vld [vmem:[%s56 + $0x760] sm:$0xff]
      %531 = vst [vmem:[%s57 + $0x760] sm:$0xff] %v530
      %v532 = vld [vmem:[%s56 + $0x768] sm:$0xff]
      %533 = vst [vmem:[%s57 + $0x768] sm:$0xff] %v532
      %v534 = vld [vmem:[%s56 + $0x770] sm:$0xff]
      %535 = vst [vmem:[%s57 + $0x770] sm:$0xff] %v534
      %v536 = vld [vmem:[%s56 + $0x778] sm:$0xff]
      %537 = vst [vmem:[%s57 + $0x778] sm:$0xff] %v536
      %v538 = vld [vmem:[%s56 + $0x780] sm:$0xff]
      %539 = vst [vmem:[%s57 + $0x780] sm:$0xff] %v538
      %v540 = vld [vmem:[%s56 + $0x788] sm:$0xff]
      %541 = vst [vmem:[%s57 + $0x788] sm:$0xff] %v540
      %v542 = vld [vmem:[%s56 + $0x790] sm:$0xff]
      %543 = vst [vmem:[%s57 + $0x790] sm:$0xff] %v542
      %v544 = vld [vmem:[%s56 + $0x798] sm:$0xff]
      %545 = vst [vmem:[%s57 + $0x798] sm:$0xff] %v544
      %v546 = vld [vmem:[%s56 + $0x7a0] sm:$0xff]
      %547 = vst [vmem:[%s57 + $0x7a0] sm:$0xff] %v546
      %v548 = vld [vmem:[%s56 + $0x7a8] sm:$0xff]
      %549 = vst [vmem:[%s57 + $0x7a8] sm:$0xff] %v548
      %v550 = vld [vmem:[%s56 + $0x7b0] sm:$0xff]
      %551 = vst [vmem:[%s57 + $0x7b0] sm:$0xff] %v550
      %v552 = vld [vmem:[%s56 + $0x7b8] sm:$0xff]
      %553 = vst [vmem:[%s57 + $0x7b8] sm:$0xff] %v552
      %v554 = vld [vmem:[%s56 + $0x7c0] sm:$0xff]
      %555 = vst [vmem:[%s57 + $0x7c0] sm:$0xff] %v554
      %v556 = vld [vmem:[%s56 + $0x7c8] sm:$0xff]
      %557 = vst [vmem:[%s57 + $0x7c8] sm:$0xff] %v556
      %v558 = vld [vmem:[%s56 + $0x7d0] sm:$0xff]
      %559 = vst [vmem:[%s57 + $0x7d0] sm:$0xff] %v558
      %v560 = vld [vmem:[%s56 + $0x7d8] sm:$0xff]
      %561 = vst [vmem:[%s57 + $0x7d8] sm:$0xff] %v560
      %v562 = vld [vmem:[%s56 + $0x7e0] sm:$0xff]
      %563 = vst [vmem:[%s57 + $0x7e0] sm:$0xff] %v562
      %v564 = vld [vmem:[%s56 + $0x7e8] sm:$0xff]
      %565 = vst [vmem:[%s57 + $0x7e8] sm:$0xff] %v564
      %v566 = vld [vmem:[%s56 + $0x7f0] sm:$0xff]
      %567 = vst [vmem:[%s57 + $0x7f0] sm:$0xff] %v566
      %v568 = vld [vmem:[%s56 + $0x7f8] sm:$0xff]
      %569 = vst [vmem:[%s57 + $0x7f8] sm:$0xff] %v568
    $region66: #{cnn_encoder_forward.1} parent=60 // loop_footer
      %s55 = sadd.s32 1, %s51
    $region67: #{cnn_encoder_forward.1} parent=60 // loop_footer_branch
      %50 = sbr.rel target = $region63
    $region68: #{cnn_encoder_forward.1} parent=60 // loop_exit
      _
  $region61: #{cnn_encoder_forward.1} parent=0 // pred_fallthru
    _
  // Predicated region
  $region69: #{cnn_encoder_forward.1} parent=0 // pred_check
    _
  $region70: #{cnn_encoder_forward.1} parent=0 // pred_check_branch
    %571 = sbr.rel target = $region72
  $region71: #{cnn_encoder_forward.1} parent=0 // pred_region
    _
  $region72: #{cnn_encoder_forward.1} parent=0 // pred_fallthru
    _
  // Predicated region
  $region73: #{cnn_encoder_forward.1} parent=0 // pred_check
    _
  $region74: #{cnn_encoder_forward.1} parent=0 // pred_check_branch
    %574 = sbr.rel (0) target = $region76
  $region75: #{cnn_encoder_forward.1} parent=0 // pred_region
    %575 = vsyncadd [#allocation3], 32768
  $region76: #{cnn_encoder_forward.1} parent=0 // pred_fallthru
    _
  %s576 = scalar_lea.vmem %s13, 2048
  %s577 = scalar_lea.vmem [#allocation2], 2048
  %s578 = scalar_lea.sflag [#allocation3], 1
  // Predicated region
  $region77: #{cnn_encoder_forward.1} parent=0 // pred_check
    _
  $region78: #{cnn_encoder_forward.1} parent=0 // pred_check_branch
    %580 = sbr.rel (0) target = $region80
  $region79: #{cnn_encoder_forward.1} parent=0 // pred_region
    loop: start=0, step=1, limit=1
    $region81: #{cnn_encoder_forward.1} parent=79 // loop_pre_header
      _
    $region82: #{cnn_encoder_forward.1} parent=79 // loop_header
      %s582 = sphi 0, %s586
      %p583 = scmp.ge.s32.totalorder %s582, 1
      %s587 = sphi %s576, %s576
      %s588 = sphi %s577, %s577
    $region83: #{cnn_encoder_forward.1} parent=79 // loop_header_branch
      %585 = sbr.rel (%p583) target = $region87
    $region84: #{cnn_encoder_forward.1} parent=79 // loop_body
      %v589 = vld [vmem:[%s587] sm:$0xff]
      %590 = vst [vmem:[%s588] sm:$0xff] %v589
      %v591 = vld [vmem:[%s587 + $0x8] sm:$0xff]
      %592 = vst [vmem:[%s588 + $0x8] sm:$0xff] %v591
      %v593 = vld [vmem:[%s587 + $0x10] sm:$0xff]
      %594 = vst [vmem:[%s588 + $0x10] sm:$0xff] %v593
      %v595 = vld [vmem:[%s587 + $0x18] sm:$0xff]
      %596 = vst [vmem:[%s588 + $0x18] sm:$0xff] %v595
      %v597 = vld [vmem:[%s587 + $0x20] sm:$0xff]
      %598 = vst [vmem:[%s588 + $0x20] sm:$0xff] %v597
      %v599 = vld [vmem:[%s587 + $0x28] sm:$0xff]
      %600 = vst [vmem:[%s588 + $0x28] sm:$0xff] %v599
      %v601 = vld [vmem:[%s587 + $0x30] sm:$0xff]
      %602 = vst [vmem:[%s588 + $0x30] sm:$0xff] %v601
      %v603 = vld [vmem:[%s587 + $0x38] sm:$0xff]
      %604 = vst [vmem:[%s588 + $0x38] sm:$0xff] %v603
      %v605 = vld [vmem:[%s587 + $0x40] sm:$0xff]
      %606 = vst [vmem:[%s588 + $0x40] sm:$0xff] %v605
      %v607 = vld [vmem:[%s587 + $0x48] sm:$0xff]
      %608 = vst [vmem:[%s588 + $0x48] sm:$0xff] %v607
      %v609 = vld [vmem:[%s587 + $0x50] sm:$0xff]
      %610 = vst [vmem:[%s588 + $0x50] sm:$0xff] %v609
      %v611 = vld [vmem:[%s587 + $0x58] sm:$0xff]
      %612 = vst [vmem:[%s588 + $0x58] sm:$0xff] %v611
      %v613 = vld [vmem:[%s587 + $0x60] sm:$0xff]
      %614 = vst [vmem:[%s588 + $0x60] sm:$0xff] %v613
      %v615 = vld [vmem:[%s587 + $0x68] sm:$0xff]
      %616 = vst [vmem:[%s588 + $0x68] sm:$0xff] %v615
      %v617 = vld [vmem:[%s587 + $0x70] sm:$0xff]
      %618 = vst [vmem:[%s588 + $0x70] sm:$0xff] %v617
      %v619 = vld [vmem:[%s587 + $0x78] sm:$0xff]
      %620 = vst [vmem:[%s588 + $0x78] sm:$0xff] %v619
      %v621 = vld [vmem:[%s587 + $0x80] sm:$0xff]
      %622 = vst [vmem:[%s588 + $0x80] sm:$0xff] %v621
      %v623 = vld [vmem:[%s587 + $0x88] sm:$0xff]
      %624 = vst [vmem:[%s588 + $0x88] sm:$0xff] %v623
      %v625 = vld [vmem:[%s587 + $0x90] sm:$0xff]
      %626 = vst [vmem:[%s588 + $0x90] sm:$0xff] %v625
      %v627 = vld [vmem:[%s587 + $0x98] sm:$0xff]
      %628 = vst [vmem:[%s588 + $0x98] sm:$0xff] %v627
      %v629 = vld [vmem:[%s587 + $0xa0] sm:$0xff]
      %630 = vst [vmem:[%s588 + $0xa0] sm:$0xff] %v629
      %v631 = vld [vmem:[%s587 + $0xa8] sm:$0xff]
      %632 = vst [vmem:[%s588 + $0xa8] sm:$0xff] %v631
      %v633 = vld [vmem:[%s587 + $0xb0] sm:$0xff]
      %634 = vst [vmem:[%s588 + $0xb0] sm:$0xff] %v633
      %v635 = vld [vmem:[%s587 + $0xb8] sm:$0xff]
      %636 = vst [vmem:[%s588 + $0xb8] sm:$0xff] %v635
      %v637 = vld [vmem:[%s587 + $0xc0] sm:$0xff]
      %638 = vst [vmem:[%s588 + $0xc0] sm:$0xff] %v637
      %v639 = vld [vmem:[%s587 + $0xc8] sm:$0xff]
      %640 = vst [vmem:[%s588 + $0xc8] sm:$0xff] %v639
      %v641 = vld [vmem:[%s587 + $0xd0] sm:$0xff]
      %642 = vst [vmem:[%s588 + $0xd0] sm:$0xff] %v641
      %v643 = vld [vmem:[%s587 + $0xd8] sm:$0xff]
      %644 = vst [vmem:[%s588 + $0xd8] sm:$0xff] %v643
      %v645 = vld [vmem:[%s587 + $0xe0] sm:$0xff]
      %646 = vst [vmem:[%s588 + $0xe0] sm:$0xff] %v645
      %v647 = vld [vmem:[%s587 + $0xe8] sm:$0xff]
      %648 = vst [vmem:[%s588 + $0xe8] sm:$0xff] %v647
      %v649 = vld [vmem:[%s587 + $0xf0] sm:$0xff]
      %650 = vst [vmem:[%s588 + $0xf0] sm:$0xff] %v649
      %v651 = vld [vmem:[%s587 + $0xf8] sm:$0xff]
      %652 = vst [vmem:[%s588 + $0xf8] sm:$0xff] %v651
      %v653 = vld [vmem:[%s587 + $0x100] sm:$0xff]
      %654 = vst [vmem:[%s588 + $0x100] sm:$0xff] %v653
      %v655 = vld [vmem:[%s587 + $0x108] sm:$0xff]
      %656 = vst [vmem:[%s588 + $0x108] sm:$0xff] %v655
      %v657 = vld [vmem:[%s587 + $0x110] sm:$0xff]
      %658 = vst [vmem:[%s588 + $0x110] sm:$0xff] %v657
      %v659 = vld [vmem:[%s587 + $0x118] sm:$0xff]
      %660 = vst [vmem:[%s588 + $0x118] sm:$0xff] %v659
      %v661 = vld [vmem:[%s587 + $0x120] sm:$0xff]
      %662 = vst [vmem:[%s588 + $0x120] sm:$0xff] %v661
      %v663 = vld [vmem:[%s587 + $0x128] sm:$0xff]
      %664 = vst [vmem:[%s588 + $0x128] sm:$0xff] %v663
      %v665 = vld [vmem:[%s587 + $0x130] sm:$0xff]
      %666 = vst [vmem:[%s588 + $0x130] sm:$0xff] %v665
      %v667 = vld [vmem:[%s587 + $0x138] sm:$0xff]
      %668 = vst [vmem:[%s588 + $0x138] sm:$0xff] %v667
      %v669 = vld [vmem:[%s587 + $0x140] sm:$0xff]
      %670 = vst [vmem:[%s588 + $0x140] sm:$0xff] %v669
      %v671 = vld [vmem:[%s587 + $0x148] sm:$0xff]
      %672 = vst [vmem:[%s588 + $0x148] sm:$0xff] %v671
      %v673 = vld [vmem:[%s587 + $0x150] sm:$0xff]
      %674 = vst [vmem:[%s588 + $0x150] sm:$0xff] %v673
      %v675 = vld [vmem:[%s587 + $0x158] sm:$0xff]
      %676 = vst [vmem:[%s588 + $0x158] sm:$0xff] %v675
      %v677 = vld [vmem:[%s587 + $0x160] sm:$0xff]
      %678 = vst [vmem:[%s588 + $0x160] sm:$0xff] %v677
      %v679 = vld [vmem:[%s587 + $0x168] sm:$0xff]
      %680 = vst [vmem:[%s588 + $0x168] sm:$0xff] %v679
      %v681 = vld [vmem:[%s587 + $0x170] sm:$0xff]
      %682 = vst [vmem:[%s588 + $0x170] sm:$0xff] %v681
      %v683 = vld [vmem:[%s587 + $0x178] sm:$0xff]
      %684 = vst [vmem:[%s588 + $0x178] sm:$0xff] %v683
      %v685 = vld [vmem:[%s587 + $0x180] sm:$0xff]
      %686 = vst [vmem:[%s588 + $0x180] sm:$0xff] %v685
      %v687 = vld [vmem:[%s587 + $0x188] sm:$0xff]
      %688 = vst [vmem:[%s588 + $0x188] sm:$0xff] %v687
      %v689 = vld [vmem:[%s587 + $0x190] sm:$0xff]
      %690 = vst [vmem:[%s588 + $0x190] sm:$0xff] %v689
      %v691 = vld [vmem:[%s587 + $0x198] sm:$0xff]
      %692 = vst [vmem:[%s588 + $0x198] sm:$0xff] %v691
      %v693 = vld [vmem:[%s587 + $0x1a0] sm:$0xff]
      %694 = vst [vmem:[%s588 + $0x1a0] sm:$0xff] %v693
      %v695 = vld [vmem:[%s587 + $0x1a8] sm:$0xff]
      %696 = vst [vmem:[%s588 + $0x1a8] sm:$0xff] %v695
      %v697 = vld [vmem:[%s587 + $0x1b0] sm:$0xff]
      %698 = vst [vmem:[%s588 + $0x1b0] sm:$0xff] %v697
      %v699 = vld [vmem:[%s587 + $0x1b8] sm:$0xff]
      %700 = vst [vmem:[%s588 + $0x1b8] sm:$0xff] %v699
      %v701 = vld [vmem:[%s587 + $0x1c0] sm:$0xff]
      %702 = vst [vmem:[%s588 + $0x1c0] sm:$0xff] %v701
      %v703 = vld [vmem:[%s587 + $0x1c8] sm:$0xff]
      %704 = vst [vmem:[%s588 + $0x1c8] sm:$0xff] %v703
      %v705 = vld [vmem:[%s587 + $0x1d0] sm:$0xff]
      %706 = vst [vmem:[%s588 + $0x1d0] sm:$0xff] %v705
      %v707 = vld [vmem:[%s587 + $0x1d8] sm:$0xff]
      %708 = vst [vmem:[%s588 + $0x1d8] sm:$0xff] %v707
      %v709 = vld [vmem:[%s587 + $0x1e0] sm:$0xff]
      %710 = vst [vmem:[%s588 + $0x1e0] sm:$0xff] %v709
      %v711 = vld [vmem:[%s587 + $0x1e8] sm:$0xff]
      %712 = vst [vmem:[%s588 + $0x1e8] sm:$0xff] %v711
      %v713 = vld [vmem:[%s587 + $0x1f0] sm:$0xff]
      %714 = vst [vmem:[%s588 + $0x1f0] sm:$0xff] %v713
      %v715 = vld [vmem:[%s587 + $0x1f8] sm:$0xff]
      %716 = vst [vmem:[%s588 + $0x1f8] sm:$0xff] %v715
      %v717 = vld [vmem:[%s587 + $0x200] sm:$0xff]
      %718 = vst [vmem:[%s588 + $0x200] sm:$0xff] %v717
      %v719 = vld [vmem:[%s587 + $0x208] sm:$0xff]
      %720 = vst [vmem:[%s588 + $0x208] sm:$0xff] %v719
      %v721 = vld [vmem:[%s587 + $0x210] sm:$0xff]
      %722 = vst [vmem:[%s588 + $0x210] sm:$0xff] %v721
      %v723 = vld [vmem:[%s587 + $0x218] sm:$0xff]
      %724 = vst [vmem:[%s588 + $0x218] sm:$0xff] %v723
      %v725 = vld [vmem:[%s587 + $0x220] sm:$0xff]
      %726 = vst [vmem:[%s588 + $0x220] sm:$0xff] %v725
      %v727 = vld [vmem:[%s587 + $0x228] sm:$0xff]
      %728 = vst [vmem:[%s588 + $0x228] sm:$0xff] %v727
      %v729 = vld [vmem:[%s587 + $0x230] sm:$0xff]
      %730 = vst [vmem:[%s588 + $0x230] sm:$0xff] %v729
      %v731 = vld [vmem:[%s587 + $0x238] sm:$0xff]
      %732 = vst [vmem:[%s588 + $0x238] sm:$0xff] %v731
      %v733 = vld [vmem:[%s587 + $0x240] sm:$0xff]
      %734 = vst [vmem:[%s588 + $0x240] sm:$0xff] %v733
      %v735 = vld [vmem:[%s587 + $0x248] sm:$0xff]
      %736 = vst [vmem:[%s588 + $0x248] sm:$0xff] %v735
      %v737 = vld [vmem:[%s587 + $0x250] sm:$0xff]
      %738 = vst [vmem:[%s588 + $0x250] sm:$0xff] %v737
      %v739 = vld [vmem:[%s587 + $0x258] sm:$0xff]
      %740 = vst [vmem:[%s588 + $0x258] sm:$0xff] %v739
      %v741 = vld [vmem:[%s587 + $0x260] sm:$0xff]
      %742 = vst [vmem:[%s588 + $0x260] sm:$0xff] %v741
      %v743 = vld [vmem:[%s587 + $0x268] sm:$0xff]
      %744 = vst [vmem:[%s588 + $0x268] sm:$0xff] %v743
      %v745 = vld [vmem:[%s587 + $0x270] sm:$0xff]
      %746 = vst [vmem:[%s588 + $0x270] sm:$0xff] %v745
      %v747 = vld [vmem:[%s587 + $0x278] sm:$0xff]
      %748 = vst [vmem:[%s588 + $0x278] sm:$0xff] %v747
      %v749 = vld [vmem:[%s587 + $0x280] sm:$0xff]
      %750 = vst [vmem:[%s588 + $0x280] sm:$0xff] %v749
      %v751 = vld [vmem:[%s587 + $0x288] sm:$0xff]
      %752 = vst [vmem:[%s588 + $0x288] sm:$0xff] %v751
      %v753 = vld [vmem:[%s587 + $0x290] sm:$0xff]
      %754 = vst [vmem:[%s588 + $0x290] sm:$0xff] %v753
      %v755 = vld [vmem:[%s587 + $0x298] sm:$0xff]
      %756 = vst [vmem:[%s588 + $0x298] sm:$0xff] %v755
      %v757 = vld [vmem:[%s587 + $0x2a0] sm:$0xff]
      %758 = vst [vmem:[%s588 + $0x2a0] sm:$0xff] %v757
      %v759 = vld [vmem:[%s587 + $0x2a8] sm:$0xff]
      %760 = vst [vmem:[%s588 + $0x2a8] sm:$0xff] %v759
      %v761 = vld [vmem:[%s587 + $0x2b0] sm:$0xff]
      %762 = vst [vmem:[%s588 + $0x2b0] sm:$0xff] %v761
      %v763 = vld [vmem:[%s587 + $0x2b8] sm:$0xff]
      %764 = vst [vmem:[%s588 + $0x2b8] sm:$0xff] %v763
      %v765 = vld [vmem:[%s587 + $0x2c0] sm:$0xff]
      %766 = vst [vmem:[%s588 + $0x2c0] sm:$0xff] %v765
      %v767 = vld [vmem:[%s587 + $0x2c8] sm:$0xff]
      %768 = vst [vmem:[%s588 + $0x2c8] sm:$0xff] %v767
      %v769 = vld [vmem:[%s587 + $0x2d0] sm:$0xff]
      %770 = vst [vmem:[%s588 + $0x2d0] sm:$0xff] %v769
      %v771 = vld [vmem:[%s587 + $0x2d8] sm:$0xff]
      %772 = vst [vmem:[%s588 + $0x2d8] sm:$0xff] %v771
      %v773 = vld [vmem:[%s587 + $0x2e0] sm:$0xff]
      %774 = vst [vmem:[%s588 + $0x2e0] sm:$0xff] %v773
      %v775 = vld [vmem:[%s587 + $0x2e8] sm:$0xff]
      %776 = vst [vmem:[%s588 + $0x2e8] sm:$0xff] %v775
      %v777 = vld [vmem:[%s587 + $0x2f0] sm:$0xff]
      %778 = vst [vmem:[%s588 + $0x2f0] sm:$0xff] %v777
      %v779 = vld [vmem:[%s587 + $0x2f8] sm:$0xff]
      %780 = vst [vmem:[%s588 + $0x2f8] sm:$0xff] %v779
      %v781 = vld [vmem:[%s587 + $0x300] sm:$0xff]
      %782 = vst [vmem:[%s588 + $0x300] sm:$0xff] %v781
      %v783 = vld [vmem:[%s587 + $0x308] sm:$0xff]
      %784 = vst [vmem:[%s588 + $0x308] sm:$0xff] %v783
      %v785 = vld [vmem:[%s587 + $0x310] sm:$0xff]
      %786 = vst [vmem:[%s588 + $0x310] sm:$0xff] %v785
      %v787 = vld [vmem:[%s587 + $0x318] sm:$0xff]
      %788 = vst [vmem:[%s588 + $0x318] sm:$0xff] %v787
      %v789 = vld [vmem:[%s587 + $0x320] sm:$0xff]
      %790 = vst [vmem:[%s588 + $0x320] sm:$0xff] %v789
      %v791 = vld [vmem:[%s587 + $0x328] sm:$0xff]
      %792 = vst [vmem:[%s588 + $0x328] sm:$0xff] %v791
      %v793 = vld [vmem:[%s587 + $0x330] sm:$0xff]
      %794 = vst [vmem:[%s588 + $0x330] sm:$0xff] %v793
      %v795 = vld [vmem:[%s587 + $0x338] sm:$0xff]
      %796 = vst [vmem:[%s588 + $0x338] sm:$0xff] %v795
      %v797 = vld [vmem:[%s587 + $0x340] sm:$0xff]
      %798 = vst [vmem:[%s588 + $0x340] sm:$0xff] %v797
      %v799 = vld [vmem:[%s587 + $0x348] sm:$0xff]
      %800 = vst [vmem:[%s588 + $0x348] sm:$0xff] %v799
      %v801 = vld [vmem:[%s587 + $0x350] sm:$0xff]
      %802 = vst [vmem:[%s588 + $0x350] sm:$0xff] %v801
      %v803 = vld [vmem:[%s587 + $0x358] sm:$0xff]
      %804 = vst [vmem:[%s588 + $0x358] sm:$0xff] %v803
      %v805 = vld [vmem:[%s587 + $0x360] sm:$0xff]
      %806 = vst [vmem:[%s588 + $0x360] sm:$0xff] %v805
      %v807 = vld [vmem:[%s587 + $0x368] sm:$0xff]
      %808 = vst [vmem:[%s588 + $0x368] sm:$0xff] %v807
      %v809 = vld [vmem:[%s587 + $0x370] sm:$0xff]
      %810 = vst [vmem:[%s588 + $0x370] sm:$0xff] %v809
      %v811 = vld [vmem:[%s587 + $0x378] sm:$0xff]
      %812 = vst [vmem:[%s588 + $0x378] sm:$0xff] %v811
      %v813 = vld [vmem:[%s587 + $0x380] sm:$0xff]
      %814 = vst [vmem:[%s588 + $0x380] sm:$0xff] %v813
      %v815 = vld [vmem:[%s587 + $0x388] sm:$0xff]
      %816 = vst [vmem:[%s588 + $0x388] sm:$0xff] %v815
      %v817 = vld [vmem:[%s587 + $0x390] sm:$0xff]
      %818 = vst [vmem:[%s588 + $0x390] sm:$0xff] %v817
      %v819 = vld [vmem:[%s587 + $0x398] sm:$0xff]
      %820 = vst [vmem:[%s588 + $0x398] sm:$0xff] %v819
      %v821 = vld [vmem:[%s587 + $0x3a0] sm:$0xff]
      %822 = vst [vmem:[%s588 + $0x3a0] sm:$0xff] %v821
      %v823 = vld [vmem:[%s587 + $0x3a8] sm:$0xff]
      %824 = vst [vmem:[%s588 + $0x3a8] sm:$0xff] %v823
      %v825 = vld [vmem:[%s587 + $0x3b0] sm:$0xff]
      %826 = vst [vmem:[%s588 + $0x3b0] sm:$0xff] %v825
      %v827 = vld [vmem:[%s587 + $0x3b8] sm:$0xff]
      %828 = vst [vmem:[%s588 + $0x3b8] sm:$0xff] %v827
      %v829 = vld [vmem:[%s587 + $0x3c0] sm:$0xff]
      %830 = vst [vmem:[%s588 + $0x3c0] sm:$0xff] %v829
      %v831 = vld [vmem:[%s587 + $0x3c8] sm:$0xff]
      %832 = vst [vmem:[%s588 + $0x3c8] sm:$0xff] %v831
      %v833 = vld [vmem:[%s587 + $0x3d0] sm:$0xff]
      %834 = vst [vmem:[%s588 + $0x3d0] sm:$0xff] %v833
      %v835 = vld [vmem:[%s587 + $0x3d8] sm:$0xff]
      %836 = vst [vmem:[%s588 + $0x3d8] sm:$0xff] %v835
      %v837 = vld [vmem:[%s587 + $0x3e0] sm:$0xff]
      %838 = vst [vmem:[%s588 + $0x3e0] sm:$0xff] %v837
      %v839 = vld [vmem:[%s587 + $0x3e8] sm:$0xff]
      %840 = vst [vmem:[%s588 + $0x3e8] sm:$0xff] %v839
      %v841 = vld [vmem:[%s587 + $0x3f0] sm:$0xff]
      %842 = vst [vmem:[%s588 + $0x3f0] sm:$0xff] %v841
      %v843 = vld [vmem:[%s587 + $0x3f8] sm:$0xff]
      %844 = vst [vmem:[%s588 + $0x3f8] sm:$0xff] %v843
      %v845 = vld [vmem:[%s587 + $0x400] sm:$0xff]
      %846 = vst [vmem:[%s588 + $0x400] sm:$0xff] %v845
      %v847 = vld [vmem:[%s587 + $0x408] sm:$0xff]
      %848 = vst [vmem:[%s588 + $0x408] sm:$0xff] %v847
      %v849 = vld [vmem:[%s587 + $0x410] sm:$0xff]
      %850 = vst [vmem:[%s588 + $0x410] sm:$0xff] %v849
      %v851 = vld [vmem:[%s587 + $0x418] sm:$0xff]
      %852 = vst [vmem:[%s588 + $0x418] sm:$0xff] %v851
      %v853 = vld [vmem:[%s587 + $0x420] sm:$0xff]
      %854 = vst [vmem:[%s588 + $0x420] sm:$0xff] %v853
      %v855 = vld [vmem:[%s587 + $0x428] sm:$0xff]
      %856 = vst [vmem:[%s588 + $0x428] sm:$0xff] %v855
      %v857 = vld [vmem:[%s587 + $0x430] sm:$0xff]
      %858 = vst [vmem:[%s588 + $0x430] sm:$0xff] %v857
      %v859 = vld [vmem:[%s587 + $0x438] sm:$0xff]
      %860 = vst [vmem:[%s588 + $0x438] sm:$0xff] %v859
      %v861 = vld [vmem:[%s587 + $0x440] sm:$0xff]
      %862 = vst [vmem:[%s588 + $0x440] sm:$0xff] %v861
      %v863 = vld [vmem:[%s587 + $0x448] sm:$0xff]
      %864 = vst [vmem:[%s588 + $0x448] sm:$0xff] %v863
      %v865 = vld [vmem:[%s587 + $0x450] sm:$0xff]
      %866 = vst [vmem:[%s588 + $0x450] sm:$0xff] %v865
      %v867 = vld [vmem:[%s587 + $0x458] sm:$0xff]
      %868 = vst [vmem:[%s588 + $0x458] sm:$0xff] %v867
      %v869 = vld [vmem:[%s587 + $0x460] sm:$0xff]
      %870 = vst [vmem:[%s588 + $0x460] sm:$0xff] %v869
      %v871 = vld [vmem:[%s587 + $0x468] sm:$0xff]
      %872 = vst [vmem:[%s588 + $0x468] sm:$0xff] %v871
      %v873 = vld [vmem:[%s587 + $0x470] sm:$0xff]
      %874 = vst [vmem:[%s588 + $0x470] sm:$0xff] %v873
      %v875 = vld [vmem:[%s587 + $0x478] sm:$0xff]
      %876 = vst [vmem:[%s588 + $0x478] sm:$0xff] %v875
      %v877 = vld [vmem:[%s587 + $0x480] sm:$0xff]
      %878 = vst [vmem:[%s588 + $0x480] sm:$0xff] %v877
      %v879 = vld [vmem:[%s587 + $0x488] sm:$0xff]
      %880 = vst [vmem:[%s588 + $0x488] sm:$0xff] %v879
      %v881 = vld [vmem:[%s587 + $0x490] sm:$0xff]
      %882 = vst [vmem:[%s588 + $0x490] sm:$0xff] %v881
      %v883 = vld [vmem:[%s587 + $0x498] sm:$0xff]
      %884 = vst [vmem:[%s588 + $0x498] sm:$0xff] %v883
      %v885 = vld [vmem:[%s587 + $0x4a0] sm:$0xff]
      %886 = vst [vmem:[%s588 + $0x4a0] sm:$0xff] %v885
      %v887 = vld [vmem:[%s587 + $0x4a8] sm:$0xff]
      %888 = vst [vmem:[%s588 + $0x4a8] sm:$0xff] %v887
      %v889 = vld [vmem:[%s587 + $0x4b0] sm:$0xff]
      %890 = vst [vmem:[%s588 + $0x4b0] sm:$0xff] %v889
      %v891 = vld [vmem:[%s587 + $0x4b8] sm:$0xff]
      %892 = vst [vmem:[%s588 + $0x4b8] sm:$0xff] %v891
      %v893 = vld [vmem:[%s587 + $0x4c0] sm:$0xff]
      %894 = vst [vmem:[%s588 + $0x4c0] sm:$0xff] %v893
      %v895 = vld [vmem:[%s587 + $0x4c8] sm:$0xff]
      %896 = vst [vmem:[%s588 + $0x4c8] sm:$0xff] %v895
      %v897 = vld [vmem:[%s587 + $0x4d0] sm:$0xff]
      %898 = vst [vmem:[%s588 + $0x4d0] sm:$0xff] %v897
      %v899 = vld [vmem:[%s587 + $0x4d8] sm:$0xff]
      %900 = vst [vmem:[%s588 + $0x4d8] sm:$0xff] %v899
      %v901 = vld [vmem:[%s587 + $0x4e0] sm:$0xff]
      %902 = vst [vmem:[%s588 + $0x4e0] sm:$0xff] %v901
      %v903 = vld [vmem:[%s587 + $0x4e8] sm:$0xff]
      %904 = vst [vmem:[%s588 + $0x4e8] sm:$0xff] %v903
      %v905 = vld [vmem:[%s587 + $0x4f0] sm:$0xff]
      %906 = vst [vmem:[%s588 + $0x4f0] sm:$0xff] %v905
      %v907 = vld [vmem:[%s587 + $0x4f8] sm:$0xff]
      %908 = vst [vmem:[%s588 + $0x4f8] sm:$0xff] %v907
      %v909 = vld [vmem:[%s587 + $0x500] sm:$0xff]
      %910 = vst [vmem:[%s588 + $0x500] sm:$0xff] %v909
      %v911 = vld [vmem:[%s587 + $0x508] sm:$0xff]
      %912 = vst [vmem:[%s588 + $0x508] sm:$0xff] %v911
      %v913 = vld [vmem:[%s587 + $0x510] sm:$0xff]
      %914 = vst [vmem:[%s588 + $0x510] sm:$0xff] %v913
      %v915 = vld [vmem:[%s587 + $0x518] sm:$0xff]
      %916 = vst [vmem:[%s588 + $0x518] sm:$0xff] %v915
      %v917 = vld [vmem:[%s587 + $0x520] sm:$0xff]
      %918 = vst [vmem:[%s588 + $0x520] sm:$0xff] %v917
      %v919 = vld [vmem:[%s587 + $0x528] sm:$0xff]
      %920 = vst [vmem:[%s588 + $0x528] sm:$0xff] %v919
      %v921 = vld [vmem:[%s587 + $0x530] sm:$0xff]
      %922 = vst [vmem:[%s588 + $0x530] sm:$0xff] %v921
      %v923 = vld [vmem:[%s587 + $0x538] sm:$0xff]
      %924 = vst [vmem:[%s588 + $0x538] sm:$0xff] %v923
      %v925 = vld [vmem:[%s587 + $0x540] sm:$0xff]
      %926 = vst [vmem:[%s588 + $0x540] sm:$0xff] %v925
      %v927 = vld [vmem:[%s587 + $0x548] sm:$0xff]
      %928 = vst [vmem:[%s588 + $0x548] sm:$0xff] %v927
      %v929 = vld [vmem:[%s587 + $0x550] sm:$0xff]
      %930 = vst [vmem:[%s588 + $0x550] sm:$0xff] %v929
      %v931 = vld [vmem:[%s587 + $0x558] sm:$0xff]
      %932 = vst [vmem:[%s588 + $0x558] sm:$0xff] %v931
      %v933 = vld [vmem:[%s587 + $0x560] sm:$0xff]
      %934 = vst [vmem:[%s588 + $0x560] sm:$0xff] %v933
      %v935 = vld [vmem:[%s587 + $0x568] sm:$0xff]
      %936 = vst [vmem:[%s588 + $0x568] sm:$0xff] %v935
      %v937 = vld [vmem:[%s587 + $0x570] sm:$0xff]
      %938 = vst [vmem:[%s588 + $0x570] sm:$0xff] %v937
      %v939 = vld [vmem:[%s587 + $0x578] sm:$0xff]
      %940 = vst [vmem:[%s588 + $0x578] sm:$0xff] %v939
      %v941 = vld [vmem:[%s587 + $0x580] sm:$0xff]
      %942 = vst [vmem:[%s588 + $0x580] sm:$0xff] %v941
      %v943 = vld [vmem:[%s587 + $0x588] sm:$0xff]
      %944 = vst [vmem:[%s588 + $0x588] sm:$0xff] %v943
      %v945 = vld [vmem:[%s587 + $0x590] sm:$0xff]
      %946 = vst [vmem:[%s588 + $0x590] sm:$0xff] %v945
      %v947 = vld [vmem:[%s587 + $0x598] sm:$0xff]
      %948 = vst [vmem:[%s588 + $0x598] sm:$0xff] %v947
      %v949 = vld [vmem:[%s587 + $0x5a0] sm:$0xff]
      %950 = vst [vmem:[%s588 + $0x5a0] sm:$0xff] %v949
      %v951 = vld [vmem:[%s587 + $0x5a8] sm:$0xff]
      %952 = vst [vmem:[%s588 + $0x5a8] sm:$0xff] %v951
      %v953 = vld [vmem:[%s587 + $0x5b0] sm:$0xff]
      %954 = vst [vmem:[%s588 + $0x5b0] sm:$0xff] %v953
      %v955 = vld [vmem:[%s587 + $0x5b8] sm:$0xff]
      %956 = vst [vmem:[%s588 + $0x5b8] sm:$0xff] %v955
      %v957 = vld [vmem:[%s587 + $0x5c0] sm:$0xff]
      %958 = vst [vmem:[%s588 + $0x5c0] sm:$0xff] %v957
      %v959 = vld [vmem:[%s587 + $0x5c8] sm:$0xff]
      %960 = vst [vmem:[%s588 + $0x5c8] sm:$0xff] %v959
      %v961 = vld [vmem:[%s587 + $0x5d0] sm:$0xff]
      %962 = vst [vmem:[%s588 + $0x5d0] sm:$0xff] %v961
      %v963 = vld [vmem:[%s587 + $0x5d8] sm:$0xff]
      %964 = vst [vmem:[%s588 + $0x5d8] sm:$0xff] %v963
      %v965 = vld [vmem:[%s587 + $0x5e0] sm:$0xff]
      %966 = vst [vmem:[%s588 + $0x5e0] sm:$0xff] %v965
      %v967 = vld [vmem:[%s587 + $0x5e8] sm:$0xff]
      %968 = vst [vmem:[%s588 + $0x5e8] sm:$0xff] %v967
      %v969 = vld [vmem:[%s587 + $0x5f0] sm:$0xff]
      %970 = vst [vmem:[%s588 + $0x5f0] sm:$0xff] %v969
      %v971 = vld [vmem:[%s587 + $0x5f8] sm:$0xff]
      %972 = vst [vmem:[%s588 + $0x5f8] sm:$0xff] %v971
      %v973 = vld [vmem:[%s587 + $0x600] sm:$0xff]
      %974 = vst [vmem:[%s588 + $0x600] sm:$0xff] %v973
      %v975 = vld [vmem:[%s587 + $0x608] sm:$0xff]
      %976 = vst [vmem:[%s588 + $0x608] sm:$0xff] %v975
      %v977 = vld [vmem:[%s587 + $0x610] sm:$0xff]
      %978 = vst [vmem:[%s588 + $0x610] sm:$0xff] %v977
      %v979 = vld [vmem:[%s587 + $0x618] sm:$0xff]
      %980 = vst [vmem:[%s588 + $0x618] sm:$0xff] %v979
      %v981 = vld [vmem:[%s587 + $0x620] sm:$0xff]
      %982 = vst [vmem:[%s588 + $0x620] sm:$0xff] %v981
      %v983 = vld [vmem:[%s587 + $0x628] sm:$0xff]
      %984 = vst [vmem:[%s588 + $0x628] sm:$0xff] %v983
      %v985 = vld [vmem:[%s587 + $0x630] sm:$0xff]
      %986 = vst [vmem:[%s588 + $0x630] sm:$0xff] %v985
      %v987 = vld [vmem:[%s587 + $0x638] sm:$0xff]
      %988 = vst [vmem:[%s588 + $0x638] sm:$0xff] %v987
      %v989 = vld [vmem:[%s587 + $0x640] sm:$0xff]
      %990 = vst [vmem:[%s588 + $0x640] sm:$0xff] %v989
      %v991 = vld [vmem:[%s587 + $0x648] sm:$0xff]
      %992 = vst [vmem:[%s588 + $0x648] sm:$0xff] %v991
      %v993 = vld [vmem:[%s587 + $0x650] sm:$0xff]
      %994 = vst [vmem:[%s588 + $0x650] sm:$0xff] %v993
      %v995 = vld [vmem:[%s587 + $0x658] sm:$0xff]
      %996 = vst [vmem:[%s588 + $0x658] sm:$0xff] %v995
      %v997 = vld [vmem:[%s587 + $0x660] sm:$0xff]
      %998 = vst [vmem:[%s588 + $0x660] sm:$0xff] %v997
      %v999 = vld [vmem:[%s587 + $0x668] sm:$0xff]
      %1000 = vst [vmem:[%s588 + $0x668] sm:$0xff] %v999
      %v1001 = vld [vmem:[%s587 + $0x670] sm:$0xff]
      %1002 = vst [vmem:[%s588 + $0x670] sm:$0xff] %v1001
      %v1003 = vld [vmem:[%s587 + $0x678] sm:$0xff]
      %1004 = vst [vmem:[%s588 + $0x678] sm:$0xff] %v1003
      %v1005 = vld [vmem:[%s587 + $0x680] sm:$0xff]
      %1006 = vst [vmem:[%s588 + $0x680] sm:$0xff] %v1005
      %v1007 = vld [vmem:[%s587 + $0x688] sm:$0xff]
      %1008 = vst [vmem:[%s588 + $0x688] sm:$0xff] %v1007
      %v1009 = vld [vmem:[%s587 + $0x690] sm:$0xff]
      %1010 = vst [vmem:[%s588 + $0x690] sm:$0xff] %v1009
      %v1011 = vld [vmem:[%s587 + $0x698] sm:$0xff]
      %1012 = vst [vmem:[%s588 + $0x698] sm:$0xff] %v1011
      %v1013 = vld [vmem:[%s587 + $0x6a0] sm:$0xff]
      %1014 = vst [vmem:[%s588 + $0x6a0] sm:$0xff] %v1013
      %v1015 = vld [vmem:[%s587 + $0x6a8] sm:$0xff]
      %1016 = vst [vmem:[%s588 + $0x6a8] sm:$0xff] %v1015
      %v1017 = vld [vmem:[%s587 + $0x6b0] sm:$0xff]
      %1018 = vst [vmem:[%s588 + $0x6b0] sm:$0xff] %v1017
      %v1019 = vld [vmem:[%s587 + $0x6b8] sm:$0xff]
      %1020 = vst [vmem:[%s588 + $0x6b8] sm:$0xff] %v1019
      %v1021 = vld [vmem:[%s587 + $0x6c0] sm:$0xff]
      %1022 = vst [vmem:[%s588 + $0x6c0] sm:$0xff] %v1021
      %v1023 = vld [vmem:[%s587 + $0x6c8] sm:$0xff]
      %1024 = vst [vmem:[%s588 + $0x6c8] sm:$0xff] %v1023
      %v1025 = vld [vmem:[%s587 + $0x6d0] sm:$0xff]
      %1026 = vst [vmem:[%s588 + $0x6d0] sm:$0xff] %v1025
      %v1027 = vld [vmem:[%s587 + $0x6d8] sm:$0xff]
      %1028 = vst [vmem:[%s588 + $0x6d8] sm:$0xff] %v1027
      %v1029 = vld [vmem:[%s587 + $0x6e0] sm:$0xff]
      %1030 = vst [vmem:[%s588 + $0x6e0] sm:$0xff] %v1029
      %v1031 = vld [vmem:[%s587 + $0x6e8] sm:$0xff]
      %1032 = vst [vmem:[%s588 + $0x6e8] sm:$0xff] %v1031
      %v1033 = vld [vmem:[%s587 + $0x6f0] sm:$0xff]
      %1034 = vst [vmem:[%s588 + $0x6f0] sm:$0xff] %v1033
      %v1035 = vld [vmem:[%s587 + $0x6f8] sm:$0xff]
      %1036 = vst [vmem:[%s588 + $0x6f8] sm:$0xff] %v1035
      %v1037 = vld [vmem:[%s587 + $0x700] sm:$0xff]
      %1038 = vst [vmem:[%s588 + $0x700] sm:$0xff] %v1037
      %v1039 = vld [vmem:[%s587 + $0x708] sm:$0xff]
      %1040 = vst [vmem:[%s588 + $0x708] sm:$0xff] %v1039
      %v1041 = vld [vmem:[%s587 + $0x710] sm:$0xff]
      %1042 = vst [vmem:[%s588 + $0x710] sm:$0xff] %v1041
      %v1043 = vld [vmem:[%s587 + $0x718] sm:$0xff]
      %1044 = vst [vmem:[%s588 + $0x718] sm:$0xff] %v1043
      %v1045 = vld [vmem:[%s587 + $0x720] sm:$0xff]
      %1046 = vst [vmem:[%s588 + $0x720] sm:$0xff] %v1045
      %v1047 = vld [vmem:[%s587 + $0x728] sm:$0xff]
      %1048 = vst [vmem:[%s588 + $0x728] sm:$0xff] %v1047
      %v1049 = vld [vmem:[%s587 + $0x730] sm:$0xff]
      %1050 = vst [vmem:[%s588 + $0x730] sm:$0xff] %v1049
      %v1051 = vld [vmem:[%s587 + $0x738] sm:$0xff]
      %1052 = vst [vmem:[%s588 + $0x738] sm:$0xff] %v1051
      %v1053 = vld [vmem:[%s587 + $0x740] sm:$0xff]
      %1054 = vst [vmem:[%s588 + $0x740] sm:$0xff] %v1053
      %v1055 = vld [vmem:[%s587 + $0x748] sm:$0xff]
      %1056 = vst [vmem:[%s588 + $0x748] sm:$0xff] %v1055
      %v1057 = vld [vmem:[%s587 + $0x750] sm:$0xff]
      %1058 = vst [vmem:[%s588 + $0x750] sm:$0xff] %v1057
      %v1059 = vld [vmem:[%s587 + $0x758] sm:$0xff]
      %1060 = vst [vmem:[%s588 + $0x758] sm:$0xff] %v1059
      %v1061 = vld [vmem:[%s587 + $0x760] sm:$0xff]
      %1062 = vst [vmem:[%s588 + $0x760] sm:$0xff] %v1061
      %v1063 = vld [vmem:[%s587 + $0x768] sm:$0xff]
      %1064 = vst [vmem:[%s588 + $0x768] sm:$0xff] %v1063
      %v1065 = vld [vmem:[%s587 + $0x770] sm:$0xff]
      %1066 = vst [vmem:[%s588 + $0x770] sm:$0xff] %v1065
      %v1067 = vld [vmem:[%s587 + $0x778] sm:$0xff]
      %1068 = vst [vmem:[%s588 + $0x778] sm:$0xff] %v1067
      %v1069 = vld [vmem:[%s587 + $0x780] sm:$0xff]
      %1070 = vst [vmem:[%s588 + $0x780] sm:$0xff] %v1069
      %v1071 = vld [vmem:[%s587 + $0x788] sm:$0xff]
      %1072 = vst [vmem:[%s588 + $0x788] sm:$0xff] %v1071
      %v1073 = vld [vmem:[%s587 + $0x790] sm:$0xff]
      %1074 = vst [vmem:[%s588 + $0x790] sm:$0xff] %v1073
      %v1075 = vld [vmem:[%s587 + $0x798] sm:$0xff]
      %1076 = vst [vmem:[%s588 + $0x798] sm:$0xff] %v1075
      %v1077 = vld [vmem:[%s587 + $0x7a0] sm:$0xff]
      %1078 = vst [vmem:[%s588 + $0x7a0] sm:$0xff] %v1077
      %v1079 = vld [vmem:[%s587 + $0x7a8] sm:$0xff]
      %1080 = vst [vmem:[%s588 + $0x7a8] sm:$0xff] %v1079
      %v1081 = vld [vmem:[%s587 + $0x7b0] sm:$0xff]
      %1082 = vst [vmem:[%s588 + $0x7b0] sm:$0xff] %v1081
      %v1083 = vld [vmem:[%s587 + $0x7b8] sm:$0xff]
      %1084 = vst [vmem:[%s588 + $0x7b8] sm:$0xff] %v1083
      %v1085 = vld [vmem:[%s587 + $0x7c0] sm:$0xff]
      %1086 = vst [vmem:[%s588 + $0x7c0] sm:$0xff] %v1085
      %v1087 = vld [vmem:[%s587 + $0x7c8] sm:$0xff]
      %1088 = vst [vmem:[%s588 + $0x7c8] sm:$0xff] %v1087
      %v1089 = vld [vmem:[%s587 + $0x7d0] sm:$0xff]
      %1090 = vst [vmem:[%s588 + $0x7d0] sm:$0xff] %v1089
      %v1091 = vld [vmem:[%s587 + $0x7d8] sm:$0xff]
      %1092 = vst [vmem:[%s588 + $0x7d8] sm:$0xff] %v1091
      %v1093 = vld [vmem:[%s587 + $0x7e0] sm:$0xff]
      %1094 = vst [vmem:[%s588 + $0x7e0] sm:$0xff] %v1093
      %v1095 = vld [vmem:[%s587 + $0x7e8] sm:$0xff]
      %1096 = vst [vmem:[%s588 + $0x7e8] sm:$0xff] %v1095
      %v1097 = vld [vmem:[%s587 + $0x7f0] sm:$0xff]
      %1098 = vst [vmem:[%s588 + $0x7f0] sm:$0xff] %v1097
      %v1099 = vld [vmem:[%s587 + $0x7f8] sm:$0xff]
      %1100 = vst [vmem:[%s588 + $0x7f8] sm:$0xff] %v1099
    $region85: #{cnn_encoder_forward.1} parent=79 // loop_footer
      %s586 = sadd.s32 1, %s582
    $region86: #{cnn_encoder_forward.1} parent=79 // loop_footer_branch
      %581 = sbr.rel target = $region82
    $region87: #{cnn_encoder_forward.1} parent=79 // loop_exit
      _
  $region80: #{cnn_encoder_forward.1} parent=0 // pred_fallthru
    _
  // Predicated region
  $region88: #{cnn_encoder_forward.1} parent=0 // pred_check
    _
  $region89: #{cnn_encoder_forward.1} parent=0 // pred_check_branch
    %1102 = sbr.rel target = $region91
  $region90: #{cnn_encoder_forward.1} parent=0 // pred_region
    _
  $region91: #{cnn_encoder_forward.1} parent=0 // pred_fallthru
    _
  // Predicated region
  $region92: #{cnn_encoder_forward.1} parent=0 // pred_check
    _
  $region93: #{cnn_encoder_forward.1} parent=0 // pred_check_branch
    %1105 = sbr.rel (0) target = $region95
  $region94: #{cnn_encoder_forward.1} parent=0 // pred_region
    %1106 = vsyncadd %s578, 32768
  $region95: #{cnn_encoder_forward.1} parent=0 // pred_fallthru
    _
  %s1107 = scalar_lea.vmem %s13, 4096
  %s1108 = scalar_lea.vmem [#allocation2], 4096
  %s1109 = scalar_lea.sflag [#allocation3], 2
  // Predicated region
  $region96: #{cnn_encoder_forward.1} parent=0 // pred_check
    _
  $region97: #{cnn_encoder_forward.1} parent=0 // pred_check_branch
    %1111 = sbr.rel (0) target = $region99
  $region98: #{cnn_encoder_forward.1} parent=0 // pred_region
    loop: start=0, step=1, limit=1
    $region100: #{cnn_encoder_forward.1} parent=98 // loop_pre_header
      _
    $region101: #{cnn_encoder_forward.1} parent=98 // loop_header
      %s1113 = sphi 0, %s1117
      %p1114 = scmp.ge.s32.totalorder %s1113, 1
      %s1118 = sphi %s1107, %s1107
      %s1119 = sphi %s1108, %s1108
    $region102: #{cnn_encoder_forward.1} parent=98 // loop_header_branch
      %1116 = sbr.rel (%p1114) target = $region106
    $region103: #{cnn_encoder_forward.1} parent=98 // loop_body
      %v1120 = vld [vmem:[%s1118] sm:$0xff]
      %1121 = vst [vmem:[%s1119] sm:$0xff] %v1120
      %v1122 = vld [vmem:[%s1118 + $0x8] sm:$0xff]
      %1123 = vst [vmem:[%s1119 + $0x8] sm:$0xff] %v1122
      %v1124 = vld [vmem:[%s1118 + $0x10] sm:$0xff]
      %1125 = vst [vmem:[%s1119 + $0x10] sm:$0xff] %v1124
      %v1126 = vld [vmem:[%s1118 + $0x18] sm:$0xff]
      %1127 = vst [vmem:[%s1119 + $0x18] sm:$0xff] %v1126
      %v1128 = vld [vmem:[%s1118 + $0x20] sm:$0xff]
      %1129 = vst [vmem:[%s1119 + $0x20] sm:$0xff] %v1128
      %v1130 = vld [vmem:[%s1118 + $0x28] sm:$0xff]
      %1131 = vst [vmem:[%s1119 + $0x28] sm:$0xff] %v1130
      %v1132 = vld [vmem:[%s1118 + $0x30] sm:$0xff]
      %1133 = vst [vmem:[%s1119 + $0x30] sm:$0xff] %v1132
      %v1134 = vld [vmem:[%s1118 + $0x38] sm:$0xff]
      %1135 = vst [vmem:[%s1119 + $0x38] sm:$0xff] %v1134
      %v1136 = vld [vmem:[%s1118 + $0x40] sm:$0xff]
      %1137 = vst [vmem:[%s1119 + $0x40] sm:$0xff] %v1136
      %v1138 = vld [vmem:[%s1118 + $0x48] sm:$0xff]
      %1139 = vst [vmem:[%s1119 + $0x48] sm:$0xff] %v1138
      %v1140 = vld [vmem:[%s1118 + $0x50] sm:$0xff]
      %1141 = vst [vmem:[%s1119 + $0x50] sm:$0xff] %v1140
      %v1142 = vld [vmem:[%s1118 + $0x58] sm:$0xff]
      %1143 = vst [vmem:[%s1119 + $0x58] sm:$0xff] %v1142
      %v1144 = vld [vmem:[%s1118 + $0x60] sm:$0xff]
      %1145 = vst [vmem:[%s1119 + $0x60] sm:$0xff] %v1144
      %v1146 = vld [vmem:[%s1118 + $0x68] sm:$0xff]
      %1147 = vst [vmem:[%s1119 + $0x68] sm:$0xff] %v1146
      %v1148 = vld [vmem:[%s1118 + $0x70] sm:$0xff]
      %1149 = vst [vmem:[%s1119 + $0x70] sm:$0xff] %v1148
      %v1150 = vld [vmem:[%s1118 + $0x78] sm:$0xff]
      %1151 = vst [vmem:[%s1119 + $0x78] sm:$0xff] %v1150
      %v1152 = vld [vmem:[%s1118 + $0x80] sm:$0xff]
      %1153 = vst [vmem:[%s1119 + $0x80] sm:$0xff] %v1152
      %v1154 = vld [vmem:[%s1118 + $0x88] sm:$0xff]
      %1155 = vst [vmem:[%s1119 + $0x88] sm:$0xff] %v1154
      %v1156 = vld [vmem:[%s1118 + $0x90] sm:$0xff]
      %1157 = vst [vmem:[%s1119 + $0x90] sm:$0xff] %v1156
      %v1158 = vld [vmem:[%s1118 + $0x98] sm:$0xff]
      %1159 = vst [vmem:[%s1119 + $0x98] sm:$0xff] %v1158
      %v1160 = vld [vmem:[%s1118 + $0xa0] sm:$0xff]
      %1161 = vst [vmem:[%s1119 + $0xa0] sm:$0xff] %v1160
      %v1162 = vld [vmem:[%s1118 + $0xa8] sm:$0xff]
      %1163 = vst [vmem:[%s1119 + $0xa8] sm:$0xff] %v1162
      %v1164 = vld [vmem:[%s1118 + $0xb0] sm:$0xff]
      %1165 = vst [vmem:[%s1119 + $0xb0] sm:$0xff] %v1164
      %v1166 = vld [vmem:[%s1118 + $0xb8] sm:$0xff]
      %1167 = vst [vmem:[%s1119 + $0xb8] sm:$0xff] %v1166
      %v1168 = vld [vmem:[%s1118 + $0xc0] sm:$0xff]
      %1169 = vst [vmem:[%s1119 + $0xc0] sm:$0xff] %v1168
      %v1170 = vld [vmem:[%s1118 + $0xc8] sm:$0xff]
      %1171 = vst [vmem:[%s1119 + $0xc8] sm:$0xff] %v1170
      %v1172 = vld [vmem:[%s1118 + $0xd0] sm:$0xff]
      %1173 = vst [vmem:[%s1119 + $0xd0] sm:$0xff] %v1172
      %v1174 = vld [vmem:[%s1118 + $0xd8] sm:$0xff]
      %1175 = vst [vmem:[%s1119 + $0xd8] sm:$0xff] %v1174
      %v1176 = vld [vmem:[%s1118 + $0xe0] sm:$0xff]
      %1177 = vst [vmem:[%s1119 + $0xe0] sm:$0xff] %v1176
      %v1178 = vld [vmem:[%s1118 + $0xe8] sm:$0xff]
      %1179 = vst [vmem:[%s1119 + $0xe8] sm:$0xff] %v1178
      %v1180 = vld [vmem:[%s1118 + $0xf0] sm:$0xff]
      %1181 = vst [vmem:[%s1119 + $0xf0] sm:$0xff] %v1180
      %v1182 = vld [vmem:[%s1118 + $0xf8] sm:$0xff]
      %1183 = vst [vmem:[%s1119 + $0xf8] sm:$0xff] %v1182
      %v1184 = vld [vmem:[%s1118 + $0x100] sm:$0xff]
      %1185 = vst [vmem:[%s1119 + $0x100] sm:$0xff] %v1184
      %v1186 = vld [vmem:[%s1118 + $0x108] sm:$0xff]
      %1187 = vst [vmem:[%s1119 + $0x108] sm:$0xff] %v1186
      %v1188 = vld [vmem:[%s1118 + $0x110] sm:$0xff]
      %1189 = vst [vmem:[%s1119 + $0x110] sm:$0xff] %v1188
      %v1190 = vld [vmem:[%s1118 + $0x118] sm:$0xff]
      %1191 = vst [vmem:[%s1119 + $0x118] sm:$0xff] %v1190
      %v1192 = vld [vmem:[%s1118 + $0x120] sm:$0xff]
      %1193 = vst [vmem:[%s1119 + $0x120] sm:$0xff] %v1192
      %v1194 = vld [vmem:[%s1118 + $0x128] sm:$0xff]
      %1195 = vst [vmem:[%s1119 + $0x128] sm:$0xff] %v1194
      %v1196 = vld [vmem:[%s1118 + $0x130] sm:$0xff]
      %1197 = vst [vmem:[%s1119 + $0x130] sm:$0xff] %v1196
      %v1198 = vld [vmem:[%s1118 + $0x138] sm:$0xff]
      %1199 = vst [vmem:[%s1119 + $0x138] sm:$0xff] %v1198
      %v1200 = vld [vmem:[%s1118 + $0x140] sm:$0xff]
      %1201 = vst [vmem:[%s1119 + $0x140] sm:$0xff] %v1200
      %v1202 = vld [vmem:[%s1118 + $0x148] sm:$0xff]
      %1203 = vst [vmem:[%s1119 + $0x148] sm:$0xff] %v1202
      %v1204 = vld [vmem:[%s1118 + $0x150] sm:$0xff]
      %1205 = vst [vmem:[%s1119 + $0x150] sm:$0xff] %v1204
      %v1206 = vld [vmem:[%s1118 + $0x158] sm:$0xff]
      %1207 = vst [vmem:[%s1119 + $0x158] sm:$0xff] %v1206
      %v1208 = vld [vmem:[%s1118 + $0x160] sm:$0xff]
      %1209 = vst [vmem:[%s1119 + $0x160] sm:$0xff] %v1208
      %v1210 = vld [vmem:[%s1118 + $0x168] sm:$0xff]
      %1211 = vst [vmem:[%s1119 + $0x168] sm:$0xff] %v1210
      %v1212 = vld [vmem:[%s1118 + $0x170] sm:$0xff]
      %1213 = vst [vmem:[%s1119 + $0x170] sm:$0xff] %v1212
      %v1214 = vld [vmem:[%s1118 + $0x178] sm:$0xff]
      %1215 = vst [vmem:[%s1119 + $0x178] sm:$0xff] %v1214
      %v1216 = vld [vmem:[%s1118 + $0x180] sm:$0xff]
      %1217 = vst [vmem:[%s1119 + $0x180] sm:$0xff] %v1216
      %v1218 = vld [vmem:[%s1118 + $0x188] sm:$0xff]
      %1219 = vst [vmem:[%s1119 + $0x188] sm:$0xff] %v1218
      %v1220 = vld [vmem:[%s1118 + $0x190] sm:$0xff]
      %1221 = vst [vmem:[%s1119 + $0x190] sm:$0xff] %v1220
      %v1222 = vld [vmem:[%s1118 + $0x198] sm:$0xff]
      %1223 = vst [vmem:[%s1119 + $0x198] sm:$0xff] %v1222
      %v1224 = vld [vmem:[%s1118 + $0x1a0] sm:$0xff]
      %1225 = vst [vmem:[%s1119 + $0x1a0] sm:$0xff] %v1224
      %v1226 = vld [vmem:[%s1118 + $0x1a8] sm:$0xff]
      %1227 = vst [vmem:[%s1119 + $0x1a8] sm:$0xff] %v1226
      %v1228 = vld [vmem:[%s1118 + $0x1b0] sm:$0xff]
      %1229 = vst [vmem:[%s1119 + $0x1b0] sm:$0xff] %v1228
      %v1230 = vld [vmem:[%s1118 + $0x1b8] sm:$0xff]
      %1231 = vst [vmem:[%s1119 + $0x1b8] sm:$0xff] %v1230
      %v1232 = vld [vmem:[%s1118 + $0x1c0] sm:$0xff]
      %1233 = vst [vmem:[%s1119 + $0x1c0] sm:$0xff] %v1232
      %v1234 = vld [vmem:[%s1118 + $0x1c8] sm:$0xff]
      %1235 = vst [vmem:[%s1119 + $0x1c8] sm:$0xff] %v1234
      %v1236 = vld [vmem:[%s1118 + $0x1d0] sm:$0xff]
      %1237 = vst [vmem:[%s1119 + $0x1d0] sm:$0xff] %v1236
      %v1238 = vld [vmem:[%s1118 + $0x1d8] sm:$0xff]
      %1239 = vst [vmem:[%s1119 + $0x1d8] sm:$0xff] %v1238
      %v1240 = vld [vmem:[%s1118 + $0x1e0] sm:$0xff]
      %1241 = vst [vmem:[%s1119 + $0x1e0] sm:$0xff] %v1240
      %v1242 = vld [vmem:[%s1118 + $0x1e8] sm:$0xff]
      %1243 = vst [vmem:[%s1119 + $0x1e8] sm:$0xff] %v1242
      %v1244 = vld [vmem:[%s1118 + $0x1f0] sm:$0xff]
      %1245 = vst [vmem:[%s1119 + $0x1f0] sm:$0xff] %v1244
      %v1246 = vld [vmem:[%s1118 + $0x1f8] sm:$0xff]
      %1247 = vst [vmem:[%s1119 + $0x1f8] sm:$0xff] %v1246
      %v1248 = vld [vmem:[%s1118 + $0x200] sm:$0xff]
      %1249 = vst [vmem:[%s1119 + $0x200] sm:$0xff] %v1248
      %v1250 = vld [vmem:[%s1118 + $0x208] sm:$0xff]
      %1251 = vst [vmem:[%s1119 + $0x208] sm:$0xff] %v1250
      %v1252 = vld [vmem:[%s1118 + $0x210] sm:$0xff]
      %1253 = vst [vmem:[%s1119 + $0x210] sm:$0xff] %v1252
      %v1254 = vld [vmem:[%s1118 + $0x218] sm:$0xff]
      %1255 = vst [vmem:[%s1119 + $0x218] sm:$0xff] %v1254
      %v1256 = vld [vmem:[%s1118 + $0x220] sm:$0xff]
      %1257 = vst [vmem:[%s1119 + $0x220] sm:$0xff] %v1256
      %v1258 = vld [vmem:[%s1118 + $0x228] sm:$0xff]
      %1259 = vst [vmem:[%s1119 + $0x228] sm:$0xff] %v1258
      %v1260 = vld [vmem:[%s1118 + $0x230] sm:$0xff]
      %1261 = vst [vmem:[%s1119 + $0x230] sm:$0xff] %v1260
      %v1262 = vld [vmem:[%s1118 + $0x238] sm:$0xff]
      %1263 = vst [vmem:[%s1119 + $0x238] sm:$0xff] %v1262
      %v1264 = vld [vmem:[%s1118 + $0x240] sm:$0xff]
      %1265 = vst [vmem:[%s1119 + $0x240] sm:$0xff] %v1264
      %v1266 = vld [vmem:[%s1118 + $0x248] sm:$0xff]
      %1267 = vst [vmem:[%s1119 + $0x248] sm:$0xff] %v1266
      %v1268 = vld [vmem:[%s1118 + $0x250] sm:$0xff]
      %1269 = vst [vmem:[%s1119 + $0x250] sm:$0xff] %v1268
      %v1270 = vld [vmem:[%s1118 + $0x258] sm:$0xff]
      %1271 = vst [vmem:[%s1119 + $0x258] sm:$0xff] %v1270
      %v1272 = vld [vmem:[%s1118 + $0x260] sm:$0xff]
      %1273 = vst [vmem:[%s1119 + $0x260] sm:$0xff] %v1272
      %v1274 = vld [vmem:[%s1118 + $0x268] sm:$0xff]
      %1275 = vst [vmem:[%s1119 + $0x268] sm:$0xff] %v1274
      %v1276 = vld [vmem:[%s1118 + $0x270] sm:$0xff]
      %1277 = vst [vmem:[%s1119 + $0x270] sm:$0xff] %v1276
      %v1278 = vld [vmem:[%s1118 + $0x278] sm:$0xff]
      %1279 = vst [vmem:[%s1119 + $0x278] sm:$0xff] %v1278
      %v1280 = vld [vmem:[%s1118 + $0x280] sm:$0xff]
      %1281 = vst [vmem:[%s1119 + $0x280] sm:$0xff] %v1280
      %v1282 = vld [vmem:[%s1118 + $0x288] sm:$0xff]
      %1283 = vst [vmem:[%s1119 + $0x288] sm:$0xff] %v1282
      %v1284 = vld [vmem:[%s1118 + $0x290] sm:$0xff]
      %1285 = vst [vmem:[%s1119 + $0x290] sm:$0xff] %v1284
      %v1286 = vld [vmem:[%s1118 + $0x298] sm:$0xff]
      %1287 = vst [vmem:[%s1119 + $0x298] sm:$0xff] %v1286
      %v1288 = vld [vmem:[%s1118 + $0x2a0] sm:$0xff]
      %1289 = vst [vmem:[%s1119 + $0x2a0] sm:$0xff] %v1288
      %v1290 = vld [vmem:[%s1118 + $0x2a8] sm:$0xff]
      %1291 = vst [vmem:[%s1119 + $0x2a8] sm:$0xff] %v1290
      %v1292 = vld [vmem:[%s1118 + $0x2b0] sm:$0xff]
      %1293 = vst [vmem:[%s1119 + $0x2b0] sm:$0xff] %v1292
      %v1294 = vld [vmem:[%s1118 + $0x2b8] sm:$0xff]
      %1295 = vst [vmem:[%s1119 + $0x2b8] sm:$0xff] %v1294
      %v1296 = vld [vmem:[%s1118 + $0x2c0] sm:$0xff]
      %1297 = vst [vmem:[%s1119 + $0x2c0] sm:$0xff] %v1296
      %v1298 = vld [vmem:[%s1118 + $0x2c8] sm:$0xff]
      %1299 = vst [vmem:[%s1119 + $0x2c8] sm:$0xff] %v1298
      %v1300 = vld [vmem:[%s1118 + $0x2d0] sm:$0xff]
      %1301 = vst [vmem:[%s1119 + $0x2d0] sm:$0xff] %v1300
      %v1302 = vld [vmem:[%s1118 + $0x2d8] sm:$0xff]
      %1303 = vst [vmem:[%s1119 + $0x2d8] sm:$0xff] %v1302
      %v1304 = vld [vmem:[%s1118 + $0x2e0] sm:$0xff]
      %1305 = vst [vmem:[%s1119 + $0x2e0] sm:$0xff] %v1304
      %v1306 = vld [vmem:[%s1118 + $0x2e8] sm:$0xff]
      %1307 = vst [vmem:[%s1119 + $0x2e8] sm:$0xff] %v1306
      %v1308 = vld [vmem:[%s1118 + $0x2f0] sm:$0xff]
      %1309 = vst [vmem:[%s1119 + $0x2f0] sm:$0xff] %v1308
      %v1310 = vld [vmem:[%s1118 + $0x2f8] sm:$0xff]
      %1311 = vst [vmem:[%s1119 + $0x2f8] sm:$0xff] %v1310
      %v1312 = vld [vmem:[%s1118 + $0x300] sm:$0xff]
      %1313 = vst [vmem:[%s1119 + $0x300] sm:$0xff] %v1312
      %v1314 = vld [vmem:[%s1118 + $0x308] sm:$0xff]
      %1315 = vst [vmem:[%s1119 + $0x308] sm:$0xff] %v1314
      %v1316 = vld [vmem:[%s1118 + $0x310] sm:$0xff]
      %1317 = vst [vmem:[%s1119 + $0x310] sm:$0xff] %v1316
      %v1318 = vld [vmem:[%s1118 + $0x318] sm:$0xff]
      %1319 = vst [vmem:[%s1119 + $0x318] sm:$0xff] %v1318
      %v1320 = vld [vmem:[%s1118 + $0x320] sm:$0xff]
      %1321 = vst [vmem:[%s1119 + $0x320] sm:$0xff] %v1320
      %v1322 = vld [vmem:[%s1118 + $0x328] sm:$0xff]
      %1323 = vst [vmem:[%s1119 + $0x328] sm:$0xff] %v1322
      %v1324 = vld [vmem:[%s1118 + $0x330] sm:$0xff]
      %1325 = vst [vmem:[%s1119 + $0x330] sm:$0xff] %v1324
      %v1326 = vld [vmem:[%s1118 + $0x338] sm:$0xff]
      %1327 = vst [vmem:[%s1119 + $0x338] sm:$0xff] %v1326
      %v1328 = vld [vmem:[%s1118 + $0x340] sm:$0xff]
      %1329 = vst [vmem:[%s1119 + $0x340] sm:$0xff] %v1328
      %v1330 = vld [vmem:[%s1118 + $0x348] sm:$0xff]
      %1331 = vst [vmem:[%s1119 + $0x348] sm:$0xff] %v1330
      %v1332 = vld [vmem:[%s1118 + $0x350] sm:$0xff]
      %1333 = vst [vmem:[%s1119 + $0x350] sm:$0xff] %v1332
      %v1334 = vld [vmem:[%s1118 + $0x358] sm:$0xff]
      %1335 = vst [vmem:[%s1119 + $0x358] sm:$0xff] %v1334
      %v1336 = vld [vmem:[%s1118 + $0x360] sm:$0xff]
      %1337 = vst [vmem:[%s1119 + $0x360] sm:$0xff] %v1336
      %v1338 = vld [vmem:[%s1118 + $0x368] sm:$0xff]
      %1339 = vst [vmem:[%s1119 + $0x368] sm:$0xff] %v1338
      %v1340 = vld [vmem:[%s1118 + $0x370] sm:$0xff]
      %1341 = vst [vmem:[%s1119 + $0x370] sm:$0xff] %v1340
      %v1342 = vld [vmem:[%s1118 + $0x378] sm:$0xff]
      %1343 = vst [vmem:[%s1119 + $0x378] sm:$0xff] %v1342
      %v1344 = vld [vmem:[%s1118 + $0x380] sm:$0xff]
      %1345 = vst [vmem:[%s1119 + $0x380] sm:$0xff] %v1344
      %v1346 = vld [vmem:[%s1118 + $0x388] sm:$0xff]
      %1347 = vst [vmem:[%s1119 + $0x388] sm:$0xff] %v1346
      %v1348 = vld [vmem:[%s1118 + $0x390] sm:$0xff]
      %1349 = vst [vmem:[%s1119 + $0x390] sm:$0xff] %v1348
      %v1350 = vld [vmem:[%s1118 + $0x398] sm:$0xff]
      %1351 = vst [vmem:[%s1119 + $0x398] sm:$0xff] %v1350
      %v1352 = vld [vmem:[%s1118 + $0x3a0] sm:$0xff]
      %1353 = vst [vmem:[%s1119 + $0x3a0] sm:$0xff] %v1352
      %v1354 = vld [vmem:[%s1118 + $0x3a8] sm:$0xff]
      %1355 = vst [vmem:[%s1119 + $0x3a8] sm:$0xff] %v1354
      %v1356 = vld [vmem:[%s1118 + $0x3b0] sm:$0xff]
      %1357 = vst [vmem:[%s1119 + $0x3b0] sm:$0xff] %v1356
      %v1358 = vld [vmem:[%s1118 + $0x3b8] sm:$0xff]
      %1359 = vst [vmem:[%s1119 + $0x3b8] sm:$0xff] %v1358
      %v1360 = vld [vmem:[%s1118 + $0x3c0] sm:$0xff]
      %1361 = vst [vmem:[%s1119 + $0x3c0] sm:$0xff] %v1360
      %v1362 = vld [vmem:[%s1118 + $0x3c8] sm:$0xff]
      %1363 = vst [vmem:[%s1119 + $0x3c8] sm:$0xff] %v1362
      %v1364 = vld [vmem:[%s1118 + $0x3d0] sm:$0xff]
      %1365 = vst [vmem:[%s1119 + $0x3d0] sm:$0xff] %v1364
      %v1366 = vld [vmem:[%s1118 + $0x3d8] sm:$0xff]
      %1367 = vst [vmem:[%s1119 + $0x3d8] sm:$0xff] %v1366
      %v1368 = vld [vmem:[%s1118 + $0x3e0] sm:$0xff]
      %1369 = vst [vmem:[%s1119 + $0x3e0] sm:$0xff] %v1368
      %v1370 = vld [vmem:[%s1118 + $0x3e8] sm:$0xff]
      %1371 = vst [vmem:[%s1119 + $0x3e8] sm:$0xff] %v1370
      %v1372 = vld [vmem:[%s1118 + $0x3f0] sm:$0xff]
      %1373 = vst [vmem:[%s1119 + $0x3f0] sm:$0xff] %v1372
      %v1374 = vld [vmem:[%s1118 + $0x3f8] sm:$0xff]
      %1375 = vst [vmem:[%s1119 + $0x3f8] sm:$0xff] %v1374
      %v1376 = vld [vmem:[%s1118 + $0x400] sm:$0xff]
      %1377 = vst [vmem:[%s1119 + $0x400] sm:$0xff] %v1376
      %v1378 = vld [vmem:[%s1118 + $0x408] sm:$0xff]
      %1379 = vst [vmem:[%s1119 + $0x408] sm:$0xff] %v1378
      %v1380 = vld [vmem:[%s1118 + $0x410] sm:$0xff]
      %1381 = vst [vmem:[%s1119 + $0x410] sm:$0xff] %v1380
      %v1382 = vld [vmem:[%s1118 + $0x418] sm:$0xff]
      %1383 = vst [vmem:[%s1119 + $0x418] sm:$0xff] %v1382
      %v1384 = vld [vmem:[%s1118 + $0x420] sm:$0xff]
      %1385 = vst [vmem:[%s1119 + $0x420] sm:$0xff] %v1384
      %v1386 = vld [vmem:[%s1118 + $0x428] sm:$0xff]
      %1387 = vst [vmem:[%s1119 + $0x428] sm:$0xff] %v1386
      %v1388 = vld [vmem:[%s1118 + $0x430] sm:$0xff]
      %1389 = vst [vmem:[%s1119 + $0x430] sm:$0xff] %v1388
      %v1390 = vld [vmem:[%s1118 + $0x438] sm:$0xff]
      %1391 = vst [vmem:[%s1119 + $0x438] sm:$0xff] %v1390
      %v1392 = vld [vmem:[%s1118 + $0x440] sm:$0xff]
      %1393 = vst [vmem:[%s1119 + $0x440] sm:$0xff] %v1392
      %v1394 = vld [vmem:[%s1118 + $0x448] sm:$0xff]
      %1395 = vst [vmem:[%s1119 + $0x448] sm:$0xff] %v1394
      %v1396 = vld [vmem:[%s1118 + $0x450] sm:$0xff]
      %1397 = vst [vmem:[%s1119 + $0x450] sm:$0xff] %v1396
      %v1398 = vld [vmem:[%s1118 + $0x458] sm:$0xff]
      %1399 = vst [vmem:[%s1119 + $0x458] sm:$0xff] %v1398
      %v1400 = vld [vmem:[%s1118 + $0x460] sm:$0xff]
      %1401 = vst [vmem:[%s1119 + $0x460] sm:$0xff] %v1400
      %v1402 = vld [vmem:[%s1118 + $0x468] sm:$0xff]
      %1403 = vst [vmem:[%s1119 + $0x468] sm:$0xff] %v1402
      %v1404 = vld [vmem:[%s1118 + $0x470] sm:$0xff]
      %1405 = vst [vmem:[%s1119 + $0x470] sm:$0xff] %v1404
      %v1406 = vld [vmem:[%s1118 + $0x478] sm:$0xff]
      %1407 = vst [vmem:[%s1119 + $0x478] sm:$0xff] %v1406
      %v1408 = vld [vmem:[%s1118 + $0x480] sm:$0xff]
      %1409 = vst [vmem:[%s1119 + $0x480] sm:$0xff] %v1408
      %v1410 = vld [vmem:[%s1118 + $0x488] sm:$0xff]
      %1411 = vst [vmem:[%s1119 + $0x488] sm:$0xff] %v1410
      %v1412 = vld [vmem:[%s1118 + $0x490] sm:$0xff]
      %1413 = vst [vmem:[%s1119 + $0x490] sm:$0xff] %v1412
      %v1414 = vld [vmem:[%s1118 + $0x498] sm:$0xff]
      %1415 = vst [vmem:[%s1119 + $0x498] sm:$0xff] %v1414
      %v1416 = vld [vmem:[%s1118 + $0x4a0] sm:$0xff]
      %1417 = vst [vmem:[%s1119 + $0x4a0] sm:$0xff] %v1416
      %v1418 = vld [vmem:[%s1118 + $0x4a8] sm:$0xff]
      %1419 = vst [vmem:[%s1119 + $0x4a8] sm:$0xff] %v1418
      %v1420 = vld [vmem:[%s1118 + $0x4b0] sm:$0xff]
      %1421 = vst [vmem:[%s1119 + $0x4b0] sm:$0xff] %v1420
      %v1422 = vld [vmem:[%s1118 + $0x4b8] sm:$0xff]
      %1423 = vst [vmem:[%s1119 + $0x4b8] sm:$0xff] %v1422
      %v1424 = vld [vmem:[%s1118 + $0x4c0] sm:$0xff]
      %1425 = vst [vmem:[%s1119 + $0x4c0] sm:$0xff] %v1424
      %v1426 = vld [vmem:[%s1118 + $0x4c8] sm:$0xff]
      %1427 = vst [vmem:[%s1119 + $0x4c8] sm:$0xff] %v1426
      %v1428 = vld [vmem:[%s1118 + $0x4d0] sm:$0xff]
      %1429 = vst [vmem:[%s1119 + $0x4d0] sm:$0xff] %v1428
      %v1430 = vld [vmem:[%s1118 + $0x4d8] sm:$0xff]
      %1431 = vst [vmem:[%s1119 + $0x4d8] sm:$0xff] %v1430
      %v1432 = vld [vmem:[%s1118 + $0x4e0] sm:$0xff]
      %1433 = vst [vmem:[%s1119 + $0x4e0] sm:$0xff] %v1432
      %v1434 = vld [vmem:[%s1118 + $0x4e8] sm:$0xff]
      %1435 = vst [vmem:[%s1119 + $0x4e8] sm:$0xff] %v1434
      %v1436 = vld [vmem:[%s1118 + $0x4f0] sm:$0xff]
      %1437 = vst [vmem:[%s1119 + $0x4f0] sm:$0xff] %v1436
      %v1438 = vld [vmem:[%s1118 + $0x4f8] sm:$0xff]
      %1439 = vst [vmem:[%s1119 + $0x4f8] sm:$0xff] %v1438
      %v1440 = vld [vmem:[%s1118 + $0x500] sm:$0xff]
      %1441 = vst [vmem:[%s1119 + $0x500] sm:$0xff] %v1440
      %v1442 = vld [vmem:[%s1118 + $0x508] sm:$0xff]
      %1443 = vst [vmem:[%s1119 + $0x508] sm:$0xff] %v1442
      %v1444 = vld [vmem:[%s1118 + $0x510] sm:$0xff]
      %1445 = vst [vmem:[%s1119 + $0x510] sm:$0xff] %v1444
      %v1446 = vld [vmem:[%s1118 + $0x518] sm:$0xff]
      %1447 = vst [vmem:[%s1119 + $0x518] sm:$0xff] %v1446
      %v1448 = vld [vmem:[%s1118 + $0x520] sm:$0xff]
      %1449 = vst [vmem:[%s1119 + $0x520] sm:$0xff] %v1448
      %v1450 = vld [vmem:[%s1118 + $0x528] sm:$0xff]
      %1451 = vst [vmem:[%s1119 + $0x528] sm:$0xff] %v1450
      %v1452 = vld [vmem:[%s1118 + $0x530] sm:$0xff]
      %1453 = vst [vmem:[%s1119 + $0x530] sm:$0xff] %v1452
      %v1454 = vld [vmem:[%s1118 + $0x538] sm:$0xff]
      %1455 = vst [vmem:[%s1119 + $0x538] sm:$0xff] %v1454
      %v1456 = vld [vmem:[%s1118 + $0x540] sm:$0xff]
      %1457 = vst [vmem:[%s1119 + $0x540] sm:$0xff] %v1456
      %v1458 = vld [vmem:[%s1118 + $0x548] sm:$0xff]
      %1459 = vst [vmem:[%s1119 + $0x548] sm:$0xff] %v1458
      %v1460 = vld [vmem:[%s1118 + $0x550] sm:$0xff]
      %1461 = vst [vmem:[%s1119 + $0x550] sm:$0xff] %v1460
      %v1462 = vld [vmem:[%s1118 + $0x558] sm:$0xff]
      %1463 = vst [vmem:[%s1119 + $0x558] sm:$0xff] %v1462
      %v1464 = vld [vmem:[%s1118 + $0x560] sm:$0xff]
      %1465 = vst [vmem:[%s1119 + $0x560] sm:$0xff] %v1464
      %v1466 = vld [vmem:[%s1118 + $0x568] sm:$0xff]
      %1467 = vst [vmem:[%s1119 + $0x568] sm:$0xff] %v1466
      %v1468 = vld [vmem:[%s1118 + $0x570] sm:$0xff]
      %1469 = vst [vmem:[%s1119 + $0x570] sm:$0xff] %v1468
      %v1470 = vld [vmem:[%s1118 + $0x578] sm:$0xff]
      %1471 = vst [vmem:[%s1119 + $0x578] sm:$0xff] %v1470
      %v1472 = vld [vmem:[%s1118 + $0x580] sm:$0xff]
      %1473 = vst [vmem:[%s1119 + $0x580] sm:$0xff] %v1472
      %v1474 = vld [vmem:[%s1118 + $0x588] sm:$0xff]
      %1475 = vst [vmem:[%s1119 + $0x588] sm:$0xff] %v1474
      %v1476 = vld [vmem:[%s1118 + $0x590] sm:$0xff]
      %1477 = vst [vmem:[%s1119 + $0x590] sm:$0xff] %v1476
      %v1478 = vld [vmem:[%s1118 + $0x598] sm:$0xff]
      %1479 = vst [vmem:[%s1119 + $0x598] sm:$0xff] %v1478
      %v1480 = vld [vmem:[%s1118 + $0x5a0] sm:$0xff]
      %1481 = vst [vmem:[%s1119 + $0x5a0] sm:$0xff] %v1480
      %v1482 = vld [vmem:[%s1118 + $0x5a8] sm:$0xff]
      %1483 = vst [vmem:[%s1119 + $0x5a8] sm:$0xff] %v1482
      %v1484 = vld [vmem:[%s1118 + $0x5b0] sm:$0xff]
      %1485 = vst [vmem:[%s1119 + $0x5b0] sm:$0xff] %v1484
      %v1486 = vld [vmem:[%s1118 + $0x5b8] sm:$0xff]
      %1487 = vst [vmem:[%s1119 + $0x5b8] sm:$0xff] %v1486
      %v1488 = vld [vmem:[%s1118 + $0x5c0] sm:$0xff]
      %1489 = vst [vmem:[%s1119 + $0x5c0] sm:$0xff] %v1488
      %v1490 = vld [vmem:[%s1118 + $0x5c8] sm:$0xff]
      %1491 = vst [vmem:[%s1119 + $0x5c8] sm:$0xff] %v1490
      %v1492 = vld [vmem:[%s1118 + $0x5d0] sm:$0xff]
      %1493 = vst [vmem:[%s1119 + $0x5d0] sm:$0xff] %v1492
      %v1494 = vld [vmem:[%s1118 + $0x5d8] sm:$0xff]
      %1495 = vst [vmem:[%s1119 + $0x5d8] sm:$0xff] %v1494
      %v1496 = vld [vmem:[%s1118 + $0x5e0] sm:$0xff]
      %1497 = vst [vmem:[%s1119 + $0x5e0] sm:$0xff] %v1496
      %v1498 = vld [vmem:[%s1118 + $0x5e8] sm:$0xff]
      %1499 = vst [vmem:[%s1119 + $0x5e8] sm:$0xff] %v1498
      %v1500 = vld [vmem:[%s1118 + $0x5f0] sm:$0xff]
      %1501 = vst [vmem:[%s1119 + $0x5f0] sm:$0xff] %v1500
      %v1502 = vld [vmem:[%s1118 + $0x5f8] sm:$0xff]
      %1503 = vst [vmem:[%s1119 + $0x5f8] sm:$0xff] %v1502
      %v1504 = vld [vmem:[%s1118 + $0x600] sm:$0xff]
      %1505 = vst [vmem:[%s1119 + $0x600] sm:$0xff] %v1504
      %v1506 = vld [vmem:[%s1118 + $0x608] sm:$0xff]
      %1507 = vst [vmem:[%s1119 + $0x608] sm:$0xff] %v1506
      %v1508 = vld [vmem:[%s1118 + $0x610] sm:$0xff]
      %1509 = vst [vmem:[%s1119 + $0x610] sm:$0xff] %v1508
      %v1510 = vld [vmem:[%s1118 + $0x618] sm:$0xff]
      %1511 = vst [vmem:[%s1119 + $0x618] sm:$0xff] %v1510
      %v1512 = vld [vmem:[%s1118 + $0x620] sm:$0xff]
      %1513 = vst [vmem:[%s1119 + $0x620] sm:$0xff] %v1512
      %v1514 = vld [vmem:[%s1118 + $0x628] sm:$0xff]
      %1515 = vst [vmem:[%s1119 + $0x628] sm:$0xff] %v1514
      %v1516 = vld [vmem:[%s1118 + $0x630] sm:$0xff]
      %1517 = vst [vmem:[%s1119 + $0x630] sm:$0xff] %v1516
      %v1518 = vld [vmem:[%s1118 + $0x638] sm:$0xff]
      %1519 = vst [vmem:[%s1119 + $0x638] sm:$0xff] %v1518
      %v1520 = vld [vmem:[%s1118 + $0x640] sm:$0xff]
      %1521 = vst [vmem:[%s1119 + $0x640] sm:$0xff] %v1520
      %v1522 = vld [vmem:[%s1118 + $0x648] sm:$0xff]
      %1523 = vst [vmem:[%s1119 + $0x648] sm:$0xff] %v1522
      %v1524 = vld [vmem:[%s1118 + $0x650] sm:$0xff]
      %1525 = vst [vmem:[%s1119 + $0x650] sm:$0xff] %v1524
      %v1526 = vld [vmem:[%s1118 + $0x658] sm:$0xff]
      %1527 = vst [vmem:[%s1119 + $0x658] sm:$0xff] %v1526
      %v1528 = vld [vmem:[%s1118 + $0x660] sm:$0xff]
      %1529 = vst [vmem:[%s1119 + $0x660] sm:$0xff] %v1528
      %v1530 = vld [vmem:[%s1118 + $0x668] sm:$0xff]
      %1531 = vst [vmem:[%s1119 + $0x668] sm:$0xff] %v1530
      %v1532 = vld [vmem:[%s1118 + $0x670] sm:$0xff]
      %1533 = vst [vmem:[%s1119 + $0x670] sm:$0xff] %v1532
      %v1534 = vld [vmem:[%s1118 + $0x678] sm:$0xff]
      %1535 = vst [vmem:[%s1119 + $0x678] sm:$0xff] %v1534
      %v1536 = vld [vmem:[%s1118 + $0x680] sm:$0xff]
      %1537 = vst [vmem:[%s1119 + $0x680] sm:$0xff] %v1536
      %v1538 = vld [vmem:[%s1118 + $0x688] sm:$0xff]
      %1539 = vst [vmem:[%s1119 + $0x688] sm:$0xff] %v1538
      %v1540 = vld [vmem:[%s1118 + $0x690] sm:$0xff]
      %1541 = vst [vmem:[%s1119 + $0x690] sm:$0xff] %v1540
      %v1542 = vld [vmem:[%s1118 + $0x698] sm:$0xff]
      %1543 = vst [vmem:[%s1119 + $0x698] sm:$0xff] %v1542
      %v1544 = vld [vmem:[%s1118 + $0x6a0] sm:$0xff]
      %1545 = vst [vmem:[%s1119 + $0x6a0] sm:$0xff] %v1544
      %v1546 = vld [vmem:[%s1118 + $0x6a8] sm:$0xff]
      %1547 = vst [vmem:[%s1119 + $0x6a8] sm:$0xff] %v1546
      %v1548 = vld [vmem:[%s1118 + $0x6b0] sm:$0xff]
      %1549 = vst [vmem:[%s1119 + $0x6b0] sm:$0xff] %v1548
      %v1550 = vld [vmem:[%s1118 + $0x6b8] sm:$0xff]
      %1551 = vst [vmem:[%s1119 + $0x6b8] sm:$0xff] %v1550
      %v1552 = vld [vmem:[%s1118 + $0x6c0] sm:$0xff]
      %1553 = vst [vmem:[%s1119 + $0x6c0] sm:$0xff] %v1552
      %v1554 = vld [vmem:[%s1118 + $0x6c8] sm:$0xff]
      %1555 = vst [vmem:[%s1119 + $0x6c8] sm:$0xff] %v1554
      %v1556 = vld [vmem:[%s1118 + $0x6d0] sm:$0xff]
      %1557 = vst [vmem:[%s1119 + $0x6d0] sm:$0xff] %v1556
      %v1558 = vld [vmem:[%s1118 + $0x6d8] sm:$0xff]
      %1559 = vst [vmem:[%s1119 + $0x6d8] sm:$0xff] %v1558
      %v1560 = vld [vmem:[%s1118 + $0x6e0] sm:$0xff]
      %1561 = vst [vmem:[%s1119 + $0x6e0] sm:$0xff] %v1560
      %v1562 = vld [vmem:[%s1118 + $0x6e8] sm:$0xff]
      %1563 = vst [vmem:[%s1119 + $0x6e8] sm:$0xff] %v1562
      %v1564 = vld [vmem:[%s1118 + $0x6f0] sm:$0xff]
      %1565 = vst [vmem:[%s1119 + $0x6f0] sm:$0xff] %v1564
      %v1566 = vld [vmem:[%s1118 + $0x6f8] sm:$0xff]
      %1567 = vst [vmem:[%s1119 + $0x6f8] sm:$0xff] %v1566
      %v1568 = vld [vmem:[%s1118 + $0x700] sm:$0xff]
      %1569 = vst [vmem:[%s1119 + $0x700] sm:$0xff] %v1568
      %v1570 = vld [vmem:[%s1118 + $0x708] sm:$0xff]
      %1571 = vst [vmem:[%s1119 + $0x708] sm:$0xff] %v1570
      %v1572 = vld [vmem:[%s1118 + $0x710] sm:$0xff]
      %1573 = vst [vmem:[%s1119 + $0x710] sm:$0xff] %v1572
      %v1574 = vld [vmem:[%s1118 + $0x718] sm:$0xff]
      %1575 = vst [vmem:[%s1119 + $0x718] sm:$0xff] %v1574
      %v1576 = vld [vmem:[%s1118 + $0x720] sm:$0xff]
      %1577 = vst [vmem:[%s1119 + $0x720] sm:$0xff] %v1576
      %v1578 = vld [vmem:[%s1118 + $0x728] sm:$0xff]
      %1579 = vst [vmem:[%s1119 + $0x728] sm:$0xff] %v1578
      %v1580 = vld [vmem:[%s1118 + $0x730] sm:$0xff]
      %1581 = vst [vmem:[%s1119 + $0x730] sm:$0xff] %v1580
      %v1582 = vld [vmem:[%s1118 + $0x738] sm:$0xff]
      %1583 = vst [vmem:[%s1119 + $0x738] sm:$0xff] %v1582
      %v1584 = vld [vmem:[%s1118 + $0x740] sm:$0xff]
      %1585 = vst [vmem:[%s1119 + $0x740] sm:$0xff] %v1584
      %v1586 = vld [vmem:[%s1118 + $0x748] sm:$0xff]
      %1587 = vst [vmem:[%s1119 + $0x748] sm:$0xff] %v1586
      %v1588 = vld [vmem:[%s1118 + $0x750] sm:$0xff]
      %1589 = vst [vmem:[%s1119 + $0x750] sm:$0xff] %v1588
      %v1590 = vld [vmem:[%s1118 + $0x758] sm:$0xff]
      %1591 = vst [vmem:[%s1119 + $0x758] sm:$0xff] %v1590
      %v1592 = vld [vmem:[%s1118 + $0x760] sm:$0xff]
      %1593 = vst [vmem:[%s1119 + $0x760] sm:$0xff] %v1592
      %v1594 = vld [vmem:[%s1118 + $0x768] sm:$0xff]
      %1595 = vst [vmem:[%s1119 + $0x768] sm:$0xff] %v1594
      %v1596 = vld [vmem:[%s1118 + $0x770] sm:$0xff]
      %1597 = vst [vmem:[%s1119 + $0x770] sm:$0xff] %v1596
      %v1598 = vld [vmem:[%s1118 + $0x778] sm:$0xff]
      %1599 = vst [vmem:[%s1119 + $0x778] sm:$0xff] %v1598
      %v1600 = vld [vmem:[%s1118 + $0x780] sm:$0xff]
      %1601 = vst [vmem:[%s1119 + $0x780] sm:$0xff] %v1600
      %v1602 = vld [vmem:[%s1118 + $0x788] sm:$0xff]
      %1603 = vst [vmem:[%s1119 + $0x788] sm:$0xff] %v1602
      %v1604 = vld [vmem:[%s1118 + $0x790] sm:$0xff]
      %1605 = vst [vmem:[%s1119 + $0x790] sm:$0xff] %v1604
      %v1606 = vld [vmem:[%s1118 + $0x798] sm:$0xff]
      %1607 = vst [vmem:[%s1119 + $0x798] sm:$0xff] %v1606
      %v1608 = vld [vmem:[%s1118 + $0x7a0] sm:$0xff]
      %1609 = vst [vmem:[%s1119 + $0x7a0] sm:$0xff] %v1608
      %v1610 = vld [vmem:[%s1118 + $0x7a8] sm:$0xff]
      %1611 = vst [vmem:[%s1119 + $0x7a8] sm:$0xff] %v1610
      %v1612 = vld [vmem:[%s1118 + $0x7b0] sm:$0xff]
      %1613 = vst [vmem:[%s1119 + $0x7b0] sm:$0xff] %v1612
      %v1614 = vld [vmem:[%s1118 + $0x7b8] sm:$0xff]
      %1615 = vst [vmem:[%s1119 + $0x7b8] sm:$0xff] %v1614
      %v1616 = vld [vmem:[%s1118 + $0x7c0] sm:$0xff]
      %1617 = vst [vmem:[%s1119 + $0x7c0] sm:$0xff] %v1616
      %v1618 = vld [vmem:[%s1118 + $0x7c8] sm:$0xff]
      %1619 = vst [vmem:[%s1119 + $0x7c8] sm:$0xff] %v1618
      %v1620 = vld [vmem:[%s1118 + $0x7d0] sm:$0xff]
      %1621 = vst [vmem:[%s1119 + $0x7d0] sm:$0xff] %v1620
      %v1622 = vld [vmem:[%s1118 + $0x7d8] sm:$0xff]
      %1623 = vst [vmem:[%s1119 + $0x7d8] sm:$0xff] %v1622
      %v1624 = vld [vmem:[%s1118 + $0x7e0] sm:$0xff]
      %1625 = vst [vmem:[%s1119 + $0x7e0] sm:$0xff] %v1624
      %v1626 = vld [vmem:[%s1118 + $0x7e8] sm:$0xff]
      %1627 = vst [vmem:[%s1119 + $0x7e8] sm:$0xff] %v1626
      %v1628 = vld [vmem:[%s1118 + $0x7f0] sm:$0xff]
      %1629 = vst [vmem:[%s1119 + $0x7f0] sm:$0xff] %v1628
      %v1630 = vld [vmem:[%s1118 + $0x7f8] sm:$0xff]
      %1631 = vst [vmem:[%s1119 + $0x7f8] sm:$0xff] %v1630
    $region104: #{cnn_encoder_forward.1} parent=98 // loop_footer
      %s1117 = sadd.s32 1, %s1113
    $region105: #{cnn_encoder_forward.1} parent=98 // loop_footer_branch
      %1112 = sbr.rel target = $region101
    $region106: #{cnn_encoder_forward.1} parent=98 // loop_exit
      _
  $region99: #{cnn_encoder_forward.1} parent=0 // pred_fallthru
    _
  // Predicated region
  $region107: #{cnn_encoder_forward.1} parent=0 // pred_check
    _
  $region108: #{cnn_encoder_forward.1} parent=0 // pred_check_branch
    %1633 = sbr.rel target = $region110
  $region109: #{cnn_encoder_forward.1} parent=0 // pred_region
    _
  $region110: #{cnn_encoder_forward.1} parent=0 // pred_fallthru
    _
  // Predicated region
  $region111: #{cnn_encoder_forward.1} parent=0 // pred_check
    _
  $region112: #{cnn_encoder_forward.1} parent=0 // pred_check_branch
    %1636 = sbr.rel (0) target = $region114
  $region113: #{cnn_encoder_forward.1} parent=0 // pred_region
    %1637 = vsyncadd %s1109, 32768
  $region114: #{cnn_encoder_forward.1} parent=0 // pred_fallthru
    _
  %s1638 = scalar_lea.vmem %s13, 6144
  %s1639 = scalar_lea.vmem [#allocation2], 6144
  %s1640 = scalar_lea.sflag [#allocation3], 3
  // Predicated region
  $region115: #{cnn_encoder_forward.1} parent=0 // pred_check
    _
  $region116: #{cnn_encoder_forward.1} parent=0 // pred_check_branch
    %1642 = sbr.rel (0) target = $region118
  $region117: #{cnn_encoder_forward.1} parent=0 // pred_region
    loop: start=0, step=1, limit=1
    $region119: #{cnn_encoder_forward.1} parent=117 // loop_pre_header
      _
    $region120: #{cnn_encoder_forward.1} parent=117 // loop_header
      %s1644 = sphi 0, %s1648
      %p1645 = scmp.ge.s32.totalorder %s1644, 1
      %s1649 = sphi %s1638, %s1638
      %s1650 = sphi %s1639, %s1639
    $region121: #{cnn_encoder_forward.1} parent=117 // loop_header_branch
      %1647 = sbr.rel (%p1645) target = $region125
    $region122: #{cnn_encoder_forward.1} parent=117 // loop_body
      %v1651 = vld [vmem:[%s1649] sm:$0xff]
      %1652 = vst [vmem:[%s1650] sm:$0xff] %v1651
      %v1653 = vld [vmem:[%s1649 + $0x8] sm:$0xff]
      %1654 = vst [vmem:[%s1650 + $0x8] sm:$0xff] %v1653
      %v1655 = vld [vmem:[%s1649 + $0x10] sm:$0xff]
      %1656 = vst [vmem:[%s1650 + $0x10] sm:$0xff] %v1655
      %v1657 = vld [vmem:[%s1649 + $0x18] sm:$0xff]
      %1658 = vst [vmem:[%s1650 + $0x18] sm:$0xff] %v1657
      %v1659 = vld [vmem:[%s1649 + $0x20] sm:$0xff]
      %1660 = vst [vmem:[%s1650 + $0x20] sm:$0xff] %v1659
      %v1661 = vld [vmem:[%s1649 + $0x28] sm:$0xff]
      %1662 = vst [vmem:[%s1650 + $0x28] sm:$0xff] %v1661
      %v1663 = vld [vmem:[%s1649 + $0x30] sm:$0xff]
      %1664 = vst [vmem:[%s1650 + $0x30] sm:$0xff] %v1663
      %v1665 = vld [vmem:[%s1649 + $0x38] sm:$0xff]
      %1666 = vst [vmem:[%s1650 + $0x38] sm:$0xff] %v1665
      %v1667 = vld [vmem:[%s1649 + $0x40] sm:$0xff]
      %1668 = vst [vmem:[%s1650 + $0x40] sm:$0xff] %v1667
      %v1669 = vld [vmem:[%s1649 + $0x48] sm:$0xff]
      %1670 = vst [vmem:[%s1650 + $0x48] sm:$0xff] %v1669
      %v1671 = vld [vmem:[%s1649 + $0x50] sm:$0xff]
      %1672 = vst [vmem:[%s1650 + $0x50] sm:$0xff] %v1671
      %v1673 = vld [vmem:[%s1649 + $0x58] sm:$0xff]
      %1674 = vst [vmem:[%s1650 + $0x58] sm:$0xff] %v1673
      %v1675 = vld [vmem:[%s1649 + $0x60] sm:$0xff]
      %1676 = vst [vmem:[%s1650 + $0x60] sm:$0xff] %v1675
      %v1677 = vld [vmem:[%s1649 + $0x68] sm:$0xff]
      %1678 = vst [vmem:[%s1650 + $0x68] sm:$0xff] %v1677
      %v1679 = vld [vmem:[%s1649 + $0x70] sm:$0xff]
      %1680 = vst [vmem:[%s1650 + $0x70] sm:$0xff] %v1679
      %v1681 = vld [vmem:[%s1649 + $0x78] sm:$0xff]
      %1682 = vst [vmem:[%s1650 + $0x78] sm:$0xff] %v1681
      %v1683 = vld [vmem:[%s1649 + $0x80] sm:$0xff]
      %1684 = vst [vmem:[%s1650 + $0x80] sm:$0xff] %v1683
      %v1685 = vld [vmem:[%s1649 + $0x88] sm:$0xff]
      %1686 = vst [vmem:[%s1650 + $0x88] sm:$0xff] %v1685
      %v1687 = vld [vmem:[%s1649 + $0x90] sm:$0xff]
      %1688 = vst [vmem:[%s1650 + $0x90] sm:$0xff] %v1687
      %v1689 = vld [vmem:[%s1649 + $0x98] sm:$0xff]
      %1690 = vst [vmem:[%s1650 + $0x98] sm:$0xff] %v1689
      %v1691 = vld [vmem:[%s1649 + $0xa0] sm:$0xff]
      %1692 = vst [vmem:[%s1650 + $0xa0] sm:$0xff] %v1691
      %v1693 = vld [vmem:[%s1649 + $0xa8] sm:$0xff]
      %1694 = vst [vmem:[%s1650 + $0xa8] sm:$0xff] %v1693
      %v1695 = vld [vmem:[%s1649 + $0xb0] sm:$0xff]
      %1696 = vst [vmem:[%s1650 + $0xb0] sm:$0xff] %v1695
      %v1697 = vld [vmem:[%s1649 + $0xb8] sm:$0xff]
      %1698 = vst [vmem:[%s1650 + $0xb8] sm:$0xff] %v1697
      %v1699 = vld [vmem:[%s1649 + $0xc0] sm:$0xff]
      %1700 = vst [vmem:[%s1650 + $0xc0] sm:$0xff] %v1699
      %v1701 = vld [vmem:[%s1649 + $0xc8] sm:$0xff]
      %1702 = vst [vmem:[%s1650 + $0xc8] sm:$0xff] %v1701
      %v1703 = vld [vmem:[%s1649 + $0xd0] sm:$0xff]
      %1704 = vst [vmem:[%s1650 + $0xd0] sm:$0xff] %v1703
      %v1705 = vld [vmem:[%s1649 + $0xd8] sm:$0xff]
      %1706 = vst [vmem:[%s1650 + $0xd8] sm:$0xff] %v1705
      %v1707 = vld [vmem:[%s1649 + $0xe0] sm:$0xff]
      %1708 = vst [vmem:[%s1650 + $0xe0] sm:$0xff] %v1707
      %v1709 = vld [vmem:[%s1649 + $0xe8] sm:$0xff]
      %1710 = vst [vmem:[%s1650 + $0xe8] sm:$0xff] %v1709
      %v1711 = vld [vmem:[%s1649 + $0xf0] sm:$0xff]
      %1712 = vst [vmem:[%s1650 + $0xf0] sm:$0xff] %v1711
      %v1713 = vld [vmem:[%s1649 + $0xf8] sm:$0xff]
      %1714 = vst [vmem:[%s1650 + $0xf8] sm:$0xff] %v1713
      %v1715 = vld [vmem:[%s1649 + $0x100] sm:$0xff]
      %1716 = vst [vmem:[%s1650 + $0x100] sm:$0xff] %v1715
      %v1717 = vld [vmem:[%s1649 + $0x108] sm:$0xff]
      %1718 = vst [vmem:[%s1650 + $0x108] sm:$0xff] %v1717
      %v1719 = vld [vmem:[%s1649 + $0x110] sm:$0xff]
      %1720 = vst [vmem:[%s1650 + $0x110] sm:$0xff] %v1719
      %v1721 = vld [vmem:[%s1649 + $0x118] sm:$0xff]
      %1722 = vst [vmem:[%s1650 + $0x118] sm:$0xff] %v1721
      %v1723 = vld [vmem:[%s1649 + $0x120] sm:$0xff]
      %1724 = vst [vmem:[%s1650 + $0x120] sm:$0xff] %v1723
      %v1725 = vld [vmem:[%s1649 + $0x128] sm:$0xff]
      %1726 = vst [vmem:[%s1650 + $0x128] sm:$0xff] %v1725
      %v1727 = vld [vmem:[%s1649 + $0x130] sm:$0xff]
      %1728 = vst [vmem:[%s1650 + $0x130] sm:$0xff] %v1727
      %v1729 = vld [vmem:[%s1649 + $0x138] sm:$0xff]
      %1730 = vst [vmem:[%s1650 + $0x138] sm:$0xff] %v1729
      %v1731 = vld [vmem:[%s1649 + $0x140] sm:$0xff]
      %1732 = vst [vmem:[%s1650 + $0x140] sm:$0xff] %v1731
      %v1733 = vld [vmem:[%s1649 + $0x148] sm:$0xff]
      %1734 = vst [vmem:[%s1650 + $0x148] sm:$0xff] %v1733
      %v1735 = vld [vmem:[%s1649 + $0x150] sm:$0xff]
      %1736 = vst [vmem:[%s1650 + $0x150] sm:$0xff] %v1735
      %v1737 = vld [vmem:[%s1649 + $0x158] sm:$0xff]
      %1738 = vst [vmem:[%s1650 + $0x158] sm:$0xff] %v1737
      %v1739 = vld [vmem:[%s1649 + $0x160] sm:$0xff]
      %1740 = vst [vmem:[%s1650 + $0x160] sm:$0xff] %v1739
      %v1741 = vld [vmem:[%s1649 + $0x168] sm:$0xff]
      %1742 = vst [vmem:[%s1650 + $0x168] sm:$0xff] %v1741
      %v1743 = vld [vmem:[%s1649 + $0x170] sm:$0xff]
      %1744 = vst [vmem:[%s1650 + $0x170] sm:$0xff] %v1743
      %v1745 = vld [vmem:[%s1649 + $0x178] sm:$0xff]
      %1746 = vst [vmem:[%s1650 + $0x178] sm:$0xff] %v1745
      %v1747 = vld [vmem:[%s1649 + $0x180] sm:$0xff]
      %1748 = vst [vmem:[%s1650 + $0x180] sm:$0xff] %v1747
      %v1749 = vld [vmem:[%s1649 + $0x188] sm:$0xff]
      %1750 = vst [vmem:[%s1650 + $0x188] sm:$0xff] %v1749
      %v1751 = vld [vmem:[%s1649 + $0x190] sm:$0xff]
      %1752 = vst [vmem:[%s1650 + $0x190] sm:$0xff] %v1751
      %v1753 = vld [vmem:[%s1649 + $0x198] sm:$0xff]
      %1754 = vst [vmem:[%s1650 + $0x198] sm:$0xff] %v1753
      %v1755 = vld [vmem:[%s1649 + $0x1a0] sm:$0xff]
      %1756 = vst [vmem:[%s1650 + $0x1a0] sm:$0xff] %v1755
      %v1757 = vld [vmem:[%s1649 + $0x1a8] sm:$0xff]
      %1758 = vst [vmem:[%s1650 + $0x1a8] sm:$0xff] %v1757
      %v1759 = vld [vmem:[%s1649 + $0x1b0] sm:$0xff]
      %1760 = vst [vmem:[%s1650 + $0x1b0] sm:$0xff] %v1759
      %v1761 = vld [vmem:[%s1649 + $0x1b8] sm:$0xff]
      %1762 = vst [vmem:[%s1650 + $0x1b8] sm:$0xff] %v1761
      %v1763 = vld [vmem:[%s1649 + $0x1c0] sm:$0xff]
      %1764 = vst [vmem:[%s1650 + $0x1c0] sm:$0xff] %v1763
      %v1765 = vld [vmem:[%s1649 + $0x1c8] sm:$0xff]
      %1766 = vst [vmem:[%s1650 + $0x1c8] sm:$0xff] %v1765
      %v1767 = vld [vmem:[%s1649 + $0x1d0] sm:$0xff]
      %1768 = vst [vmem:[%s1650 + $0x1d0] sm:$0xff] %v1767
      %v1769 = vld [vmem:[%s1649 + $0x1d8] sm:$0xff]
      %1770 = vst [vmem:[%s1650 + $0x1d8] sm:$0xff] %v1769
      %v1771 = vld [vmem:[%s1649 + $0x1e0] sm:$0xff]
      %1772 = vst [vmem:[%s1650 + $0x1e0] sm:$0xff] %v1771
      %v1773 = vld [vmem:[%s1649 + $0x1e8] sm:$0xff]
      %1774 = vst [vmem:[%s1650 + $0x1e8] sm:$0xff] %v1773
      %v1775 = vld [vmem:[%s1649 + $0x1f0] sm:$0xff]
      %1776 = vst [vmem:[%s1650 + $0x1f0] sm:$0xff] %v1775
      %v1777 = vld [vmem:[%s1649 + $0x1f8] sm:$0xff]
      %1778 = vst [vmem:[%s1650 + $0x1f8] sm:$0xff] %v1777
      %v1779 = vld [vmem:[%s1649 + $0x200] sm:$0xff]
      %1780 = vst [vmem:[%s1650 + $0x200] sm:$0xff] %v1779
      %v1781 = vld [vmem:[%s1649 + $0x208] sm:$0xff]
      %1782 = vst [vmem:[%s1650 + $0x208] sm:$0xff] %v1781
      %v1783 = vld [vmem:[%s1649 + $0x210] sm:$0xff]
      %1784 = vst [vmem:[%s1650 + $0x210] sm:$0xff] %v1783
      %v1785 = vld [vmem:[%s1649 + $0x218] sm:$0xff]
      %1786 = vst [vmem:[%s1650 + $0x218] sm:$0xff] %v1785
      %v1787 = vld [vmem:[%s1649 + $0x220] sm:$0xff]
      %1788 = vst [vmem:[%s1650 + $0x220] sm:$0xff] %v1787
      %v1789 = vld [vmem:[%s1649 + $0x228] sm:$0xff]
      %1790 = vst [vmem:[%s1650 + $0x228] sm:$0xff] %v1789
      %v1791 = vld [vmem:[%s1649 + $0x230] sm:$0xff]
      %1792 = vst [vmem:[%s1650 + $0x230] sm:$0xff] %v1791
      %v1793 = vld [vmem:[%s1649 + $0x238] sm:$0xff]
      %1794 = vst [vmem:[%s1650 + $0x238] sm:$0xff] %v1793
      %v1795 = vld [vmem:[%s1649 + $0x240] sm:$0xff]
      %1796 = vst [vmem:[%s1650 + $0x240] sm:$0xff] %v1795
      %v1797 = vld [vmem:[%s1649 + $0x248] sm:$0xff]
      %1798 = vst [vmem:[%s1650 + $0x248] sm:$0xff] %v1797
      %v1799 = vld [vmem:[%s1649 + $0x250] sm:$0xff]
      %1800 = vst [vmem:[%s1650 + $0x250] sm:$0xff] %v1799
      %v1801 = vld [vmem:[%s1649 + $0x258] sm:$0xff]
      %1802 = vst [vmem:[%s1650 + $0x258] sm:$0xff] %v1801
      %v1803 = vld [vmem:[%s1649 + $0x260] sm:$0xff]
      %1804 = vst [vmem:[%s1650 + $0x260] sm:$0xff] %v1803
      %v1805 = vld [vmem:[%s1649 + $0x268] sm:$0xff]
      %1806 = vst [vmem:[%s1650 + $0x268] sm:$0xff] %v1805
      %v1807 = vld [vmem:[%s1649 + $0x270] sm:$0xff]
      %1808 = vst [vmem:[%s1650 + $0x270] sm:$0xff] %v1807
      %v1809 = vld [vmem:[%s1649 + $0x278] sm:$0xff]
      %1810 = vst [vmem:[%s1650 + $0x278] sm:$0xff] %v1809
      %v1811 = vld [vmem:[%s1649 + $0x280] sm:$0xff]
      %1812 = vst [vmem:[%s1650 + $0x280] sm:$0xff] %v1811
      %v1813 = vld [vmem:[%s1649 + $0x288] sm:$0xff]
      %1814 = vst [vmem:[%s1650 + $0x288] sm:$0xff] %v1813
      %v1815 = vld [vmem:[%s1649 + $0x290] sm:$0xff]
      %1816 = vst [vmem:[%s1650 + $0x290] sm:$0xff] %v1815
      %v1817 = vld [vmem:[%s1649 + $0x298] sm:$0xff]
      %1818 = vst [vmem:[%s1650 + $0x298] sm:$0xff] %v1817
      %v1819 = vld [vmem:[%s1649 + $0x2a0] sm:$0xff]
      %1820 = vst [vmem:[%s1650 + $0x2a0] sm:$0xff] %v1819
      %v1821 = vld [vmem:[%s1649 + $0x2a8] sm:$0xff]
      %1822 = vst [vmem:[%s1650 + $0x2a8] sm:$0xff] %v1821
      %v1823 = vld [vmem:[%s1649 + $0x2b0] sm:$0xff]
      %1824 = vst [vmem:[%s1650 + $0x2b0] sm:$0xff] %v1823
      %v1825 = vld [vmem:[%s1649 + $0x2b8] sm:$0xff]
      %1826 = vst [vmem:[%s1650 + $0x2b8] sm:$0xff] %v1825
      %v1827 = vld [vmem:[%s1649 + $0x2c0] sm:$0xff]
      %1828 = vst [vmem:[%s1650 + $0x2c0] sm:$0xff] %v1827
      %v1829 = vld [vmem:[%s1649 + $0x2c8] sm:$0xff]
      %1830 = vst [vmem:[%s1650 + $0x2c8] sm:$0xff] %v1829
      %v1831 = vld [vmem:[%s1649 + $0x2d0] sm:$0xff]
      %1832 = vst [vmem:[%s1650 + $0x2d0] sm:$0xff] %v1831
      %v1833 = vld [vmem:[%s1649 + $0x2d8] sm:$0xff]
      %1834 = vst [vmem:[%s1650 + $0x2d8] sm:$0xff] %v1833
      %v1835 = vld [vmem:[%s1649 + $0x2e0] sm:$0xff]
      %1836 = vst [vmem:[%s1650 + $0x2e0] sm:$0xff] %v1835
      %v1837 = vld [vmem:[%s1649 + $0x2e8] sm:$0xff]
      %1838 = vst [vmem:[%s1650 + $0x2e8] sm:$0xff] %v1837
      %v1839 = vld [vmem:[%s1649 + $0x2f0] sm:$0xff]
      %1840 = vst [vmem:[%s1650 + $0x2f0] sm:$0xff] %v1839
      %v1841 = vld [vmem:[%s1649 + $0x2f8] sm:$0xff]
      %1842 = vst [vmem:[%s1650 + $0x2f8] sm:$0xff] %v1841
      %v1843 = vld [vmem:[%s1649 + $0x300] sm:$0xff]
      %1844 = vst [vmem:[%s1650 + $0x300] sm:$0xff] %v1843
      %v1845 = vld [vmem:[%s1649 + $0x308] sm:$0xff]
      %1846 = vst [vmem:[%s1650 + $0x308] sm:$0xff] %v1845
      %v1847 = vld [vmem:[%s1649 + $0x310] sm:$0xff]
      %1848 = vst [vmem:[%s1650 + $0x310] sm:$0xff] %v1847
      %v1849 = vld [vmem:[%s1649 + $0x318] sm:$0xff]
      %1850 = vst [vmem:[%s1650 + $0x318] sm:$0xff] %v1849
      %v1851 = vld [vmem:[%s1649 + $0x320] sm:$0xff]
      %1852 = vst [vmem:[%s1650 + $0x320] sm:$0xff] %v1851
      %v1853 = vld [vmem:[%s1649 + $0x328] sm:$0xff]
      %1854 = vst [vmem:[%s1650 + $0x328] sm:$0xff] %v1853
      %v1855 = vld [vmem:[%s1649 + $0x330] sm:$0xff]
      %1856 = vst [vmem:[%s1650 + $0x330] sm:$0xff] %v1855
      %v1857 = vld [vmem:[%s1649 + $0x338] sm:$0xff]
      %1858 = vst [vmem:[%s1650 + $0x338] sm:$0xff] %v1857
      %v1859 = vld [vmem:[%s1649 + $0x340] sm:$0xff]
      %1860 = vst [vmem:[%s1650 + $0x340] sm:$0xff] %v1859
      %v1861 = vld [vmem:[%s1649 + $0x348] sm:$0xff]
      %1862 = vst [vmem:[%s1650 + $0x348] sm:$0xff] %v1861
      %v1863 = vld [vmem:[%s1649 + $0x350] sm:$0xff]
      %1864 = vst [vmem:[%s1650 + $0x350] sm:$0xff] %v1863
      %v1865 = vld [vmem:[%s1649 + $0x358] sm:$0xff]
      %1866 = vst [vmem:[%s1650 + $0x358] sm:$0xff] %v1865
      %v1867 = vld [vmem:[%s1649 + $0x360] sm:$0xff]
      %1868 = vst [vmem:[%s1650 + $0x360] sm:$0xff] %v1867
      %v1869 = vld [vmem:[%s1649 + $0x368] sm:$0xff]
      %1870 = vst [vmem:[%s1650 + $0x368] sm:$0xff] %v1869
      %v1871 = vld [vmem:[%s1649 + $0x370] sm:$0xff]
      %1872 = vst [vmem:[%s1650 + $0x370] sm:$0xff] %v1871
      %v1873 = vld [vmem:[%s1649 + $0x378] sm:$0xff]
      %1874 = vst [vmem:[%s1650 + $0x378] sm:$0xff] %v1873
      %v1875 = vld [vmem:[%s1649 + $0x380] sm:$0xff]
      %1876 = vst [vmem:[%s1650 + $0x380] sm:$0xff] %v1875
      %v1877 = vld [vmem:[%s1649 + $0x388] sm:$0xff]
      %1878 = vst [vmem:[%s1650 + $0x388] sm:$0xff] %v1877
      %v1879 = vld [vmem:[%s1649 + $0x390] sm:$0xff]
      %1880 = vst [vmem:[%s1650 + $0x390] sm:$0xff] %v1879
      %v1881 = vld [vmem:[%s1649 + $0x398] sm:$0xff]
      %1882 = vst [vmem:[%s1650 + $0x398] sm:$0xff] %v1881
      %v1883 = vld [vmem:[%s1649 + $0x3a0] sm:$0xff]
      %1884 = vst [vmem:[%s1650 + $0x3a0] sm:$0xff] %v1883
      %v1885 = vld [vmem:[%s1649 + $0x3a8] sm:$0xff]
      %1886 = vst [vmem:[%s1650 + $0x3a8] sm:$0xff] %v1885
      %v1887 = vld [vmem:[%s1649 + $0x3b0] sm:$0xff]
      %1888 = vst [vmem:[%s1650 + $0x3b0] sm:$0xff] %v1887
      %v1889 = vld [vmem:[%s1649 + $0x3b8] sm:$0xff]
      %1890 = vst [vmem:[%s1650 + $0x3b8] sm:$0xff] %v1889
      %v1891 = vld [vmem:[%s1649 + $0x3c0] sm:$0xff]
      %1892 = vst [vmem:[%s1650 + $0x3c0] sm:$0xff] %v1891
      %v1893 = vld [vmem:[%s1649 + $0x3c8] sm:$0xff]
      %1894 = vst [vmem:[%s1650 + $0x3c8] sm:$0xff] %v1893
      %v1895 = vld [vmem:[%s1649 + $0x3d0] sm:$0xff]
      %1896 = vst [vmem:[%s1650 + $0x3d0] sm:$0xff] %v1895
      %v1897 = vld [vmem:[%s1649 + $0x3d8] sm:$0xff]
      %1898 = vst [vmem:[%s1650 + $0x3d8] sm:$0xff] %v1897
      %v1899 = vld [vmem:[%s1649 + $0x3e0] sm:$0xff]
      %1900 = vst [vmem:[%s1650 + $0x3e0] sm:$0xff] %v1899
      %v1901 = vld [vmem:[%s1649 + $0x3e8] sm:$0xff]
      %1902 = vst [vmem:[%s1650 + $0x3e8] sm:$0xff] %v1901
      %v1903 = vld [vmem:[%s1649 + $0x3f0] sm:$0xff]
      %1904 = vst [vmem:[%s1650 + $0x3f0] sm:$0xff] %v1903
      %v1905 = vld [vmem:[%s1649 + $0x3f8] sm:$0xff]
      %1906 = vst [vmem:[%s1650 + $0x3f8] sm:$0xff] %v1905
      %v1907 = vld [vmem:[%s1649 + $0x400] sm:$0xff]
      %1908 = vst [vmem:[%s1650 + $0x400] sm:$0xff] %v1907
      %v1909 = vld [vmem:[%s1649 + $0x408] sm:$0xff]
      %1910 = vst [vmem:[%s1650 + $0x408] sm:$0xff] %v1909
      %v1911 = vld [vmem:[%s1649 + $0x410] sm:$0xff]
      %1912 = vst [vmem:[%s1650 + $0x410] sm:$0xff] %v1911
      %v1913 = vld [vmem:[%s1649 + $0x418] sm:$0xff]
      %1914 = vst [vmem:[%s1650 + $0x418] sm:$0xff] %v1913
      %v1915 = vld [vmem:[%s1649 + $0x420] sm:$0xff]
      %1916 = vst [vmem:[%s1650 + $0x420] sm:$0xff] %v1915
      %v1917 = vld [vmem:[%s1649 + $0x428] sm:$0xff]
      %1918 = vst [vmem:[%s1650 + $0x428] sm:$0xff] %v1917
      %v1919 = vld [vmem:[%s1649 + $0x430] sm:$0xff]
      %1920 = vst [vmem:[%s1650 + $0x430] sm:$0xff] %v1919
      %v1921 = vld [vmem:[%s1649 + $0x438] sm:$0xff]
      %1922 = vst [vmem:[%s1650 + $0x438] sm:$0xff] %v1921
      %v1923 = vld [vmem:[%s1649 + $0x440] sm:$0xff]
      %1924 = vst [vmem:[%s1650 + $0x440] sm:$0xff] %v1923
      %v1925 = vld [vmem:[%s1649 + $0x448] sm:$0xff]
      %1926 = vst [vmem:[%s1650 + $0x448] sm:$0xff] %v1925
      %v1927 = vld [vmem:[%s1649 + $0x450] sm:$0xff]
      %1928 = vst [vmem:[%s1650 + $0x450] sm:$0xff] %v1927
      %v1929 = vld [vmem:[%s1649 + $0x458] sm:$0xff]
      %1930 = vst [vmem:[%s1650 + $0x458] sm:$0xff] %v1929
      %v1931 = vld [vmem:[%s1649 + $0x460] sm:$0xff]
      %1932 = vst [vmem:[%s1650 + $0x460] sm:$0xff] %v1931
      %v1933 = vld [vmem:[%s1649 + $0x468] sm:$0xff]
      %1934 = vst [vmem:[%s1650 + $0x468] sm:$0xff] %v1933
      %v1935 = vld [vmem:[%s1649 + $0x470] sm:$0xff]
      %1936 = vst [vmem:[%s1650 + $0x470] sm:$0xff] %v1935
      %v1937 = vld [vmem:[%s1649 + $0x478] sm:$0xff]
      %1938 = vst [vmem:[%s1650 + $0x478] sm:$0xff] %v1937
      %v1939 = vld [vmem:[%s1649 + $0x480] sm:$0xff]
      %1940 = vst [vmem:[%s1650 + $0x480] sm:$0xff] %v1939
      %v1941 = vld [vmem:[%s1649 + $0x488] sm:$0xff]
      %1942 = vst [vmem:[%s1650 + $0x488] sm:$0xff] %v1941
      %v1943 = vld [vmem:[%s1649 + $0x490] sm:$0xff]
      %1944 = vst [vmem:[%s1650 + $0x490] sm:$0xff] %v1943
      %v1945 = vld [vmem:[%s1649 + $0x498] sm:$0xff]
      %1946 = vst [vmem:[%s1650 + $0x498] sm:$0xff] %v1945
      %v1947 = vld [vmem:[%s1649 + $0x4a0] sm:$0xff]
      %1948 = vst [vmem:[%s1650 + $0x4a0] sm:$0xff] %v1947
      %v1949 = vld [vmem:[%s1649 + $0x4a8] sm:$0xff]
      %1950 = vst [vmem:[%s1650 + $0x4a8] sm:$0xff] %v1949
      %v1951 = vld [vmem:[%s1649 + $0x4b0] sm:$0xff]
      %1952 = vst [vmem:[%s1650 + $0x4b0] sm:$0xff] %v1951
      %v1953 = vld [vmem:[%s1649 + $0x4b8] sm:$0xff]
      %1954 = vst [vmem:[%s1650 + $0x4b8] sm:$0xff] %v1953
      %v1955 = vld [vmem:[%s1649 + $0x4c0] sm:$0xff]
      %1956 = vst [vmem:[%s1650 + $0x4c0] sm:$0xff] %v1955
      %v1957 = vld [vmem:[%s1649 + $0x4c8] sm:$0xff]
      %1958 = vst [vmem:[%s1650 + $0x4c8] sm:$0xff] %v1957
      %v1959 = vld [vmem:[%s1649 + $0x4d0] sm:$0xff]
      %1960 = vst [vmem:[%s1650 + $0x4d0] sm:$0xff] %v1959
      %v1961 = vld [vmem:[%s1649 + $0x4d8] sm:$0xff]
      %1962 = vst [vmem:[%s1650 + $0x4d8] sm:$0xff] %v1961
      %v1963 = vld [vmem:[%s1649 + $0x4e0] sm:$0xff]
      %1964 = vst [vmem:[%s1650 + $0x4e0] sm:$0xff] %v1963
      %v1965 = vld [vmem:[%s1649 + $0x4e8] sm:$0xff]
      %1966 = vst [vmem:[%s1650 + $0x4e8] sm:$0xff] %v1965
      %v1967 = vld [vmem:[%s1649 + $0x4f0] sm:$0xff]
      %1968 = vst [vmem:[%s1650 + $0x4f0] sm:$0xff] %v1967
      %v1969 = vld [vmem:[%s1649 + $0x4f8] sm:$0xff]
      %1970 = vst [vmem:[%s1650 + $0x4f8] sm:$0xff] %v1969
      %v1971 = vld [vmem:[%s1649 + $0x500] sm:$0xff]
      %1972 = vst [vmem:[%s1650 + $0x500] sm:$0xff] %v1971
      %v1973 = vld [vmem:[%s1649 + $0x508] sm:$0xff]
      %1974 = vst [vmem:[%s1650 + $0x508] sm:$0xff] %v1973
      %v1975 = vld [vmem:[%s1649 + $0x510] sm:$0xff]
      %1976 = vst [vmem:[%s1650 + $0x510] sm:$0xff] %v1975
      %v1977 = vld [vmem:[%s1649 + $0x518] sm:$0xff]
      %1978 = vst [vmem:[%s1650 + $0x518] sm:$0xff] %v1977
      %v1979 = vld [vmem:[%s1649 + $0x520] sm:$0xff]
      %1980 = vst [vmem:[%s1650 + $0x520] sm:$0xff] %v1979
      %v1981 = vld [vmem:[%s1649 + $0x528] sm:$0xff]
      %1982 = vst [vmem:[%s1650 + $0x528] sm:$0xff] %v1981
      %v1983 = vld [vmem:[%s1649 + $0x530] sm:$0xff]
      %1984 = vst [vmem:[%s1650 + $0x530] sm:$0xff] %v1983
      %v1985 = vld [vmem:[%s1649 + $0x538] sm:$0xff]
      %1986 = vst [vmem:[%s1650 + $0x538] sm:$0xff] %v1985
      %v1987 = vld [vmem:[%s1649 + $0x540] sm:$0xff]
      %1988 = vst [vmem:[%s1650 + $0x540] sm:$0xff] %v1987
      %v1989 = vld [vmem:[%s1649 + $0x548] sm:$0xff]
      %1990 = vst [vmem:[%s1650 + $0x548] sm:$0xff] %v1989
      %v1991 = vld [vmem:[%s1649 + $0x550] sm:$0xff]
      %1992 = vst [vmem:[%s1650 + $0x550] sm:$0xff] %v1991
      %v1993 = vld [vmem:[%s1649 + $0x558] sm:$0xff]
      %1994 = vst [vmem:[%s1650 + $0x558] sm:$0xff] %v1993
      %v1995 = vld [vmem:[%s1649 + $0x560] sm:$0xff]
      %1996 = vst [vmem:[%s1650 + $0x560] sm:$0xff] %v1995
      %v1997 = vld [vmem:[%s1649 + $0x568] sm:$0xff]
      %1998 = vst [vmem:[%s1650 + $0x568] sm:$0xff] %v1997
      %v1999 = vld [vmem:[%s1649 + $0x570] sm:$0xff]
      %2000 = vst [vmem:[%s1650 + $0x570] sm:$0xff] %v1999
      %v2001 = vld [vmem:[%s1649 + $0x578] sm:$0xff]
      %2002 = vst [vmem:[%s1650 + $0x578] sm:$0xff] %v2001
      %v2003 = vld [vmem:[%s1649 + $0x580] sm:$0xff]
      %2004 = vst [vmem:[%s1650 + $0x580] sm:$0xff] %v2003
      %v2005 = vld [vmem:[%s1649 + $0x588] sm:$0xff]
      %2006 = vst [vmem:[%s1650 + $0x588] sm:$0xff] %v2005
      %v2007 = vld [vmem:[%s1649 + $0x590] sm:$0xff]
      %2008 = vst [vmem:[%s1650 + $0x590] sm:$0xff] %v2007
      %v2009 = vld [vmem:[%s1649 + $0x598] sm:$0xff]
      %2010 = vst [vmem:[%s1650 + $0x598] sm:$0xff] %v2009
      %v2011 = vld [vmem:[%s1649 + $0x5a0] sm:$0xff]
      %2012 = vst [vmem:[%s1650 + $0x5a0] sm:$0xff] %v2011
      %v2013 = vld [vmem:[%s1649 + $0x5a8] sm:$0xff]
      %2014 = vst [vmem:[%s1650 + $0x5a8] sm:$0xff] %v2013
      %v2015 = vld [vmem:[%s1649 + $0x5b0] sm:$0xff]
      %2016 = vst [vmem:[%s1650 + $0x5b0] sm:$0xff] %v2015
      %v2017 = vld [vmem:[%s1649 + $0x5b8] sm:$0xff]
      %2018 = vst [vmem:[%s1650 + $0x5b8] sm:$0xff] %v2017
      %v2019 = vld [vmem:[%s1649 + $0x5c0] sm:$0xff]
      %2020 = vst [vmem:[%s1650 + $0x5c0] sm:$0xff] %v2019
      %v2021 = vld [vmem:[%s1649 + $0x5c8] sm:$0xff]
      %2022 = vst [vmem:[%s1650 + $0x5c8] sm:$0xff] %v2021
      %v2023 = vld [vmem:[%s1649 + $0x5d0] sm:$0xff]
      %2024 = vst [vmem:[%s1650 + $0x5d0] sm:$0xff] %v2023
      %v2025 = vld [vmem:[%s1649 + $0x5d8] sm:$0xff]
      %2026 = vst [vmem:[%s1650 + $0x5d8] sm:$0xff] %v2025
      %v2027 = vld [vmem:[%s1649 + $0x5e0] sm:$0xff]
      %2028 = vst [vmem:[%s1650 + $0x5e0] sm:$0xff] %v2027
      %v2029 = vld [vmem:[%s1649 + $0x5e8] sm:$0xff]
      %2030 = vst [vmem:[%s1650 + $0x5e8] sm:$0xff] %v2029
      %v2031 = vld [vmem:[%s1649 + $0x5f0] sm:$0xff]
      %2032 = vst [vmem:[%s1650 + $0x5f0] sm:$0xff] %v2031
      %v2033 = vld [vmem:[%s1649 + $0x5f8] sm:$0xff]
      %2034 = vst [vmem:[%s1650 + $0x5f8] sm:$0xff] %v2033
      %v2035 = vld [vmem:[%s1649 + $0x600] sm:$0xff]
      %2036 = vst [vmem:[%s1650 + $0x600] sm:$0xff] %v2035
      %v2037 = vld [vmem:[%s1649 + $0x608] sm:$0xff]
      %2038 = vst [vmem:[%s1650 + $0x608] sm:$0xff] %v2037
      %v2039 = vld [vmem:[%s1649 + $0x610] sm:$0xff]
      %2040 = vst [vmem:[%s1650 + $0x610] sm:$0xff] %v2039
      %v2041 = vld [vmem:[%s1649 + $0x618] sm:$0xff]
      %2042 = vst [vmem:[%s1650 + $0x618] sm:$0xff] %v2041
      %v2043 = vld [vmem:[%s1649 + $0x620] sm:$0xff]
      %2044 = vst [vmem:[%s1650 + $0x620] sm:$0xff] %v2043
      %v2045 = vld [vmem:[%s1649 + $0x628] sm:$0xff]
      %2046 = vst [vmem:[%s1650 + $0x628] sm:$0xff] %v2045
      %v2047 = vld [vmem:[%s1649 + $0x630] sm:$0xff]
      %2048 = vst [vmem:[%s1650 + $0x630] sm:$0xff] %v2047
      %v2049 = vld [vmem:[%s1649 + $0x638] sm:$0xff]
      %2050 = vst [vmem:[%s1650 + $0x638] sm:$0xff] %v2049
      %v2051 = vld [vmem:[%s1649 + $0x640] sm:$0xff]
      %2052 = vst [vmem:[%s1650 + $0x640] sm:$0xff] %v2051
      %v2053 = vld [vmem:[%s1649 + $0x648] sm:$0xff]
      %2054 = vst [vmem:[%s1650 + $0x648] sm:$0xff] %v2053
      %v2055 = vld [vmem:[%s1649 + $0x650] sm:$0xff]
      %2056 = vst [vmem:[%s1650 + $0x650] sm:$0xff] %v2055
      %v2057 = vld [vmem:[%s1649 + $0x658] sm:$0xff]
      %2058 = vst [vmem:[%s1650 + $0x658] sm:$0xff] %v2057
      %v2059 = vld [vmem:[%s1649 + $0x660] sm:$0xff]
      %2060 = vst [vmem:[%s1650 + $0x660] sm:$0xff] %v2059
      %v2061 = vld [vmem:[%s1649 + $0x668] sm:$0xff]
      %2062 = vst [vmem:[%s1650 + $0x668] sm:$0xff] %v2061
      %v2063 = vld [vmem:[%s1649 + $0x670] sm:$0xff]
      %2064 = vst [vmem:[%s1650 + $0x670] sm:$0xff] %v2063
      %v2065 = vld [vmem:[%s1649 + $0x678] sm:$0xff]
      %2066 = vst [vmem:[%s1650 + $0x678] sm:$0xff] %v2065
      %v2067 = vld [vmem:[%s1649 + $0x680] sm:$0xff]
      %2068 = vst [vmem:[%s1650 + $0x680] sm:$0xff] %v2067
      %v2069 = vld [vmem:[%s1649 + $0x688] sm:$0xff]
      %2070 = vst [vmem:[%s1650 + $0x688] sm:$0xff] %v2069
      %v2071 = vld [vmem:[%s1649 + $0x690] sm:$0xff]
      %2072 = vst [vmem:[%s1650 + $0x690] sm:$0xff] %v2071
      %v2073 = vld [vmem:[%s1649 + $0x698] sm:$0xff]
      %2074 = vst [vmem:[%s1650 + $0x698] sm:$0xff] %v2073
      %v2075 = vld [vmem:[%s1649 + $0x6a0] sm:$0xff]
      %2076 = vst [vmem:[%s1650 + $0x6a0] sm:$0xff] %v2075
      %v2077 = vld [vmem:[%s1649 + $0x6a8] sm:$0xff]
      %2078 = vst [vmem:[%s1650 + $0x6a8] sm:$0xff] %v2077
      %v2079 = vld [vmem:[%s1649 + $0x6b0] sm:$0xff]
      %2080 = vst [vmem:[%s1650 + $0x6b0] sm:$0xff] %v2079
      %v2081 = vld [vmem:[%s1649 + $0x6b8] sm:$0xff]
      %2082 = vst [vmem:[%s1650 + $0x6b8] sm:$0xff] %v2081
      %v2083 = vld [vmem:[%s1649 + $0x6c0] sm:$0xff]
      %2084 = vst [vmem:[%s1650 + $0x6c0] sm:$0xff] %v2083
      %v2085 = vld [vmem:[%s1649 + $0x6c8] sm:$0xff]
      %2086 = vst [vmem:[%s1650 + $0x6c8] sm:$0xff] %v2085
      %v2087 = vld [vmem:[%s1649 + $0x6d0] sm:$0xff]
      %2088 = vst [vmem:[%s1650 + $0x6d0] sm:$0xff] %v2087
      %v2089 = vld [vmem:[%s1649 + $0x6d8] sm:$0xff]
      %2090 = vst [vmem:[%s1650 + $0x6d8] sm:$0xff] %v2089
      %v2091 = vld [vmem:[%s1649 + $0x6e0] sm:$0xff]
      %2092 = vst [vmem:[%s1650 + $0x6e0] sm:$0xff] %v2091
      %v2093 = vld [vmem:[%s1649 + $0x6e8] sm:$0xff]
      %2094 = vst [vmem:[%s1650 + $0x6e8] sm:$0xff] %v2093
      %v2095 = vld [vmem:[%s1649 + $0x6f0] sm:$0xff]
      %2096 = vst [vmem:[%s1650 + $0x6f0] sm:$0xff] %v2095
      %v2097 = vld [vmem:[%s1649 + $0x6f8] sm:$0xff]
      %2098 = vst [vmem:[%s1650 + $0x6f8] sm:$0xff] %v2097
      %v2099 = vld [vmem:[%s1649 + $0x700] sm:$0xff]
      %2100 = vst [vmem:[%s1650 + $0x700] sm:$0xff] %v2099
      %v2101 = vld [vmem:[%s1649 + $0x708] sm:$0xff]
      %2102 = vst [vmem:[%s1650 + $0x708] sm:$0xff] %v2101
      %v2103 = vld [vmem:[%s1649 + $0x710] sm:$0xff]
      %2104 = vst [vmem:[%s1650 + $0x710] sm:$0xff] %v2103
      %v2105 = vld [vmem:[%s1649 + $0x718] sm:$0xff]
      %2106 = vst [vmem:[%s1650 + $0x718] sm:$0xff] %v2105
      %v2107 = vld [vmem:[%s1649 + $0x720] sm:$0xff]
      %2108 = vst [vmem:[%s1650 + $0x720] sm:$0xff] %v2107
      %v2109 = vld [vmem:[%s1649 + $0x728] sm:$0xff]
      %2110 = vst [vmem:[%s1650 + $0x728] sm:$0xff] %v2109
      %v2111 = vld [vmem:[%s1649 + $0x730] sm:$0xff]
      %2112 = vst [vmem:[%s1650 + $0x730] sm:$0xff] %v2111
      %v2113 = vld [vmem:[%s1649 + $0x738] sm:$0xff]
      %2114 = vst [vmem:[%s1650 + $0x738] sm:$0xff] %v2113
      %v2115 = vld [vmem:[%s1649 + $0x740] sm:$0xff]
      %2116 = vst [vmem:[%s1650 + $0x740] sm:$0xff] %v2115
      %v2117 = vld [vmem:[%s1649 + $0x748] sm:$0xff]
      %2118 = vst [vmem:[%s1650 + $0x748] sm:$0xff] %v2117
      %v2119 = vld [vmem:[%s1649 + $0x750] sm:$0xff]
      %2120 = vst [vmem:[%s1650 + $0x750] sm:$0xff] %v2119
      %v2121 = vld [vmem:[%s1649 + $0x758] sm:$0xff]
      %2122 = vst [vmem:[%s1650 + $0x758] sm:$0xff] %v2121
      %v2123 = vld [vmem:[%s1649 + $0x760] sm:$0xff]
      %2124 = vst [vmem:[%s1650 + $0x760] sm:$0xff] %v2123
      %v2125 = vld [vmem:[%s1649 + $0x768] sm:$0xff]
      %2126 = vst [vmem:[%s1650 + $0x768] sm:$0xff] %v2125
      %v2127 = vld [vmem:[%s1649 + $0x770] sm:$0xff]
      %2128 = vst [vmem:[%s1650 + $0x770] sm:$0xff] %v2127
      %v2129 = vld [vmem:[%s1649 + $0x778] sm:$0xff]
      %2130 = vst [vmem:[%s1650 + $0x778] sm:$0xff] %v2129
      %v2131 = vld [vmem:[%s1649 + $0x780] sm:$0xff]
      %2132 = vst [vmem:[%s1650 + $0x780] sm:$0xff] %v2131
      %v2133 = vld [vmem:[%s1649 + $0x788] sm:$0xff]
      %2134 = vst [vmem:[%s1650 + $0x788] sm:$0xff] %v2133
      %v2135 = vld [vmem:[%s1649 + $0x790] sm:$0xff]
      %2136 = vst [vmem:[%s1650 + $0x790] sm:$0xff] %v2135
      %v2137 = vld [vmem:[%s1649 + $0x798] sm:$0xff]
      %2138 = vst [vmem:[%s1650 + $0x798] sm:$0xff] %v2137
      %v2139 = vld [vmem:[%s1649 + $0x7a0] sm:$0xff]
      %2140 = vst [vmem:[%s1650 + $0x7a0] sm:$0xff] %v2139
      %v2141 = vld [vmem:[%s1649 + $0x7a8] sm:$0xff]
      %2142 = vst [vmem:[%s1650 + $0x7a8] sm:$0xff] %v2141
      %v2143 = vld [vmem:[%s1649 + $0x7b0] sm:$0xff]
      %2144 = vst [vmem:[%s1650 + $0x7b0] sm:$0xff] %v2143
      %v2145 = vld [vmem:[%s1649 + $0x7b8] sm:$0xff]
      %2146 = vst [vmem:[%s1650 + $0x7b8] sm:$0xff] %v2145
      %v2147 = vld [vmem:[%s1649 + $0x7c0] sm:$0xff]
      %2148 = vst [vmem:[%s1650 + $0x7c0] sm:$0xff] %v2147
      %v2149 = vld [vmem:[%s1649 + $0x7c8] sm:$0xff]
      %2150 = vst [vmem:[%s1650 + $0x7c8] sm:$0xff] %v2149
      %v2151 = vld [vmem:[%s1649 + $0x7d0] sm:$0xff]
      %2152 = vst [vmem:[%s1650 + $0x7d0] sm:$0xff] %v2151
      %v2153 = vld [vmem:[%s1649 + $0x7d8] sm:$0xff]
      %2154 = vst [vmem:[%s1650 + $0x7d8] sm:$0xff] %v2153
      %v2155 = vld [vmem:[%s1649 + $0x7e0] sm:$0xff]
      %2156 = vst [vmem:[%s1650 + $0x7e0] sm:$0xff] %v2155
      %v2157 = vld [vmem:[%s1649 + $0x7e8] sm:$0xff]
      %2158 = vst [vmem:[%s1650 + $0x7e8] sm:$0xff] %v2157
      %v2159 = vld [vmem:[%s1649 + $0x7f0] sm:$0xff]
      %2160 = vst [vmem:[%s1650 + $0x7f0] sm:$0xff] %v2159
      %v2161 = vld [vmem:[%s1649 + $0x7f8] sm:$0xff]
      %2162 = vst [vmem:[%s1650 + $0x7f8] sm:$0xff] %v2161
    $region123: #{cnn_encoder_forward.1} parent=117 // loop_footer
      %s1648 = sadd.s32 1, %s1644
    $region124: #{cnn_encoder_forward.1} parent=117 // loop_footer_branch
      %1643 = sbr.rel target = $region120
    $region125: #{cnn_encoder_forward.1} parent=117 // loop_exit
      _
  $region118: #{cnn_encoder_forward.1} parent=0 // pred_fallthru
    _
  // Predicated region
  $region126: #{cnn_encoder_forward.1} parent=0 // pred_check
    _
  $region127: #{cnn_encoder_forward.1} parent=0 // pred_check_branch
    %2164 = sbr.rel target = $region129
  $region128: #{cnn_encoder_forward.1} parent=0 // pred_region
    _
  $region129: #{cnn_encoder_forward.1} parent=0 // pred_fallthru
    _
  // Predicated region
  $region130: #{cnn_encoder_forward.1} parent=0 // pred_check
    _
  $region131: #{cnn_encoder_forward.1} parent=0 // pred_check_branch
    %2167 = sbr.rel (0) target = $region133
  $region132: #{cnn_encoder_forward.1} parent=0 // pred_region
    %2168 = vsyncadd %s1640, 32768
  $region133: #{cnn_encoder_forward.1} parent=0 // pred_fallthru
    _
  %v2169 = vld [vmem:[%s0] sm:$0xff]
  %v2170 = vld [vmem:[%s0 + $0x8] sm:$0xff]
  %v2171 = vld [vmem:[%s0 + $0x10] sm:$0xff]
  %v2172 = vld [vmem:[%s0 + $0x18] sm:$0xff]
  %v2173 = vld [vmem:[%s0 + $0x20] sm:$0xff]
  %v2174 = vld [vmem:[%s0 + $0x28] sm:$0xff]
  %v2175 = vld [vmem:[%s0 + $0x30] sm:$0xff]
  %v2176 = vld [vmem:[%s0 + $0x38] sm:$0xff]
  %v2177 = vld [vmem:[%s0 + $0x40] sm:$0xff]
  %v2178 = vld [vmem:[%s0 + $0x48] sm:$0xff]
  %v2179 = vld [vmem:[%s0 + $0x50] sm:$0xff]
  %v2180 = vld [vmem:[%s0 + $0x58] sm:$0xff]
  %v2181 = vld [vmem:[%s0 + $0x60] sm:$0xff]
  %v2182 = vld [vmem:[%s0 + $0x68] sm:$0xff]
  %v2183 = vld [vmem:[%s0 + $0x70] sm:$0xff]
  %v2184 = vld [vmem:[%s0 + $0x78] sm:$0xff]
  %v2185 = vld [vmem:[%s0 + $0x80] sm:$0xff]
  %v2186 = vld [vmem:[%s0 + $0x88] sm:$0xff]
  %v2187 = vld [vmem:[%s0 + $0x90] sm:$0xff]
  %v2188 = vld [vmem:[%s0 + $0x98] sm:$0xff]
  %v2189 = vld [vmem:[%s0 + $0xa0] sm:$0xff]
  %v2190 = vld [vmem:[%s0 + $0xa8] sm:$0xff]
  %v2191 = vld [vmem:[%s0 + $0xb0] sm:$0xff]
  %v2192 = vld [vmem:[%s0 + $0xb8] sm:$0xff]
  %v2193 = vld [vmem:[%s0 + $0xc0] sm:$0xff]
  %v2194 = vld [vmem:[%s0 + $0xc8] sm:$0xff]
  %v2195 = vld [vmem:[%s0 + $0xd0] sm:$0xff]
  %v2196 = vld [vmem:[%s0 + $0xd8] sm:$0xff]
  %v2197 = vld [vmem:[%s0 + $0xe0] sm:$0xff]
  %v2198 = vld [vmem:[%s0 + $0xe8] sm:$0xff]
  %v2199 = vld [vmem:[%s0 + $0xf0] sm:$0xff]
  %v2200 = vld [vmem:[%s0 + $0xf8] sm:$0xff]
  %v2201 = vld [vmem:[%s1] sm:$0xf]
  %v2202 = vld [vmem:[%s2] sm:$0xf]
  %vm2203 = vcmask 31744
  %v2205 = vsel %vm2203, %v2169, 0
  %v2208 = vsel %vm2203, %v2170, 0
  %v2211 = vsel %vm2203, %v2171, 0
  %v2214 = vsel %vm2203, %v2172, 0
  %v2217 = vsel %vm2203, %v2173, 0
  %v2220 = vsel %vm2203, %v2174, 0
  %v2223 = vsel %vm2203, %v2175, 0
  %v2226 = vsel %vm2203, %v2176, 0
  %v2229 = vsel %vm2203, %v2177, 0
  %v2232 = vsel %vm2203, %v2178, 0
  %v2235 = vsel %vm2203, %v2179, 0
  %v2238 = vsel %vm2203, %v2180, 0
  %v2241 = vsel %vm2203, %v2181, 0
  %v2244 = vsel %vm2203, %v2182, 0
  %v2247 = vsel %vm2203, %v2183, 0
  %v2250 = vsel %vm2203, %v2184, 0
  %v2253 = vsel %vm2203, %v2185, 0
  %v2256 = vsel %vm2203, %v2186, 0
  %v2259 = vsel %vm2203, %v2187, 0
  %v2262 = vsel %vm2203, %v2188, 0
  %v2265 = vsel %vm2203, %v2189, 0
  %v2268 = vsel %vm2203, %v2190, 0
  %v2271 = vsel %vm2203, %v2191, 0
  %v2274 = vsel %vm2203, %v2192, 0
  %v2277 = vsel %vm2203, %v2193, 0
  %v2280 = vsel %vm2203, %v2194, 0
  %v2283 = vsel %vm2203, %v2195, 0
  %v2286 = vsel %vm2203, %v2196, 0
  %v2289 = vsel %vm2203, %v2197, 0
  %v2292 = vsel %vm2203, %v2198, 0
  %v2295 = vsel %vm2203, %v2199, 0
  %v2298 = vsel %vm2203, %v2200, 0
  %vm2300 = vcmask 1043456
  %v2302 = vsel %vm2300, %v2202, 0
  %2304 = vmatpush.msra.mxu0 0.0
  %2305 = vmatpush.msra.mxu0 0.0
  %2306 = vmatpush.msra.mxu0 0.0
  %2307 = vmatpush.msra.mxu0 0.0
  %2308 = vmatpush.msra.mxu0 0.0
  %2309 = vmatpush.msra.mxu0 0.0
  %2310 = vmatpush.msra.mxu0 0.0
  %2311 = vmatpush.msra.mxu0 0.0
  %2312 = vmatpush.msra.mxu0 0.0
  %2313 = vmatpush.msra.mxu0 0.0
  %2314 = vmatpush.msra.mxu0 0.0
  %2315 = vmatpush.msra.mxu0 0.0
  %2316 = vmatpush.msra.mxu0 0.0
  %2317 = vmatpush.msra.mxu0 0.0
  %2318 = vmatpush.msra.mxu0 0.0
  %2319 = vmatpush.msra.mxu0 %v2302
  %2320 = vmatmul.f32.gmra.mxu0 %v2205
  %v2321 = vpop.f32.mrf.mxu0
  %v2322 = vadd.f32 0.0, %v2321
  %2323 = vmatmul.f32.gmra.mxu0 %v2208
  %v2324 = vpop.f32.mrf.mxu0
  %v2325 = vadd.f32 0.0, %v2324
  %2326 = vmatmul.f32.gmra.mxu0 %v2211
  %v2327 = vpop.f32.mrf.mxu0
  %v2328 = vadd.f32 0.0, %v2327
  %2329 = vmatmul.f32.gmra.mxu0 %v2214
  %v2330 = vpop.f32.mrf.mxu0
  %v2331 = vadd.f32 0.0, %v2330
  %2332 = vmatmul.f32.gmra.mxu0 %v2217
  %v2333 = vpop.f32.mrf.mxu0
  %v2334 = vadd.f32 0.0, %v2333
  %2335 = vmatmul.f32.gmra.mxu0 %v2220
  %v2336 = vpop.f32.mrf.mxu0
  %v2337 = vadd.f32 0.0, %v2336
  %2338 = vmatmul.f32.gmra.mxu0 %v2223
  %v2339 = vpop.f32.mrf.mxu0
  %v2340 = vadd.f32 0.0, %v2339
  %2341 = vmatmul.f32.gmra.mxu0 %v2226
  %v2342 = vpop.f32.mrf.mxu0
  %v2343 = vadd.f32 0.0, %v2342
  %2344 = vmatmul.f32.gmra.mxu0 %v2229
  %v2345 = vpop.f32.mrf.mxu0
  %v2346 = vadd.f32 0.0, %v2345
  %2347 = vmatmul.f32.gmra.mxu0 %v2232
  %v2348 = vpop.f32.mrf.mxu0
  %v2349 = vadd.f32 0.0, %v2348
  %2350 = vmatmul.f32.gmra.mxu0 %v2235
  %v2351 = vpop.f32.mrf.mxu0
  %v2352 = vadd.f32 0.0, %v2351
  %2353 = vmatmul.f32.gmra.mxu0 %v2238
  %v2354 = vpop.f32.mrf.mxu0
  %v2355 = vadd.f32 0.0, %v2354
  %2356 = vmatmul.f32.gmra.mxu0 %v2241
  %v2357 = vpop.f32.mrf.mxu0
  %v2358 = vadd.f32 0.0, %v2357
  %2359 = vmatmul.f32.gmra.mxu0 %v2244
  %v2360 = vpop.f32.mrf.mxu0
  %v2361 = vadd.f32 0.0, %v2360
  %2362 = vmatmul.f32.gmra.mxu0 %v2247
  %v2363 = vpop.f32.mrf.mxu0
  %v2364 = vadd.f32 0.0, %v2363
  %2365 = vmatmul.f32.gmra.mxu0 %v2250
  %v2366 = vpop.f32.mrf.mxu0
  %v2367 = vadd.f32 0.0, %v2366
  %2368 = vmatmul.f32.gmra.mxu0 %v2253
  %v2369 = vpop.f32.mrf.mxu0
  %v2370 = vadd.f32 0.0, %v2369
  %2371 = vmatmul.f32.gmra.mxu0 %v2256
  %v2372 = vpop.f32.mrf.mxu0
  %v2373 = vadd.f32 0.0, %v2372
  %2374 = vmatmul.f32.gmra.mxu0 %v2259
  %v2375 = vpop.f32.mrf.mxu0
  %v2376 = vadd.f32 0.0, %v2375
  %2377 = vmatmul.f32.gmra.mxu0 %v2262
  %v2378 = vpop.f32.mrf.mxu0
  %v2379 = vadd.f32 0.0, %v2378
  %2380 = vmatmul.f32.gmra.mxu0 %v2265
  %v2381 = vpop.f32.mrf.mxu0
  %v2382 = vadd.f32 0.0, %v2381
  %2383 = vmatmul.f32.gmra.mxu0 %v2268
  %v2384 = vpop.f32.mrf.mxu0
  %v2385 = vadd.f32 0.0, %v2384
  %2386 = vmatmul.f32.gmra.mxu0 %v2271
  %v2387 = vpop.f32.mrf.mxu0
  %v2388 = vadd.f32 0.0, %v2387
  %2389 = vmatmul.f32.gmra.mxu0 %v2274
  %v2390 = vpop.f32.mrf.mxu0
  %v2391 = vadd.f32 0.0, %v2390
  %2392 = vmatmul.f32.gmra.mxu0 %v2277
  %v2393 = vpop.f32.mrf.mxu0
  %v2394 = vadd.f32 0.0, %v2393
  %2395 = vmatmul.f32.gmra.mxu0 %v2280
  %v2396 = vpop.f32.mrf.mxu0
  %v2397 = vadd.f32 0.0, %v2396
  %2398 = vmatmul.f32.gmra.mxu0 %v2283
  %v2399 = vpop.f32.mrf.mxu0
  %v2400 = vadd.f32 0.0, %v2399
  %2401 = vmatmul.f32.gmra.mxu0 %v2286
  %v2402 = vpop.f32.mrf.mxu0
  %v2403 = vadd.f32 0.0, %v2402
  %2404 = vmatmul.f32.gmra.mxu0 %v2289
  %v2405 = vpop.f32.mrf.mxu0
  %v2406 = vadd.f32 0.0, %v2405
  %2407 = vmatmul.f32.gmra.mxu0 %v2292
  %v2408 = vpop.f32.mrf.mxu0
  %v2409 = vadd.f32 0.0, %v2408
  %2410 = vmatmul.f32.gmra.mxu0 %v2295
  %v2411 = vpop.f32.mrf.mxu0
  %v2412 = vadd.f32 0.0, %v2411
  %2413 = vmatmul.f32.gmra.mxu0 %v2298
  %v2414 = vpop.f32.mrf.mxu0
  %v2415 = vadd.f32 0.0, %v2414
  %2416 = vdwg.mxu0
  %v2418 = vsel %vm2203, 0.0, 0
  %v2421 = vsel %vm2300, %v2201, 0
  %2423 = vmatpush.msra.mxu0 0.0
  %2424 = vmatpush.msra.mxu0 0.0
  %2425 = vmatpush.msra.mxu0 0.0
  %2426 = vmatpush.msra.mxu0 0.0
  %2427 = vmatpush.msra.mxu0 0.0
  %2428 = vmatpush.msra.mxu0 0.0
  %2429 = vmatpush.msra.mxu0 0.0
  %2430 = vmatpush.msra.mxu0 0.0
  %2431 = vmatpush.msra.mxu0 0.0
  %2432 = vmatpush.msra.mxu0 0.0
  %2433 = vmatpush.msra.mxu0 0.0
  %2434 = vmatpush.msra.mxu0 0.0
  %2435 = vmatpush.msra.mxu0 0.0
  %2436 = vmatpush.msra.mxu0 0.0
  %2437 = vmatpush.msra.mxu0 0.0
  %2438 = vmatpush.msra.mxu0 %v2421
  %2439 = vmatmul.f32.gmra.mxu0 %v2418
  %v2440 = vpop.f32.mrf.mxu0
  %v2441 = vadd.f32 %v2322, %v2440
  %2442 = vmatmul.f32.gmra.mxu0 %v2205
  %v2443 = vpop.f32.mrf.mxu0
  %v2444 = vadd.f32 %v2325, %v2443
  %2445 = vmatmul.f32.gmra.mxu0 %v2208
  %v2446 = vpop.f32.mrf.mxu0
  %v2447 = vadd.f32 %v2328, %v2446
  %2448 = vmatmul.f32.gmra.mxu0 %v2211
  %v2449 = vpop.f32.mrf.mxu0
  %v2450 = vadd.f32 %v2331, %v2449
  %2451 = vmatmul.f32.gmra.mxu0 %v2214
  %v2452 = vpop.f32.mrf.mxu0
  %v2453 = vadd.f32 %v2334, %v2452
  %2454 = vmatmul.f32.gmra.mxu0 %v2217
  %v2455 = vpop.f32.mrf.mxu0
  %v2456 = vadd.f32 %v2337, %v2455
  %2457 = vmatmul.f32.gmra.mxu0 %v2220
  %v2458 = vpop.f32.mrf.mxu0
  %v2459 = vadd.f32 %v2340, %v2458
  %2460 = vmatmul.f32.gmra.mxu0 %v2223
  %v2461 = vpop.f32.mrf.mxu0
  %v2462 = vadd.f32 %v2343, %v2461
  %2463 = vmatmul.f32.gmra.mxu0 %v2226
  %v2464 = vpop.f32.mrf.mxu0
  %v2465 = vadd.f32 %v2346, %v2464
  %2466 = vmatmul.f32.gmra.mxu0 %v2229
  %v2467 = vpop.f32.mrf.mxu0
  %v2468 = vadd.f32 %v2349, %v2467
  %2469 = vmatmul.f32.gmra.mxu0 %v2232
  %v2470 = vpop.f32.mrf.mxu0
  %v2471 = vadd.f32 %v2352, %v2470
  %2472 = vmatmul.f32.gmra.mxu0 %v2235
  %v2473 = vpop.f32.mrf.mxu0
  %v2474 = vadd.f32 %v2355, %v2473
  %2475 = vmatmul.f32.gmra.mxu0 %v2238
  %v2476 = vpop.f32.mrf.mxu0
  %v2477 = vadd.f32 %v2358, %v2476
  %2478 = vmatmul.f32.gmra.mxu0 %v2241
  %v2479 = vpop.f32.mrf.mxu0
  %v2480 = vadd.f32 %v2361, %v2479
  %2481 = vmatmul.f32.gmra.mxu0 %v2244
  %v2482 = vpop.f32.mrf.mxu0
  %v2483 = vadd.f32 %v2364, %v2482
  %2484 = vmatmul.f32.gmra.mxu0 %v2247
  %v2485 = vpop.f32.mrf.mxu0
  %v2486 = vadd.f32 %v2367, %v2485
  %2487 = vmatmul.f32.gmra.mxu0 %v2250
  %v2488 = vpop.f32.mrf.mxu0
  %v2489 = vadd.f32 %v2370, %v2488
  %2490 = vmatmul.f32.gmra.mxu0 %v2253
  %v2491 = vpop.f32.mrf.mxu0
  %v2492 = vadd.f32 %v2373, %v2491
  %2493 = vmatmul.f32.gmra.mxu0 %v2256
  %v2494 = vpop.f32.mrf.mxu0
  %v2495 = vadd.f32 %v2376, %v2494
  %2496 = vmatmul.f32.gmra.mxu0 %v2259
  %v2497 = vpop.f32.mrf.mxu0
  %v2498 = vadd.f32 %v2379, %v2497
  %2499 = vmatmul.f32.gmra.mxu0 %v2262
  %v2500 = vpop.f32.mrf.mxu0
  %v2501 = vadd.f32 %v2382, %v2500
  %2502 = vmatmul.f32.gmra.mxu0 %v2265
  %v2503 = vpop.f32.mrf.mxu0
  %v2504 = vadd.f32 %v2385, %v2503
  %2505 = vmatmul.f32.gmra.mxu0 %v2268
  %v2506 = vpop.f32.mrf.mxu0
  %v2507 = vadd.f32 %v2388, %v2506
  %2508 = vmatmul.f32.gmra.mxu0 %v2271
  %v2509 = vpop.f32.mrf.mxu0
  %v2510 = vadd.f32 %v2391, %v2509
  %2511 = vmatmul.f32.gmra.mxu0 %v2274
  %v2512 = vpop.f32.mrf.mxu0
  %v2513 = vadd.f32 %v2394, %v2512
  %2514 = vmatmul.f32.gmra.mxu0 %v2277
  %v2515 = vpop.f32.mrf.mxu0
  %v2516 = vadd.f32 %v2397, %v2515
  %2517 = vmatmul.f32.gmra.mxu0 %v2280
  %v2518 = vpop.f32.mrf.mxu0
  %v2519 = vadd.f32 %v2400, %v2518
  %2520 = vmatmul.f32.gmra.mxu0 %v2283
  %v2521 = vpop.f32.mrf.mxu0
  %v2522 = vadd.f32 %v2403, %v2521
  %2523 = vmatmul.f32.gmra.mxu0 %v2286
  %v2524 = vpop.f32.mrf.mxu0
  %v2525 = vadd.f32 %v2406, %v2524
  %2526 = vmatmul.f32.gmra.mxu0 %v2289
  %v2527 = vpop.f32.mrf.mxu0
  %v2528 = vadd.f32 %v2409, %v2527
  %2529 = vmatmul.f32.gmra.mxu0 %v2292
  %v2530 = vpop.f32.mrf.mxu0
  %v2531 = vadd.f32 %v2412, %v2530
  %2532 = vmatmul.f32.gmra.mxu0 %v2295
  %v2533 = vpop.f32.mrf.mxu0
  %v2534 = vadd.f32 %v2415, %v2533
  %2535 = vdwg.mxu0
  %v2536 = vld [vmem:[%s3] sm:$0xf]
  %v2538 = vsel %vm2300, %v2536, 0
  %2540 = vmatpush.msra.mxu0 0.0
  %2541 = vmatpush.msra.mxu0 0.0
  %2542 = vmatpush.msra.mxu0 0.0
  %2543 = vmatpush.msra.mxu0 0.0
  %2544 = vmatpush.msra.mxu0 0.0
  %2545 = vmatpush.msra.mxu0 0.0
  %2546 = vmatpush.msra.mxu0 0.0
  %2547 = vmatpush.msra.mxu0 0.0
  %2548 = vmatpush.msra.mxu0 0.0
  %2549 = vmatpush.msra.mxu0 0.0
  %2550 = vmatpush.msra.mxu0 0.0
  %2551 = vmatpush.msra.mxu0 0.0
  %2552 = vmatpush.msra.mxu0 0.0
  %2553 = vmatpush.msra.mxu0 0.0
  %2554 = vmatpush.msra.mxu0 0.0
  %2555 = vmatpush.msra.mxu0 %v2538
  %2556 = vmatmul.f32.gmra.mxu0 %v2208
  %v2557 = vpop.f32.mrf.mxu0
  %v2558 = vadd.f32 0.0, %v2557
  %2559 = vmatmul.f32.gmra.mxu0 %v2211
  %v2560 = vpop.f32.mrf.mxu0
  %v2561 = vadd.f32 0.0, %v2560
  %2562 = vmatmul.f32.gmra.mxu0 %v2214
  %v2563 = vpop.f32.mrf.mxu0
  %v2564 = vadd.f32 0.0, %v2563
  %2565 = vmatmul.f32.gmra.mxu0 %v2217
  %v2566 = vpop.f32.mrf.mxu0
  %v2567 = vadd.f32 0.0, %v2566
  %2568 = vmatmul.f32.gmra.mxu0 %v2220
  %v2569 = vpop.f32.mrf.mxu0
  %v2570 = vadd.f32 0.0, %v2569
  %2571 = vmatmul.f32.gmra.mxu0 %v2223
  %v2572 = vpop.f32.mrf.mxu0
  %v2573 = vadd.f32 0.0, %v2572
  %2574 = vmatmul.f32.gmra.mxu0 %v2226
  %v2575 = vpop.f32.mrf.mxu0
  %v2576 = vadd.f32 0.0, %v2575
  %2577 = vmatmul.f32.gmra.mxu0 %v2229
  %v2578 = vpop.f32.mrf.mxu0
  %v2579 = vadd.f32 0.0, %v2578
  %2580 = vmatmul.f32.gmra.mxu0 %v2232
  %v2581 = vpop.f32.mrf.mxu0
  %v2582 = vadd.f32 0.0, %v2581
  %2583 = vmatmul.f32.gmra.mxu0 %v2235
  %v2584 = vpop.f32.mrf.mxu0
  %v2585 = vadd.f32 0.0, %v2584
  %2586 = vmatmul.f32.gmra.mxu0 %v2238
  %v2587 = vpop.f32.mrf.mxu0
  %v2588 = vadd.f32 0.0, %v2587
  %2589 = vmatmul.f32.gmra.mxu0 %v2241
  %v2590 = vpop.f32.mrf.mxu0
  %v2591 = vadd.f32 0.0, %v2590
  %2592 = vmatmul.f32.gmra.mxu0 %v2244
  %v2593 = vpop.f32.mrf.mxu0
  %v2594 = vadd.f32 0.0, %v2593
  %2595 = vmatmul.f32.gmra.mxu0 %v2247
  %v2596 = vpop.f32.mrf.mxu0
  %v2597 = vadd.f32 0.0, %v2596
  %2598 = vmatmul.f32.gmra.mxu0 %v2250
  %v2599 = vpop.f32.mrf.mxu0
  %v2600 = vadd.f32 0.0, %v2599
  %2601 = vmatmul.f32.gmra.mxu0 %v2253
  %v2602 = vpop.f32.mrf.mxu0
  %v2603 = vadd.f32 0.0, %v2602
  %2604 = vmatmul.f32.gmra.mxu0 %v2256
  %v2605 = vpop.f32.mrf.mxu0
  %v2606 = vadd.f32 0.0, %v2605
  %2607 = vmatmul.f32.gmra.mxu0 %v2259
  %v2608 = vpop.f32.mrf.mxu0
  %v2609 = vadd.f32 0.0, %v2608
  %2610 = vmatmul.f32.gmra.mxu0 %v2262
  %v2611 = vpop.f32.mrf.mxu0
  %v2612 = vadd.f32 0.0, %v2611
  %2613 = vmatmul.f32.gmra.mxu0 %v2265
  %v2614 = vpop.f32.mrf.mxu0
  %v2615 = vadd.f32 0.0, %v2614
  %2616 = vmatmul.f32.gmra.mxu0 %v2268
  %v2617 = vpop.f32.mrf.mxu0
  %v2618 = vadd.f32 0.0, %v2617
  %2619 = vmatmul.f32.gmra.mxu0 %v2271
  %v2620 = vpop.f32.mrf.mxu0
  %v2621 = vadd.f32 0.0, %v2620
  %2622 = vmatmul.f32.gmra.mxu0 %v2274
  %v2623 = vpop.f32.mrf.mxu0
  %v2624 = vadd.f32 0.0, %v2623
  %2625 = vmatmul.f32.gmra.mxu0 %v2277
  %v2626 = vpop.f32.mrf.mxu0
  %v2627 = vadd.f32 0.0, %v2626
  %2628 = vmatmul.f32.gmra.mxu0 %v2280
  %v2629 = vpop.f32.mrf.mxu0
  %v2630 = vadd.f32 0.0, %v2629
  %2631 = vmatmul.f32.gmra.mxu0 %v2283
  %v2632 = vpop.f32.mrf.mxu0
  %v2633 = vadd.f32 0.0, %v2632
  %2634 = vmatmul.f32.gmra.mxu0 %v2286
  %v2635 = vpop.f32.mrf.mxu0
  %v2636 = vadd.f32 0.0, %v2635
  %2637 = vmatmul.f32.gmra.mxu0 %v2289
  %v2638 = vpop.f32.mrf.mxu0
  %v2639 = vadd.f32 0.0, %v2638
  %2640 = vmatmul.f32.gmra.mxu0 %v2292
  %v2641 = vpop.f32.mrf.mxu0
  %v2642 = vadd.f32 0.0, %v2641
  %2643 = vmatmul.f32.gmra.mxu0 %v2295
  %v2644 = vpop.f32.mrf.mxu0
  %v2645 = vadd.f32 0.0, %v2644
  %2646 = vmatmul.f32.gmra.mxu0 %v2298
  %v2647 = vpop.f32.mrf.mxu0
  %v2648 = vadd.f32 0.0, %v2647
  %2649 = vmatmul.f32.gmra.mxu0 %v2418
  %v2650 = vpop.f32.mrf.mxu0
  %v2651 = vadd.f32 0.0, %v2650
  %2652 = vdwg.mxu0
  %v2653 = vadd.f32 %v2441, %v2558
  %v2654 = vadd.f32 %v2444, %v2561
  %v2655 = vadd.f32 %v2447, %v2564
  %v2656 = vadd.f32 %v2450, %v2567
  %v2657 = vadd.f32 %v2453, %v2570
  %v2658 = vadd.f32 %v2456, %v2573
  %v2659 = vadd.f32 %v2459, %v2576
  %v2660 = vadd.f32 %v2462, %v2579
  %v2661 = vadd.f32 %v2465, %v2582
  %v2662 = vadd.f32 %v2468, %v2585
  %v2663 = vadd.f32 %v2471, %v2588
  %v2664 = vadd.f32 %v2474, %v2591
  %v2665 = vadd.f32 %v2477, %v2594
  %v2666 = vadd.f32 %v2480, %v2597
  %v2667 = vadd.f32 %v2483, %v2600
  %v2668 = vadd.f32 %v2486, %v2603
  %v2669 = vadd.f32 %v2489, %v2606
  %v2670 = vadd.f32 %v2492, %v2609
  %v2671 = vadd.f32 %v2495, %v2612
  %v2672 = vadd.f32 %v2498, %v2615
  %v2673 = vadd.f32 %v2501, %v2618
  %v2674 = vadd.f32 %v2504, %v2621
  %v2675 = vadd.f32 %v2507, %v2624
  %v2676 = vadd.f32 %v2510, %v2627
  %v2677 = vadd.f32 %v2513, %v2630
  %v2678 = vadd.f32 %v2516, %v2633
  %v2679 = vadd.f32 %v2519, %v2636
  %v2680 = vadd.f32 %v2522, %v2639
  %v2681 = vadd.f32 %v2525, %v2642
  %v2682 = vadd.f32 %v2528, %v2645
  %v2683 = vadd.f32 %v2531, %v2648
  %v2684 = vadd.f32 %v2534, %v2651
  %v2685 = vld [vmem:[%s4] sm:$0x1]
  %v2687 = vperm.slane %v2685, 0
  %v2689 = vadd.f32 %v2653, %v2687
  %v2690 = vadd.f32 %v2654, %v2687
  %v2691 = vadd.f32 %v2655, %v2687
  %v2692 = vadd.f32 %v2656, %v2687
  %v2693 = vadd.f32 %v2657, %v2687
  %v2694 = vadd.f32 %v2658, %v2687
  %v2695 = vadd.f32 %v2659, %v2687
  %v2696 = vadd.f32 %v2660, %v2687
  %v2697 = vadd.f32 %v2661, %v2687
  %v2698 = vadd.f32 %v2662, %v2687
  %v2699 = vadd.f32 %v2663, %v2687
  %v2700 = vadd.f32 %v2664, %v2687
  %v2701 = vadd.f32 %v2665, %v2687
  %v2702 = vadd.f32 %v2666, %v2687
  %v2703 = vadd.f32 %v2667, %v2687
  %v2704 = vadd.f32 %v2668, %v2687
  %v2705 = vadd.f32 %v2669, %v2687
  %v2706 = vadd.f32 %v2670, %v2687
  %v2707 = vadd.f32 %v2671, %v2687
  %v2708 = vadd.f32 %v2672, %v2687
  %v2709 = vadd.f32 %v2673, %v2687
  %v2710 = vadd.f32 %v2674, %v2687
  %v2711 = vadd.f32 %v2675, %v2687
  %v2712 = vadd.f32 %v2676, %v2687
  %v2713 = vadd.f32 %v2677, %v2687
  %v2714 = vadd.f32 %v2678, %v2687
  %v2715 = vadd.f32 %v2679, %v2687
  %v2716 = vadd.f32 %v2680, %v2687
  %v2717 = vadd.f32 %v2681, %v2687
  %v2718 = vadd.f32 %v2682, %v2687
  %v2719 = vadd.f32 %v2683, %v2687
  %v2720 = vadd.f32 %v2684, %v2687
  %v2721 = vmax.f32 %v2689, 0.0
  %v2722 = vmax.f32 %v2690, 0.0
  %v2723 = vmax.f32 %v2691, 0.0
  %v2724 = vmax.f32 %v2692, 0.0
  %v2725 = vmax.f32 %v2693, 0.0
  %v2726 = vmax.f32 %v2694, 0.0
  %v2727 = vmax.f32 %v2695, 0.0
  %v2728 = vmax.f32 %v2696, 0.0
  %v2729 = vmax.f32 %v2697, 0.0
  %v2730 = vmax.f32 %v2698, 0.0
  %v2731 = vmax.f32 %v2699, 0.0
  %v2732 = vmax.f32 %v2700, 0.0
  %v2733 = vmax.f32 %v2701, 0.0
  %v2734 = vmax.f32 %v2702, 0.0
  %v2735 = vmax.f32 %v2703, 0.0
  %v2736 = vmax.f32 %v2704, 0.0
  %v2737 = vmax.f32 %v2705, 0.0
  %v2738 = vmax.f32 %v2706, 0.0
  %v2739 = vmax.f32 %v2707, 0.0
  %v2740 = vmax.f32 %v2708, 0.0
  %v2741 = vmax.f32 %v2709, 0.0
  %v2742 = vmax.f32 %v2710, 0.0
  %v2743 = vmax.f32 %v2711, 0.0
  %v2744 = vmax.f32 %v2712, 0.0
  %v2745 = vmax.f32 %v2713, 0.0
  %v2746 = vmax.f32 %v2714, 0.0
  %v2747 = vmax.f32 %v2715, 0.0
  %v2748 = vmax.f32 %v2716, 0.0
  %v2749 = vmax.f32 %v2717, 0.0
  %v2750 = vmax.f32 %v2718, 0.0
  %v2751 = vmax.f32 %v2719, 0.0
  %v2752 = vmax.f32 %v2720, 0.0
  %v2753 = vld [vmem:[%s5] sm:$0xff]
  %v2754 = vld [vmem:[%s5 + $0x8] sm:$0xff]
  %v2755 = vld [vmem:[%s5 + $0x10] sm:$0xff]
  %v2756 = vld [vmem:[%s5 + $0x18] sm:$0xff]
  %v2757 = vld [vmem:[%s5 + $0x20] sm:$0xff]
  %v2758 = vld [vmem:[%s5 + $0x28] sm:$0xff]
  %v2759 = vld [vmem:[%s5 + $0x30] sm:$0xff]
  %v2760 = vld [vmem:[%s5 + $0x38] sm:$0xff]
  %v2761 = vld [vmem:[%s6] sm:$0xff]
  %v2762 = vld [vmem:[%s6 + $0x8] sm:$0xff]
  %v2763 = vld [vmem:[%s6 + $0x10] sm:$0xff]
  %v2764 = vld [vmem:[%s6 + $0x18] sm:$0xff]
  %v2765 = vld [vmem:[%s6 + $0x20] sm:$0xff]
  %v2766 = vld [vmem:[%s6 + $0x28] sm:$0xff]
  %v2767 = vld [vmem:[%s6 + $0x30] sm:$0xff]
  %v2768 = vld [vmem:[%s6 + $0x38] sm:$0xff]
  %vm2769 = vcmask 523264
  %v2771 = vsel %vm2769, %v2721, 0
  %v2774 = vsel %vm2769, %v2722, 0
  %v2777 = vsel %vm2769, %v2723, 0
  %v2780 = vsel %vm2769, %v2724, 0
  %v2783 = vsel %vm2769, %v2725, 0
  %v2786 = vsel %vm2769, %v2726, 0
  %v2789 = vsel %vm2769, %v2727, 0
  %v2792 = vsel %vm2769, %v2728, 0
  %v2795 = vsel %vm2769, %v2729, 0
  %v2798 = vsel %vm2769, %v2730, 0
  %v2801 = vsel %vm2769, %v2731, 0
  %v2804 = vsel %vm2769, %v2732, 0
  %v2807 = vsel %vm2769, %v2733, 0
  %v2810 = vsel %vm2769, %v2734, 0
  %v2813 = vsel %vm2769, %v2735, 0
  %v2816 = vsel %vm2769, %v2736, 0
  %v2819 = vsel %vm2769, %v2737, 0
  %v2822 = vsel %vm2769, %v2738, 0
  %v2825 = vsel %vm2769, %v2739, 0
  %v2828 = vsel %vm2769, %v2740, 0
  %v2831 = vsel %vm2769, %v2741, 0
  %v2834 = vsel %vm2769, %v2742, 0
  %v2837 = vsel %vm2769, %v2743, 0
  %v2840 = vsel %vm2769, %v2744, 0
  %v2843 = vsel %vm2769, %v2745, 0
  %v2846 = vsel %vm2769, %v2746, 0
  %v2849 = vsel %vm2769, %v2747, 0
  %v2852 = vsel %vm2769, %v2748, 0
  %v2855 = vsel %vm2769, %v2749, 0
  %v2858 = vsel %vm2769, %v2750, 0
  %v2861 = vsel %vm2769, %v2751, 0
  %v2864 = vsel %vm2769, %v2752, 0
  %2866 = vmatpush.msra.mxu0 0.0
  %2867 = vmatpush.msra.mxu0 0.0
  %2868 = vmatpush.msra.mxu0 0.0
  %2869 = vmatpush.msra.mxu0 0.0
  %2870 = vmatpush.msra.mxu0 0.0
  %2871 = vmatpush.msra.mxu0 0.0
  %2872 = vmatpush.msra.mxu0 0.0
  %2873 = vmatpush.msra.mxu0 0.0
  %2874 = vmatpush.msra.mxu0 %v2768
  %2875 = vmatpush.msra.mxu0 %v2767
  %2876 = vmatpush.msra.mxu0 %v2766
  %2877 = vmatpush.msra.mxu0 %v2765
  %2878 = vmatpush.msra.mxu0 %v2764
  %2879 = vmatpush.msra.mxu0 %v2763
  %2880 = vmatpush.msra.mxu0 %v2762
  %2881 = vmatpush.msra.mxu0 %v2761
  %2882 = vmatmul.f32.gmra.mxu0 %v2771
  %v2883 = vpop.f32.mrf.mxu0
  %v2884 = vadd.f32 0.0, %v2883
  %2885 = vmatmul.f32.gmra.mxu0 %v2774
  %v2886 = vpop.f32.mrf.mxu0
  %v2887 = vadd.f32 0.0, %v2886
  %2888 = vmatmul.f32.gmra.mxu0 %v2777
  %v2889 = vpop.f32.mrf.mxu0
  %v2890 = vadd.f32 0.0, %v2889
  %2891 = vmatmul.f32.gmra.mxu0 %v2780
  %v2892 = vpop.f32.mrf.mxu0
  %v2893 = vadd.f32 0.0, %v2892
  %2894 = vmatmul.f32.gmra.mxu0 %v2783
  %v2895 = vpop.f32.mrf.mxu0
  %v2896 = vadd.f32 0.0, %v2895
  %2897 = vmatmul.f32.gmra.mxu0 %v2786
  %v2898 = vpop.f32.mrf.mxu0
  %v2899 = vadd.f32 0.0, %v2898
  %2900 = vmatmul.f32.gmra.mxu0 %v2789
  %v2901 = vpop.f32.mrf.mxu0
  %v2902 = vadd.f32 0.0, %v2901
  %2903 = vmatmul.f32.gmra.mxu0 %v2792
  %v2904 = vpop.f32.mrf.mxu0
  %v2905 = vadd.f32 0.0, %v2904
  %2906 = vmatmul.f32.gmra.mxu0 %v2795
  %v2907 = vpop.f32.mrf.mxu0
  %v2908 = vadd.f32 0.0, %v2907
  %2909 = vmatmul.f32.gmra.mxu0 %v2798
  %v2910 = vpop.f32.mrf.mxu0
  %v2911 = vadd.f32 0.0, %v2910
  %2912 = vmatmul.f32.gmra.mxu0 %v2801
  %v2913 = vpop.f32.mrf.mxu0
  %v2914 = vadd.f32 0.0, %v2913
  %2915 = vmatmul.f32.gmra.mxu0 %v2804
  %v2916 = vpop.f32.mrf.mxu0
  %v2917 = vadd.f32 0.0, %v2916
  %2918 = vmatmul.f32.gmra.mxu0 %v2807
  %v2919 = vpop.f32.mrf.mxu0
  %v2920 = vadd.f32 0.0, %v2919
  %2921 = vmatmul.f32.gmra.mxu0 %v2810
  %v2922 = vpop.f32.mrf.mxu0
  %v2923 = vadd.f32 0.0, %v2922
  %2924 = vmatmul.f32.gmra.mxu0 %v2813
  %v2925 = vpop.f32.mrf.mxu0
  %v2926 = vadd.f32 0.0, %v2925
  %2927 = vmatmul.f32.gmra.mxu0 %v2816
  %v2928 = vpop.f32.mrf.mxu0
  %v2929 = vadd.f32 0.0, %v2928
  %2930 = vmatmul.f32.gmra.mxu0 %v2819
  %v2931 = vpop.f32.mrf.mxu0
  %v2932 = vadd.f32 0.0, %v2931
  %2933 = vmatmul.f32.gmra.mxu0 %v2822
  %v2934 = vpop.f32.mrf.mxu0
  %v2935 = vadd.f32 0.0, %v2934
  %2936 = vmatmul.f32.gmra.mxu0 %v2825
  %v2937 = vpop.f32.mrf.mxu0
  %v2938 = vadd.f32 0.0, %v2937
  %2939 = vmatmul.f32.gmra.mxu0 %v2828
  %v2940 = vpop.f32.mrf.mxu0
  %v2941 = vadd.f32 0.0, %v2940
  %2942 = vmatmul.f32.gmra.mxu0 %v2831
  %v2943 = vpop.f32.mrf.mxu0
  %v2944 = vadd.f32 0.0, %v2943
  %2945 = vmatmul.f32.gmra.mxu0 %v2834
  %v2946 = vpop.f32.mrf.mxu0
  %v2947 = vadd.f32 0.0, %v2946
  %2948 = vmatmul.f32.gmra.mxu0 %v2837
  %v2949 = vpop.f32.mrf.mxu0
  %v2950 = vadd.f32 0.0, %v2949
  %2951 = vmatmul.f32.gmra.mxu0 %v2840
  %v2952 = vpop.f32.mrf.mxu0
  %v2953 = vadd.f32 0.0, %v2952
  %2954 = vmatmul.f32.gmra.mxu0 %v2843
  %v2955 = vpop.f32.mrf.mxu0
  %v2956 = vadd.f32 0.0, %v2955
  %2957 = vmatmul.f32.gmra.mxu0 %v2846
  %v2958 = vpop.f32.mrf.mxu0
  %v2959 = vadd.f32 0.0, %v2958
  %2960 = vmatmul.f32.gmra.mxu0 %v2849
  %v2961 = vpop.f32.mrf.mxu0
  %v2962 = vadd.f32 0.0, %v2961
  %2963 = vmatmul.f32.gmra.mxu0 %v2852
  %v2964 = vpop.f32.mrf.mxu0
  %v2965 = vadd.f32 0.0, %v2964
  %2966 = vmatmul.f32.gmra.mxu0 %v2855
  %v2967 = vpop.f32.mrf.mxu0
  %v2968 = vadd.f32 0.0, %v2967
  %2969 = vmatmul.f32.gmra.mxu0 %v2858
  %v2970 = vpop.f32.mrf.mxu0
  %v2971 = vadd.f32 0.0, %v2970
  %2972 = vmatmul.f32.gmra.mxu0 %v2861
  %v2973 = vpop.f32.mrf.mxu0
  %v2974 = vadd.f32 0.0, %v2973
  %2975 = vmatmul.f32.gmra.mxu0 %v2864
  %v2976 = vpop.f32.mrf.mxu0
  %v2977 = vadd.f32 0.0, %v2976
  %2978 = vdwg.mxu0
  %v2979 = vsel %vm2769, 0.0, 0
  %2981 = vmatpush.msra.mxu0 0.0
  %2982 = vmatpush.msra.mxu0 0.0
  %2983 = vmatpush.msra.mxu0 0.0
  %2984 = vmatpush.msra.mxu0 0.0
  %2985 = vmatpush.msra.mxu0 0.0
  %2986 = vmatpush.msra.mxu0 0.0
  %2987 = vmatpush.msra.mxu0 0.0
  %2988 = vmatpush.msra.mxu0 0.0
  %2989 = vmatpush.msra.mxu0 %v2760
  %2990 = vmatpush.msra.mxu0 %v2759
  %2991 = vmatpush.msra.mxu0 %v2758
  %2992 = vmatpush.msra.mxu0 %v2757
  %2993 = vmatpush.msra.mxu0 %v2756
  %2994 = vmatpush.msra.mxu0 %v2755
  %2995 = vmatpush.msra.mxu0 %v2754
  %2996 = vmatpush.msra.mxu0 %v2753
  %2997 = vmatmul.f32.gmra.mxu0 %v2979
  %v2998 = vpop.f32.mrf.mxu0
  %v2999 = vadd.f32 %v2884, %v2998
  %3000 = vmatmul.f32.gmra.mxu0 %v2771
  %v3001 = vpop.f32.mrf.mxu0
  %v3002 = vadd.f32 %v2887, %v3001
  %3003 = vmatmul.f32.gmra.mxu0 %v2774
  %v3004 = vpop.f32.mrf.mxu0
  %v3005 = vadd.f32 %v2890, %v3004
  %3006 = vmatmul.f32.gmra.mxu0 %v2777
  %v3007 = vpop.f32.mrf.mxu0
  %v3008 = vadd.f32 %v2893, %v3007
  %3009 = vmatmul.f32.gmra.mxu0 %v2780
  %v3010 = vpop.f32.mrf.mxu0
  %v3011 = vadd.f32 %v2896, %v3010
  %3012 = vmatmul.f32.gmra.mxu0 %v2783
  %v3013 = vpop.f32.mrf.mxu0
  %v3014 = vadd.f32 %v2899, %v3013
  %3015 = vmatmul.f32.gmra.mxu0 %v2786
  %v3016 = vpop.f32.mrf.mxu0
  %v3017 = vadd.f32 %v2902, %v3016
  %3018 = vmatmul.f32.gmra.mxu0 %v2789
  %v3019 = vpop.f32.mrf.mxu0
  %v3020 = vadd.f32 %v2905, %v3019
  %3021 = vmatmul.f32.gmra.mxu0 %v2792
  %v3022 = vpop.f32.mrf.mxu0
  %v3023 = vadd.f32 %v2908, %v3022
  %3024 = vmatmul.f32.gmra.mxu0 %v2795
  %v3025 = vpop.f32.mrf.mxu0
  %v3026 = vadd.f32 %v2911, %v3025
  %3027 = vmatmul.f32.gmra.mxu0 %v2798
  %v3028 = vpop.f32.mrf.mxu0
  %v3029 = vadd.f32 %v2914, %v3028
  %3030 = vmatmul.f32.gmra.mxu0 %v2801
  %v3031 = vpop.f32.mrf.mxu0
  %v3032 = vadd.f32 %v2917, %v3031
  %3033 = vmatmul.f32.gmra.mxu0 %v2804
  %v3034 = vpop.f32.mrf.mxu0
  %v3035 = vadd.f32 %v2920, %v3034
  %3036 = vmatmul.f32.gmra.mxu0 %v2807
  %v3037 = vpop.f32.mrf.mxu0
  %v3038 = vadd.f32 %v2923, %v3037
  %3039 = vmatmul.f32.gmra.mxu0 %v2810
  %v3040 = vpop.f32.mrf.mxu0
  %v3041 = vadd.f32 %v2926, %v3040
  %3042 = vmatmul.f32.gmra.mxu0 %v2813
  %v3043 = vpop.f32.mrf.mxu0
  %v3044 = vadd.f32 %v2929, %v3043
  %3045 = vmatmul.f32.gmra.mxu0 %v2816
  %v3046 = vpop.f32.mrf.mxu0
  %v3047 = vadd.f32 %v2932, %v3046
  %3048 = vmatmul.f32.gmra.mxu0 %v2819
  %v3049 = vpop.f32.mrf.mxu0
  %v3050 = vadd.f32 %v2935, %v3049
  %3051 = vmatmul.f32.gmra.mxu0 %v2822
  %v3052 = vpop.f32.mrf.mxu0
  %v3053 = vadd.f32 %v2938, %v3052
  %3054 = vmatmul.f32.gmra.mxu0 %v2825
  %v3055 = vpop.f32.mrf.mxu0
  %v3056 = vadd.f32 %v2941, %v3055
  %3057 = vmatmul.f32.gmra.mxu0 %v2828
  %v3058 = vpop.f32.mrf.mxu0
  %v3059 = vadd.f32 %v2944, %v3058
  %3060 = vmatmul.f32.gmra.mxu0 %v2831
  %v3061 = vpop.f32.mrf.mxu0
  %v3062 = vadd.f32 %v2947, %v3061
  %3063 = vmatmul.f32.gmra.mxu0 %v2834
  %v3064 = vpop.f32.mrf.mxu0
  %v3065 = vadd.f32 %v2950, %v3064
  %3066 = vmatmul.f32.gmra.mxu0 %v2837
  %v3067 = vpop.f32.mrf.mxu0
  %v3068 = vadd.f32 %v2953, %v3067
  %3069 = vmatmul.f32.gmra.mxu0 %v2840
  %v3070 = vpop.f32.mrf.mxu0
  %v3071 = vadd.f32 %v2956, %v3070
  %3072 = vmatmul.f32.gmra.mxu0 %v2843
  %v3073 = vpop.f32.mrf.mxu0
  %v3074 = vadd.f32 %v2959, %v3073
  %3075 = vmatmul.f32.gmra.mxu0 %v2846
  %v3076 = vpop.f32.mrf.mxu0
  %v3077 = vadd.f32 %v2962, %v3076
  %3078 = vmatmul.f32.gmra.mxu0 %v2849
  %v3079 = vpop.f32.mrf.mxu0
  %v3080 = vadd.f32 %v2965, %v3079
  %3081 = vmatmul.f32.gmra.mxu0 %v2852
  %v3082 = vpop.f32.mrf.mxu0
  %v3083 = vadd.f32 %v2968, %v3082
  %3084 = vmatmul.f32.gmra.mxu0 %v2855
  %v3085 = vpop.f32.mrf.mxu0
  %v3086 = vadd.f32 %v2971, %v3085
  %3087 = vmatmul.f32.gmra.mxu0 %v2858
  %v3088 = vpop.f32.mrf.mxu0
  %v3089 = vadd.f32 %v2974, %v3088
  %3090 = vmatmul.f32.gmra.mxu0 %v2861
  %v3091 = vpop.f32.mrf.mxu0
  %v3092 = vadd.f32 %v2977, %v3091
  %3093 = vdwg.mxu0
  %v3094 = vld [vmem:[%s7] sm:$0xff]
  %v3095 = vld [vmem:[%s7 + $0x8] sm:$0xff]
  %v3096 = vld [vmem:[%s7 + $0x10] sm:$0xff]
  %v3097 = vld [vmem:[%s7 + $0x18] sm:$0xff]
  %v3098 = vld [vmem:[%s7 + $0x20] sm:$0xff]
  %v3099 = vld [vmem:[%s7 + $0x28] sm:$0xff]
  %v3100 = vld [vmem:[%s7 + $0x30] sm:$0xff]
  %v3101 = vld [vmem:[%s7 + $0x38] sm:$0xff]
  %3102 = vmatpush.msra.mxu0 0.0
  %3103 = vmatpush.msra.mxu0 0.0
  %3104 = vmatpush.msra.mxu0 0.0
  %3105 = vmatpush.msra.mxu0 0.0
  %3106 = vmatpush.msra.mxu0 0.0
  %3107 = vmatpush.msra.mxu0 0.0
  %3108 = vmatpush.msra.mxu0 0.0
  %3109 = vmatpush.msra.mxu0 0.0
  %3110 = vmatpush.msra.mxu0 %v3101
  %3111 = vmatpush.msra.mxu0 %v3100
  %3112 = vmatpush.msra.mxu0 %v3099
  %3113 = vmatpush.msra.mxu0 %v3098
  %3114 = vmatpush.msra.mxu0 %v3097
  %3115 = vmatpush.msra.mxu0 %v3096
  %3116 = vmatpush.msra.mxu0 %v3095
  %3117 = vmatpush.msra.mxu0 %v3094
  %3118 = vmatmul.f32.gmra.mxu0 %v2774
  %v3119 = vpop.f32.mrf.mxu0
  %v3120 = vadd.f32 0.0, %v3119
  %3121 = vmatmul.f32.gmra.mxu0 %v2777
  %v3122 = vpop.f32.mrf.mxu0
  %v3123 = vadd.f32 0.0, %v3122
  %3124 = vmatmul.f32.gmra.mxu0 %v2780
  %v3125 = vpop.f32.mrf.mxu0
  %v3126 = vadd.f32 0.0, %v3125
  %3127 = vmatmul.f32.gmra.mxu0 %v2783
  %v3128 = vpop.f32.mrf.mxu0
  %v3129 = vadd.f32 0.0, %v3128
  %3130 = vmatmul.f32.gmra.mxu0 %v2786
  %v3131 = vpop.f32.mrf.mxu0
  %v3132 = vadd.f32 0.0, %v3131
  %3133 = vmatmul.f32.gmra.mxu0 %v2789
  %v3134 = vpop.f32.mrf.mxu0
  %v3135 = vadd.f32 0.0, %v3134
  %3136 = vmatmul.f32.gmra.mxu0 %v2792
  %v3137 = vpop.f32.mrf.mxu0
  %v3138 = vadd.f32 0.0, %v3137
  %3139 = vmatmul.f32.gmra.mxu0 %v2795
  %v3140 = vpop.f32.mrf.mxu0
  %v3141 = vadd.f32 0.0, %v3140
  %3142 = vmatmul.f32.gmra.mxu0 %v2798
  %v3143 = vpop.f32.mrf.mxu0
  %v3144 = vadd.f32 0.0, %v3143
  %3145 = vmatmul.f32.gmra.mxu0 %v2801
  %v3146 = vpop.f32.mrf.mxu0
  %v3147 = vadd.f32 0.0, %v3146
  %3148 = vmatmul.f32.gmra.mxu0 %v2804
  %v3149 = vpop.f32.mrf.mxu0
  %v3150 = vadd.f32 0.0, %v3149
  %3151 = vmatmul.f32.gmra.mxu0 %v2807
  %v3152 = vpop.f32.mrf.mxu0
  %v3153 = vadd.f32 0.0, %v3152
  %3154 = vmatmul.f32.gmra.mxu0 %v2810
  %v3155 = vpop.f32.mrf.mxu0
  %v3156 = vadd.f32 0.0, %v3155
  %3157 = vmatmul.f32.gmra.mxu0 %v2813
  %v3158 = vpop.f32.mrf.mxu0
  %v3159 = vadd.f32 0.0, %v3158
  %3160 = vmatmul.f32.gmra.mxu0 %v2816
  %v3161 = vpop.f32.mrf.mxu0
  %v3162 = vadd.f32 0.0, %v3161
  %3163 = vmatmul.f32.gmra.mxu0 %v2819
  %v3164 = vpop.f32.mrf.mxu0
  %v3165 = vadd.f32 0.0, %v3164
  %3166 = vmatmul.f32.gmra.mxu0 %v2822
  %v3167 = vpop.f32.mrf.mxu0
  %v3168 = vadd.f32 0.0, %v3167
  %3169 = vmatmul.f32.gmra.mxu0 %v2825
  %v3170 = vpop.f32.mrf.mxu0
  %v3171 = vadd.f32 0.0, %v3170
  %3172 = vmatmul.f32.gmra.mxu0 %v2828
  %v3173 = vpop.f32.mrf.mxu0
  %v3174 = vadd.f32 0.0, %v3173
  %3175 = vmatmul.f32.gmra.mxu0 %v2831
  %v3176 = vpop.f32.mrf.mxu0
  %v3177 = vadd.f32 0.0, %v3176
  %3178 = vmatmul.f32.gmra.mxu0 %v2834
  %v3179 = vpop.f32.mrf.mxu0
  %v3180 = vadd.f32 0.0, %v3179
  %3181 = vmatmul.f32.gmra.mxu0 %v2837
  %v3182 = vpop.f32.mrf.mxu0
  %v3183 = vadd.f32 0.0, %v3182
  %3184 = vmatmul.f32.gmra.mxu0 %v2840
  %v3185 = vpop.f32.mrf.mxu0
  %v3186 = vadd.f32 0.0, %v3185
  %3187 = vmatmul.f32.gmra.mxu0 %v2843
  %v3188 = vpop.f32.mrf.mxu0
  %v3189 = vadd.f32 0.0, %v3188
  %3190 = vmatmul.f32.gmra.mxu0 %v2846
  %v3191 = vpop.f32.mrf.mxu0
  %v3192 = vadd.f32 0.0, %v3191
  %3193 = vmatmul.f32.gmra.mxu0 %v2849
  %v3194 = vpop.f32.mrf.mxu0
  %v3195 = vadd.f32 0.0, %v3194
  %3196 = vmatmul.f32.gmra.mxu0 %v2852
  %v3197 = vpop.f32.mrf.mxu0
  %v3198 = vadd.f32 0.0, %v3197
  %3199 = vmatmul.f32.gmra.mxu0 %v2855
  %v3200 = vpop.f32.mrf.mxu0
  %v3201 = vadd.f32 0.0, %v3200
  %3202 = vmatmul.f32.gmra.mxu0 %v2858
  %v3203 = vpop.f32.mrf.mxu0
  %v3204 = vadd.f32 0.0, %v3203
  %3205 = vmatmul.f32.gmra.mxu0 %v2861
  %v3206 = vpop.f32.mrf.mxu0
  %v3207 = vadd.f32 0.0, %v3206
  %3208 = vmatmul.f32.gmra.mxu0 %v2864
  %v3209 = vpop.f32.mrf.mxu0
  %v3210 = vadd.f32 0.0, %v3209
  %3211 = vmatmul.f32.gmra.mxu0 %v2979
  %v3212 = vpop.f32.mrf.mxu0
  %v3213 = vadd.f32 0.0, %v3212
  %3214 = vdwg.mxu0
  %v3215 = vadd.f32 %v2999, %v3120
  %v3216 = vadd.f32 %v3002, %v3123
  %v3217 = vadd.f32 %v3005, %v3126
  %v3218 = vadd.f32 %v3008, %v3129
  %v3219 = vadd.f32 %v3011, %v3132
  %v3220 = vadd.f32 %v3014, %v3135
  %v3221 = vadd.f32 %v3017, %v3138
  %v3222 = vadd.f32 %v3020, %v3141
  %v3223 = vadd.f32 %v3023, %v3144
  %v3224 = vadd.f32 %v3026, %v3147
  %v3225 = vadd.f32 %v3029, %v3150
  %v3226 = vadd.f32 %v3032, %v3153
  %v3227 = vadd.f32 %v3035, %v3156
  %v3228 = vadd.f32 %v3038, %v3159
  %v3229 = vadd.f32 %v3041, %v3162
  %v3230 = vadd.f32 %v3044, %v3165
  %v3231 = vadd.f32 %v3047, %v3168
  %v3232 = vadd.f32 %v3050, %v3171
  %v3233 = vadd.f32 %v3053, %v3174
  %v3234 = vadd.f32 %v3056, %v3177
  %v3235 = vadd.f32 %v3059, %v3180
  %v3236 = vadd.f32 %v3062, %v3183
  %v3237 = vadd.f32 %v3065, %v3186
  %v3238 = vadd.f32 %v3068, %v3189
  %v3239 = vadd.f32 %v3071, %v3192
  %v3240 = vadd.f32 %v3074, %v3195
  %v3241 = vadd.f32 %v3077, %v3198
  %v3242 = vadd.f32 %v3080, %v3201
  %v3243 = vadd.f32 %v3083, %v3204
  %v3244 = vadd.f32 %v3086, %v3207
  %v3245 = vadd.f32 %v3089, %v3210
  %v3246 = vadd.f32 %v3092, %v3213
  %v3247 = vld [vmem:[%s8] sm:$0x1]
  %v3249 = vperm.slane %v3247, 0
  %v3251 = vadd.f32 %v3215, %v3249
  %v3252 = vadd.f32 %v3216, %v3249
  %v3253 = vadd.f32 %v3217, %v3249
  %v3254 = vadd.f32 %v3218, %v3249
  %v3255 = vadd.f32 %v3219, %v3249
  %v3256 = vadd.f32 %v3220, %v3249
  %v3257 = vadd.f32 %v3221, %v3249
  %v3258 = vadd.f32 %v3222, %v3249
  %v3259 = vadd.f32 %v3223, %v3249
  %v3260 = vadd.f32 %v3224, %v3249
  %v3261 = vadd.f32 %v3225, %v3249
  %v3262 = vadd.f32 %v3226, %v3249
  %v3263 = vadd.f32 %v3227, %v3249
  %v3264 = vadd.f32 %v3228, %v3249
  %v3265 = vadd.f32 %v3229, %v3249
  %v3266 = vadd.f32 %v3230, %v3249
  %v3267 = vadd.f32 %v3231, %v3249
  %v3268 = vadd.f32 %v3232, %v3249
  %v3269 = vadd.f32 %v3233, %v3249
  %v3270 = vadd.f32 %v3234, %v3249
  %v3271 = vadd.f32 %v3235, %v3249
  %v3272 = vadd.f32 %v3236, %v3249
  %v3273 = vadd.f32 %v3237, %v3249
  %v3274 = vadd.f32 %v3238, %v3249
  %v3275 = vadd.f32 %v3239, %v3249
  %v3276 = vadd.f32 %v3240, %v3249
  %v3277 = vadd.f32 %v3241, %v3249
  %v3278 = vadd.f32 %v3242, %v3249
  %v3279 = vadd.f32 %v3243, %v3249
  %v3280 = vadd.f32 %v3244, %v3249
  %v3281 = vadd.f32 %v3245, %v3249
  %v3282 = vadd.f32 %v3246, %v3249
  %v3283 = vmax.f32 %v3251, 0.0
  %v3284 = vmax.f32 %v3252, 0.0
  %v3285 = vmax.f32 %v3253, 0.0
  %v3286 = vmax.f32 %v3254, 0.0
  %v3287 = vmax.f32 %v3255, 0.0
  %v3288 = vmax.f32 %v3256, 0.0
  %v3289 = vmax.f32 %v3257, 0.0
  %v3290 = vmax.f32 %v3258, 0.0
  %v3291 = vmax.f32 %v3259, 0.0
  %v3292 = vmax.f32 %v3260, 0.0
  %v3293 = vmax.f32 %v3261, 0.0
  %v3294 = vmax.f32 %v3262, 0.0
  %v3295 = vmax.f32 %v3263, 0.0
  %v3296 = vmax.f32 %v3264, 0.0
  %v3297 = vmax.f32 %v3265, 0.0
  %v3298 = vmax.f32 %v3266, 0.0
  %v3299 = vmax.f32 %v3267, 0.0
  %v3300 = vmax.f32 %v3268, 0.0
  %v3301 = vmax.f32 %v3269, 0.0
  %v3302 = vmax.f32 %v3270, 0.0
  %v3303 = vmax.f32 %v3271, 0.0
  %v3304 = vmax.f32 %v3272, 0.0
  %v3305 = vmax.f32 %v3273, 0.0
  %v3306 = vmax.f32 %v3274, 0.0
  %v3307 = vmax.f32 %v3275, 0.0
  %v3308 = vmax.f32 %v3276, 0.0
  %v3309 = vmax.f32 %v3277, 0.0
  %v3310 = vmax.f32 %v3278, 0.0
  %v3311 = vmax.f32 %v3279, 0.0
  %v3312 = vmax.f32 %v3280, 0.0
  %v3313 = vmax.f32 %v3281, 0.0
  %v3314 = vmax.f32 %v3282, 0.0
  %v3315 = vld [vmem:[%s9] sm:$0xff]
  %v3316 = vld [vmem:[%s9 + $0x8] sm:$0xff]
  %v3317 = vld [vmem:[%s9 + $0x10] sm:$0xff]
  %v3318 = vld [vmem:[%s9 + $0x18] sm:$0xff]
  %v3319 = vld [vmem:[%s9 + $0x20] sm:$0xff]
  %v3320 = vld [vmem:[%s9 + $0x28] sm:$0xff]
  %v3321 = vld [vmem:[%s9 + $0x30] sm:$0xff]
  %v3322 = vld [vmem:[%s9 + $0x38] sm:$0xff]
  %v3323 = vld [vmem:[%s9 + $0x40] sm:$0xff]
  %v3324 = vld [vmem:[%s9 + $0x48] sm:$0xff]
  %v3325 = vld [vmem:[%s9 + $0x50] sm:$0xff]
  %v3326 = vld [vmem:[%s9 + $0x58] sm:$0xff]
  %v3327 = vld [vmem:[%s9 + $0x60] sm:$0xff]
  %v3328 = vld [vmem:[%s9 + $0x68] sm:$0xff]
  %v3329 = vld [vmem:[%s9 + $0x70] sm:$0xff]
  %v3330 = vld [vmem:[%s9 + $0x78] sm:$0xff]
  %v3331 = vld [vmem:[%s9 + $0x80] sm:$0xff]
  %v3332 = vld [vmem:[%s9 + $0x88] sm:$0xff]
  %v3333 = vld [vmem:[%s9 + $0x90] sm:$0xff]
  %v3334 = vld [vmem:[%s9 + $0x98] sm:$0xff]
  %v3335 = vld [vmem:[%s9 + $0xa0] sm:$0xff]
  %v3336 = vld [vmem:[%s9 + $0xa8] sm:$0xff]
  %v3337 = vld [vmem:[%s9 + $0xb0] sm:$0xff]
  %v3338 = vld [vmem:[%s9 + $0xb8] sm:$0xff]
  %v3339 = vld [vmem:[%s9 + $0xc0] sm:$0xff]
  %v3340 = vld [vmem:[%s9 + $0xc8] sm:$0xff]
  %v3341 = vld [vmem:[%s9 + $0xd0] sm:$0xff]
  %v3342 = vld [vmem:[%s9 + $0xd8] sm:$0xff]
  %v3343 = vld [vmem:[%s9 + $0xe0] sm:$0xff]
  %v3344 = vld [vmem:[%s9 + $0xe8] sm:$0xff]
  %v3345 = vld [vmem:[%s9 + $0xf0] sm:$0xff]
  %v3346 = vld [vmem:[%s9 + $0xf8] sm:$0xff]
  %v3347 = vld [vmem:[%s10] sm:$0xff]
  %v3348 = vld [vmem:[%s10 + $0x8] sm:$0xff]
  %v3349 = vld [vmem:[%s10 + $0x10] sm:$0xff]
  %v3350 = vld [vmem:[%s10 + $0x18] sm:$0xff]
  %v3351 = vld [vmem:[%s10 + $0x20] sm:$0xff]
  %v3352 = vld [vmem:[%s10 + $0x28] sm:$0xff]
  %v3353 = vld [vmem:[%s10 + $0x30] sm:$0xff]
  %v3354 = vld [vmem:[%s10 + $0x38] sm:$0xff]
  %v3355 = vld [vmem:[%s10 + $0x40] sm:$0xff]
  %v3356 = vld [vmem:[%s10 + $0x48] sm:$0xff]
  %v3357 = vld [vmem:[%s10 + $0x50] sm:$0xff]
  %v3358 = vld [vmem:[%s10 + $0x58] sm:$0xff]
  %v3359 = vld [vmem:[%s10 + $0x60] sm:$0xff]
  %v3360 = vld [vmem:[%s10 + $0x68] sm:$0xff]
  %v3361 = vld [vmem:[%s10 + $0x70] sm:$0xff]
  %v3362 = vld [vmem:[%s10 + $0x78] sm:$0xff]
  %v3363 = vld [vmem:[%s10 + $0x80] sm:$0xff]
  %v3364 = vld [vmem:[%s10 + $0x88] sm:$0xff]
  %v3365 = vld [vmem:[%s10 + $0x90] sm:$0xff]
  %v3366 = vld [vmem:[%s10 + $0x98] sm:$0xff]
  %v3367 = vld [vmem:[%s10 + $0xa0] sm:$0xff]
  %v3368 = vld [vmem:[%s10 + $0xa8] sm:$0xff]
  %v3369 = vld [vmem:[%s10 + $0xb0] sm:$0xff]
  %v3370 = vld [vmem:[%s10 + $0xb8] sm:$0xff]
  %v3371 = vld [vmem:[%s10 + $0xc0] sm:$0xff]
  %v3372 = vld [vmem:[%s10 + $0xc8] sm:$0xff]
  %v3373 = vld [vmem:[%s10 + $0xd0] sm:$0xff]
  %v3374 = vld [vmem:[%s10 + $0xd8] sm:$0xff]
  %v3375 = vld [vmem:[%s10 + $0xe0] sm:$0xff]
  %v3376 = vld [vmem:[%s10 + $0xe8] sm:$0xff]
  %v3377 = vld [vmem:[%s10 + $0xf0] sm:$0xff]
  %v3378 = vld [vmem:[%s10 + $0xf8] sm:$0xff]
  %3379 = vmatpush.msra.mxu0 %v3377
  %3380 = vmatpush.msra.mxu0 %v3375
  %3381 = vmatpush.msra.mxu0 %v3373
  %3382 = vmatpush.msra.mxu0 %v3371
  %3383 = vmatpush.msra.mxu0 %v3369
  %3384 = vmatpush.msra.mxu0 %v3367
  %3385 = vmatpush.msra.mxu0 %v3365
  %3386 = vmatpush.msra.mxu0 %v3363
  %3387 = vmatpush.msra.mxu0 %v3361
  %3388 = vmatpush.msra.mxu0 %v3359
  %3389 = vmatpush.msra.mxu0 %v3357
  %3390 = vmatpush.msra.mxu0 %v3355
  %3391 = vmatpush.msra.mxu0 %v3353
  %3392 = vmatpush.msra.mxu0 %v3351
  %3393 = vmatpush.msra.mxu0 %v3349
  %3394 = vmatpush.msra.mxu0 %v3347
  %3395 = vmatmul.f32.gmra.mxu0 %v3283
  %v3396 = vpop.f32.mrf.mxu0
  %v3397 = vadd.f32 0.0, %v3396
  %3398 = vmatmul.f32.gmra.mxu0 %v3284
  %v3399 = vpop.f32.mrf.mxu0
  %v3400 = vadd.f32 0.0, %v3399
  %3401 = vmatmul.f32.gmra.mxu0 %v3285
  %v3402 = vpop.f32.mrf.mxu0
  %v3403 = vadd.f32 0.0, %v3402
  %3404 = vmatmul.f32.gmra.mxu0 %v3286
  %v3405 = vpop.f32.mrf.mxu0
  %v3406 = vadd.f32 0.0, %v3405
  %3407 = vmatmul.f32.gmra.mxu0 %v3287
  %v3408 = vpop.f32.mrf.mxu0
  %v3409 = vadd.f32 0.0, %v3408
  %3410 = vmatmul.f32.gmra.mxu0 %v3288
  %v3411 = vpop.f32.mrf.mxu0
  %v3412 = vadd.f32 0.0, %v3411
  %3413 = vmatmul.f32.gmra.mxu0 %v3289
  %v3414 = vpop.f32.mrf.mxu0
  %v3415 = vadd.f32 0.0, %v3414
  %3416 = vmatmul.f32.gmra.mxu0 %v3290
  %v3417 = vpop.f32.mrf.mxu0
  %v3418 = vadd.f32 0.0, %v3417
  %3419 = vmatmul.f32.gmra.mxu0 %v3291
  %v3420 = vpop.f32.mrf.mxu0
  %v3421 = vadd.f32 0.0, %v3420
  %3422 = vmatmul.f32.gmra.mxu0 %v3292
  %v3423 = vpop.f32.mrf.mxu0
  %v3424 = vadd.f32 0.0, %v3423
  %3425 = vmatmul.f32.gmra.mxu0 %v3293
  %v3426 = vpop.f32.mrf.mxu0
  %v3427 = vadd.f32 0.0, %v3426
  %3428 = vmatmul.f32.gmra.mxu0 %v3294
  %v3429 = vpop.f32.mrf.mxu0
  %v3430 = vadd.f32 0.0, %v3429
  %3431 = vmatmul.f32.gmra.mxu0 %v3295
  %v3432 = vpop.f32.mrf.mxu0
  %v3433 = vadd.f32 0.0, %v3432
  %3434 = vmatmul.f32.gmra.mxu0 %v3296
  %v3435 = vpop.f32.mrf.mxu0
  %v3436 = vadd.f32 0.0, %v3435
  %3437 = vmatmul.f32.gmra.mxu0 %v3297
  %v3438 = vpop.f32.mrf.mxu0
  %v3439 = vadd.f32 0.0, %v3438
  %3440 = vmatmul.f32.gmra.mxu0 %v3298
  %v3441 = vpop.f32.mrf.mxu0
  %v3442 = vadd.f32 0.0, %v3441
  %3443 = vmatmul.f32.gmra.mxu0 %v3299
  %v3444 = vpop.f32.mrf.mxu0
  %v3445 = vadd.f32 0.0, %v3444
  %3446 = vmatmul.f32.gmra.mxu0 %v3300
  %v3447 = vpop.f32.mrf.mxu0
  %v3448 = vadd.f32 0.0, %v3447
  %3449 = vmatmul.f32.gmra.mxu0 %v3301
  %v3450 = vpop.f32.mrf.mxu0
  %v3451 = vadd.f32 0.0, %v3450
  %3452 = vmatmul.f32.gmra.mxu0 %v3302
  %v3453 = vpop.f32.mrf.mxu0
  %v3454 = vadd.f32 0.0, %v3453
  %3455 = vmatmul.f32.gmra.mxu0 %v3303
  %v3456 = vpop.f32.mrf.mxu0
  %v3457 = vadd.f32 0.0, %v3456
  %3458 = vmatmul.f32.gmra.mxu0 %v3304
  %v3459 = vpop.f32.mrf.mxu0
  %v3460 = vadd.f32 0.0, %v3459
  %3461 = vmatmul.f32.gmra.mxu0 %v3305
  %v3462 = vpop.f32.mrf.mxu0
  %v3463 = vadd.f32 0.0, %v3462
  %3464 = vmatmul.f32.gmra.mxu0 %v3306
  %v3465 = vpop.f32.mrf.mxu0
  %v3466 = vadd.f32 0.0, %v3465
  %3467 = vmatmul.f32.gmra.mxu0 %v3307
  %v3468 = vpop.f32.mrf.mxu0
  %v3469 = vadd.f32 0.0, %v3468
  %3470 = vmatmul.f32.gmra.mxu0 %v3308
  %v3471 = vpop.f32.mrf.mxu0
  %v3472 = vadd.f32 0.0, %v3471
  %3473 = vmatmul.f32.gmra.mxu0 %v3309
  %v3474 = vpop.f32.mrf.mxu0
  %v3475 = vadd.f32 0.0, %v3474
  %3476 = vmatmul.f32.gmra.mxu0 %v3310
  %v3477 = vpop.f32.mrf.mxu0
  %v3478 = vadd.f32 0.0, %v3477
  %3479 = vmatmul.f32.gmra.mxu0 %v3311
  %v3480 = vpop.f32.mrf.mxu0
  %v3481 = vadd.f32 0.0, %v3480
  %3482 = vmatmul.f32.gmra.mxu0 %v3312
  %v3483 = vpop.f32.mrf.mxu0
  %v3484 = vadd.f32 0.0, %v3483
  %3485 = vmatmul.f32.gmra.mxu0 %v3313
  %v3486 = vpop.f32.mrf.mxu0
  %v3487 = vadd.f32 0.0, %v3486
  %3488 = vmatmul.f32.gmra.mxu0 %v3314
  %v3489 = vpop.f32.mrf.mxu0
  %v3490 = vadd.f32 0.0, %v3489
  %3491 = vdwg.mxu0
  %3492 = vmatpush.msra.mxu0 %v3378
  %3493 = vmatpush.msra.mxu0 %v3376
  %3494 = vmatpush.msra.mxu0 %v3374
  %3495 = vmatpush.msra.mxu0 %v3372
  %3496 = vmatpush.msra.mxu0 %v3370
  %3497 = vmatpush.msra.mxu0 %v3368
  %3498 = vmatpush.msra.mxu0 %v3366
  %3499 = vmatpush.msra.mxu0 %v3364
  %3500 = vmatpush.msra.mxu0 %v3362
  %3501 = vmatpush.msra.mxu0 %v3360
  %3502 = vmatpush.msra.mxu0 %v3358
  %3503 = vmatpush.msra.mxu0 %v3356
  %3504 = vmatpush.msra.mxu0 %v3354
  %3505 = vmatpush.msra.mxu0 %v3352
  %3506 = vmatpush.msra.mxu0 %v3350
  %3507 = vmatpush.msra.mxu0 %v3348
  %3508 = vmatmul.f32.gmra.mxu0 %v3283
  %v3509 = vpop.f32.mrf.mxu0
  %v3510 = vadd.f32 0.0, %v3509
  %3511 = vmatmul.f32.gmra.mxu0 %v3284
  %v3512 = vpop.f32.mrf.mxu0
  %v3513 = vadd.f32 0.0, %v3512
  %3514 = vmatmul.f32.gmra.mxu0 %v3285
  %v3515 = vpop.f32.mrf.mxu0
  %v3516 = vadd.f32 0.0, %v3515
  %3517 = vmatmul.f32.gmra.mxu0 %v3286
  %v3518 = vpop.f32.mrf.mxu0
  %v3519 = vadd.f32 0.0, %v3518
  %3520 = vmatmul.f32.gmra.mxu0 %v3287
  %v3521 = vpop.f32.mrf.mxu0
  %v3522 = vadd.f32 0.0, %v3521
  %3523 = vmatmul.f32.gmra.mxu0 %v3288
  %v3524 = vpop.f32.mrf.mxu0
  %v3525 = vadd.f32 0.0, %v3524
  %3526 = vmatmul.f32.gmra.mxu0 %v3289
  %v3527 = vpop.f32.mrf.mxu0
  %v3528 = vadd.f32 0.0, %v3527
  %3529 = vmatmul.f32.gmra.mxu0 %v3290
  %v3530 = vpop.f32.mrf.mxu0
  %v3531 = vadd.f32 0.0, %v3530
  %3532 = vmatmul.f32.gmra.mxu0 %v3291
  %v3533 = vpop.f32.mrf.mxu0
  %v3534 = vadd.f32 0.0, %v3533
  %3535 = vmatmul.f32.gmra.mxu0 %v3292
  %v3536 = vpop.f32.mrf.mxu0
  %v3537 = vadd.f32 0.0, %v3536
  %3538 = vmatmul.f32.gmra.mxu0 %v3293
  %v3539 = vpop.f32.mrf.mxu0
  %v3540 = vadd.f32 0.0, %v3539
  %3541 = vmatmul.f32.gmra.mxu0 %v3294
  %v3542 = vpop.f32.mrf.mxu0
  %v3543 = vadd.f32 0.0, %v3542
  %3544 = vmatmul.f32.gmra.mxu0 %v3295
  %v3545 = vpop.f32.mrf.mxu0
  %v3546 = vadd.f32 0.0, %v3545
  %3547 = vmatmul.f32.gmra.mxu0 %v3296
  %v3548 = vpop.f32.mrf.mxu0
  %v3549 = vadd.f32 0.0, %v3548
  %3550 = vmatmul.f32.gmra.mxu0 %v3297
  %v3551 = vpop.f32.mrf.mxu0
  %v3552 = vadd.f32 0.0, %v3551
  %3553 = vmatmul.f32.gmra.mxu0 %v3298
  %v3554 = vpop.f32.mrf.mxu0
  %v3555 = vadd.f32 0.0, %v3554
  %3556 = vmatmul.f32.gmra.mxu0 %v3299
  %v3557 = vpop.f32.mrf.mxu0
  %v3558 = vadd.f32 0.0, %v3557
  %3559 = vmatmul.f32.gmra.mxu0 %v3300
  %v3560 = vpop.f32.mrf.mxu0
  %v3561 = vadd.f32 0.0, %v3560
  %3562 = vmatmul.f32.gmra.mxu0 %v3301
  %v3563 = vpop.f32.mrf.mxu0
  %v3564 = vadd.f32 0.0, %v3563
  %3565 = vmatmul.f32.gmra.mxu0 %v3302
  %v3566 = vpop.f32.mrf.mxu0
  %v3567 = vadd.f32 0.0, %v3566
  %3568 = vmatmul.f32.gmra.mxu0 %v3303
  %v3569 = vpop.f32.mrf.mxu0
  %v3570 = vadd.f32 0.0, %v3569
  %3571 = vmatmul.f32.gmra.mxu0 %v3304
  %v3572 = vpop.f32.mrf.mxu0
  %v3573 = vadd.f32 0.0, %v3572
  %3574 = vmatmul.f32.gmra.mxu0 %v3305
  %v3575 = vpop.f32.mrf.mxu0
  %v3576 = vadd.f32 0.0, %v3575
  %3577 = vmatmul.f32.gmra.mxu0 %v3306
  %v3578 = vpop.f32.mrf.mxu0
  %v3579 = vadd.f32 0.0, %v3578
  %3580 = vmatmul.f32.gmra.mxu0 %v3307
  %v3581 = vpop.f32.mrf.mxu0
  %v3582 = vadd.f32 0.0, %v3581
  %3583 = vmatmul.f32.gmra.mxu0 %v3308
  %v3584 = vpop.f32.mrf.mxu0
  %v3585 = vadd.f32 0.0, %v3584
  %3586 = vmatmul.f32.gmra.mxu0 %v3309
  %v3587 = vpop.f32.mrf.mxu0
  %v3588 = vadd.f32 0.0, %v3587
  %3589 = vmatmul.f32.gmra.mxu0 %v3310
  %v3590 = vpop.f32.mrf.mxu0
  %v3591 = vadd.f32 0.0, %v3590
  %3592 = vmatmul.f32.gmra.mxu0 %v3311
  %v3593 = vpop.f32.mrf.mxu0
  %v3594 = vadd.f32 0.0, %v3593
  %3595 = vmatmul.f32.gmra.mxu0 %v3312
  %v3596 = vpop.f32.mrf.mxu0
  %v3597 = vadd.f32 0.0, %v3596
  %3598 = vmatmul.f32.gmra.mxu0 %v3313
  %v3599 = vpop.f32.mrf.mxu0
  %v3600 = vadd.f32 0.0, %v3599
  %3601 = vmatmul.f32.gmra.mxu0 %v3314
  %v3602 = vpop.f32.mrf.mxu0
  %v3603 = vadd.f32 0.0, %v3602
  %3604 = vdwg.mxu0
  %3605 = vmatpush.msra.mxu0 %v3345
  %3606 = vmatpush.msra.mxu0 %v3343
  %3607 = vmatpush.msra.mxu0 %v3341
  %3608 = vmatpush.msra.mxu0 %v3339
  %3609 = vmatpush.msra.mxu0 %v3337
  %3610 = vmatpush.msra.mxu0 %v3335
  %3611 = vmatpush.msra.mxu0 %v3333
  %3612 = vmatpush.msra.mxu0 %v3331
  %3613 = vmatpush.msra.mxu0 %v3329
  %3614 = vmatpush.msra.mxu0 %v3327
  %3615 = vmatpush.msra.mxu0 %v3325
  %3616 = vmatpush.msra.mxu0 %v3323
  %3617 = vmatpush.msra.mxu0 %v3321
  %3618 = vmatpush.msra.mxu0 %v3319
  %3619 = vmatpush.msra.mxu0 %v3317
  %3620 = vmatpush.msra.mxu0 %v3315
  %3621 = vmatmul.f32.gmra.mxu0 0.0
  %v3622 = vpop.f32.mrf.mxu0
  %v3623 = vadd.f32 %v3397, %v3622
  %3624 = vmatmul.f32.gmra.mxu0 %v3283
  %v3625 = vpop.f32.mrf.mxu0
  %v3626 = vadd.f32 %v3400, %v3625
  %3627 = vmatmul.f32.gmra.mxu0 %v3284
  %v3628 = vpop.f32.mrf.mxu0
  %v3629 = vadd.f32 %v3403, %v3628
  %3630 = vmatmul.f32.gmra.mxu0 %v3285
  %v3631 = vpop.f32.mrf.mxu0
  %v3632 = vadd.f32 %v3406, %v3631
  %3633 = vmatmul.f32.gmra.mxu0 %v3286
  %v3634 = vpop.f32.mrf.mxu0
  %v3635 = vadd.f32 %v3409, %v3634
  %3636 = vmatmul.f32.gmra.mxu0 %v3287
  %v3637 = vpop.f32.mrf.mxu0
  %v3638 = vadd.f32 %v3412, %v3637
  %3639 = vmatmul.f32.gmra.mxu0 %v3288
  %v3640 = vpop.f32.mrf.mxu0
  %v3641 = vadd.f32 %v3415, %v3640
  %3642 = vmatmul.f32.gmra.mxu0 %v3289
  %v3643 = vpop.f32.mrf.mxu0
  %v3644 = vadd.f32 %v3418, %v3643
  %3645 = vmatmul.f32.gmra.mxu0 %v3290
  %v3646 = vpop.f32.mrf.mxu0
  %v3647 = vadd.f32 %v3421, %v3646
  %3648 = vmatmul.f32.gmra.mxu0 %v3291
  %v3649 = vpop.f32.mrf.mxu0
  %v3650 = vadd.f32 %v3424, %v3649
  %3651 = vmatmul.f32.gmra.mxu0 %v3292
  %v3652 = vpop.f32.mrf.mxu0
  %v3653 = vadd.f32 %v3427, %v3652
  %3654 = vmatmul.f32.gmra.mxu0 %v3293
  %v3655 = vpop.f32.mrf.mxu0
  %v3656 = vadd.f32 %v3430, %v3655
  %3657 = vmatmul.f32.gmra.mxu0 %v3294
  %v3658 = vpop.f32.mrf.mxu0
  %v3659 = vadd.f32 %v3433, %v3658
  %3660 = vmatmul.f32.gmra.mxu0 %v3295
  %v3661 = vpop.f32.mrf.mxu0
  %v3662 = vadd.f32 %v3436, %v3661
  %3663 = vmatmul.f32.gmra.mxu0 %v3296
  %v3664 = vpop.f32.mrf.mxu0
  %v3665 = vadd.f32 %v3439, %v3664
  %3666 = vmatmul.f32.gmra.mxu0 %v3297
  %v3667 = vpop.f32.mrf.mxu0
  %v3668 = vadd.f32 %v3442, %v3667
  %3669 = vmatmul.f32.gmra.mxu0 %v3298
  %v3670 = vpop.f32.mrf.mxu0
  %v3671 = vadd.f32 %v3445, %v3670
  %3672 = vmatmul.f32.gmra.mxu0 %v3299
  %v3673 = vpop.f32.mrf.mxu0
  %v3674 = vadd.f32 %v3448, %v3673
  %3675 = vmatmul.f32.gmra.mxu0 %v3300
  %v3676 = vpop.f32.mrf.mxu0
  %v3677 = vadd.f32 %v3451, %v3676
  %3678 = vmatmul.f32.gmra.mxu0 %v3301
  %v3679 = vpop.f32.mrf.mxu0
  %v3680 = vadd.f32 %v3454, %v3679
  %3681 = vmatmul.f32.gmra.mxu0 %v3302
  %v3682 = vpop.f32.mrf.mxu0
  %v3683 = vadd.f32 %v3457, %v3682
  %3684 = vmatmul.f32.gmra.mxu0 %v3303
  %v3685 = vpop.f32.mrf.mxu0
  %v3686 = vadd.f32 %v3460, %v3685
  %3687 = vmatmul.f32.gmra.mxu0 %v3304
  %v3688 = vpop.f32.mrf.mxu0
  %v3689 = vadd.f32 %v3463, %v3688
  %3690 = vmatmul.f32.gmra.mxu0 %v3305
  %v3691 = vpop.f32.mrf.mxu0
  %v3692 = vadd.f32 %v3466, %v3691
  %3693 = vmatmul.f32.gmra.mxu0 %v3306
  %v3694 = vpop.f32.mrf.mxu0
  %v3695 = vadd.f32 %v3469, %v3694
  %3696 = vmatmul.f32.gmra.mxu0 %v3307
  %v3697 = vpop.f32.mrf.mxu0
  %v3698 = vadd.f32 %v3472, %v3697
  %3699 = vmatmul.f32.gmra.mxu0 %v3308
  %v3700 = vpop.f32.mrf.mxu0
  %v3701 = vadd.f32 %v3475, %v3700
  %3702 = vmatmul.f32.gmra.mxu0 %v3309
  %v3703 = vpop.f32.mrf.mxu0
  %v3704 = vadd.f32 %v3478, %v3703
  %3705 = vmatmul.f32.gmra.mxu0 %v3310
  %v3706 = vpop.f32.mrf.mxu0
  %v3707 = vadd.f32 %v3481, %v3706
  %3708 = vmatmul.f32.gmra.mxu0 %v3311
  %v3709 = vpop.f32.mrf.mxu0
  %v3710 = vadd.f32 %v3484, %v3709
  %3711 = vmatmul.f32.gmra.mxu0 %v3312
  %v3712 = vpop.f32.mrf.mxu0
  %v3713 = vadd.f32 %v3487, %v3712
  %3714 = vmatmul.f32.gmra.mxu0 %v3313
  %v3715 = vpop.f32.mrf.mxu0
  %v3716 = vadd.f32 %v3490, %v3715
  %3717 = vdwg.mxu0
  %3718 = vmatpush.msra.mxu0 %v3346
  %3719 = vmatpush.msra.mxu0 %v3344
  %3720 = vmatpush.msra.mxu0 %v3342
  %3721 = vmatpush.msra.mxu0 %v3340
  %3722 = vmatpush.msra.mxu0 %v3338
  %3723 = vmatpush.msra.mxu0 %v3336
  %3724 = vmatpush.msra.mxu0 %v3334
  %3725 = vmatpush.msra.mxu0 %v3332
  %3726 = vmatpush.msra.mxu0 %v3330
  %3727 = vmatpush.msra.mxu0 %v3328
  %3728 = vmatpush.msra.mxu0 %v3326
  %3729 = vmatpush.msra.mxu0 %v3324
  %3730 = vmatpush.msra.mxu0 %v3322
  %3731 = vmatpush.msra.mxu0 %v3320
  %3732 = vmatpush.msra.mxu0 %v3318
  %3733 = vmatpush.msra.mxu0 %v3316
  %3734 = vmatmul.f32.gmra.mxu0 0.0
  %v3735 = vpop.f32.mrf.mxu0
  %v3736 = vadd.f32 %v3510, %v3735
  %3737 = vmatmul.f32.gmra.mxu0 %v3283
  %v3738 = vpop.f32.mrf.mxu0
  %v3739 = vadd.f32 %v3513, %v3738
  %3740 = vmatmul.f32.gmra.mxu0 %v3284
  %v3741 = vpop.f32.mrf.mxu0
  %v3742 = vadd.f32 %v3516, %v3741
  %3743 = vmatmul.f32.gmra.mxu0 %v3285
  %v3744 = vpop.f32.mrf.mxu0
  %v3745 = vadd.f32 %v3519, %v3744
  %3746 = vmatmul.f32.gmra.mxu0 %v3286
  %v3747 = vpop.f32.mrf.mxu0
  %v3748 = vadd.f32 %v3522, %v3747
  %3749 = vmatmul.f32.gmra.mxu0 %v3287
  %v3750 = vpop.f32.mrf.mxu0
  %v3751 = vadd.f32 %v3525, %v3750
  %3752 = vmatmul.f32.gmra.mxu0 %v3288
  %v3753 = vpop.f32.mrf.mxu0
  %v3754 = vadd.f32 %v3528, %v3753
  %3755 = vmatmul.f32.gmra.mxu0 %v3289
  %v3756 = vpop.f32.mrf.mxu0
  %v3757 = vadd.f32 %v3531, %v3756
  %3758 = vmatmul.f32.gmra.mxu0 %v3290
  %v3759 = vpop.f32.mrf.mxu0
  %v3760 = vadd.f32 %v3534, %v3759
  %3761 = vmatmul.f32.gmra.mxu0 %v3291
  %v3762 = vpop.f32.mrf.mxu0
  %v3763 = vadd.f32 %v3537, %v3762
  %3764 = vmatmul.f32.gmra.mxu0 %v3292
  %v3765 = vpop.f32.mrf.mxu0
  %v3766 = vadd.f32 %v3540, %v3765
  %3767 = vmatmul.f32.gmra.mxu0 %v3293
  %v3768 = vpop.f32.mrf.mxu0
  %v3769 = vadd.f32 %v3543, %v3768
  %3770 = vmatmul.f32.gmra.mxu0 %v3294
  %v3771 = vpop.f32.mrf.mxu0
  %v3772 = vadd.f32 %v3546, %v3771
  %3773 = vmatmul.f32.gmra.mxu0 %v3295
  %v3774 = vpop.f32.mrf.mxu0
  %v3775 = vadd.f32 %v3549, %v3774
  %3776 = vmatmul.f32.gmra.mxu0 %v3296
  %v3777 = vpop.f32.mrf.mxu0
  %v3778 = vadd.f32 %v3552, %v3777
  %3779 = vmatmul.f32.gmra.mxu0 %v3297
  %v3780 = vpop.f32.mrf.mxu0
  %v3781 = vadd.f32 %v3555, %v3780
  %3782 = vmatmul.f32.gmra.mxu0 %v3298
  %v3783 = vpop.f32.mrf.mxu0
  %v3784 = vadd.f32 %v3558, %v3783
  %3785 = vmatmul.f32.gmra.mxu0 %v3299
  %v3786 = vpop.f32.mrf.mxu0
  %v3787 = vadd.f32 %v3561, %v3786
  %3788 = vmatmul.f32.gmra.mxu0 %v3300
  %v3789 = vpop.f32.mrf.mxu0
  %v3790 = vadd.f32 %v3564, %v3789
  %3791 = vmatmul.f32.gmra.mxu0 %v3301
  %v3792 = vpop.f32.mrf.mxu0
  %v3793 = vadd.f32 %v3567, %v3792
  %3794 = vmatmul.f32.gmra.mxu0 %v3302
  %v3795 = vpop.f32.mrf.mxu0
  %v3796 = vadd.f32 %v3570, %v3795
  %3797 = vmatmul.f32.gmra.mxu0 %v3303
  %v3798 = vpop.f32.mrf.mxu0
  %v3799 = vadd.f32 %v3573, %v3798
  %3800 = vmatmul.f32.gmra.mxu0 %v3304
  %v3801 = vpop.f32.mrf.mxu0
  %v3802 = vadd.f32 %v3576, %v3801
  %3803 = vmatmul.f32.gmra.mxu0 %v3305
  %v3804 = vpop.f32.mrf.mxu0
  %v3805 = vadd.f32 %v3579, %v3804
  %3806 = vmatmul.f32.gmra.mxu0 %v3306
  %v3807 = vpop.f32.mrf.mxu0
  %v3808 = vadd.f32 %v3582, %v3807
  %3809 = vmatmul.f32.gmra.mxu0 %v3307
  %v3810 = vpop.f32.mrf.mxu0
  %v3811 = vadd.f32 %v3585, %v3810
  %3812 = vmatmul.f32.gmra.mxu0 %v3308
  %v3813 = vpop.f32.mrf.mxu0
  %v3814 = vadd.f32 %v3588, %v3813
  %3815 = vmatmul.f32.gmra.mxu0 %v3309
  %v3816 = vpop.f32.mrf.mxu0
  %v3817 = vadd.f32 %v3591, %v3816
  %3818 = vmatmul.f32.gmra.mxu0 %v3310
  %v3819 = vpop.f32.mrf.mxu0
  %v3820 = vadd.f32 %v3594, %v3819
  %3821 = vmatmul.f32.gmra.mxu0 %v3311
  %v3822 = vpop.f32.mrf.mxu0
  %v3823 = vadd.f32 %v3597, %v3822
  %3824 = vmatmul.f32.gmra.mxu0 %v3312
  %v3825 = vpop.f32.mrf.mxu0
  %v3826 = vadd.f32 %v3600, %v3825
  %3827 = vmatmul.f32.gmra.mxu0 %v3313
  %v3828 = vpop.f32.mrf.mxu0
  %v3829 = vadd.f32 %v3603, %v3828
  %3830 = vdwg.mxu0
  %v3831 = vld [vmem:[%s11] sm:$0xff]
  %v3832 = vld [vmem:[%s11 + $0x8] sm:$0xff]
  %v3833 = vld [vmem:[%s11 + $0x10] sm:$0xff]
  %v3834 = vld [vmem:[%s11 + $0x18] sm:$0xff]
  %v3835 = vld [vmem:[%s11 + $0x20] sm:$0xff]
  %v3836 = vld [vmem:[%s11 + $0x28] sm:$0xff]
  %v3837 = vld [vmem:[%s11 + $0x30] sm:$0xff]
  %v3838 = vld [vmem:[%s11 + $0x38] sm:$0xff]
  %v3839 = vld [vmem:[%s11 + $0x40] sm:$0xff]
  %v3840 = vld [vmem:[%s11 + $0x48] sm:$0xff]
  %v3841 = vld [vmem:[%s11 + $0x50] sm:$0xff]
  %v3842 = vld [vmem:[%s11 + $0x58] sm:$0xff]
  %v3843 = vld [vmem:[%s11 + $0x60] sm:$0xff]
  %v3844 = vld [vmem:[%s11 + $0x68] sm:$0xff]
  %v3845 = vld [vmem:[%s11 + $0x70] sm:$0xff]
  %v3846 = vld [vmem:[%s11 + $0x78] sm:$0xff]
  %v3847 = vld [vmem:[%s11 + $0x80] sm:$0xff]
  %v3848 = vld [vmem:[%s11 + $0x88] sm:$0xff]
  %v3849 = vld [vmem:[%s11 + $0x90] sm:$0xff]
  %v3850 = vld [vmem:[%s11 + $0x98] sm:$0xff]
  %v3851 = vld [vmem:[%s11 + $0xa0] sm:$0xff]
  %v3852 = vld [vmem:[%s11 + $0xa8] sm:$0xff]
  %v3853 = vld [vmem:[%s11 + $0xb0] sm:$0xff]
  %v3854 = vld [vmem:[%s11 + $0xb8] sm:$0xff]
  %v3855 = vld [vmem:[%s11 + $0xc0] sm:$0xff]
  %v3856 = vld [vmem:[%s11 + $0xc8] sm:$0xff]
  %v3857 = vld [vmem:[%s11 + $0xd0] sm:$0xff]
  %v3858 = vld [vmem:[%s11 + $0xd8] sm:$0xff]
  %v3859 = vld [vmem:[%s11 + $0xe0] sm:$0xff]
  %v3860 = vld [vmem:[%s11 + $0xe8] sm:$0xff]
  %v3861 = vld [vmem:[%s11 + $0xf0] sm:$0xff]
  %v3862 = vld [vmem:[%s11 + $0xf8] sm:$0xff]
  %3863 = vmatpush.msra.mxu0 %v3861
  %3864 = vmatpush.msra.mxu0 %v3859
  %3865 = vmatpush.msra.mxu0 %v3857
  %3866 = vmatpush.msra.mxu0 %v3855
  %3867 = vmatpush.msra.mxu0 %v3853
  %3868 = vmatpush.msra.mxu0 %v3851
  %3869 = vmatpush.msra.mxu0 %v3849
  %3870 = vmatpush.msra.mxu0 %v3847
  %3871 = vmatpush.msra.mxu0 %v3845
  %3872 = vmatpush.msra.mxu0 %v3843
  %3873 = vmatpush.msra.mxu0 %v3841
  %3874 = vmatpush.msra.mxu0 %v3839
  %3875 = vmatpush.msra.mxu0 %v3837
  %3876 = vmatpush.msra.mxu0 %v3835
  %3877 = vmatpush.msra.mxu0 %v3833
  %3878 = vmatpush.msra.mxu0 %v3831
  %3879 = vmatmul.f32.gmra.mxu0 %v3284
  %v3880 = vpop.f32.mrf.mxu0
  %v3881 = vadd.f32 0.0, %v3880
  %3882 = vmatmul.f32.gmra.mxu0 %v3285
  %v3883 = vpop.f32.mrf.mxu0
  %v3884 = vadd.f32 0.0, %v3883
  %3885 = vmatmul.f32.gmra.mxu0 %v3286
  %v3886 = vpop.f32.mrf.mxu0
  %v3887 = vadd.f32 0.0, %v3886
  %3888 = vmatmul.f32.gmra.mxu0 %v3287
  %v3889 = vpop.f32.mrf.mxu0
  %v3890 = vadd.f32 0.0, %v3889
  %3891 = vmatmul.f32.gmra.mxu0 %v3288
  %v3892 = vpop.f32.mrf.mxu0
  %v3893 = vadd.f32 0.0, %v3892
  %3894 = vmatmul.f32.gmra.mxu0 %v3289
  %v3895 = vpop.f32.mrf.mxu0
  %v3896 = vadd.f32 0.0, %v3895
  %3897 = vmatmul.f32.gmra.mxu0 %v3290
  %v3898 = vpop.f32.mrf.mxu0
  %v3899 = vadd.f32 0.0, %v3898
  %3900 = vmatmul.f32.gmra.mxu0 %v3291
  %v3901 = vpop.f32.mrf.mxu0
  %v3902 = vadd.f32 0.0, %v3901
  %3903 = vmatmul.f32.gmra.mxu0 %v3292
  %v3904 = vpop.f32.mrf.mxu0
  %v3905 = vadd.f32 0.0, %v3904
  %3906 = vmatmul.f32.gmra.mxu0 %v3293
  %v3907 = vpop.f32.mrf.mxu0
  %v3908 = vadd.f32 0.0, %v3907
  %3909 = vmatmul.f32.gmra.mxu0 %v3294
  %v3910 = vpop.f32.mrf.mxu0
  %v3911 = vadd.f32 0.0, %v3910
  %3912 = vmatmul.f32.gmra.mxu0 %v3295
  %v3913 = vpop.f32.mrf.mxu0
  %v3914 = vadd.f32 0.0, %v3913
  %3915 = vmatmul.f32.gmra.mxu0 %v3296
  %v3916 = vpop.f32.mrf.mxu0
  %v3917 = vadd.f32 0.0, %v3916
  %3918 = vmatmul.f32.gmra.mxu0 %v3297
  %v3919 = vpop.f32.mrf.mxu0
  %v3920 = vadd.f32 0.0, %v3919
  %3921 = vmatmul.f32.gmra.mxu0 %v3298
  %v3922 = vpop.f32.mrf.mxu0
  %v3923 = vadd.f32 0.0, %v3922
  %3924 = vmatmul.f32.gmra.mxu0 %v3299
  %v3925 = vpop.f32.mrf.mxu0
  %v3926 = vadd.f32 0.0, %v3925
  %3927 = vmatmul.f32.gmra.mxu0 %v3300
  %v3928 = vpop.f32.mrf.mxu0
  %v3929 = vadd.f32 0.0, %v3928
  %3930 = vmatmul.f32.gmra.mxu0 %v3301
  %v3931 = vpop.f32.mrf.mxu0
  %v3932 = vadd.f32 0.0, %v3931
  %3933 = vmatmul.f32.gmra.mxu0 %v3302
  %v3934 = vpop.f32.mrf.mxu0
  %v3935 = vadd.f32 0.0, %v3934
  %3936 = vmatmul.f32.gmra.mxu0 %v3303
  %v3937 = vpop.f32.mrf.mxu0
  %v3938 = vadd.f32 0.0, %v3937
  %3939 = vmatmul.f32.gmra.mxu0 %v3304
  %v3940 = vpop.f32.mrf.mxu0
  %v3941 = vadd.f32 0.0, %v3940
  %3942 = vmatmul.f32.gmra.mxu0 %v3305
  %v3943 = vpop.f32.mrf.mxu0
  %v3944 = vadd.f32 0.0, %v3943
  %3945 = vmatmul.f32.gmra.mxu0 %v3306
  %v3946 = vpop.f32.mrf.mxu0
  %v3947 = vadd.f32 0.0, %v3946
  %3948 = vmatmul.f32.gmra.mxu0 %v3307
  %v3949 = vpop.f32.mrf.mxu0
  %v3950 = vadd.f32 0.0, %v3949
  %3951 = vmatmul.f32.gmra.mxu0 %v3308
  %v3952 = vpop.f32.mrf.mxu0
  %v3953 = vadd.f32 0.0, %v3952
  %3954 = vmatmul.f32.gmra.mxu0 %v3309
  %v3955 = vpop.f32.mrf.mxu0
  %v3956 = vadd.f32 0.0, %v3955
  %3957 = vmatmul.f32.gmra.mxu0 %v3310
  %v3958 = vpop.f32.mrf.mxu0
  %v3959 = vadd.f32 0.0, %v3958
  %3960 = vmatmul.f32.gmra.mxu0 %v3311
  %v3961 = vpop.f32.mrf.mxu0
  %v3962 = vadd.f32 0.0, %v3961
  %3963 = vmatmul.f32.gmra.mxu0 %v3312
  %v3964 = vpop.f32.mrf.mxu0
  %v3965 = vadd.f32 0.0, %v3964
  %3966 = vmatmul.f32.gmra.mxu0 %v3313
  %v3967 = vpop.f32.mrf.mxu0
  %v3968 = vadd.f32 0.0, %v3967
  %3969 = vmatmul.f32.gmra.mxu0 %v3314
  %v3970 = vpop.f32.mrf.mxu0
  %v3971 = vadd.f32 0.0, %v3970
  %3972 = vmatmul.f32.gmra.mxu0 0.0
  %v3973 = vpop.f32.mrf.mxu0
  %v3974 = vadd.f32 0.0, %v3973
  %3975 = vdwg.mxu0
  %3976 = vmatpush.msra.mxu0 %v3862
  %3977 = vmatpush.msra.mxu0 %v3860
  %3978 = vmatpush.msra.mxu0 %v3858
  %3979 = vmatpush.msra.mxu0 %v3856
  %3980 = vmatpush.msra.mxu0 %v3854
  %3981 = vmatpush.msra.mxu0 %v3852
  %3982 = vmatpush.msra.mxu0 %v3850
  %3983 = vmatpush.msra.mxu0 %v3848
  %3984 = vmatpush.msra.mxu0 %v3846
  %3985 = vmatpush.msra.mxu0 %v3844
  %3986 = vmatpush.msra.mxu0 %v3842
  %3987 = vmatpush.msra.mxu0 %v3840
  %3988 = vmatpush.msra.mxu0 %v3838
  %3989 = vmatpush.msra.mxu0 %v3836
  %3990 = vmatpush.msra.mxu0 %v3834
  %3991 = vmatpush.msra.mxu0 %v3832
  %3992 = vmatmul.f32.gmra.mxu0 %v3284
  %v3993 = vpop.f32.mrf.mxu0
  %v3994 = vadd.f32 0.0, %v3993
  %3995 = vmatmul.f32.gmra.mxu0 %v3285
  %v3996 = vpop.f32.mrf.mxu0
  %v3997 = vadd.f32 0.0, %v3996
  %3998 = vmatmul.f32.gmra.mxu0 %v3286
  %v3999 = vpop.f32.mrf.mxu0
  %v4000 = vadd.f32 0.0, %v3999
  %4001 = vmatmul.f32.gmra.mxu0 %v3287
  %v4002 = vpop.f32.mrf.mxu0
  %v4003 = vadd.f32 0.0, %v4002
  %4004 = vmatmul.f32.gmra.mxu0 %v3288
  %v4005 = vpop.f32.mrf.mxu0
  %v4006 = vadd.f32 0.0, %v4005
  %4007 = vmatmul.f32.gmra.mxu0 %v3289
  %v4008 = vpop.f32.mrf.mxu0
  %v4009 = vadd.f32 0.0, %v4008
  %4010 = vmatmul.f32.gmra.mxu0 %v3290
  %v4011 = vpop.f32.mrf.mxu0
  %v4012 = vadd.f32 0.0, %v4011
  %4013 = vmatmul.f32.gmra.mxu0 %v3291
  %v4014 = vpop.f32.mrf.mxu0
  %v4015 = vadd.f32 0.0, %v4014
  %4016 = vmatmul.f32.gmra.mxu0 %v3292
  %v4017 = vpop.f32.mrf.mxu0
  %v4018 = vadd.f32 0.0, %v4017
  %4019 = vmatmul.f32.gmra.mxu0 %v3293
  %v4020 = vpop.f32.mrf.mxu0
  %v4021 = vadd.f32 0.0, %v4020
  %4022 = vmatmul.f32.gmra.mxu0 %v3294
  %v4023 = vpop.f32.mrf.mxu0
  %v4024 = vadd.f32 0.0, %v4023
  %4025 = vmatmul.f32.gmra.mxu0 %v3295
  %v4026 = vpop.f32.mrf.mxu0
  %v4027 = vadd.f32 0.0, %v4026
  %4028 = vmatmul.f32.gmra.mxu0 %v3296
  %v4029 = vpop.f32.mrf.mxu0
  %v4030 = vadd.f32 0.0, %v4029
  %4031 = vmatmul.f32.gmra.mxu0 %v3297
  %v4032 = vpop.f32.mrf.mxu0
  %v4033 = vadd.f32 0.0, %v4032
  %4034 = vmatmul.f32.gmra.mxu0 %v3298
  %v4035 = vpop.f32.mrf.mxu0
  %v4036 = vadd.f32 0.0, %v4035
  %4037 = vmatmul.f32.gmra.mxu0 %v3299
  %v4038 = vpop.f32.mrf.mxu0
  %v4039 = vadd.f32 0.0, %v4038
  %4040 = vmatmul.f32.gmra.mxu0 %v3300
  %v4041 = vpop.f32.mrf.mxu0
  %v4042 = vadd.f32 0.0, %v4041
  %4043 = vmatmul.f32.gmra.mxu0 %v3301
  %v4044 = vpop.f32.mrf.mxu0
  %v4045 = vadd.f32 0.0, %v4044
  %4046 = vmatmul.f32.gmra.mxu0 %v3302
  %v4047 = vpop.f32.mrf.mxu0
  %v4048 = vadd.f32 0.0, %v4047
  %4049 = vmatmul.f32.gmra.mxu0 %v3303
  %v4050 = vpop.f32.mrf.mxu0
  %v4051 = vadd.f32 0.0, %v4050
  %4052 = vmatmul.f32.gmra.mxu0 %v3304
  %v4053 = vpop.f32.mrf.mxu0
  %v4054 = vadd.f32 0.0, %v4053
  %4055 = vmatmul.f32.gmra.mxu0 %v3305
  %v4056 = vpop.f32.mrf.mxu0
  %v4057 = vadd.f32 0.0, %v4056
  %4058 = vmatmul.f32.gmra.mxu0 %v3306
  %v4059 = vpop.f32.mrf.mxu0
  %v4060 = vadd.f32 0.0, %v4059
  %4061 = vmatmul.f32.gmra.mxu0 %v3307
  %v4062 = vpop.f32.mrf.mxu0
  %v4063 = vadd.f32 0.0, %v4062
  %4064 = vmatmul.f32.gmra.mxu0 %v3308
  %v4065 = vpop.f32.mrf.mxu0
  %v4066 = vadd.f32 0.0, %v4065
  %4067 = vmatmul.f32.gmra.mxu0 %v3309
  %v4068 = vpop.f32.mrf.mxu0
  %v4069 = vadd.f32 0.0, %v4068
  %4070 = vmatmul.f32.gmra.mxu0 %v3310
  %v4071 = vpop.f32.mrf.mxu0
  %v4072 = vadd.f32 0.0, %v4071
  %4073 = vmatmul.f32.gmra.mxu0 %v3311
  %v4074 = vpop.f32.mrf.mxu0
  %v4075 = vadd.f32 0.0, %v4074
  %4076 = vmatmul.f32.gmra.mxu0 %v3312
  %v4077 = vpop.f32.mrf.mxu0
  %v4078 = vadd.f32 0.0, %v4077
  %4079 = vmatmul.f32.gmra.mxu0 %v3313
  %v4080 = vpop.f32.mrf.mxu0
  %v4081 = vadd.f32 0.0, %v4080
  %4082 = vmatmul.f32.gmra.mxu0 %v3314
  %v4083 = vpop.f32.mrf.mxu0
  %v4084 = vadd.f32 0.0, %v4083
  %4085 = vmatmul.f32.gmra.mxu0 0.0
  %v4086 = vpop.f32.mrf.mxu0
  %v4087 = vadd.f32 0.0, %v4086
  %4088 = vdwg.mxu0
  %v4089 = vadd.f32 %v3623, %v3881
  %v4090 = vadd.f32 %v3736, %v3994
  %v4091 = vadd.f32 %v3626, %v3884
  %v4092 = vadd.f32 %v3739, %v3997
  %v4093 = vadd.f32 %v3629, %v3887
  %v4094 = vadd.f32 %v3742, %v4000
  %v4095 = vadd.f32 %v3632, %v3890
  %v4096 = vadd.f32 %v3745, %v4003
  %v4097 = vadd.f32 %v3635, %v3893
  %v4098 = vadd.f32 %v3748, %v4006
  %v4099 = vadd.f32 %v3638, %v3896
  %v4100 = vadd.f32 %v3751, %v4009
  %v4101 = vadd.f32 %v3641, %v3899
  %v4102 = vadd.f32 %v3754, %v4012
  %v4103 = vadd.f32 %v3644, %v3902
  %v4104 = vadd.f32 %v3757, %v4015
  %v4105 = vadd.f32 %v3647, %v3905
  %v4106 = vadd.f32 %v3760, %v4018
  %v4107 = vadd.f32 %v3650, %v3908
  %v4108 = vadd.f32 %v3763, %v4021
  %v4109 = vadd.f32 %v3653, %v3911
  %v4110 = vadd.f32 %v3766, %v4024
  %v4111 = vadd.f32 %v3656, %v3914
  %v4112 = vadd.f32 %v3769, %v4027
  %v4113 = vadd.f32 %v3659, %v3917
  %v4114 = vadd.f32 %v3772, %v4030
  %v4115 = vadd.f32 %v3662, %v3920
  %v4116 = vadd.f32 %v3775, %v4033
  %v4117 = vadd.f32 %v3665, %v3923
  %v4118 = vadd.f32 %v3778, %v4036
  %v4119 = vadd.f32 %v3668, %v3926
  %v4120 = vadd.f32 %v3781, %v4039
  %v4121 = vadd.f32 %v3671, %v3929
  %v4122 = vadd.f32 %v3784, %v4042
  %v4123 = vadd.f32 %v3674, %v3932
  %v4124 = vadd.f32 %v3787, %v4045
  %v4125 = vadd.f32 %v3677, %v3935
  %v4126 = vadd.f32 %v3790, %v4048
  %v4127 = vadd.f32 %v3680, %v3938
  %v4128 = vadd.f32 %v3793, %v4051
  %v4129 = vadd.f32 %v3683, %v3941
  %v4130 = vadd.f32 %v3796, %v4054
  %v4131 = vadd.f32 %v3686, %v3944
  %v4132 = vadd.f32 %v3799, %v4057
  %v4133 = vadd.f32 %v3689, %v3947
  %v4134 = vadd.f32 %v3802, %v4060
  %v4135 = vadd.f32 %v3692, %v3950
  %v4136 = vadd.f32 %v3805, %v4063
  %v4137 = vadd.f32 %v3695, %v3953
  %v4138 = vadd.f32 %v3808, %v4066
  %v4139 = vadd.f32 %v3698, %v3956
  %v4140 = vadd.f32 %v3811, %v4069
  %v4141 = vadd.f32 %v3701, %v3959
  %v4142 = vadd.f32 %v3814, %v4072
  %v4143 = vadd.f32 %v3704, %v3962
  %v4144 = vadd.f32 %v3817, %v4075
  %v4145 = vadd.f32 %v3707, %v3965
  %v4146 = vadd.f32 %v3820, %v4078
  %v4147 = vadd.f32 %v3710, %v3968
  %v4148 = vadd.f32 %v3823, %v4081
  %v4149 = vadd.f32 %v3713, %v3971
  %v4150 = vadd.f32 %v3826, %v4084
  %v4151 = vadd.f32 %v3716, %v3974
  %v4152 = vadd.f32 %v3829, %v4087
  %v4153 = vld [vmem:[%s12] sm:$0x3]
  %v4155 = vperm.slane %v4153, 0
  %v4156 = vperm.slane %v4153, 1
  %v4159 = vadd.f32 %v4089, %v4155
  %v4160 = vadd.f32 %v4090, %v4156
  %v4161 = vadd.f32 %v4091, %v4155
  %v4162 = vadd.f32 %v4092, %v4156
  %v4163 = vadd.f32 %v4093, %v4155
  %v4164 = vadd.f32 %v4094, %v4156
  %v4165 = vadd.f32 %v4095, %v4155
  %v4166 = vadd.f32 %v4096, %v4156
  %v4167 = vadd.f32 %v4097, %v4155
  %v4168 = vadd.f32 %v4098, %v4156
  %v4169 = vadd.f32 %v4099, %v4155
  %v4170 = vadd.f32 %v4100, %v4156
  %v4171 = vadd.f32 %v4101, %v4155
  %v4172 = vadd.f32 %v4102, %v4156
  %v4173 = vadd.f32 %v4103, %v4155
  %v4174 = vadd.f32 %v4104, %v4156
  %v4175 = vadd.f32 %v4105, %v4155
  %v4176 = vadd.f32 %v4106, %v4156
  %v4177 = vadd.f32 %v4107, %v4155
  %v4178 = vadd.f32 %v4108, %v4156
  %v4179 = vadd.f32 %v4109, %v4155
  %v4180 = vadd.f32 %v4110, %v4156
  %v4181 = vadd.f32 %v4111, %v4155
  %v4182 = vadd.f32 %v4112, %v4156
  %v4183 = vadd.f32 %v4113, %v4155
  %v4184 = vadd.f32 %v4114, %v4156
  %v4185 = vadd.f32 %v4115, %v4155
  %v4186 = vadd.f32 %v4116, %v4156
  %v4187 = vadd.f32 %v4117, %v4155
  %v4188 = vadd.f32 %v4118, %v4156
  %v4189 = vadd.f32 %v4119, %v4155
  %v4190 = vadd.f32 %v4120, %v4156
  %v4191 = vadd.f32 %v4121, %v4155
  %v4192 = vadd.f32 %v4122, %v4156
  %v4193 = vadd.f32 %v4123, %v4155
  %v4194 = vadd.f32 %v4124, %v4156
  %v4195 = vadd.f32 %v4125, %v4155
  %v4196 = vadd.f32 %v4126, %v4156
  %v4197 = vadd.f32 %v4127, %v4155
  %v4198 = vadd.f32 %v4128, %v4156
  %v4199 = vadd.f32 %v4129, %v4155
  %v4200 = vadd.f32 %v4130, %v4156
  %v4201 = vadd.f32 %v4131, %v4155
  %v4202 = vadd.f32 %v4132, %v4156
  %v4203 = vadd.f32 %v4133, %v4155
  %v4204 = vadd.f32 %v4134, %v4156
  %v4205 = vadd.f32 %v4135, %v4155
  %v4206 = vadd.f32 %v4136, %v4156
  %v4207 = vadd.f32 %v4137, %v4155
  %v4208 = vadd.f32 %v4138, %v4156
  %v4209 = vadd.f32 %v4139, %v4155
  %v4210 = vadd.f32 %v4140, %v4156
  %v4211 = vadd.f32 %v4141, %v4155
  %v4212 = vadd.f32 %v4142, %v4156
  %v4213 = vadd.f32 %v4143, %v4155
  %v4214 = vadd.f32 %v4144, %v4156
  %v4215 = vadd.f32 %v4145, %v4155
  %v4216 = vadd.f32 %v4146, %v4156
  %v4217 = vadd.f32 %v4147, %v4155
  %v4218 = vadd.f32 %v4148, %v4156
  %v4219 = vadd.f32 %v4149, %v4155
  %v4220 = vadd.f32 %v4150, %v4156
  %v4221 = vadd.f32 %v4151, %v4155
  %v4222 = vadd.f32 %v4152, %v4156
  %v4223 = vmax.f32 %v4159, 0.0
  %v4224 = vmax.f32 %v4160, 0.0
  %v4225 = vmax.f32 %v4161, 0.0
  %v4226 = vmax.f32 %v4162, 0.0
  %v4227 = vmax.f32 %v4163, 0.0
  %v4228 = vmax.f32 %v4164, 0.0
  %v4229 = vmax.f32 %v4165, 0.0
  %v4230 = vmax.f32 %v4166, 0.0
  %v4231 = vmax.f32 %v4167, 0.0
  %v4232 = vmax.f32 %v4168, 0.0
  %v4233 = vmax.f32 %v4169, 0.0
  %v4234 = vmax.f32 %v4170, 0.0
  %v4235 = vmax.f32 %v4171, 0.0
  %v4236 = vmax.f32 %v4172, 0.0
  %v4237 = vmax.f32 %v4173, 0.0
  %v4238 = vmax.f32 %v4174, 0.0
  %v4239 = vmax.f32 %v4175, 0.0
  %v4240 = vmax.f32 %v4176, 0.0
  %v4241 = vmax.f32 %v4177, 0.0
  %v4242 = vmax.f32 %v4178, 0.0
  %v4243 = vmax.f32 %v4179, 0.0
  %v4244 = vmax.f32 %v4180, 0.0
  %v4245 = vmax.f32 %v4181, 0.0
  %v4246 = vmax.f32 %v4182, 0.0
  %v4247 = vmax.f32 %v4183, 0.0
  %v4248 = vmax.f32 %v4184, 0.0
  %v4249 = vmax.f32 %v4185, 0.0
  %v4250 = vmax.f32 %v4186, 0.0
  %v4251 = vmax.f32 %v4187, 0.0
  %v4252 = vmax.f32 %v4188, 0.0
  %v4253 = vmax.f32 %v4189, 0.0
  %v4254 = vmax.f32 %v4190, 0.0
  %v4255 = vmax.f32 %v4191, 0.0
  %v4256 = vmax.f32 %v4192, 0.0
  %v4257 = vmax.f32 %v4193, 0.0
  %v4258 = vmax.f32 %v4194, 0.0
  %v4259 = vmax.f32 %v4195, 0.0
  %v4260 = vmax.f32 %v4196, 0.0
  %v4261 = vmax.f32 %v4197, 0.0
  %v4262 = vmax.f32 %v4198, 0.0
  %v4263 = vmax.f32 %v4199, 0.0
  %v4264 = vmax.f32 %v4200, 0.0
  %v4265 = vmax.f32 %v4201, 0.0
  %v4266 = vmax.f32 %v4202, 0.0
  %v4267 = vmax.f32 %v4203, 0.0
  %v4268 = vmax.f32 %v4204, 0.0
  %v4269 = vmax.f32 %v4205, 0.0
  %v4270 = vmax.f32 %v4206, 0.0
  %v4271 = vmax.f32 %v4207, 0.0
  %v4272 = vmax.f32 %v4208, 0.0
  %v4273 = vmax.f32 %v4209, 0.0
  %v4274 = vmax.f32 %v4210, 0.0
  %v4275 = vmax.f32 %v4211, 0.0
  %v4276 = vmax.f32 %v4212, 0.0
  %v4277 = vmax.f32 %v4213, 0.0
  %v4278 = vmax.f32 %v4214, 0.0
  %v4279 = vmax.f32 %v4215, 0.0
  %v4280 = vmax.f32 %v4216, 0.0
  %v4281 = vmax.f32 %v4217, 0.0
  %v4282 = vmax.f32 %v4218, 0.0
  %v4283 = vmax.f32 %v4219, 0.0
  %v4284 = vmax.f32 %v4220, 0.0
  %v4285 = vmax.f32 %v4221, 0.0
  %v4286 = vmax.f32 %v4222, 0.0
  %s4287 = smul.u32 2048, 1
  %s4288 = sshll.u32 %s4287, 4
  %4289 = dma.done [#allocation3], %s4288
  %v4290 = vld [vmem:[#allocation2] sm:$0xff]
  %v4291 = vld [vmem:[#allocation2 + $0x8] sm:$0xff]
  %v4292 = vld [vmem:[#allocation2 + $0x10] sm:$0xff]
  %v4293 = vld [vmem:[#allocation2 + $0x18] sm:$0xff]
  %v4294 = vld [vmem:[#allocation2 + $0x20] sm:$0xff]
  %v4295 = vld [vmem:[#allocation2 + $0x28] sm:$0xff]
  %v4296 = vld [vmem:[#allocation2 + $0x30] sm:$0xff]
  %v4297 = vld [vmem:[#allocation2 + $0x38] sm:$0xff]
  %v4298 = vld [vmem:[#allocation2 + $0x40] sm:$0xff]
  %v4299 = vld [vmem:[#allocation2 + $0x48] sm:$0xff]
  %v4300 = vld [vmem:[#allocation2 + $0x50] sm:$0xff]
  %v4301 = vld [vmem:[#allocation2 + $0x58] sm:$0xff]
  %v4302 = vld [vmem:[#allocation2 + $0x60] sm:$0xff]
  %v4303 = vld [vmem:[#allocation2 + $0x68] sm:$0xff]
  %v4304 = vld [vmem:[#allocation2 + $0x70] sm:$0xff]
  %v4305 = vld [vmem:[#allocation2 + $0x78] sm:$0xff]
  %v4306 = vld [vmem:[#allocation2 + $0x80] sm:$0xff]
  %v4307 = vld [vmem:[#allocation2 + $0x88] sm:$0xff]
  %v4308 = vld [vmem:[#allocation2 + $0x90] sm:$0xff]
  %v4309 = vld [vmem:[#allocation2 + $0x98] sm:$0xff]
  %v4310 = vld [vmem:[#allocation2 + $0xa0] sm:$0xff]
  %v4311 = vld [vmem:[#allocation2 + $0xa8] sm:$0xff]
  %v4312 = vld [vmem:[#allocation2 + $0xb0] sm:$0xff]
  %v4313 = vld [vmem:[#allocation2 + $0xb8] sm:$0xff]
  %v4314 = vld [vmem:[#allocation2 + $0xc0] sm:$0xff]
  %v4315 = vld [vmem:[#allocation2 + $0xc8] sm:$0xff]
  %v4316 = vld [vmem:[#allocation2 + $0xd0] sm:$0xff]
  %v4317 = vld [vmem:[#allocation2 + $0xd8] sm:$0xff]
  %v4318 = vld [vmem:[#allocation2 + $0xe0] sm:$0xff]
  %v4319 = vld [vmem:[#allocation2 + $0xe8] sm:$0xff]
  %v4320 = vld [vmem:[#allocation2 + $0xf0] sm:$0xff]
  %v4321 = vld [vmem:[#allocation2 + $0xf8] sm:$0xff]
  %v4322 = vld [vmem:[#allocation2 + $0x100] sm:$0xff]
  %v4323 = vld [vmem:[#allocation2 + $0x108] sm:$0xff]
  %v4324 = vld [vmem:[#allocation2 + $0x110] sm:$0xff]
  %v4325 = vld [vmem:[#allocation2 + $0x118] sm:$0xff]
  %v4326 = vld [vmem:[#allocation2 + $0x120] sm:$0xff]
  %v4327 = vld [vmem:[#allocation2 + $0x128] sm:$0xff]
  %v4328 = vld [vmem:[#allocation2 + $0x130] sm:$0xff]
  %v4329 = vld [vmem:[#allocation2 + $0x138] sm:$0xff]
  %v4330 = vld [vmem:[#allocation2 + $0x140] sm:$0xff]
  %v4331 = vld [vmem:[#allocation2 + $0x148] sm:$0xff]
  %v4332 = vld [vmem:[#allocation2 + $0x150] sm:$0xff]
  %v4333 = vld [vmem:[#allocation2 + $0x158] sm:$0xff]
  %v4334 = vld [vmem:[#allocation2 + $0x160] sm:$0xff]
  %v4335 = vld [vmem:[#allocation2 + $0x168] sm:$0xff]
  %v4336 = vld [vmem:[#allocation2 + $0x170] sm:$0xff]
  %v4337 = vld [vmem:[#allocation2 + $0x178] sm:$0xff]
  %v4338 = vld [vmem:[#allocation2 + $0x180] sm:$0xff]
  %v4339 = vld [vmem:[#allocation2 + $0x188] sm:$0xff]
  %v4340 = vld [vmem:[#allocation2 + $0x190] sm:$0xff]
  %v4341 = vld [vmem:[#allocation2 + $0x198] sm:$0xff]
  %v4342 = vld [vmem:[#allocation2 + $0x1a0] sm:$0xff]
  %v4343 = vld [vmem:[#allocation2 + $0x1a8] sm:$0xff]
  %v4344 = vld [vmem:[#allocation2 + $0x1b0] sm:$0xff]
  %v4345 = vld [vmem:[#allocation2 + $0x1b8] sm:$0xff]
  %v4346 = vld [vmem:[#allocation2 + $0x1c0] sm:$0xff]
  %v4347 = vld [vmem:[#allocation2 + $0x1c8] sm:$0xff]
  %v4348 = vld [vmem:[#allocation2 + $0x1d0] sm:$0xff]
  %v4349 = vld [vmem:[#allocation2 + $0x1d8] sm:$0xff]
  %v4350 = vld [vmem:[#allocation2 + $0x1e0] sm:$0xff]
  %v4351 = vld [vmem:[#allocation2 + $0x1e8] sm:$0xff]
  %v4352 = vld [vmem:[#allocation2 + $0x1f0] sm:$0xff]
  %v4353 = vld [vmem:[#allocation2 + $0x1f8] sm:$0xff]
  %4354 = vmatpush.msra.mxu0 %v4337
  %4355 = vmatpush.msra.mxu0 %v4336
  %4356 = vmatpush.msra.mxu0 %v4335
  %4357 = vmatpush.msra.mxu0 %v4334
  %4358 = vmatpush.msra.mxu0 %v4333
  %4359 = vmatpush.msra.mxu0 %v4332
  %4360 = vmatpush.msra.mxu0 %v4331
  %4361 = vmatpush.msra.mxu0 %v4330
  %4362 = vmatpush.msra.mxu0 %v4329
  %4363 = vmatpush.msra.mxu0 %v4328
  %4364 = vmatpush.msra.mxu0 %v4327
  %4365 = vmatpush.msra.mxu0 %v4326
  %4366 = vmatpush.msra.mxu0 %v4325
  %4367 = vmatpush.msra.mxu0 %v4324
  %4368 = vmatpush.msra.mxu0 %v4323
  %4369 = vmatpush.msra.mxu0 %v4322
  %4370 = vmatmul.f32.gmra.mxu0 %v4225
  %v4371 = vpop.f32.mrf.mxu0
  %v4372 = vadd.f32 0.0, %v4371
  %4373 = vdwg.mxu0
  %4374 = vmatpush.msra.mxu0 %v4353
  %4375 = vmatpush.msra.mxu0 %v4352
  %4376 = vmatpush.msra.mxu0 %v4351
  %4377 = vmatpush.msra.mxu0 %v4350
  %4378 = vmatpush.msra.mxu0 %v4349
  %4379 = vmatpush.msra.mxu0 %v4348
  %4380 = vmatpush.msra.mxu0 %v4347
  %4381 = vmatpush.msra.mxu0 %v4346
  %4382 = vmatpush.msra.mxu0 %v4345
  %4383 = vmatpush.msra.mxu0 %v4344
  %4384 = vmatpush.msra.mxu0 %v4343
  %4385 = vmatpush.msra.mxu0 %v4342
  %4386 = vmatpush.msra.mxu0 %v4341
  %4387 = vmatpush.msra.mxu0 %v4340
  %4388 = vmatpush.msra.mxu0 %v4339
  %4389 = vmatpush.msra.mxu0 %v4338
  %4390 = vmatmul.f32.gmra.mxu0 %v4226
  %v4391 = vpop.f32.mrf.mxu0
  %v4392 = vadd.f32 %v4372, %v4391
  %4393 = vdwg.mxu0
  %4394 = vmatpush.msra.mxu0 %v4305
  %4395 = vmatpush.msra.mxu0 %v4304
  %4396 = vmatpush.msra.mxu0 %v4303
  %4397 = vmatpush.msra.mxu0 %v4302
  %4398 = vmatpush.msra.mxu0 %v4301
  %4399 = vmatpush.msra.mxu0 %v4300
  %4400 = vmatpush.msra.mxu0 %v4299
  %4401 = vmatpush.msra.mxu0 %v4298
  %4402 = vmatpush.msra.mxu0 %v4297
  %4403 = vmatpush.msra.mxu0 %v4296
  %4404 = vmatpush.msra.mxu0 %v4295
  %4405 = vmatpush.msra.mxu0 %v4294
  %4406 = vmatpush.msra.mxu0 %v4293
  %4407 = vmatpush.msra.mxu0 %v4292
  %4408 = vmatpush.msra.mxu0 %v4291
  %4409 = vmatpush.msra.mxu0 %v4290
  %4410 = vmatmul.f32.gmra.mxu0 %v4223
  %v4411 = vpop.f32.mrf.mxu0
  %v4412 = vadd.f32 %v4392, %v4411
  %4413 = vdwg.mxu0
  %4414 = vmatpush.msra.mxu0 %v4321
  %4415 = vmatpush.msra.mxu0 %v4320
  %4416 = vmatpush.msra.mxu0 %v4319
  %4417 = vmatpush.msra.mxu0 %v4318
  %4418 = vmatpush.msra.mxu0 %v4317
  %4419 = vmatpush.msra.mxu0 %v4316
  %4420 = vmatpush.msra.mxu0 %v4315
  %4421 = vmatpush.msra.mxu0 %v4314
  %4422 = vmatpush.msra.mxu0 %v4313
  %4423 = vmatpush.msra.mxu0 %v4312
  %4424 = vmatpush.msra.mxu0 %v4311
  %4425 = vmatpush.msra.mxu0 %v4310
  %4426 = vmatpush.msra.mxu0 %v4309
  %4427 = vmatpush.msra.mxu0 %v4308
  %4428 = vmatpush.msra.mxu0 %v4307
  %4429 = vmatpush.msra.mxu0 %v4306
  %4430 = vmatmul.f32.gmra.mxu0 %v4224
  %v4431 = vpop.f32.mrf.mxu0
  %v4432 = vadd.f32 %v4412, %v4431
  %4433 = vdwg.mxu0
  %v4434 = vld [vmem:[#allocation2 + $0x200] sm:$0xff]
  %v4435 = vld [vmem:[#allocation2 + $0x208] sm:$0xff]
  %v4436 = vld [vmem:[#allocation2 + $0x210] sm:$0xff]
  %v4437 = vld [vmem:[#allocation2 + $0x218] sm:$0xff]
  %v4438 = vld [vmem:[#allocation2 + $0x220] sm:$0xff]
  %v4439 = vld [vmem:[#allocation2 + $0x228] sm:$0xff]
  %v4440 = vld [vmem:[#allocation2 + $0x230] sm:$0xff]
  %v4441 = vld [vmem:[#allocation2 + $0x238] sm:$0xff]
  %v4442 = vld [vmem:[#allocation2 + $0x240] sm:$0xff]
  %v4443 = vld [vmem:[#allocation2 + $0x248] sm:$0xff]
  %v4444 = vld [vmem:[#allocation2 + $0x250] sm:$0xff]
  %v4445 = vld [vmem:[#allocation2 + $0x258] sm:$0xff]
  %v4446 = vld [vmem:[#allocation2 + $0x260] sm:$0xff]
  %v4447 = vld [vmem:[#allocation2 + $0x268] sm:$0xff]
  %v4448 = vld [vmem:[#allocation2 + $0x270] sm:$0xff]
  %v4449 = vld [vmem:[#allocation2 + $0x278] sm:$0xff]
  %v4450 = vld [vmem:[#allocation2 + $0x280] sm:$0xff]
  %v4451 = vld [vmem:[#allocation2 + $0x288] sm:$0xff]
  %v4452 = vld [vmem:[#allocation2 + $0x290] sm:$0xff]
  %v4453 = vld [vmem:[#allocation2 + $0x298] sm:$0xff]
  %v4454 = vld [vmem:[#allocation2 + $0x2a0] sm:$0xff]
  %v4455 = vld [vmem:[#allocation2 + $0x2a8] sm:$0xff]
  %v4456 = vld [vmem:[#allocation2 + $0x2b0] sm:$0xff]
  %v4457 = vld [vmem:[#allocation2 + $0x2b8] sm:$0xff]
  %v4458 = vld [vmem:[#allocation2 + $0x2c0] sm:$0xff]
  %v4459 = vld [vmem:[#allocation2 + $0x2c8] sm:$0xff]
  %v4460 = vld [vmem:[#allocation2 + $0x2d0] sm:$0xff]
  %v4461 = vld [vmem:[#allocation2 + $0x2d8] sm:$0xff]
  %v4462 = vld [vmem:[#allocation2 + $0x2e0] sm:$0xff]
  %v4463 = vld [vmem:[#allocation2 + $0x2e8] sm:$0xff]
  %v4464 = vld [vmem:[#allocation2 + $0x2f0] sm:$0xff]
  %v4465 = vld [vmem:[#allocation2 + $0x2f8] sm:$0xff]
  %4466 = vmatpush.msra.mxu0 %v4449
  %4467 = vmatpush.msra.mxu0 %v4448
  %4468 = vmatpush.msra.mxu0 %v4447
  %4469 = vmatpush.msra.mxu0 %v4446
  %4470 = vmatpush.msra.mxu0 %v4445
  %4471 = vmatpush.msra.mxu0 %v4444
  %4472 = vmatpush.msra.mxu0 %v4443
  %4473 = vmatpush.msra.mxu0 %v4442
  %4474 = vmatpush.msra.mxu0 %v4441
  %4475 = vmatpush.msra.mxu0 %v4440
  %4476 = vmatpush.msra.mxu0 %v4439
  %4477 = vmatpush.msra.mxu0 %v4438
  %4478 = vmatpush.msra.mxu0 %v4437
  %4479 = vmatpush.msra.mxu0 %v4436
  %4480 = vmatpush.msra.mxu0 %v4435
  %4481 = vmatpush.msra.mxu0 %v4434
  %4482 = vmatmul.f32.gmra.mxu0 %v4227
  %v4483 = vpop.f32.mrf.mxu0
  %v4484 = vadd.f32 0.0, %v4483
  %4485 = vdwg.mxu0
  %4486 = vmatpush.msra.mxu0 %v4465
  %4487 = vmatpush.msra.mxu0 %v4464
  %4488 = vmatpush.msra.mxu0 %v4463
  %4489 = vmatpush.msra.mxu0 %v4462
  %4490 = vmatpush.msra.mxu0 %v4461
  %4491 = vmatpush.msra.mxu0 %v4460
  %4492 = vmatpush.msra.mxu0 %v4459
  %4493 = vmatpush.msra.mxu0 %v4458
  %4494 = vmatpush.msra.mxu0 %v4457
  %4495 = vmatpush.msra.mxu0 %v4456
  %4496 = vmatpush.msra.mxu0 %v4455
  %4497 = vmatpush.msra.mxu0 %v4454
  %4498 = vmatpush.msra.mxu0 %v4453
  %4499 = vmatpush.msra.mxu0 %v4452
  %4500 = vmatpush.msra.mxu0 %v4451
  %4501 = vmatpush.msra.mxu0 %v4450
  %4502 = vmatmul.f32.gmra.mxu0 %v4228
  %v4503 = vpop.f32.mrf.mxu0
  %v4504 = vadd.f32 %v4484, %v4503
  %4505 = vdwg.mxu0
  %v4506 = vadd.f32 %v4432, %v4504
  %v4507 = vld [vmem:[#allocation2 + $0x300] sm:$0xff]
  %v4508 = vld [vmem:[#allocation2 + $0x308] sm:$0xff]
  %v4509 = vld [vmem:[#allocation2 + $0x310] sm:$0xff]
  %v4510 = vld [vmem:[#allocation2 + $0x318] sm:$0xff]
  %v4511 = vld [vmem:[#allocation2 + $0x320] sm:$0xff]
  %v4512 = vld [vmem:[#allocation2 + $0x328] sm:$0xff]
  %v4513 = vld [vmem:[#allocation2 + $0x330] sm:$0xff]
  %v4514 = vld [vmem:[#allocation2 + $0x338] sm:$0xff]
  %v4515 = vld [vmem:[#allocation2 + $0x340] sm:$0xff]
  %v4516 = vld [vmem:[#allocation2 + $0x348] sm:$0xff]
  %v4517 = vld [vmem:[#allocation2 + $0x350] sm:$0xff]
  %v4518 = vld [vmem:[#allocation2 + $0x358] sm:$0xff]
  %v4519 = vld [vmem:[#allocation2 + $0x360] sm:$0xff]
  %v4520 = vld [vmem:[#allocation2 + $0x368] sm:$0xff]
  %v4521 = vld [vmem:[#allocation2 + $0x370] sm:$0xff]
  %v4522 = vld [vmem:[#allocation2 + $0x378] sm:$0xff]
  %v4523 = vld [vmem:[#allocation2 + $0x380] sm:$0xff]
  %v4524 = vld [vmem:[#allocation2 + $0x388] sm:$0xff]
  %v4525 = vld [vmem:[#allocation2 + $0x390] sm:$0xff]
  %v4526 = vld [vmem:[#allocation2 + $0x398] sm:$0xff]
  %v4527 = vld [vmem:[#allocation2 + $0x3a0] sm:$0xff]
  %v4528 = vld [vmem:[#allocation2 + $0x3a8] sm:$0xff]
  %v4529 = vld [vmem:[#allocation2 + $0x3b0] sm:$0xff]
  %v4530 = vld [vmem:[#allocation2 + $0x3b8] sm:$0xff]
  %v4531 = vld [vmem:[#allocation2 + $0x3c0] sm:$0xff]
  %v4532 = vld [vmem:[#allocation2 + $0x3c8] sm:$0xff]
  %v4533 = vld [vmem:[#allocation2 + $0x3d0] sm:$0xff]
  %v4534 = vld [vmem:[#allocation2 + $0x3d8] sm:$0xff]
  %v4535 = vld [vmem:[#allocation2 + $0x3e0] sm:$0xff]
  %v4536 = vld [vmem:[#allocation2 + $0x3e8] sm:$0xff]
  %v4537 = vld [vmem:[#allocation2 + $0x3f0] sm:$0xff]
  %v4538 = vld [vmem:[#allocation2 + $0x3f8] sm:$0xff]
  %4539 = vmatpush.msra.mxu0 %v4522
  %4540 = vmatpush.msra.mxu0 %v4521
  %4541 = vmatpush.msra.mxu0 %v4520
  %4542 = vmatpush.msra.mxu0 %v4519
  %4543 = vmatpush.msra.mxu0 %v4518
  %4544 = vmatpush.msra.mxu0 %v4517
  %4545 = vmatpush.msra.mxu0 %v4516
  %4546 = vmatpush.msra.mxu0 %v4515
  %4547 = vmatpush.msra.mxu0 %v4514
  %4548 = vmatpush.msra.mxu0 %v4513
  %4549 = vmatpush.msra.mxu0 %v4512
  %4550 = vmatpush.msra.mxu0 %v4511
  %4551 = vmatpush.msra.mxu0 %v4510
  %4552 = vmatpush.msra.mxu0 %v4509
  %4553 = vmatpush.msra.mxu0 %v4508
  %4554 = vmatpush.msra.mxu0 %v4507
  %4555 = vmatmul.f32.gmra.mxu0 %v4229
  %v4556 = vpop.f32.mrf.mxu0
  %v4557 = vadd.f32 0.0, %v4556
  %4558 = vdwg.mxu0
  %4559 = vmatpush.msra.mxu0 %v4538
  %4560 = vmatpush.msra.mxu0 %v4537
  %4561 = vmatpush.msra.mxu0 %v4536
  %4562 = vmatpush.msra.mxu0 %v4535
  %4563 = vmatpush.msra.mxu0 %v4534
  %4564 = vmatpush.msra.mxu0 %v4533
  %4565 = vmatpush.msra.mxu0 %v4532
  %4566 = vmatpush.msra.mxu0 %v4531
  %4567 = vmatpush.msra.mxu0 %v4530
  %4568 = vmatpush.msra.mxu0 %v4529
  %4569 = vmatpush.msra.mxu0 %v4528
  %4570 = vmatpush.msra.mxu0 %v4527
  %4571 = vmatpush.msra.mxu0 %v4526
  %4572 = vmatpush.msra.mxu0 %v4525
  %4573 = vmatpush.msra.mxu0 %v4524
  %4574 = vmatpush.msra.mxu0 %v4523
  %4575 = vmatmul.f32.gmra.mxu0 %v4230
  %v4576 = vpop.f32.mrf.mxu0
  %v4577 = vadd.f32 %v4557, %v4576
  %4578 = vdwg.mxu0
  %v4579 = vadd.f32 %v4506, %v4577
  %v4580 = vld [vmem:[#allocation2 + $0x400] sm:$0xff]
  %v4581 = vld [vmem:[#allocation2 + $0x408] sm:$0xff]
  %v4582 = vld [vmem:[#allocation2 + $0x410] sm:$0xff]
  %v4583 = vld [vmem:[#allocation2 + $0x418] sm:$0xff]
  %v4584 = vld [vmem:[#allocation2 + $0x420] sm:$0xff]
  %v4585 = vld [vmem:[#allocation2 + $0x428] sm:$0xff]
  %v4586 = vld [vmem:[#allocation2 + $0x430] sm:$0xff]
  %v4587 = vld [vmem:[#allocation2 + $0x438] sm:$0xff]
  %v4588 = vld [vmem:[#allocation2 + $0x440] sm:$0xff]
  %v4589 = vld [vmem:[#allocation2 + $0x448] sm:$0xff]
  %v4590 = vld [vmem:[#allocation2 + $0x450] sm:$0xff]
  %v4591 = vld [vmem:[#allocation2 + $0x458] sm:$0xff]
  %v4592 = vld [vmem:[#allocation2 + $0x460] sm:$0xff]
  %v4593 = vld [vmem:[#allocation2 + $0x468] sm:$0xff]
  %v4594 = vld [vmem:[#allocation2 + $0x470] sm:$0xff]
  %v4595 = vld [vmem:[#allocation2 + $0x478] sm:$0xff]
  %v4596 = vld [vmem:[#allocation2 + $0x480] sm:$0xff]
  %v4597 = vld [vmem:[#allocation2 + $0x488] sm:$0xff]
  %v4598 = vld [vmem:[#allocation2 + $0x490] sm:$0xff]
  %v4599 = vld [vmem:[#allocation2 + $0x498] sm:$0xff]
  %v4600 = vld [vmem:[#allocation2 + $0x4a0] sm:$0xff]
  %v4601 = vld [vmem:[#allocation2 + $0x4a8] sm:$0xff]
  %v4602 = vld [vmem:[#allocation2 + $0x4b0] sm:$0xff]
  %v4603 = vld [vmem:[#allocation2 + $0x4b8] sm:$0xff]
  %v4604 = vld [vmem:[#allocation2 + $0x4c0] sm:$0xff]
  %v4605 = vld [vmem:[#allocation2 + $0x4c8] sm:$0xff]
  %v4606 = vld [vmem:[#allocation2 + $0x4d0] sm:$0xff]
  %v4607 = vld [vmem:[#allocation2 + $0x4d8] sm:$0xff]
  %v4608 = vld [vmem:[#allocation2 + $0x4e0] sm:$0xff]
  %v4609 = vld [vmem:[#allocation2 + $0x4e8] sm:$0xff]
  %v4610 = vld [vmem:[#allocation2 + $0x4f0] sm:$0xff]
  %v4611 = vld [vmem:[#allocation2 + $0x4f8] sm:$0xff]
  %4612 = vmatpush.msra.mxu0 %v4595
  %4613 = vmatpush.msra.mxu0 %v4594
  %4614 = vmatpush.msra.mxu0 %v4593
  %4615 = vmatpush.msra.mxu0 %v4592
  %4616 = vmatpush.msra.mxu0 %v4591
  %4617 = vmatpush.msra.mxu0 %v4590
  %4618 = vmatpush.msra.mxu0 %v4589
  %4619 = vmatpush.msra.mxu0 %v4588
  %4620 = vmatpush.msra.mxu0 %v4587
  %4621 = vmatpush.msra.mxu0 %v4586
  %4622 = vmatpush.msra.mxu0 %v4585
  %4623 = vmatpush.msra.mxu0 %v4584
  %4624 = vmatpush.msra.mxu0 %v4583
  %4625 = vmatpush.msra.mxu0 %v4582
  %4626 = vmatpush.msra.mxu0 %v4581
  %4627 = vmatpush.msra.mxu0 %v4580
  %4628 = vmatmul.f32.gmra.mxu0 %v4231
  %v4629 = vpop.f32.mrf.mxu0
  %v4630 = vadd.f32 0.0, %v4629
  %4631 = vdwg.mxu0
  %4632 = vmatpush.msra.mxu0 %v4611
  %4633 = vmatpush.msra.mxu0 %v4610
  %4634 = vmatpush.msra.mxu0 %v4609
  %4635 = vmatpush.msra.mxu0 %v4608
  %4636 = vmatpush.msra.mxu0 %v4607
  %4637 = vmatpush.msra.mxu0 %v4606
  %4638 = vmatpush.msra.mxu0 %v4605
  %4639 = vmatpush.msra.mxu0 %v4604
  %4640 = vmatpush.msra.mxu0 %v4603
  %4641 = vmatpush.msra.mxu0 %v4602
  %4642 = vmatpush.msra.mxu0 %v4601
  %4643 = vmatpush.msra.mxu0 %v4600
  %4644 = vmatpush.msra.mxu0 %v4599
  %4645 = vmatpush.msra.mxu0 %v4598
  %4646 = vmatpush.msra.mxu0 %v4597
  %4647 = vmatpush.msra.mxu0 %v4596
  %4648 = vmatmul.f32.gmra.mxu0 %v4232
  %v4649 = vpop.f32.mrf.mxu0
  %v4650 = vadd.f32 %v4630, %v4649
  %4651 = vdwg.mxu0
  %v4652 = vadd.f32 %v4579, %v4650
  %v4653 = vld [vmem:[#allocation2 + $0x500] sm:$0xff]
  %v4654 = vld [vmem:[#allocation2 + $0x508] sm:$0xff]
  %v4655 = vld [vmem:[#allocation2 + $0x510] sm:$0xff]
  %v4656 = vld [vmem:[#allocation2 + $0x518] sm:$0xff]
  %v4657 = vld [vmem:[#allocation2 + $0x520] sm:$0xff]
  %v4658 = vld [vmem:[#allocation2 + $0x528] sm:$0xff]
  %v4659 = vld [vmem:[#allocation2 + $0x530] sm:$0xff]
  %v4660 = vld [vmem:[#allocation2 + $0x538] sm:$0xff]
  %v4661 = vld [vmem:[#allocation2 + $0x540] sm:$0xff]
  %v4662 = vld [vmem:[#allocation2 + $0x548] sm:$0xff]
  %v4663 = vld [vmem:[#allocation2 + $0x550] sm:$0xff]
  %v4664 = vld [vmem:[#allocation2 + $0x558] sm:$0xff]
  %v4665 = vld [vmem:[#allocation2 + $0x560] sm:$0xff]
  %v4666 = vld [vmem:[#allocation2 + $0x568] sm:$0xff]
  %v4667 = vld [vmem:[#allocation2 + $0x570] sm:$0xff]
  %v4668 = vld [vmem:[#allocation2 + $0x578] sm:$0xff]
  %v4669 = vld [vmem:[#allocation2 + $0x580] sm:$0xff]
  %v4670 = vld [vmem:[#allocation2 + $0x588] sm:$0xff]
  %v4671 = vld [vmem:[#allocation2 + $0x590] sm:$0xff]
  %v4672 = vld [vmem:[#allocation2 + $0x598] sm:$0xff]
  %v4673 = vld [vmem:[#allocation2 + $0x5a0] sm:$0xff]
  %v4674 = vld [vmem:[#allocation2 + $0x5a8] sm:$0xff]
  %v4675 = vld [vmem:[#allocation2 + $0x5b0] sm:$0xff]
  %v4676 = vld [vmem:[#allocation2 + $0x5b8] sm:$0xff]
  %v4677 = vld [vmem:[#allocation2 + $0x5c0] sm:$0xff]
  %v4678 = vld [vmem:[#allocation2 + $0x5c8] sm:$0xff]
  %v4679 = vld [vmem:[#allocation2 + $0x5d0] sm:$0xff]
  %v4680 = vld [vmem:[#allocation2 + $0x5d8] sm:$0xff]
  %v4681 = vld [vmem:[#allocation2 + $0x5e0] sm:$0xff]
  %v4682 = vld [vmem:[#allocation2 + $0x5e8] sm:$0xff]
  %v4683 = vld [vmem:[#allocation2 + $0x5f0] sm:$0xff]
  %v4684 = vld [vmem:[#allocation2 + $0x5f8] sm:$0xff]
  %4685 = vmatpush.msra.mxu0 %v4668
  %4686 = vmatpush.msra.mxu0 %v4667
  %4687 = vmatpush.msra.mxu0 %v4666
  %4688 = vmatpush.msra.mxu0 %v4665
  %4689 = vmatpush.msra.mxu0 %v4664
  %4690 = vmatpush.msra.mxu0 %v4663
  %4691 = vmatpush.msra.mxu0 %v4662
  %4692 = vmatpush.msra.mxu0 %v4661
  %4693 = vmatpush.msra.mxu0 %v4660
  %4694 = vmatpush.msra.mxu0 %v4659
  %4695 = vmatpush.msra.mxu0 %v4658
  %4696 = vmatpush.msra.mxu0 %v4657
  %4697 = vmatpush.msra.mxu0 %v4656
  %4698 = vmatpush.msra.mxu0 %v4655
  %4699 = vmatpush.msra.mxu0 %v4654
  %4700 = vmatpush.msra.mxu0 %v4653
  %4701 = vmatmul.f32.gmra.mxu0 %v4233
  %v4702 = vpop.f32.mrf.mxu0
  %v4703 = vadd.f32 0.0, %v4702
  %4704 = vdwg.mxu0
  %4705 = vmatpush.msra.mxu0 %v4684
  %4706 = vmatpush.msra.mxu0 %v4683
  %4707 = vmatpush.msra.mxu0 %v4682
  %4708 = vmatpush.msra.mxu0 %v4681
  %4709 = vmatpush.msra.mxu0 %v4680
  %4710 = vmatpush.msra.mxu0 %v4679
  %4711 = vmatpush.msra.mxu0 %v4678
  %4712 = vmatpush.msra.mxu0 %v4677
  %4713 = vmatpush.msra.mxu0 %v4676
  %4714 = vmatpush.msra.mxu0 %v4675
  %4715 = vmatpush.msra.mxu0 %v4674
  %4716 = vmatpush.msra.mxu0 %v4673
  %4717 = vmatpush.msra.mxu0 %v4672
  %4718 = vmatpush.msra.mxu0 %v4671
  %4719 = vmatpush.msra.mxu0 %v4670
  %4720 = vmatpush.msra.mxu0 %v4669
  %4721 = vmatmul.f32.gmra.mxu0 %v4234
  %v4722 = vpop.f32.mrf.mxu0
  %v4723 = vadd.f32 %v4703, %v4722
  %4724 = vdwg.mxu0
  %v4725 = vadd.f32 %v4652, %v4723
  %v4726 = vld [vmem:[#allocation2 + $0x600] sm:$0xff]
  %v4727 = vld [vmem:[#allocation2 + $0x608] sm:$0xff]
  %v4728 = vld [vmem:[#allocation2 + $0x610] sm:$0xff]
  %v4729 = vld [vmem:[#allocation2 + $0x618] sm:$0xff]
  %v4730 = vld [vmem:[#allocation2 + $0x620] sm:$0xff]
  %v4731 = vld [vmem:[#allocation2 + $0x628] sm:$0xff]
  %v4732 = vld [vmem:[#allocation2 + $0x630] sm:$0xff]
  %v4733 = vld [vmem:[#allocation2 + $0x638] sm:$0xff]
  %v4734 = vld [vmem:[#allocation2 + $0x640] sm:$0xff]
  %v4735 = vld [vmem:[#allocation2 + $0x648] sm:$0xff]
  %v4736 = vld [vmem:[#allocation2 + $0x650] sm:$0xff]
  %v4737 = vld [vmem:[#allocation2 + $0x658] sm:$0xff]
  %v4738 = vld [vmem:[#allocation2 + $0x660] sm:$0xff]
  %v4739 = vld [vmem:[#allocation2 + $0x668] sm:$0xff]
  %v4740 = vld [vmem:[#allocation2 + $0x670] sm:$0xff]
  %v4741 = vld [vmem:[#allocation2 + $0x678] sm:$0xff]
  %v4742 = vld [vmem:[#allocation2 + $0x680] sm:$0xff]
  %v4743 = vld [vmem:[#allocation2 + $0x688] sm:$0xff]
  %v4744 = vld [vmem:[#allocation2 + $0x690] sm:$0xff]
  %v4745 = vld [vmem:[#allocation2 + $0x698] sm:$0xff]
  %v4746 = vld [vmem:[#allocation2 + $0x6a0] sm:$0xff]
  %v4747 = vld [vmem:[#allocation2 + $0x6a8] sm:$0xff]
  %v4748 = vld [vmem:[#allocation2 + $0x6b0] sm:$0xff]
  %v4749 = vld [vmem:[#allocation2 + $0x6b8] sm:$0xff]
  %v4750 = vld [vmem:[#allocation2 + $0x6c0] sm:$0xff]
  %v4751 = vld [vmem:[#allocation2 + $0x6c8] sm:$0xff]
  %v4752 = vld [vmem:[#allocation2 + $0x6d0] sm:$0xff]
  %v4753 = vld [vmem:[#allocation2 + $0x6d8] sm:$0xff]
  %v4754 = vld [vmem:[#allocation2 + $0x6e0] sm:$0xff]
  %v4755 = vld [vmem:[#allocation2 + $0x6e8] sm:$0xff]
  %v4756 = vld [vmem:[#allocation2 + $0x6f0] sm:$0xff]
  %v4757 = vld [vmem:[#allocation2 + $0x6f8] sm:$0xff]
  %4758 = vmatpush.msra.mxu0 %v4741
  %4759 = vmatpush.msra.mxu0 %v4740
  %4760 = vmatpush.msra.mxu0 %v4739
  %4761 = vmatpush.msra.mxu0 %v4738
  %4762 = vmatpush.msra.mxu0 %v4737
  %4763 = vmatpush.msra.mxu0 %v4736
  %4764 = vmatpush.msra.mxu0 %v4735
  %4765 = vmatpush.msra.mxu0 %v4734
  %4766 = vmatpush.msra.mxu0 %v4733
  %4767 = vmatpush.msra.mxu0 %v4732
  %4768 = vmatpush.msra.mxu0 %v4731
  %4769 = vmatpush.msra.mxu0 %v4730
  %4770 = vmatpush.msra.mxu0 %v4729
  %4771 = vmatpush.msra.mxu0 %v4728
  %4772 = vmatpush.msra.mxu0 %v4727
  %4773 = vmatpush.msra.mxu0 %v4726
  %4774 = vmatmul.f32.gmra.mxu0 %v4235
  %v4775 = vpop.f32.mrf.mxu0
  %v4776 = vadd.f32 0.0, %v4775
  %4777 = vdwg.mxu0
  %4778 = vmatpush.msra.mxu0 %v4757
  %4779 = vmatpush.msra.mxu0 %v4756
  %4780 = vmatpush.msra.mxu0 %v4755
  %4781 = vmatpush.msra.mxu0 %v4754
  %4782 = vmatpush.msra.mxu0 %v4753
  %4783 = vmatpush.msra.mxu0 %v4752
  %4784 = vmatpush.msra.mxu0 %v4751
  %4785 = vmatpush.msra.mxu0 %v4750
  %4786 = vmatpush.msra.mxu0 %v4749
  %4787 = vmatpush.msra.mxu0 %v4748
  %4788 = vmatpush.msra.mxu0 %v4747
  %4789 = vmatpush.msra.mxu0 %v4746
  %4790 = vmatpush.msra.mxu0 %v4745
  %4791 = vmatpush.msra.mxu0 %v4744
  %4792 = vmatpush.msra.mxu0 %v4743
  %4793 = vmatpush.msra.mxu0 %v4742
  %4794 = vmatmul.f32.gmra.mxu0 %v4236
  %v4795 = vpop.f32.mrf.mxu0
  %v4796 = vadd.f32 %v4776, %v4795
  %4797 = vdwg.mxu0
  %v4798 = vadd.f32 %v4725, %v4796
  %v4799 = vld [vmem:[#allocation2 + $0x700] sm:$0xff]
  %v4800 = vld [vmem:[#allocation2 + $0x708] sm:$0xff]
  %v4801 = vld [vmem:[#allocation2 + $0x710] sm:$0xff]
  %v4802 = vld [vmem:[#allocation2 + $0x718] sm:$0xff]
  %v4803 = vld [vmem:[#allocation2 + $0x720] sm:$0xff]
  %v4804 = vld [vmem:[#allocation2 + $0x728] sm:$0xff]
  %v4805 = vld [vmem:[#allocation2 + $0x730] sm:$0xff]
  %v4806 = vld [vmem:[#allocation2 + $0x738] sm:$0xff]
  %v4807 = vld [vmem:[#allocation2 + $0x740] sm:$0xff]
  %v4808 = vld [vmem:[#allocation2 + $0x748] sm:$0xff]
  %v4809 = vld [vmem:[#allocation2 + $0x750] sm:$0xff]
  %v4810 = vld [vmem:[#allocation2 + $0x758] sm:$0xff]
  %v4811 = vld [vmem:[#allocation2 + $0x760] sm:$0xff]
  %v4812 = vld [vmem:[#allocation2 + $0x768] sm:$0xff]
  %v4813 = vld [vmem:[#allocation2 + $0x770] sm:$0xff]
  %v4814 = vld [vmem:[#allocation2 + $0x778] sm:$0xff]
  %v4815 = vld [vmem:[#allocation2 + $0x780] sm:$0xff]
  %v4816 = vld [vmem:[#allocation2 + $0x788] sm:$0xff]
  %v4817 = vld [vmem:[#allocation2 + $0x790] sm:$0xff]
  %v4818 = vld [vmem:[#allocation2 + $0x798] sm:$0xff]
  %v4819 = vld [vmem:[#allocation2 + $0x7a0] sm:$0xff]
  %v4820 = vld [vmem:[#allocation2 + $0x7a8] sm:$0xff]
  %v4821 = vld [vmem:[#allocation2 + $0x7b0] sm:$0xff]
  %v4822 = vld [vmem:[#allocation2 + $0x7b8] sm:$0xff]
  %v4823 = vld [vmem:[#allocation2 + $0x7c0] sm:$0xff]
  %v4824 = vld [vmem:[#allocation2 + $0x7c8] sm:$0xff]
  %v4825 = vld [vmem:[#allocation2 + $0x7d0] sm:$0xff]
  %v4826 = vld [vmem:[#allocation2 + $0x7d8] sm:$0xff]
  %v4827 = vld [vmem:[#allocation2 + $0x7e0] sm:$0xff]
  %v4828 = vld [vmem:[#allocation2 + $0x7e8] sm:$0xff]
  %v4829 = vld [vmem:[#allocation2 + $0x7f0] sm:$0xff]
  %v4830 = vld [vmem:[#allocation2 + $0x7f8] sm:$0xff]
  %4831 = vmatpush.msra.mxu0 %v4814
  %4832 = vmatpush.msra.mxu0 %v4813
  %4833 = vmatpush.msra.mxu0 %v4812
  %4834 = vmatpush.msra.mxu0 %v4811
  %4835 = vmatpush.msra.mxu0 %v4810
  %4836 = vmatpush.msra.mxu0 %v4809
  %4837 = vmatpush.msra.mxu0 %v4808
  %4838 = vmatpush.msra.mxu0 %v4807
  %4839 = vmatpush.msra.mxu0 %v4806
  %4840 = vmatpush.msra.mxu0 %v4805
  %4841 = vmatpush.msra.mxu0 %v4804
  %4842 = vmatpush.msra.mxu0 %v4803
  %4843 = vmatpush.msra.mxu0 %v4802
  %4844 = vmatpush.msra.mxu0 %v4801
  %4845 = vmatpush.msra.mxu0 %v4800
  %4846 = vmatpush.msra.mxu0 %v4799
  %4847 = vmatmul.f32.gmra.mxu0 %v4237
  %v4848 = vpop.f32.mrf.mxu0
  %v4849 = vadd.f32 0.0, %v4848
  %4850 = vdwg.mxu0
  %4851 = vmatpush.msra.mxu0 %v4830
  %4852 = vmatpush.msra.mxu0 %v4829
  %4853 = vmatpush.msra.mxu0 %v4828
  %4854 = vmatpush.msra.mxu0 %v4827
  %4855 = vmatpush.msra.mxu0 %v4826
  %4856 = vmatpush.msra.mxu0 %v4825
  %4857 = vmatpush.msra.mxu0 %v4824
  %4858 = vmatpush.msra.mxu0 %v4823
  %4859 = vmatpush.msra.mxu0 %v4822
  %4860 = vmatpush.msra.mxu0 %v4821
  %4861 = vmatpush.msra.mxu0 %v4820
  %4862 = vmatpush.msra.mxu0 %v4819
  %4863 = vmatpush.msra.mxu0 %v4818
  %4864 = vmatpush.msra.mxu0 %v4817
  %4865 = vmatpush.msra.mxu0 %v4816
  %4866 = vmatpush.msra.mxu0 %v4815
  %4867 = vmatmul.f32.gmra.mxu0 %v4238
  %v4868 = vpop.f32.mrf.mxu0
  %v4869 = vadd.f32 %v4849, %v4868
  %4870 = vdwg.mxu0
  %v4871 = vadd.f32 %v4798, %v4869
  %s4872 = sshll.u32 %s4287, 4
  %4873 = dma.done %s578, %s4872
  %v4874 = vld [vmem:[#allocation2 + $0x800] sm:$0xff]
  %v4875 = vld [vmem:[#allocation2 + $0x808] sm:$0xff]
  %v4876 = vld [vmem:[#allocation2 + $0x810] sm:$0xff]
  %v4877 = vld [vmem:[#allocation2 + $0x818] sm:$0xff]
  %v4878 = vld [vmem:[#allocation2 + $0x820] sm:$0xff]
  %v4879 = vld [vmem:[#allocation2 + $0x828] sm:$0xff]
  %v4880 = vld [vmem:[#allocation2 + $0x830] sm:$0xff]
  %v4881 = vld [vmem:[#allocation2 + $0x838] sm:$0xff]
  %v4882 = vld [vmem:[#allocation2 + $0x840] sm:$0xff]
  %v4883 = vld [vmem:[#allocation2 + $0x848] sm:$0xff]
  %v4884 = vld [vmem:[#allocation2 + $0x850] sm:$0xff]
  %v4885 = vld [vmem:[#allocation2 + $0x858] sm:$0xff]
  %v4886 = vld [vmem:[#allocation2 + $0x860] sm:$0xff]
  %v4887 = vld [vmem:[#allocation2 + $0x868] sm:$0xff]
  %v4888 = vld [vmem:[#allocation2 + $0x870] sm:$0xff]
  %v4889 = vld [vmem:[#allocation2 + $0x878] sm:$0xff]
  %v4890 = vld [vmem:[#allocation2 + $0x880] sm:$0xff]
  %v4891 = vld [vmem:[#allocation2 + $0x888] sm:$0xff]
  %v4892 = vld [vmem:[#allocation2 + $0x890] sm:$0xff]
  %v4893 = vld [vmem:[#allocation2 + $0x898] sm:$0xff]
  %v4894 = vld [vmem:[#allocation2 + $0x8a0] sm:$0xff]
  %v4895 = vld [vmem:[#allocation2 + $0x8a8] sm:$0xff]
  %v4896 = vld [vmem:[#allocation2 + $0x8b0] sm:$0xff]
  %v4897 = vld [vmem:[#allocation2 + $0x8b8] sm:$0xff]
  %v4898 = vld [vmem:[#allocation2 + $0x8c0] sm:$0xff]
  %v4899 = vld [vmem:[#allocation2 + $0x8c8] sm:$0xff]
  %v4900 = vld [vmem:[#allocation2 + $0x8d0] sm:$0xff]
  %v4901 = vld [vmem:[#allocation2 + $0x8d8] sm:$0xff]
  %v4902 = vld [vmem:[#allocation2 + $0x8e0] sm:$0xff]
  %v4903 = vld [vmem:[#allocation2 + $0x8e8] sm:$0xff]
  %v4904 = vld [vmem:[#allocation2 + $0x8f0] sm:$0xff]
  %v4905 = vld [vmem:[#allocation2 + $0x8f8] sm:$0xff]
  %4906 = vmatpush.msra.mxu0 %v4889
  %4907 = vmatpush.msra.mxu0 %v4888
  %4908 = vmatpush.msra.mxu0 %v4887
  %4909 = vmatpush.msra.mxu0 %v4886
  %4910 = vmatpush.msra.mxu0 %v4885
  %4911 = vmatpush.msra.mxu0 %v4884
  %4912 = vmatpush.msra.mxu0 %v4883
  %4913 = vmatpush.msra.mxu0 %v4882
  %4914 = vmatpush.msra.mxu0 %v4881
  %4915 = vmatpush.msra.mxu0 %v4880
  %4916 = vmatpush.msra.mxu0 %v4879
  %4917 = vmatpush.msra.mxu0 %v4878
  %4918 = vmatpush.msra.mxu0 %v4877
  %4919 = vmatpush.msra.mxu0 %v4876
  %4920 = vmatpush.msra.mxu0 %v4875
  %4921 = vmatpush.msra.mxu0 %v4874
  %4922 = vmatmul.f32.gmra.mxu0 %v4239
  %v4923 = vpop.f32.mrf.mxu0
  %v4924 = vadd.f32 0.0, %v4923
  %4925 = vdwg.mxu0
  %4926 = vmatpush.msra.mxu0 %v4905
  %4927 = vmatpush.msra.mxu0 %v4904
  %4928 = vmatpush.msra.mxu0 %v4903
  %4929 = vmatpush.msra.mxu0 %v4902
  %4930 = vmatpush.msra.mxu0 %v4901
  %4931 = vmatpush.msra.mxu0 %v4900
  %4932 = vmatpush.msra.mxu0 %v4899
  %4933 = vmatpush.msra.mxu0 %v4898
  %4934 = vmatpush.msra.mxu0 %v4897
  %4935 = vmatpush.msra.mxu0 %v4896
  %4936 = vmatpush.msra.mxu0 %v4895
  %4937 = vmatpush.msra.mxu0 %v4894
  %4938 = vmatpush.msra.mxu0 %v4893
  %4939 = vmatpush.msra.mxu0 %v4892
  %4940 = vmatpush.msra.mxu0 %v4891
  %4941 = vmatpush.msra.mxu0 %v4890
  %4942 = vmatmul.f32.gmra.mxu0 %v4240
  %v4943 = vpop.f32.mrf.mxu0
  %v4944 = vadd.f32 %v4924, %v4943
  %4945 = vdwg.mxu0
  %v4946 = vadd.f32 %v4871, %v4944
  %v4947 = vld [vmem:[#allocation2 + $0x900] sm:$0xff]
  %v4948 = vld [vmem:[#allocation2 + $0x908] sm:$0xff]
  %v4949 = vld [vmem:[#allocation2 + $0x910] sm:$0xff]
  %v4950 = vld [vmem:[#allocation2 + $0x918] sm:$0xff]
  %v4951 = vld [vmem:[#allocation2 + $0x920] sm:$0xff]
  %v4952 = vld [vmem:[#allocation2 + $0x928] sm:$0xff]
  %v4953 = vld [vmem:[#allocation2 + $0x930] sm:$0xff]
  %v4954 = vld [vmem:[#allocation2 + $0x938] sm:$0xff]
  %v4955 = vld [vmem:[#allocation2 + $0x940] sm:$0xff]
  %v4956 = vld [vmem:[#allocation2 + $0x948] sm:$0xff]
  %v4957 = vld [vmem:[#allocation2 + $0x950] sm:$0xff]
  %v4958 = vld [vmem:[#allocation2 + $0x958] sm:$0xff]
  %v4959 = vld [vmem:[#allocation2 + $0x960] sm:$0xff]
  %v4960 = vld [vmem:[#allocation2 + $0x968] sm:$0xff]
  %v4961 = vld [vmem:[#allocation2 + $0x970] sm:$0xff]
  %v4962 = vld [vmem:[#allocation2 + $0x978] sm:$0xff]
  %v4963 = vld [vmem:[#allocation2 + $0x980] sm:$0xff]
  %v4964 = vld [vmem:[#allocation2 + $0x988] sm:$0xff]
  %v4965 = vld [vmem:[#allocation2 + $0x990] sm:$0xff]
  %v4966 = vld [vmem:[#allocation2 + $0x998] sm:$0xff]
  %v4967 = vld [vmem:[#allocation2 + $0x9a0] sm:$0xff]
  %v4968 = vld [vmem:[#allocation2 + $0x9a8] sm:$0xff]
  %v4969 = vld [vmem:[#allocation2 + $0x9b0] sm:$0xff]
  %v4970 = vld [vmem:[#allocation2 + $0x9b8] sm:$0xff]
  %v4971 = vld [vmem:[#allocation2 + $0x9c0] sm:$0xff]
  %v4972 = vld [vmem:[#allocation2 + $0x9c8] sm:$0xff]
  %v4973 = vld [vmem:[#allocation2 + $0x9d0] sm:$0xff]
  %v4974 = vld [vmem:[#allocation2 + $0x9d8] sm:$0xff]
  %v4975 = vld [vmem:[#allocation2 + $0x9e0] sm:$0xff]
  %v4976 = vld [vmem:[#allocation2 + $0x9e8] sm:$0xff]
  %v4977 = vld [vmem:[#allocation2 + $0x9f0] sm:$0xff]
  %v4978 = vld [vmem:[#allocation2 + $0x9f8] sm:$0xff]
  %4979 = vmatpush.msra.mxu0 %v4962
  %4980 = vmatpush.msra.mxu0 %v4961
  %4981 = vmatpush.msra.mxu0 %v4960
  %4982 = vmatpush.msra.mxu0 %v4959
  %4983 = vmatpush.msra.mxu0 %v4958
  %4984 = vmatpush.msra.mxu0 %v4957
  %4985 = vmatpush.msra.mxu0 %v4956
  %4986 = vmatpush.msra.mxu0 %v4955
  %4987 = vmatpush.msra.mxu0 %v4954
  %4988 = vmatpush.msra.mxu0 %v4953
  %4989 = vmatpush.msra.mxu0 %v4952
  %4990 = vmatpush.msra.mxu0 %v4951
  %4991 = vmatpush.msra.mxu0 %v4950
  %4992 = vmatpush.msra.mxu0 %v4949
  %4993 = vmatpush.msra.mxu0 %v4948
  %4994 = vmatpush.msra.mxu0 %v4947
  %4995 = vmatmul.f32.gmra.mxu0 %v4241
  %v4996 = vpop.f32.mrf.mxu0
  %v4997 = vadd.f32 0.0, %v4996
  %4998 = vdwg.mxu0
  %4999 = vmatpush.msra.mxu0 %v4978
  %5000 = vmatpush.msra.mxu0 %v4977
  %5001 = vmatpush.msra.mxu0 %v4976
  %5002 = vmatpush.msra.mxu0 %v4975
  %5003 = vmatpush.msra.mxu0 %v4974
  %5004 = vmatpush.msra.mxu0 %v4973
  %5005 = vmatpush.msra.mxu0 %v4972
  %5006 = vmatpush.msra.mxu0 %v4971
  %5007 = vmatpush.msra.mxu0 %v4970
  %5008 = vmatpush.msra.mxu0 %v4969
  %5009 = vmatpush.msra.mxu0 %v4968
  %5010 = vmatpush.msra.mxu0 %v4967
  %5011 = vmatpush.msra.mxu0 %v4966
  %5012 = vmatpush.msra.mxu0 %v4965
  %5013 = vmatpush.msra.mxu0 %v4964
  %5014 = vmatpush.msra.mxu0 %v4963
  %5015 = vmatmul.f32.gmra.mxu0 %v4242
  %v5016 = vpop.f32.mrf.mxu0
  %v5017 = vadd.f32 %v4997, %v5016
  %5018 = vdwg.mxu0
  %v5019 = vadd.f32 %v4946, %v5017
  %v5020 = vld [vmem:[#allocation2 + $0xa00] sm:$0xff]
  %v5021 = vld [vmem:[#allocation2 + $0xa08] sm:$0xff]
  %v5022 = vld [vmem:[#allocation2 + $0xa10] sm:$0xff]
  %v5023 = vld [vmem:[#allocation2 + $0xa18] sm:$0xff]
  %v5024 = vld [vmem:[#allocation2 + $0xa20] sm:$0xff]
  %v5025 = vld [vmem:[#allocation2 + $0xa28] sm:$0xff]
  %v5026 = vld [vmem:[#allocation2 + $0xa30] sm:$0xff]
  %v5027 = vld [vmem:[#allocation2 + $0xa38] sm:$0xff]
  %v5028 = vld [vmem:[#allocation2 + $0xa40] sm:$0xff]
  %v5029 = vld [vmem:[#allocation2 + $0xa48] sm:$0xff]
  %v5030 = vld [vmem:[#allocation2 + $0xa50] sm:$0xff]
  %v5031 = vld [vmem:[#allocation2 + $0xa58] sm:$0xff]
  %v5032 = vld [vmem:[#allocation2 + $0xa60] sm:$0xff]
  %v5033 = vld [vmem:[#allocation2 + $0xa68] sm:$0xff]
  %v5034 = vld [vmem:[#allocation2 + $0xa70] sm:$0xff]
  %v5035 = vld [vmem:[#allocation2 + $0xa78] sm:$0xff]
  %v5036 = vld [vmem:[#allocation2 + $0xa80] sm:$0xff]
  %v5037 = vld [vmem:[#allocation2 + $0xa88] sm:$0xff]
  %v5038 = vld [vmem:[#allocation2 + $0xa90] sm:$0xff]
  %v5039 = vld [vmem:[#allocation2 + $0xa98] sm:$0xff]
  %v5040 = vld [vmem:[#allocation2 + $0xaa0] sm:$0xff]
  %v5041 = vld [vmem:[#allocation2 + $0xaa8] sm:$0xff]
  %v5042 = vld [vmem:[#allocation2 + $0xab0] sm:$0xff]
  %v5043 = vld [vmem:[#allocation2 + $0xab8] sm:$0xff]
  %v5044 = vld [vmem:[#allocation2 + $0xac0] sm:$0xff]
  %v5045 = vld [vmem:[#allocation2 + $0xac8] sm:$0xff]
  %v5046 = vld [vmem:[#allocation2 + $0xad0] sm:$0xff]
  %v5047 = vld [vmem:[#allocation2 + $0xad8] sm:$0xff]
  %v5048 = vld [vmem:[#allocation2 + $0xae0] sm:$0xff]
  %v5049 = vld [vmem:[#allocation2 + $0xae8] sm:$0xff]
  %v5050 = vld [vmem:[#allocation2 + $0xaf0] sm:$0xff]
  %v5051 = vld [vmem:[#allocation2 + $0xaf8] sm:$0xff]
  %5052 = vmatpush.msra.mxu0 %v5035
  %5053 = vmatpush.msra.mxu0 %v5034
  %5054 = vmatpush.msra.mxu0 %v5033
  %5055 = vmatpush.msra.mxu0 %v5032
  %5056 = vmatpush.msra.mxu0 %v5031
  %5057 = vmatpush.msra.mxu0 %v5030
  %5058 = vmatpush.msra.mxu0 %v5029
  %5059 = vmatpush.msra.mxu0 %v5028
  %5060 = vmatpush.msra.mxu0 %v5027
  %5061 = vmatpush.msra.mxu0 %v5026
  %5062 = vmatpush.msra.mxu0 %v5025
  %5063 = vmatpush.msra.mxu0 %v5024
  %5064 = vmatpush.msra.mxu0 %v5023
  %5065 = vmatpush.msra.mxu0 %v5022
  %5066 = vmatpush.msra.mxu0 %v5021
  %5067 = vmatpush.msra.mxu0 %v5020
  %5068 = vmatmul.f32.gmra.mxu0 %v4243
  %v5069 = vpop.f32.mrf.mxu0
  %v5070 = vadd.f32 0.0, %v5069
  %5071 = vdwg.mxu0
  %5072 = vmatpush.msra.mxu0 %v5051
  %5073 = vmatpush.msra.mxu0 %v5050
  %5074 = vmatpush.msra.mxu0 %v5049
  %5075 = vmatpush.msra.mxu0 %v5048
  %5076 = vmatpush.msra.mxu0 %v5047
  %5077 = vmatpush.msra.mxu0 %v5046
  %5078 = vmatpush.msra.mxu0 %v5045
  %5079 = vmatpush.msra.mxu0 %v5044
  %5080 = vmatpush.msra.mxu0 %v5043
  %5081 = vmatpush.msra.mxu0 %v5042
  %5082 = vmatpush.msra.mxu0 %v5041
  %5083 = vmatpush.msra.mxu0 %v5040
  %5084 = vmatpush.msra.mxu0 %v5039
  %5085 = vmatpush.msra.mxu0 %v5038
  %5086 = vmatpush.msra.mxu0 %v5037
  %5087 = vmatpush.msra.mxu0 %v5036
  %5088 = vmatmul.f32.gmra.mxu0 %v4244
  %v5089 = vpop.f32.mrf.mxu0
  %v5090 = vadd.f32 %v5070, %v5089
  %5091 = vdwg.mxu0
  %v5092 = vadd.f32 %v5019, %v5090
  %v5093 = vld [vmem:[#allocation2 + $0xb00] sm:$0xff]
  %v5094 = vld [vmem:[#allocation2 + $0xb08] sm:$0xff]
  %v5095 = vld [vmem:[#allocation2 + $0xb10] sm:$0xff]
  %v5096 = vld [vmem:[#allocation2 + $0xb18] sm:$0xff]
  %v5097 = vld [vmem:[#allocation2 + $0xb20] sm:$0xff]
  %v5098 = vld [vmem:[#allocation2 + $0xb28] sm:$0xff]
  %v5099 = vld [vmem:[#allocation2 + $0xb30] sm:$0xff]
  %v5100 = vld [vmem:[#allocation2 + $0xb38] sm:$0xff]
  %v5101 = vld [vmem:[#allocation2 + $0xb40] sm:$0xff]
  %v5102 = vld [vmem:[#allocation2 + $0xb48] sm:$0xff]
  %v5103 = vld [vmem:[#allocation2 + $0xb50] sm:$0xff]
  %v5104 = vld [vmem:[#allocation2 + $0xb58] sm:$0xff]
  %v5105 = vld [vmem:[#allocation2 + $0xb60] sm:$0xff]
  %v5106 = vld [vmem:[#allocation2 + $0xb68] sm:$0xff]
  %v5107 = vld [vmem:[#allocation2 + $0xb70] sm:$0xff]
  %v5108 = vld [vmem:[#allocation2 + $0xb78] sm:$0xff]
  %v5109 = vld [vmem:[#allocation2 + $0xb80] sm:$0xff]
  %v5110 = vld [vmem:[#allocation2 + $0xb88] sm:$0xff]
  %v5111 = vld [vmem:[#allocation2 + $0xb90] sm:$0xff]
  %v5112 = vld [vmem:[#allocation2 + $0xb98] sm:$0xff]
  %v5113 = vld [vmem:[#allocation2 + $0xba0] sm:$0xff]
  %v5114 = vld [vmem:[#allocation2 + $0xba8] sm:$0xff]
  %v5115 = vld [vmem:[#allocation2 + $0xbb0] sm:$0xff]
  %v5116 = vld [vmem:[#allocation2 + $0xbb8] sm:$0xff]
  %v5117 = vld [vmem:[#allocation2 + $0xbc0] sm:$0xff]
  %v5118 = vld [vmem:[#allocation2 + $0xbc8] sm:$0xff]
  %v5119 = vld [vmem:[#allocation2 + $0xbd0] sm:$0xff]
  %v5120 = vld [vmem:[#allocation2 + $0xbd8] sm:$0xff]
  %v5121 = vld [vmem:[#allocation2 + $0xbe0] sm:$0xff]
  %v5122 = vld [vmem:[#allocation2 + $0xbe8] sm:$0xff]
  %v5123 = vld [vmem:[#allocation2 + $0xbf0] sm:$0xff]
  %v5124 = vld [vmem:[#allocation2 + $0xbf8] sm:$0xff]
  %5125 = vmatpush.msra.mxu0 %v5108
  %5126 = vmatpush.msra.mxu0 %v5107
  %5127 = vmatpush.msra.mxu0 %v5106
  %5128 = vmatpush.msra.mxu0 %v5105
  %5129 = vmatpush.msra.mxu0 %v5104
  %5130 = vmatpush.msra.mxu0 %v5103
  %5131 = vmatpush.msra.mxu0 %v5102
  %5132 = vmatpush.msra.mxu0 %v5101
  %5133 = vmatpush.msra.mxu0 %v5100
  %5134 = vmatpush.msra.mxu0 %v5099
  %5135 = vmatpush.msra.mxu0 %v5098
  %5136 = vmatpush.msra.mxu0 %v5097
  %5137 = vmatpush.msra.mxu0 %v5096
  %5138 = vmatpush.msra.mxu0 %v5095
  %5139 = vmatpush.msra.mxu0 %v5094
  %5140 = vmatpush.msra.mxu0 %v5093
  %5141 = vmatmul.f32.gmra.mxu0 %v4245
  %v5142 = vpop.f32.mrf.mxu0
  %v5143 = vadd.f32 0.0, %v5142
  %5144 = vdwg.mxu0
  %5145 = vmatpush.msra.mxu0 %v5124
  %5146 = vmatpush.msra.mxu0 %v5123
  %5147 = vmatpush.msra.mxu0 %v5122
  %5148 = vmatpush.msra.mxu0 %v5121
  %5149 = vmatpush.msra.mxu0 %v5120
  %5150 = vmatpush.msra.mxu0 %v5119
  %5151 = vmatpush.msra.mxu0 %v5118
  %5152 = vmatpush.msra.mxu0 %v5117
  %5153 = vmatpush.msra.mxu0 %v5116
  %5154 = vmatpush.msra.mxu0 %v5115
  %5155 = vmatpush.msra.mxu0 %v5114
  %5156 = vmatpush.msra.mxu0 %v5113
  %5157 = vmatpush.msra.mxu0 %v5112
  %5158 = vmatpush.msra.mxu0 %v5111
  %5159 = vmatpush.msra.mxu0 %v5110
  %5160 = vmatpush.msra.mxu0 %v5109
  %5161 = vmatmul.f32.gmra.mxu0 %v4246
  %v5162 = vpop.f32.mrf.mxu0
  %v5163 = vadd.f32 %v5143, %v5162
  %5164 = vdwg.mxu0
  %v5165 = vadd.f32 %v5092, %v5163
  %v5166 = vld [vmem:[#allocation2 + $0xc00] sm:$0xff]
  %v5167 = vld [vmem:[#allocation2 + $0xc08] sm:$0xff]
  %v5168 = vld [vmem:[#allocation2 + $0xc10] sm:$0xff]
  %v5169 = vld [vmem:[#allocation2 + $0xc18] sm:$0xff]
  %v5170 = vld [vmem:[#allocation2 + $0xc20] sm:$0xff]
  %v5171 = vld [vmem:[#allocation2 + $0xc28] sm:$0xff]
  %v5172 = vld [vmem:[#allocation2 + $0xc30] sm:$0xff]
  %v5173 = vld [vmem:[#allocation2 + $0xc38] sm:$0xff]
  %v5174 = vld [vmem:[#allocation2 + $0xc40] sm:$0xff]
  %v5175 = vld [vmem:[#allocation2 + $0xc48] sm:$0xff]
  %v5176 = vld [vmem:[#allocation2 + $0xc50] sm:$0xff]
  %v5177 = vld [vmem:[#allocation2 + $0xc58] sm:$0xff]
  %v5178 = vld [vmem:[#allocation2 + $0xc60] sm:$0xff]
  %v5179 = vld [vmem:[#allocation2 + $0xc68] sm:$0xff]
  %v5180 = vld [vmem:[#allocation2 + $0xc70] sm:$0xff]
  %v5181 = vld [vmem:[#allocation2 + $0xc78] sm:$0xff]
  %v5182 = vld [vmem:[#allocation2 + $0xc80] sm:$0xff]
  %v5183 = vld [vmem:[#allocation2 + $0xc88] sm:$0xff]
  %v5184 = vld [vmem:[#allocation2 + $0xc90] sm:$0xff]
  %v5185 = vld [vmem:[#allocation2 + $0xc98] sm:$0xff]
  %v5186 = vld [vmem:[#allocation2 + $0xca0] sm:$0xff]
  %v5187 = vld [vmem:[#allocation2 + $0xca8] sm:$0xff]
  %v5188 = vld [vmem:[#allocation2 + $0xcb0] sm:$0xff]
  %v5189 = vld [vmem:[#allocation2 + $0xcb8] sm:$0xff]
  %v5190 = vld [vmem:[#allocation2 + $0xcc0] sm:$0xff]
  %v5191 = vld [vmem:[#allocation2 + $0xcc8] sm:$0xff]
  %v5192 = vld [vmem:[#allocation2 + $0xcd0] sm:$0xff]
  %v5193 = vld [vmem:[#allocation2 + $0xcd8] sm:$0xff]
  %v5194 = vld [vmem:[#allocation2 + $0xce0] sm:$0xff]
  %v5195 = vld [vmem:[#allocation2 + $0xce8] sm:$0xff]
  %v5196 = vld [vmem:[#allocation2 + $0xcf0] sm:$0xff]
  %v5197 = vld [vmem:[#allocation2 + $0xcf8] sm:$0xff]
  %5198 = vmatpush.msra.mxu0 %v5181
  %5199 = vmatpush.msra.mxu0 %v5180
  %5200 = vmatpush.msra.mxu0 %v5179
  %5201 = vmatpush.msra.mxu0 %v5178
  %5202 = vmatpush.msra.mxu0 %v5177
  %5203 = vmatpush.msra.mxu0 %v5176
  %5204 = vmatpush.msra.mxu0 %v5175
  %5205 = vmatpush.msra.mxu0 %v5174
  %5206 = vmatpush.msra.mxu0 %v5173
  %5207 = vmatpush.msra.mxu0 %v5172
  %5208 = vmatpush.msra.mxu0 %v5171
  %5209 = vmatpush.msra.mxu0 %v5170
  %5210 = vmatpush.msra.mxu0 %v5169
  %5211 = vmatpush.msra.mxu0 %v5168
  %5212 = vmatpush.msra.mxu0 %v5167
  %5213 = vmatpush.msra.mxu0 %v5166
  %5214 = vmatmul.f32.gmra.mxu0 %v4247
  %v5215 = vpop.f32.mrf.mxu0
  %v5216 = vadd.f32 0.0, %v5215
  %5217 = vdwg.mxu0
  %5218 = vmatpush.msra.mxu0 %v5197
  %5219 = vmatpush.msra.mxu0 %v5196
  %5220 = vmatpush.msra.mxu0 %v5195
  %5221 = vmatpush.msra.mxu0 %v5194
  %5222 = vmatpush.msra.mxu0 %v5193
  %5223 = vmatpush.msra.mxu0 %v5192
  %5224 = vmatpush.msra.mxu0 %v5191
  %5225 = vmatpush.msra.mxu0 %v5190
  %5226 = vmatpush.msra.mxu0 %v5189
  %5227 = vmatpush.msra.mxu0 %v5188
  %5228 = vmatpush.msra.mxu0 %v5187
  %5229 = vmatpush.msra.mxu0 %v5186
  %5230 = vmatpush.msra.mxu0 %v5185
  %5231 = vmatpush.msra.mxu0 %v5184
  %5232 = vmatpush.msra.mxu0 %v5183
  %5233 = vmatpush.msra.mxu0 %v5182
  %5234 = vmatmul.f32.gmra.mxu0 %v4248
  %v5235 = vpop.f32.mrf.mxu0
  %v5236 = vadd.f32 %v5216, %v5235
  %5237 = vdwg.mxu0
  %v5238 = vadd.f32 %v5165, %v5236
  %v5239 = vld [vmem:[#allocation2 + $0xd00] sm:$0xff]
  %v5240 = vld [vmem:[#allocation2 + $0xd08] sm:$0xff]
  %v5241 = vld [vmem:[#allocation2 + $0xd10] sm:$0xff]
  %v5242 = vld [vmem:[#allocation2 + $0xd18] sm:$0xff]
  %v5243 = vld [vmem:[#allocation2 + $0xd20] sm:$0xff]
  %v5244 = vld [vmem:[#allocation2 + $0xd28] sm:$0xff]
  %v5245 = vld [vmem:[#allocation2 + $0xd30] sm:$0xff]
  %v5246 = vld [vmem:[#allocation2 + $0xd38] sm:$0xff]
  %v5247 = vld [vmem:[#allocation2 + $0xd40] sm:$0xff]
  %v5248 = vld [vmem:[#allocation2 + $0xd48] sm:$0xff]
  %v5249 = vld [vmem:[#allocation2 + $0xd50] sm:$0xff]
  %v5250 = vld [vmem:[#allocation2 + $0xd58] sm:$0xff]
  %v5251 = vld [vmem:[#allocation2 + $0xd60] sm:$0xff]
  %v5252 = vld [vmem:[#allocation2 + $0xd68] sm:$0xff]
  %v5253 = vld [vmem:[#allocation2 + $0xd70] sm:$0xff]
  %v5254 = vld [vmem:[#allocation2 + $0xd78] sm:$0xff]
  %v5255 = vld [vmem:[#allocation2 + $0xd80] sm:$0xff]
  %v5256 = vld [vmem:[#allocation2 + $0xd88] sm:$0xff]
  %v5257 = vld [vmem:[#allocation2 + $0xd90] sm:$0xff]
  %v5258 = vld [vmem:[#allocation2 + $0xd98] sm:$0xff]
  %v5259 = vld [vmem:[#allocation2 + $0xda0] sm:$0xff]
  %v5260 = vld [vmem:[#allocation2 + $0xda8] sm:$0xff]
  %v5261 = vld [vmem:[#allocation2 + $0xdb0] sm:$0xff]
  %v5262 = vld [vmem:[#allocation2 + $0xdb8] sm:$0xff]
  %v5263 = vld [vmem:[#allocation2 + $0xdc0] sm:$0xff]
  %v5264 = vld [vmem:[#allocation2 + $0xdc8] sm:$0xff]
  %v5265 = vld [vmem:[#allocation2 + $0xdd0] sm:$0xff]
  %v5266 = vld [vmem:[#allocation2 + $0xdd8] sm:$0xff]
  %v5267 = vld [vmem:[#allocation2 + $0xde0] sm:$0xff]
  %v5268 = vld [vmem:[#allocation2 + $0xde8] sm:$0xff]
  %v5269 = vld [vmem:[#allocation2 + $0xdf0] sm:$0xff]
  %v5270 = vld [vmem:[#allocation2 + $0xdf8] sm:$0xff]
  %5271 = vmatpush.msra.mxu0 %v5254
  %5272 = vmatpush.msra.mxu0 %v5253
  %5273 = vmatpush.msra.mxu0 %v5252
  %5274 = vmatpush.msra.mxu0 %v5251
  %5275 = vmatpush.msra.mxu0 %v5250
  %5276 = vmatpush.msra.mxu0 %v5249
  %5277 = vmatpush.msra.mxu0 %v5248
  %5278 = vmatpush.msra.mxu0 %v5247
  %5279 = vmatpush.msra.mxu0 %v5246
  %5280 = vmatpush.msra.mxu0 %v5245
  %5281 = vmatpush.msra.mxu0 %v5244
  %5282 = vmatpush.msra.mxu0 %v5243
  %5283 = vmatpush.msra.mxu0 %v5242
  %5284 = vmatpush.msra.mxu0 %v5241
  %5285 = vmatpush.msra.mxu0 %v5240
  %5286 = vmatpush.msra.mxu0 %v5239
  %5287 = vmatmul.f32.gmra.mxu0 %v4249
  %v5288 = vpop.f32.mrf.mxu0
  %v5289 = vadd.f32 0.0, %v5288
  %5290 = vdwg.mxu0
  %5291 = vmatpush.msra.mxu0 %v5270
  %5292 = vmatpush.msra.mxu0 %v5269
  %5293 = vmatpush.msra.mxu0 %v5268
  %5294 = vmatpush.msra.mxu0 %v5267
  %5295 = vmatpush.msra.mxu0 %v5266
  %5296 = vmatpush.msra.mxu0 %v5265
  %5297 = vmatpush.msra.mxu0 %v5264
  %5298 = vmatpush.msra.mxu0 %v5263
  %5299 = vmatpush.msra.mxu0 %v5262
  %5300 = vmatpush.msra.mxu0 %v5261
  %5301 = vmatpush.msra.mxu0 %v5260
  %5302 = vmatpush.msra.mxu0 %v5259
  %5303 = vmatpush.msra.mxu0 %v5258
  %5304 = vmatpush.msra.mxu0 %v5257
  %5305 = vmatpush.msra.mxu0 %v5256
  %5306 = vmatpush.msra.mxu0 %v5255
  %5307 = vmatmul.f32.gmra.mxu0 %v4250
  %v5308 = vpop.f32.mrf.mxu0
  %v5309 = vadd.f32 %v5289, %v5308
  %5310 = vdwg.mxu0
  %v5311 = vadd.f32 %v5238, %v5309
  %v5312 = vld [vmem:[#allocation2 + $0xe00] sm:$0xff]
  %v5313 = vld [vmem:[#allocation2 + $0xe08] sm:$0xff]
  %v5314 = vld [vmem:[#allocation2 + $0xe10] sm:$0xff]
  %v5315 = vld [vmem:[#allocation2 + $0xe18] sm:$0xff]
  %v5316 = vld [vmem:[#allocation2 + $0xe20] sm:$0xff]
  %v5317 = vld [vmem:[#allocation2 + $0xe28] sm:$0xff]
  %v5318 = vld [vmem:[#allocation2 + $0xe30] sm:$0xff]
  %v5319 = vld [vmem:[#allocation2 + $0xe38] sm:$0xff]
  %v5320 = vld [vmem:[#allocation2 + $0xe40] sm:$0xff]
  %v5321 = vld [vmem:[#allocation2 + $0xe48] sm:$0xff]
  %v5322 = vld [vmem:[#allocation2 + $0xe50] sm:$0xff]
  %v5323 = vld [vmem:[#allocation2 + $0xe58] sm:$0xff]
  %v5324 = vld [vmem:[#allocation2 + $0xe60] sm:$0xff]
  %v5325 = vld [vmem:[#allocation2 + $0xe68] sm:$0xff]
  %v5326 = vld [vmem:[#allocation2 + $0xe70] sm:$0xff]
  %v5327 = vld [vmem:[#allocation2 + $0xe78] sm:$0xff]
  %v5328 = vld [vmem:[#allocation2 + $0xe80] sm:$0xff]
  %v5329 = vld [vmem:[#allocation2 + $0xe88] sm:$0xff]
  %v5330 = vld [vmem:[#allocation2 + $0xe90] sm:$0xff]
  %v5331 = vld [vmem:[#allocation2 + $0xe98] sm:$0xff]
  %v5332 = vld [vmem:[#allocation2 + $0xea0] sm:$0xff]
  %v5333 = vld [vmem:[#allocation2 + $0xea8] sm:$0xff]
  %v5334 = vld [vmem:[#allocation2 + $0xeb0] sm:$0xff]
  %v5335 = vld [vmem:[#allocation2 + $0xeb8] sm:$0xff]
  %v5336 = vld [vmem:[#allocation2 + $0xec0] sm:$0xff]
  %v5337 = vld [vmem:[#allocation2 + $0xec8] sm:$0xff]
  %v5338 = vld [vmem:[#allocation2 + $0xed0] sm:$0xff]
  %v5339 = vld [vmem:[#allocation2 + $0xed8] sm:$0xff]
  %v5340 = vld [vmem:[#allocation2 + $0xee0] sm:$0xff]
  %v5341 = vld [vmem:[#allocation2 + $0xee8] sm:$0xff]
  %v5342 = vld [vmem:[#allocation2 + $0xef0] sm:$0xff]
  %v5343 = vld [vmem:[#allocation2 + $0xef8] sm:$0xff]
  %5344 = vmatpush.msra.mxu0 %v5327
  %5345 = vmatpush.msra.mxu0 %v5326
  %5346 = vmatpush.msra.mxu0 %v5325
  %5347 = vmatpush.msra.mxu0 %v5324
  %5348 = vmatpush.msra.mxu0 %v5323
  %5349 = vmatpush.msra.mxu0 %v5322
  %5350 = vmatpush.msra.mxu0 %v5321
  %5351 = vmatpush.msra.mxu0 %v5320
  %5352 = vmatpush.msra.mxu0 %v5319
  %5353 = vmatpush.msra.mxu0 %v5318
  %5354 = vmatpush.msra.mxu0 %v5317
  %5355 = vmatpush.msra.mxu0 %v5316
  %5356 = vmatpush.msra.mxu0 %v5315
  %5357 = vmatpush.msra.mxu0 %v5314
  %5358 = vmatpush.msra.mxu0 %v5313
  %5359 = vmatpush.msra.mxu0 %v5312
  %5360 = vmatmul.f32.gmra.mxu0 %v4251
  %v5361 = vpop.f32.mrf.mxu0
  %v5362 = vadd.f32 0.0, %v5361
  %5363 = vdwg.mxu0
  %5364 = vmatpush.msra.mxu0 %v5343
  %5365 = vmatpush.msra.mxu0 %v5342
  %5366 = vmatpush.msra.mxu0 %v5341
  %5367 = vmatpush.msra.mxu0 %v5340
  %5368 = vmatpush.msra.mxu0 %v5339
  %5369 = vmatpush.msra.mxu0 %v5338
  %5370 = vmatpush.msra.mxu0 %v5337
  %5371 = vmatpush.msra.mxu0 %v5336
  %5372 = vmatpush.msra.mxu0 %v5335
  %5373 = vmatpush.msra.mxu0 %v5334
  %5374 = vmatpush.msra.mxu0 %v5333
  %5375 = vmatpush.msra.mxu0 %v5332
  %5376 = vmatpush.msra.mxu0 %v5331
  %5377 = vmatpush.msra.mxu0 %v5330
  %5378 = vmatpush.msra.mxu0 %v5329
  %5379 = vmatpush.msra.mxu0 %v5328
  %5380 = vmatmul.f32.gmra.mxu0 %v4252
  %v5381 = vpop.f32.mrf.mxu0
  %v5382 = vadd.f32 %v5362, %v5381
  %5383 = vdwg.mxu0
  %v5384 = vadd.f32 %v5311, %v5382
  %v5385 = vld [vmem:[#allocation2 + $0xf00] sm:$0xff]
  %v5386 = vld [vmem:[#allocation2 + $0xf08] sm:$0xff]
  %v5387 = vld [vmem:[#allocation2 + $0xf10] sm:$0xff]
  %v5388 = vld [vmem:[#allocation2 + $0xf18] sm:$0xff]
  %v5389 = vld [vmem:[#allocation2 + $0xf20] sm:$0xff]
  %v5390 = vld [vmem:[#allocation2 + $0xf28] sm:$0xff]
  %v5391 = vld [vmem:[#allocation2 + $0xf30] sm:$0xff]
  %v5392 = vld [vmem:[#allocation2 + $0xf38] sm:$0xff]
  %v5393 = vld [vmem:[#allocation2 + $0xf40] sm:$0xff]
  %v5394 = vld [vmem:[#allocation2 + $0xf48] sm:$0xff]
  %v5395 = vld [vmem:[#allocation2 + $0xf50] sm:$0xff]
  %v5396 = vld [vmem:[#allocation2 + $0xf58] sm:$0xff]
  %v5397 = vld [vmem:[#allocation2 + $0xf60] sm:$0xff]
  %v5398 = vld [vmem:[#allocation2 + $0xf68] sm:$0xff]
  %v5399 = vld [vmem:[#allocation2 + $0xf70] sm:$0xff]
  %v5400 = vld [vmem:[#allocation2 + $0xf78] sm:$0xff]
  %v5401 = vld [vmem:[#allocation2 + $0xf80] sm:$0xff]
  %v5402 = vld [vmem:[#allocation2 + $0xf88] sm:$0xff]
  %v5403 = vld [vmem:[#allocation2 + $0xf90] sm:$0xff]
  %v5404 = vld [vmem:[#allocation2 + $0xf98] sm:$0xff]
  %v5405 = vld [vmem:[#allocation2 + $0xfa0] sm:$0xff]
  %v5406 = vld [vmem:[#allocation2 + $0xfa8] sm:$0xff]
  %v5407 = vld [vmem:[#allocation2 + $0xfb0] sm:$0xff]
  %v5408 = vld [vmem:[#allocation2 + $0xfb8] sm:$0xff]
  %v5409 = vld [vmem:[#allocation2 + $0xfc0] sm:$0xff]
  %v5410 = vld [vmem:[#allocation2 + $0xfc8] sm:$0xff]
  %v5411 = vld [vmem:[#allocation2 + $0xfd0] sm:$0xff]
  %v5412 = vld [vmem:[#allocation2 + $0xfd8] sm:$0xff]
  %v5413 = vld [vmem:[#allocation2 + $0xfe0] sm:$0xff]
  %v5414 = vld [vmem:[#allocation2 + $0xfe8] sm:$0xff]
  %v5415 = vld [vmem:[#allocation2 + $0xff0] sm:$0xff]
  %v5416 = vld [vmem:[#allocation2 + $0xff8] sm:$0xff]
  %5417 = vmatpush.msra.mxu0 %v5400
  %5418 = vmatpush.msra.mxu0 %v5399
  %5419 = vmatpush.msra.mxu0 %v5398
  %5420 = vmatpush.msra.mxu0 %v5397
  %5421 = vmatpush.msra.mxu0 %v5396
  %5422 = vmatpush.msra.mxu0 %v5395
  %5423 = vmatpush.msra.mxu0 %v5394
  %5424 = vmatpush.msra.mxu0 %v5393
  %5425 = vmatpush.msra.mxu0 %v5392
  %5426 = vmatpush.msra.mxu0 %v5391
  %5427 = vmatpush.msra.mxu0 %v5390
  %5428 = vmatpush.msra.mxu0 %v5389
  %5429 = vmatpush.msra.mxu0 %v5388
  %5430 = vmatpush.msra.mxu0 %v5387
  %5431 = vmatpush.msra.mxu0 %v5386
  %5432 = vmatpush.msra.mxu0 %v5385
  %5433 = vmatmul.f32.gmra.mxu0 %v4253
  %v5434 = vpop.f32.mrf.mxu0
  %v5435 = vadd.f32 0.0, %v5434
  %5436 = vdwg.mxu0
  %5437 = vmatpush.msra.mxu0 %v5416
  %5438 = vmatpush.msra.mxu0 %v5415
  %5439 = vmatpush.msra.mxu0 %v5414
  %5440 = vmatpush.msra.mxu0 %v5413
  %5441 = vmatpush.msra.mxu0 %v5412
  %5442 = vmatpush.msra.mxu0 %v5411
  %5443 = vmatpush.msra.mxu0 %v5410
  %5444 = vmatpush.msra.mxu0 %v5409
  %5445 = vmatpush.msra.mxu0 %v5408
  %5446 = vmatpush.msra.mxu0 %v5407
  %5447 = vmatpush.msra.mxu0 %v5406
  %5448 = vmatpush.msra.mxu0 %v5405
  %5449 = vmatpush.msra.mxu0 %v5404
  %5450 = vmatpush.msra.mxu0 %v5403
  %5451 = vmatpush.msra.mxu0 %v5402
  %5452 = vmatpush.msra.mxu0 %v5401
  %5453 = vmatmul.f32.gmra.mxu0 %v4254
  %v5454 = vpop.f32.mrf.mxu0
  %v5455 = vadd.f32 %v5435, %v5454
  %5456 = vdwg.mxu0
  %v5457 = vadd.f32 %v5384, %v5455
  %s5458 = sshll.u32 %s4287, 4
  %5459 = dma.done %s1109, %s5458
  %v5460 = vld [vmem:[#allocation2 + $0x1000] sm:$0xff]
  %v5461 = vld [vmem:[#allocation2 + $0x1008] sm:$0xff]
  %v5462 = vld [vmem:[#allocation2 + $0x1010] sm:$0xff]
  %v5463 = vld [vmem:[#allocation2 + $0x1018] sm:$0xff]
  %v5464 = vld [vmem:[#allocation2 + $0x1020] sm:$0xff]
  %v5465 = vld [vmem:[#allocation2 + $0x1028] sm:$0xff]
  %v5466 = vld [vmem:[#allocation2 + $0x1030] sm:$0xff]
  %v5467 = vld [vmem:[#allocation2 + $0x1038] sm:$0xff]
  %v5468 = vld [vmem:[#allocation2 + $0x1040] sm:$0xff]
  %v5469 = vld [vmem:[#allocation2 + $0x1048] sm:$0xff]
  %v5470 = vld [vmem:[#allocation2 + $0x1050] sm:$0xff]
  %v5471 = vld [vmem:[#allocation2 + $0x1058] sm:$0xff]
  %v5472 = vld [vmem:[#allocation2 + $0x1060] sm:$0xff]
  %v5473 = vld [vmem:[#allocation2 + $0x1068] sm:$0xff]
  %v5474 = vld [vmem:[#allocation2 + $0x1070] sm:$0xff]
  %v5475 = vld [vmem:[#allocation2 + $0x1078] sm:$0xff]
  %v5476 = vld [vmem:[#allocation2 + $0x1080] sm:$0xff]
  %v5477 = vld [vmem:[#allocation2 + $0x1088] sm:$0xff]
  %v5478 = vld [vmem:[#allocation2 + $0x1090] sm:$0xff]
  %v5479 = vld [vmem:[#allocation2 + $0x1098] sm:$0xff]
  %v5480 = vld [vmem:[#allocation2 + $0x10a0] sm:$0xff]
  %v5481 = vld [vmem:[#allocation2 + $0x10a8] sm:$0xff]
  %v5482 = vld [vmem:[#allocation2 + $0x10b0] sm:$0xff]
  %v5483 = vld [vmem:[#allocation2 + $0x10b8] sm:$0xff]
  %v5484 = vld [vmem:[#allocation2 + $0x10c0] sm:$0xff]
  %v5485 = vld [vmem:[#allocation2 + $0x10c8] sm:$0xff]
  %v5486 = vld [vmem:[#allocation2 + $0x10d0] sm:$0xff]
  %v5487 = vld [vmem:[#allocation2 + $0x10d8] sm:$0xff]
  %v5488 = vld [vmem:[#allocation2 + $0x10e0] sm:$0xff]
  %v5489 = vld [vmem:[#allocation2 + $0x10e8] sm:$0xff]
  %v5490 = vld [vmem:[#allocation2 + $0x10f0] sm:$0xff]
  %v5491 = vld [vmem:[#allocation2 + $0x10f8] sm:$0xff]
  %5492 = vmatpush.msra.mxu0 %v5475
  %5493 = vmatpush.msra.mxu0 %v5474
  %5494 = vmatpush.msra.mxu0 %v5473
  %5495 = vmatpush.msra.mxu0 %v5472
  %5496 = vmatpush.msra.mxu0 %v5471
  %5497 = vmatpush.msra.mxu0 %v5470
  %5498 = vmatpush.msra.mxu0 %v5469
  %5499 = vmatpush.msra.mxu0 %v5468
  %5500 = vmatpush.msra.mxu0 %v5467
  %5501 = vmatpush.msra.mxu0 %v5466
  %5502 = vmatpush.msra.mxu0 %v5465
  %5503 = vmatpush.msra.mxu0 %v5464
  %5504 = vmatpush.msra.mxu0 %v5463
  %5505 = vmatpush.msra.mxu0 %v5462
  %5506 = vmatpush.msra.mxu0 %v5461
  %5507 = vmatpush.msra.mxu0 %v5460
  %5508 = vmatmul.f32.gmra.mxu0 %v4255
  %v5509 = vpop.f32.mrf.mxu0
  %v5510 = vadd.f32 0.0, %v5509
  %5511 = vdwg.mxu0
  %5512 = vmatpush.msra.mxu0 %v5491
  %5513 = vmatpush.msra.mxu0 %v5490
  %5514 = vmatpush.msra.mxu0 %v5489
  %5515 = vmatpush.msra.mxu0 %v5488
  %5516 = vmatpush.msra.mxu0 %v5487
  %5517 = vmatpush.msra.mxu0 %v5486
  %5518 = vmatpush.msra.mxu0 %v5485
  %5519 = vmatpush.msra.mxu0 %v5484
  %5520 = vmatpush.msra.mxu0 %v5483
  %5521 = vmatpush.msra.mxu0 %v5482
  %5522 = vmatpush.msra.mxu0 %v5481
  %5523 = vmatpush.msra.mxu0 %v5480
  %5524 = vmatpush.msra.mxu0 %v5479
  %5525 = vmatpush.msra.mxu0 %v5478
  %5526 = vmatpush.msra.mxu0 %v5477
  %5527 = vmatpush.msra.mxu0 %v5476
  %5528 = vmatmul.f32.gmra.mxu0 %v4256
  %v5529 = vpop.f32.mrf.mxu0
  %v5530 = vadd.f32 %v5510, %v5529
  %5531 = vdwg.mxu0
  %v5532 = vadd.f32 %v5457, %v5530
  %v5533 = vld [vmem:[#allocation2 + $0x1100] sm:$0xff]
  %v5534 = vld [vmem:[#allocation2 + $0x1108] sm:$0xff]
  %v5535 = vld [vmem:[#allocation2 + $0x1110] sm:$0xff]
  %v5536 = vld [vmem:[#allocation2 + $0x1118] sm:$0xff]
  %v5537 = vld [vmem:[#allocation2 + $0x1120] sm:$0xff]
  %v5538 = vld [vmem:[#allocation2 + $0x1128] sm:$0xff]
  %v5539 = vld [vmem:[#allocation2 + $0x1130] sm:$0xff]
  %v5540 = vld [vmem:[#allocation2 + $0x1138] sm:$0xff]
  %v5541 = vld [vmem:[#allocation2 + $0x1140] sm:$0xff]
  %v5542 = vld [vmem:[#allocation2 + $0x1148] sm:$0xff]
  %v5543 = vld [vmem:[#allocation2 + $0x1150] sm:$0xff]
  %v5544 = vld [vmem:[#allocation2 + $0x1158] sm:$0xff]
  %v5545 = vld [vmem:[#allocation2 + $0x1160] sm:$0xff]
  %v5546 = vld [vmem:[#allocation2 + $0x1168] sm:$0xff]
  %v5547 = vld [vmem:[#allocation2 + $0x1170] sm:$0xff]
  %v5548 = vld [vmem:[#allocation2 + $0x1178] sm:$0xff]
  %v5549 = vld [vmem:[#allocation2 + $0x1180] sm:$0xff]
  %v5550 = vld [vmem:[#allocation2 + $0x1188] sm:$0xff]
  %v5551 = vld [vmem:[#allocation2 + $0x1190] sm:$0xff]
  %v5552 = vld [vmem:[#allocation2 + $0x1198] sm:$0xff]
  %v5553 = vld [vmem:[#allocation2 + $0x11a0] sm:$0xff]
  %v5554 = vld [vmem:[#allocation2 + $0x11a8] sm:$0xff]
  %v5555 = vld [vmem:[#allocation2 + $0x11b0] sm:$0xff]
  %v5556 = vld [vmem:[#allocation2 + $0x11b8] sm:$0xff]
  %v5557 = vld [vmem:[#allocation2 + $0x11c0] sm:$0xff]
  %v5558 = vld [vmem:[#allocation2 + $0x11c8] sm:$0xff]
  %v5559 = vld [vmem:[#allocation2 + $0x11d0] sm:$0xff]
  %v5560 = vld [vmem:[#allocation2 + $0x11d8] sm:$0xff]
  %v5561 = vld [vmem:[#allocation2 + $0x11e0] sm:$0xff]
  %v5562 = vld [vmem:[#allocation2 + $0x11e8] sm:$0xff]
  %v5563 = vld [vmem:[#allocation2 + $0x11f0] sm:$0xff]
  %v5564 = vld [vmem:[#allocation2 + $0x11f8] sm:$0xff]
  %5565 = vmatpush.msra.mxu0 %v5548
  %5566 = vmatpush.msra.mxu0 %v5547
  %5567 = vmatpush.msra.mxu0 %v5546
  %5568 = vmatpush.msra.mxu0 %v5545
  %5569 = vmatpush.msra.mxu0 %v5544
  %5570 = vmatpush.msra.mxu0 %v5543
  %5571 = vmatpush.msra.mxu0 %v5542
  %5572 = vmatpush.msra.mxu0 %v5541
  %5573 = vmatpush.msra.mxu0 %v5540
  %5574 = vmatpush.msra.mxu0 %v5539
  %5575 = vmatpush.msra.mxu0 %v5538
  %5576 = vmatpush.msra.mxu0 %v5537
  %5577 = vmatpush.msra.mxu0 %v5536
  %5578 = vmatpush.msra.mxu0 %v5535
  %5579 = vmatpush.msra.mxu0 %v5534
  %5580 = vmatpush.msra.mxu0 %v5533
  %5581 = vmatmul.f32.gmra.mxu0 %v4257
  %v5582 = vpop.f32.mrf.mxu0
  %v5583 = vadd.f32 0.0, %v5582
  %5584 = vdwg.mxu0
  %5585 = vmatpush.msra.mxu0 %v5564
  %5586 = vmatpush.msra.mxu0 %v5563
  %5587 = vmatpush.msra.mxu0 %v5562
  %5588 = vmatpush.msra.mxu0 %v5561
  %5589 = vmatpush.msra.mxu0 %v5560
  %5590 = vmatpush.msra.mxu0 %v5559
  %5591 = vmatpush.msra.mxu0 %v5558
  %5592 = vmatpush.msra.mxu0 %v5557
  %5593 = vmatpush.msra.mxu0 %v5556
  %5594 = vmatpush.msra.mxu0 %v5555
  %5595 = vmatpush.msra.mxu0 %v5554
  %5596 = vmatpush.msra.mxu0 %v5553
  %5597 = vmatpush.msra.mxu0 %v5552
  %5598 = vmatpush.msra.mxu0 %v5551
  %5599 = vmatpush.msra.mxu0 %v5550
  %5600 = vmatpush.msra.mxu0 %v5549
  %5601 = vmatmul.f32.gmra.mxu0 %v4258
  %v5602 = vpop.f32.mrf.mxu0
  %v5603 = vadd.f32 %v5583, %v5602
  %5604 = vdwg.mxu0
  %v5605 = vadd.f32 %v5532, %v5603
  %v5606 = vld [vmem:[#allocation2 + $0x1200] sm:$0xff]
  %v5607 = vld [vmem:[#allocation2 + $0x1208] sm:$0xff]
  %v5608 = vld [vmem:[#allocation2 + $0x1210] sm:$0xff]
  %v5609 = vld [vmem:[#allocation2 + $0x1218] sm:$0xff]
  %v5610 = vld [vmem:[#allocation2 + $0x1220] sm:$0xff]
  %v5611 = vld [vmem:[#allocation2 + $0x1228] sm:$0xff]
  %v5612 = vld [vmem:[#allocation2 + $0x1230] sm:$0xff]
  %v5613 = vld [vmem:[#allocation2 + $0x1238] sm:$0xff]
  %v5614 = vld [vmem:[#allocation2 + $0x1240] sm:$0xff]
  %v5615 = vld [vmem:[#allocation2 + $0x1248] sm:$0xff]
  %v5616 = vld [vmem:[#allocation2 + $0x1250] sm:$0xff]
  %v5617 = vld [vmem:[#allocation2 + $0x1258] sm:$0xff]
  %v5618 = vld [vmem:[#allocation2 + $0x1260] sm:$0xff]
  %v5619 = vld [vmem:[#allocation2 + $0x1268] sm:$0xff]
  %v5620 = vld [vmem:[#allocation2 + $0x1270] sm:$0xff]
  %v5621 = vld [vmem:[#allocation2 + $0x1278] sm:$0xff]
  %v5622 = vld [vmem:[#allocation2 + $0x1280] sm:$0xff]
  %v5623 = vld [vmem:[#allocation2 + $0x1288] sm:$0xff]
  %v5624 = vld [vmem:[#allocation2 + $0x1290] sm:$0xff]
  %v5625 = vld [vmem:[#allocation2 + $0x1298] sm:$0xff]
  %v5626 = vld [vmem:[#allocation2 + $0x12a0] sm:$0xff]
  %v5627 = vld [vmem:[#allocation2 + $0x12a8] sm:$0xff]
  %v5628 = vld [vmem:[#allocation2 + $0x12b0] sm:$0xff]
  %v5629 = vld [vmem:[#allocation2 + $0x12b8] sm:$0xff]
  %v5630 = vld [vmem:[#allocation2 + $0x12c0] sm:$0xff]
  %v5631 = vld [vmem:[#allocation2 + $0x12c8] sm:$0xff]
  %v5632 = vld [vmem:[#allocation2 + $0x12d0] sm:$0xff]
  %v5633 = vld [vmem:[#allocation2 + $0x12d8] sm:$0xff]
  %v5634 = vld [vmem:[#allocation2 + $0x12e0] sm:$0xff]
  %v5635 = vld [vmem:[#allocation2 + $0x12e8] sm:$0xff]
  %v5636 = vld [vmem:[#allocation2 + $0x12f0] sm:$0xff]
  %v5637 = vld [vmem:[#allocation2 + $0x12f8] sm:$0xff]
  %5638 = vmatpush.msra.mxu0 %v5621
  %5639 = vmatpush.msra.mxu0 %v5620
  %5640 = vmatpush.msra.mxu0 %v5619
  %5641 = vmatpush.msra.mxu0 %v5618
  %5642 = vmatpush.msra.mxu0 %v5617
  %5643 = vmatpush.msra.mxu0 %v5616
  %5644 = vmatpush.msra.mxu0 %v5615
  %5645 = vmatpush.msra.mxu0 %v5614
  %5646 = vmatpush.msra.mxu0 %v5613
  %5647 = vmatpush.msra.mxu0 %v5612
  %5648 = vmatpush.msra.mxu0 %v5611
  %5649 = vmatpush.msra.mxu0 %v5610
  %5650 = vmatpush.msra.mxu0 %v5609
  %5651 = vmatpush.msra.mxu0 %v5608
  %5652 = vmatpush.msra.mxu0 %v5607
  %5653 = vmatpush.msra.mxu0 %v5606
  %5654 = vmatmul.f32.gmra.mxu0 %v4259
  %v5655 = vpop.f32.mrf.mxu0
  %v5656 = vadd.f32 0.0, %v5655
  %5657 = vdwg.mxu0
  %5658 = vmatpush.msra.mxu0 %v5637
  %5659 = vmatpush.msra.mxu0 %v5636
  %5660 = vmatpush.msra.mxu0 %v5635
  %5661 = vmatpush.msra.mxu0 %v5634
  %5662 = vmatpush.msra.mxu0 %v5633
  %5663 = vmatpush.msra.mxu0 %v5632
  %5664 = vmatpush.msra.mxu0 %v5631
  %5665 = vmatpush.msra.mxu0 %v5630
  %5666 = vmatpush.msra.mxu0 %v5629
  %5667 = vmatpush.msra.mxu0 %v5628
  %5668 = vmatpush.msra.mxu0 %v5627
  %5669 = vmatpush.msra.mxu0 %v5626
  %5670 = vmatpush.msra.mxu0 %v5625
  %5671 = vmatpush.msra.mxu0 %v5624
  %5672 = vmatpush.msra.mxu0 %v5623
  %5673 = vmatpush.msra.mxu0 %v5622
  %5674 = vmatmul.f32.gmra.mxu0 %v4260
  %v5675 = vpop.f32.mrf.mxu0
  %v5676 = vadd.f32 %v5656, %v5675
  %5677 = vdwg.mxu0
  %v5678 = vadd.f32 %v5605, %v5676
  %v5679 = vld [vmem:[#allocation2 + $0x1300] sm:$0xff]
  %v5680 = vld [vmem:[#allocation2 + $0x1308] sm:$0xff]
  %v5681 = vld [vmem:[#allocation2 + $0x1310] sm:$0xff]
  %v5682 = vld [vmem:[#allocation2 + $0x1318] sm:$0xff]
  %v5683 = vld [vmem:[#allocation2 + $0x1320] sm:$0xff]
  %v5684 = vld [vmem:[#allocation2 + $0x1328] sm:$0xff]
  %v5685 = vld [vmem:[#allocation2 + $0x1330] sm:$0xff]
  %v5686 = vld [vmem:[#allocation2 + $0x1338] sm:$0xff]
  %v5687 = vld [vmem:[#allocation2 + $0x1340] sm:$0xff]
  %v5688 = vld [vmem:[#allocation2 + $0x1348] sm:$0xff]
  %v5689 = vld [vmem:[#allocation2 + $0x1350] sm:$0xff]
  %v5690 = vld [vmem:[#allocation2 + $0x1358] sm:$0xff]
  %v5691 = vld [vmem:[#allocation2 + $0x1360] sm:$0xff]
  %v5692 = vld [vmem:[#allocation2 + $0x1368] sm:$0xff]
  %v5693 = vld [vmem:[#allocation2 + $0x1370] sm:$0xff]
  %v5694 = vld [vmem:[#allocation2 + $0x1378] sm:$0xff]
  %v5695 = vld [vmem:[#allocation2 + $0x1380] sm:$0xff]
  %v5696 = vld [vmem:[#allocation2 + $0x1388] sm:$0xff]
  %v5697 = vld [vmem:[#allocation2 + $0x1390] sm:$0xff]
  %v5698 = vld [vmem:[#allocation2 + $0x1398] sm:$0xff]
  %v5699 = vld [vmem:[#allocation2 + $0x13a0] sm:$0xff]
  %v5700 = vld [vmem:[#allocation2 + $0x13a8] sm:$0xff]
  %v5701 = vld [vmem:[#allocation2 + $0x13b0] sm:$0xff]
  %v5702 = vld [vmem:[#allocation2 + $0x13b8] sm:$0xff]
  %v5703 = vld [vmem:[#allocation2 + $0x13c0] sm:$0xff]
  %v5704 = vld [vmem:[#allocation2 + $0x13c8] sm:$0xff]
  %v5705 = vld [vmem:[#allocation2 + $0x13d0] sm:$0xff]
  %v5706 = vld [vmem:[#allocation2 + $0x13d8] sm:$0xff]
  %v5707 = vld [vmem:[#allocation2 + $0x13e0] sm:$0xff]
  %v5708 = vld [vmem:[#allocation2 + $0x13e8] sm:$0xff]
  %v5709 = vld [vmem:[#allocation2 + $0x13f0] sm:$0xff]
  %v5710 = vld [vmem:[#allocation2 + $0x13f8] sm:$0xff]
  %5711 = vmatpush.msra.mxu0 %v5694
  %5712 = vmatpush.msra.mxu0 %v5693
  %5713 = vmatpush.msra.mxu0 %v5692
  %5714 = vmatpush.msra.mxu0 %v5691
  %5715 = vmatpush.msra.mxu0 %v5690
  %5716 = vmatpush.msra.mxu0 %v5689
  %5717 = vmatpush.msra.mxu0 %v5688
  %5718 = vmatpush.msra.mxu0 %v5687
  %5719 = vmatpush.msra.mxu0 %v5686
  %5720 = vmatpush.msra.mxu0 %v5685
  %5721 = vmatpush.msra.mxu0 %v5684
  %5722 = vmatpush.msra.mxu0 %v5683
  %5723 = vmatpush.msra.mxu0 %v5682
  %5724 = vmatpush.msra.mxu0 %v5681
  %5725 = vmatpush.msra.mxu0 %v5680
  %5726 = vmatpush.msra.mxu0 %v5679
  %5727 = vmatmul.f32.gmra.mxu0 %v4261
  %v5728 = vpop.f32.mrf.mxu0
  %v5729 = vadd.f32 0.0, %v5728
  %5730 = vdwg.mxu0
  %5731 = vmatpush.msra.mxu0 %v5710
  %5732 = vmatpush.msra.mxu0 %v5709
  %5733 = vmatpush.msra.mxu0 %v5708
  %5734 = vmatpush.msra.mxu0 %v5707
  %5735 = vmatpush.msra.mxu0 %v5706
  %5736 = vmatpush.msra.mxu0 %v5705
  %5737 = vmatpush.msra.mxu0 %v5704
  %5738 = vmatpush.msra.mxu0 %v5703
  %5739 = vmatpush.msra.mxu0 %v5702
  %5740 = vmatpush.msra.mxu0 %v5701
  %5741 = vmatpush.msra.mxu0 %v5700
  %5742 = vmatpush.msra.mxu0 %v5699
  %5743 = vmatpush.msra.mxu0 %v5698
  %5744 = vmatpush.msra.mxu0 %v5697
  %5745 = vmatpush.msra.mxu0 %v5696
  %5746 = vmatpush.msra.mxu0 %v5695
  %5747 = vmatmul.f32.gmra.mxu0 %v4262
  %v5748 = vpop.f32.mrf.mxu0
  %v5749 = vadd.f32 %v5729, %v5748
  %5750 = vdwg.mxu0
  %v5751 = vadd.f32 %v5678, %v5749
  %v5752 = vld [vmem:[#allocation2 + $0x1400] sm:$0xff]
  %v5753 = vld [vmem:[#allocation2 + $0x1408] sm:$0xff]
  %v5754 = vld [vmem:[#allocation2 + $0x1410] sm:$0xff]
  %v5755 = vld [vmem:[#allocation2 + $0x1418] sm:$0xff]
  %v5756 = vld [vmem:[#allocation2 + $0x1420] sm:$0xff]
  %v5757 = vld [vmem:[#allocation2 + $0x1428] sm:$0xff]
  %v5758 = vld [vmem:[#allocation2 + $0x1430] sm:$0xff]
  %v5759 = vld [vmem:[#allocation2 + $0x1438] sm:$0xff]
  %v5760 = vld [vmem:[#allocation2 + $0x1440] sm:$0xff]
  %v5761 = vld [vmem:[#allocation2 + $0x1448] sm:$0xff]
  %v5762 = vld [vmem:[#allocation2 + $0x1450] sm:$0xff]
  %v5763 = vld [vmem:[#allocation2 + $0x1458] sm:$0xff]
  %v5764 = vld [vmem:[#allocation2 + $0x1460] sm:$0xff]
  %v5765 = vld [vmem:[#allocation2 + $0x1468] sm:$0xff]
  %v5766 = vld [vmem:[#allocation2 + $0x1470] sm:$0xff]
  %v5767 = vld [vmem:[#allocation2 + $0x1478] sm:$0xff]
  %v5768 = vld [vmem:[#allocation2 + $0x1480] sm:$0xff]
  %v5769 = vld [vmem:[#allocation2 + $0x1488] sm:$0xff]
  %v5770 = vld [vmem:[#allocation2 + $0x1490] sm:$0xff]
  %v5771 = vld [vmem:[#allocation2 + $0x1498] sm:$0xff]
  %v5772 = vld [vmem:[#allocation2 + $0x14a0] sm:$0xff]
  %v5773 = vld [vmem:[#allocation2 + $0x14a8] sm:$0xff]
  %v5774 = vld [vmem:[#allocation2 + $0x14b0] sm:$0xff]
  %v5775 = vld [vmem:[#allocation2 + $0x14b8] sm:$0xff]
  %v5776 = vld [vmem:[#allocation2 + $0x14c0] sm:$0xff]
  %v5777 = vld [vmem:[#allocation2 + $0x14c8] sm:$0xff]
  %v5778 = vld [vmem:[#allocation2 + $0x14d0] sm:$0xff]
  %v5779 = vld [vmem:[#allocation2 + $0x14d8] sm:$0xff]
  %v5780 = vld [vmem:[#allocation2 + $0x14e0] sm:$0xff]
  %v5781 = vld [vmem:[#allocation2 + $0x14e8] sm:$0xff]
  %v5782 = vld [vmem:[#allocation2 + $0x14f0] sm:$0xff]
  %v5783 = vld [vmem:[#allocation2 + $0x14f8] sm:$0xff]
  %5784 = vmatpush.msra.mxu0 %v5767
  %5785 = vmatpush.msra.mxu0 %v5766
  %5786 = vmatpush.msra.mxu0 %v5765
  %5787 = vmatpush.msra.mxu0 %v5764
  %5788 = vmatpush.msra.mxu0 %v5763
  %5789 = vmatpush.msra.mxu0 %v5762
  %5790 = vmatpush.msra.mxu0 %v5761
  %5791 = vmatpush.msra.mxu0 %v5760
  %5792 = vmatpush.msra.mxu0 %v5759
  %5793 = vmatpush.msra.mxu0 %v5758
  %5794 = vmatpush.msra.mxu0 %v5757
  %5795 = vmatpush.msra.mxu0 %v5756
  %5796 = vmatpush.msra.mxu0 %v5755
  %5797 = vmatpush.msra.mxu0 %v5754
  %5798 = vmatpush.msra.mxu0 %v5753
  %5799 = vmatpush.msra.mxu0 %v5752
  %5800 = vmatmul.f32.gmra.mxu0 %v4263
  %v5801 = vpop.f32.mrf.mxu0
  %v5802 = vadd.f32 0.0, %v5801
  %5803 = vdwg.mxu0
  %5804 = vmatpush.msra.mxu0 %v5783
  %5805 = vmatpush.msra.mxu0 %v5782
  %5806 = vmatpush.msra.mxu0 %v5781
  %5807 = vmatpush.msra.mxu0 %v5780
  %5808 = vmatpush.msra.mxu0 %v5779
  %5809 = vmatpush.msra.mxu0 %v5778
  %5810 = vmatpush.msra.mxu0 %v5777
  %5811 = vmatpush.msra.mxu0 %v5776
  %5812 = vmatpush.msra.mxu0 %v5775
  %5813 = vmatpush.msra.mxu0 %v5774
  %5814 = vmatpush.msra.mxu0 %v5773
  %5815 = vmatpush.msra.mxu0 %v5772
  %5816 = vmatpush.msra.mxu0 %v5771
  %5817 = vmatpush.msra.mxu0 %v5770
  %5818 = vmatpush.msra.mxu0 %v5769
  %5819 = vmatpush.msra.mxu0 %v5768
  %5820 = vmatmul.f32.gmra.mxu0 %v4264
  %v5821 = vpop.f32.mrf.mxu0
  %v5822 = vadd.f32 %v5802, %v5821
  %5823 = vdwg.mxu0
  %v5824 = vadd.f32 %v5751, %v5822
  %v5825 = vld [vmem:[#allocation2 + $0x1500] sm:$0xff]
  %v5826 = vld [vmem:[#allocation2 + $0x1508] sm:$0xff]
  %v5827 = vld [vmem:[#allocation2 + $0x1510] sm:$0xff]
  %v5828 = vld [vmem:[#allocation2 + $0x1518] sm:$0xff]
  %v5829 = vld [vmem:[#allocation2 + $0x1520] sm:$0xff]
  %v5830 = vld [vmem:[#allocation2 + $0x1528] sm:$0xff]
  %v5831 = vld [vmem:[#allocation2 + $0x1530] sm:$0xff]
  %v5832 = vld [vmem:[#allocation2 + $0x1538] sm:$0xff]
  %v5833 = vld [vmem:[#allocation2 + $0x1540] sm:$0xff]
  %v5834 = vld [vmem:[#allocation2 + $0x1548] sm:$0xff]
  %v5835 = vld [vmem:[#allocation2 + $0x1550] sm:$0xff]
  %v5836 = vld [vmem:[#allocation2 + $0x1558] sm:$0xff]
  %v5837 = vld [vmem:[#allocation2 + $0x1560] sm:$0xff]
  %v5838 = vld [vmem:[#allocation2 + $0x1568] sm:$0xff]
  %v5839 = vld [vmem:[#allocation2 + $0x1570] sm:$0xff]
  %v5840 = vld [vmem:[#allocation2 + $0x1578] sm:$0xff]
  %v5841 = vld [vmem:[#allocation2 + $0x1580] sm:$0xff]
  %v5842 = vld [vmem:[#allocation2 + $0x1588] sm:$0xff]
  %v5843 = vld [vmem:[#allocation2 + $0x1590] sm:$0xff]
  %v5844 = vld [vmem:[#allocation2 + $0x1598] sm:$0xff]
  %v5845 = vld [vmem:[#allocation2 + $0x15a0] sm:$0xff]
  %v5846 = vld [vmem:[#allocation2 + $0x15a8] sm:$0xff]
  %v5847 = vld [vmem:[#allocation2 + $0x15b0] sm:$0xff]
  %v5848 = vld [vmem:[#allocation2 + $0x15b8] sm:$0xff]
  %v5849 = vld [vmem:[#allocation2 + $0x15c0] sm:$0xff]
  %v5850 = vld [vmem:[#allocation2 + $0x15c8] sm:$0xff]
  %v5851 = vld [vmem:[#allocation2 + $0x15d0] sm:$0xff]
  %v5852 = vld [vmem:[#allocation2 + $0x15d8] sm:$0xff]
  %v5853 = vld [vmem:[#allocation2 + $0x15e0] sm:$0xff]
  %v5854 = vld [vmem:[#allocation2 + $0x15e8] sm:$0xff]
  %v5855 = vld [vmem:[#allocation2 + $0x15f0] sm:$0xff]
  %v5856 = vld [vmem:[#allocation2 + $0x15f8] sm:$0xff]
  %5857 = vmatpush.msra.mxu0 %v5840
  %5858 = vmatpush.msra.mxu0 %v5839
  %5859 = vmatpush.msra.mxu0 %v5838
  %5860 = vmatpush.msra.mxu0 %v5837
  %5861 = vmatpush.msra.mxu0 %v5836
  %5862 = vmatpush.msra.mxu0 %v5835
  %5863 = vmatpush.msra.mxu0 %v5834
  %5864 = vmatpush.msra.mxu0 %v5833
  %5865 = vmatpush.msra.mxu0 %v5832
  %5866 = vmatpush.msra.mxu0 %v5831
  %5867 = vmatpush.msra.mxu0 %v5830
  %5868 = vmatpush.msra.mxu0 %v5829
  %5869 = vmatpush.msra.mxu0 %v5828
  %5870 = vmatpush.msra.mxu0 %v5827
  %5871 = vmatpush.msra.mxu0 %v5826
  %5872 = vmatpush.msra.mxu0 %v5825
  %5873 = vmatmul.f32.gmra.mxu0 %v4265
  %v5874 = vpop.f32.mrf.mxu0
  %v5875 = vadd.f32 0.0, %v5874
  %5876 = vdwg.mxu0
  %5877 = vmatpush.msra.mxu0 %v5856
  %5878 = vmatpush.msra.mxu0 %v5855
  %5879 = vmatpush.msra.mxu0 %v5854
  %5880 = vmatpush.msra.mxu0 %v5853
  %5881 = vmatpush.msra.mxu0 %v5852
  %5882 = vmatpush.msra.mxu0 %v5851
  %5883 = vmatpush.msra.mxu0 %v5850
  %5884 = vmatpush.msra.mxu0 %v5849
  %5885 = vmatpush.msra.mxu0 %v5848
  %5886 = vmatpush.msra.mxu0 %v5847
  %5887 = vmatpush.msra.mxu0 %v5846
  %5888 = vmatpush.msra.mxu0 %v5845
  %5889 = vmatpush.msra.mxu0 %v5844
  %5890 = vmatpush.msra.mxu0 %v5843
  %5891 = vmatpush.msra.mxu0 %v5842
  %5892 = vmatpush.msra.mxu0 %v5841
  %5893 = vmatmul.f32.gmra.mxu0 %v4266
  %v5894 = vpop.f32.mrf.mxu0
  %v5895 = vadd.f32 %v5875, %v5894
  %5896 = vdwg.mxu0
  %v5897 = vadd.f32 %v5824, %v5895
  %v5898 = vld [vmem:[#allocation2 + $0x1600] sm:$0xff]
  %v5899 = vld [vmem:[#allocation2 + $0x1608] sm:$0xff]
  %v5900 = vld [vmem:[#allocation2 + $0x1610] sm:$0xff]
  %v5901 = vld [vmem:[#allocation2 + $0x1618] sm:$0xff]
  %v5902 = vld [vmem:[#allocation2 + $0x1620] sm:$0xff]
  %v5903 = vld [vmem:[#allocation2 + $0x1628] sm:$0xff]
  %v5904 = vld [vmem:[#allocation2 + $0x1630] sm:$0xff]
  %v5905 = vld [vmem:[#allocation2 + $0x1638] sm:$0xff]
  %v5906 = vld [vmem:[#allocation2 + $0x1640] sm:$0xff]
  %v5907 = vld [vmem:[#allocation2 + $0x1648] sm:$0xff]
  %v5908 = vld [vmem:[#allocation2 + $0x1650] sm:$0xff]
  %v5909 = vld [vmem:[#allocation2 + $0x1658] sm:$0xff]
  %v5910 = vld [vmem:[#allocation2 + $0x1660] sm:$0xff]
  %v5911 = vld [vmem:[#allocation2 + $0x1668] sm:$0xff]
  %v5912 = vld [vmem:[#allocation2 + $0x1670] sm:$0xff]
  %v5913 = vld [vmem:[#allocation2 + $0x1678] sm:$0xff]
  %v5914 = vld [vmem:[#allocation2 + $0x1680] sm:$0xff]
  %v5915 = vld [vmem:[#allocation2 + $0x1688] sm:$0xff]
  %v5916 = vld [vmem:[#allocation2 + $0x1690] sm:$0xff]
  %v5917 = vld [vmem:[#allocation2 + $0x1698] sm:$0xff]
  %v5918 = vld [vmem:[#allocation2 + $0x16a0] sm:$0xff]
  %v5919 = vld [vmem:[#allocation2 + $0x16a8] sm:$0xff]
  %v5920 = vld [vmem:[#allocation2 + $0x16b0] sm:$0xff]
  %v5921 = vld [vmem:[#allocation2 + $0x16b8] sm:$0xff]
  %v5922 = vld [vmem:[#allocation2 + $0x16c0] sm:$0xff]
  %v5923 = vld [vmem:[#allocation2 + $0x16c8] sm:$0xff]
  %v5924 = vld [vmem:[#allocation2 + $0x16d0] sm:$0xff]
  %v5925 = vld [vmem:[#allocation2 + $0x16d8] sm:$0xff]
  %v5926 = vld [vmem:[#allocation2 + $0x16e0] sm:$0xff]
  %v5927 = vld [vmem:[#allocation2 + $0x16e8] sm:$0xff]
  %v5928 = vld [vmem:[#allocation2 + $0x16f0] sm:$0xff]
  %v5929 = vld [vmem:[#allocation2 + $0x16f8] sm:$0xff]
  %5930 = vmatpush.msra.mxu0 %v5913
  %5931 = vmatpush.msra.mxu0 %v5912
  %5932 = vmatpush.msra.mxu0 %v5911
  %5933 = vmatpush.msra.mxu0 %v5910
  %5934 = vmatpush.msra.mxu0 %v5909
  %5935 = vmatpush.msra.mxu0 %v5908
  %5936 = vmatpush.msra.mxu0 %v5907
  %5937 = vmatpush.msra.mxu0 %v5906
  %5938 = vmatpush.msra.mxu0 %v5905
  %5939 = vmatpush.msra.mxu0 %v5904
  %5940 = vmatpush.msra.mxu0 %v5903
  %5941 = vmatpush.msra.mxu0 %v5902
  %5942 = vmatpush.msra.mxu0 %v5901
  %5943 = vmatpush.msra.mxu0 %v5900
  %5944 = vmatpush.msra.mxu0 %v5899
  %5945 = vmatpush.msra.mxu0 %v5898
  %5946 = vmatmul.f32.gmra.mxu0 %v4267
  %v5947 = vpop.f32.mrf.mxu0
  %v5948 = vadd.f32 0.0, %v5947
  %5949 = vdwg.mxu0
  %5950 = vmatpush.msra.mxu0 %v5929
  %5951 = vmatpush.msra.mxu0 %v5928
  %5952 = vmatpush.msra.mxu0 %v5927
  %5953 = vmatpush.msra.mxu0 %v5926
  %5954 = vmatpush.msra.mxu0 %v5925
  %5955 = vmatpush.msra.mxu0 %v5924
  %5956 = vmatpush.msra.mxu0 %v5923
  %5957 = vmatpush.msra.mxu0 %v5922
  %5958 = vmatpush.msra.mxu0 %v5921
  %5959 = vmatpush.msra.mxu0 %v5920
  %5960 = vmatpush.msra.mxu0 %v5919
  %5961 = vmatpush.msra.mxu0 %v5918
  %5962 = vmatpush.msra.mxu0 %v5917
  %5963 = vmatpush.msra.mxu0 %v5916
  %5964 = vmatpush.msra.mxu0 %v5915
  %5965 = vmatpush.msra.mxu0 %v5914
  %5966 = vmatmul.f32.gmra.mxu0 %v4268
  %v5967 = vpop.f32.mrf.mxu0
  %v5968 = vadd.f32 %v5948, %v5967
  %5969 = vdwg.mxu0
  %v5970 = vadd.f32 %v5897, %v5968
  %v5971 = vld [vmem:[#allocation2 + $0x1700] sm:$0xff]
  %v5972 = vld [vmem:[#allocation2 + $0x1708] sm:$0xff]
  %v5973 = vld [vmem:[#allocation2 + $0x1710] sm:$0xff]
  %v5974 = vld [vmem:[#allocation2 + $0x1718] sm:$0xff]
  %v5975 = vld [vmem:[#allocation2 + $0x1720] sm:$0xff]
  %v5976 = vld [vmem:[#allocation2 + $0x1728] sm:$0xff]
  %v5977 = vld [vmem:[#allocation2 + $0x1730] sm:$0xff]
  %v5978 = vld [vmem:[#allocation2 + $0x1738] sm:$0xff]
  %v5979 = vld [vmem:[#allocation2 + $0x1740] sm:$0xff]
  %v5980 = vld [vmem:[#allocation2 + $0x1748] sm:$0xff]
  %v5981 = vld [vmem:[#allocation2 + $0x1750] sm:$0xff]
  %v5982 = vld [vmem:[#allocation2 + $0x1758] sm:$0xff]
  %v5983 = vld [vmem:[#allocation2 + $0x1760] sm:$0xff]
  %v5984 = vld [vmem:[#allocation2 + $0x1768] sm:$0xff]
  %v5985 = vld [vmem:[#allocation2 + $0x1770] sm:$0xff]
  %v5986 = vld [vmem:[#allocation2 + $0x1778] sm:$0xff]
  %v5987 = vld [vmem:[#allocation2 + $0x1780] sm:$0xff]
  %v5988 = vld [vmem:[#allocation2 + $0x1788] sm:$0xff]
  %v5989 = vld [vmem:[#allocation2 + $0x1790] sm:$0xff]
  %v5990 = vld [vmem:[#allocation2 + $0x1798] sm:$0xff]
  %v5991 = vld [vmem:[#allocation2 + $0x17a0] sm:$0xff]
  %v5992 = vld [vmem:[#allocation2 + $0x17a8] sm:$0xff]
  %v5993 = vld [vmem:[#allocation2 + $0x17b0] sm:$0xff]
  %v5994 = vld [vmem:[#allocation2 + $0x17b8] sm:$0xff]
  %v5995 = vld [vmem:[#allocation2 + $0x17c0] sm:$0xff]
  %v5996 = vld [vmem:[#allocation2 + $0x17c8] sm:$0xff]
  %v5997 = vld [vmem:[#allocation2 + $0x17d0] sm:$0xff]
  %v5998 = vld [vmem:[#allocation2 + $0x17d8] sm:$0xff]
  %v5999 = vld [vmem:[#allocation2 + $0x17e0] sm:$0xff]
  %v6000 = vld [vmem:[#allocation2 + $0x17e8] sm:$0xff]
  %v6001 = vld [vmem:[#allocation2 + $0x17f0] sm:$0xff]
  %v6002 = vld [vmem:[#allocation2 + $0x17f8] sm:$0xff]
  %6003 = vmatpush.msra.mxu0 %v5986
  %6004 = vmatpush.msra.mxu0 %v5985
  %6005 = vmatpush.msra.mxu0 %v5984
  %6006 = vmatpush.msra.mxu0 %v5983
  %6007 = vmatpush.msra.mxu0 %v5982
  %6008 = vmatpush.msra.mxu0 %v5981
  %6009 = vmatpush.msra.mxu0 %v5980
  %6010 = vmatpush.msra.mxu0 %v5979
  %6011 = vmatpush.msra.mxu0 %v5978
  %6012 = vmatpush.msra.mxu0 %v5977
  %6013 = vmatpush.msra.mxu0 %v5976
  %6014 = vmatpush.msra.mxu0 %v5975
  %6015 = vmatpush.msra.mxu0 %v5974
  %6016 = vmatpush.msra.mxu0 %v5973
  %6017 = vmatpush.msra.mxu0 %v5972
  %6018 = vmatpush.msra.mxu0 %v5971
  %6019 = vmatmul.f32.gmra.mxu0 %v4269
  %v6020 = vpop.f32.mrf.mxu0
  %v6021 = vadd.f32 0.0, %v6020
  %6022 = vdwg.mxu0
  %6023 = vmatpush.msra.mxu0 %v6002
  %6024 = vmatpush.msra.mxu0 %v6001
  %6025 = vmatpush.msra.mxu0 %v6000
  %6026 = vmatpush.msra.mxu0 %v5999
  %6027 = vmatpush.msra.mxu0 %v5998
  %6028 = vmatpush.msra.mxu0 %v5997
  %6029 = vmatpush.msra.mxu0 %v5996
  %6030 = vmatpush.msra.mxu0 %v5995
  %6031 = vmatpush.msra.mxu0 %v5994
  %6032 = vmatpush.msra.mxu0 %v5993
  %6033 = vmatpush.msra.mxu0 %v5992
  %6034 = vmatpush.msra.mxu0 %v5991
  %6035 = vmatpush.msra.mxu0 %v5990
  %6036 = vmatpush.msra.mxu0 %v5989
  %6037 = vmatpush.msra.mxu0 %v5988
  %6038 = vmatpush.msra.mxu0 %v5987
  %6039 = vmatmul.f32.gmra.mxu0 %v4270
  %v6040 = vpop.f32.mrf.mxu0
  %v6041 = vadd.f32 %v6021, %v6040
  %6042 = vdwg.mxu0
  %v6043 = vadd.f32 %v5970, %v6041
  %s6044 = sshll.u32 %s4287, 4
  %6045 = dma.done %s1640, %s6044
  %v6046 = vld [vmem:[#allocation2 + $0x1800] sm:$0xff]
  %v6047 = vld [vmem:[#allocation2 + $0x1808] sm:$0xff]
  %v6048 = vld [vmem:[#allocation2 + $0x1810] sm:$0xff]
  %v6049 = vld [vmem:[#allocation2 + $0x1818] sm:$0xff]
  %v6050 = vld [vmem:[#allocation2 + $0x1820] sm:$0xff]
  %v6051 = vld [vmem:[#allocation2 + $0x1828] sm:$0xff]
  %v6052 = vld [vmem:[#allocation2 + $0x1830] sm:$0xff]
  %v6053 = vld [vmem:[#allocation2 + $0x1838] sm:$0xff]
  %v6054 = vld [vmem:[#allocation2 + $0x1840] sm:$0xff]
  %v6055 = vld [vmem:[#allocation2 + $0x1848] sm:$0xff]
  %v6056 = vld [vmem:[#allocation2 + $0x1850] sm:$0xff]
  %v6057 = vld [vmem:[#allocation2 + $0x1858] sm:$0xff]
  %v6058 = vld [vmem:[#allocation2 + $0x1860] sm:$0xff]
  %v6059 = vld [vmem:[#allocation2 + $0x1868] sm:$0xff]
  %v6060 = vld [vmem:[#allocation2 + $0x1870] sm:$0xff]
  %v6061 = vld [vmem:[#allocation2 + $0x1878] sm:$0xff]
  %v6062 = vld [vmem:[#allocation2 + $0x1880] sm:$0xff]
  %v6063 = vld [vmem:[#allocation2 + $0x1888] sm:$0xff]
  %v6064 = vld [vmem:[#allocation2 + $0x1890] sm:$0xff]
  %v6065 = vld [vmem:[#allocation2 + $0x1898] sm:$0xff]
  %v6066 = vld [vmem:[#allocation2 + $0x18a0] sm:$0xff]
  %v6067 = vld [vmem:[#allocation2 + $0x18a8] sm:$0xff]
  %v6068 = vld [vmem:[#allocation2 + $0x18b0] sm:$0xff]
  %v6069 = vld [vmem:[#allocation2 + $0x18b8] sm:$0xff]
  %v6070 = vld [vmem:[#allocation2 + $0x18c0] sm:$0xff]
  %v6071 = vld [vmem:[#allocation2 + $0x18c8] sm:$0xff]
  %v6072 = vld [vmem:[#allocation2 + $0x18d0] sm:$0xff]
  %v6073 = vld [vmem:[#allocation2 + $0x18d8] sm:$0xff]
  %v6074 = vld [vmem:[#allocation2 + $0x18e0] sm:$0xff]
  %v6075 = vld [vmem:[#allocation2 + $0x18e8] sm:$0xff]
  %v6076 = vld [vmem:[#allocation2 + $0x18f0] sm:$0xff]
  %v6077 = vld [vmem:[#allocation2 + $0x18f8] sm:$0xff]
  %6078 = vmatpush.msra.mxu0 %v6061
  %6079 = vmatpush.msra.mxu0 %v6060
  %6080 = vmatpush.msra.mxu0 %v6059
  %6081 = vmatpush.msra.mxu0 %v6058
  %6082 = vmatpush.msra.mxu0 %v6057
  %6083 = vmatpush.msra.mxu0 %v6056
  %6084 = vmatpush.msra.mxu0 %v6055
  %6085 = vmatpush.msra.mxu0 %v6054
  %6086 = vmatpush.msra.mxu0 %v6053
  %6087 = vmatpush.msra.mxu0 %v6052
  %6088 = vmatpush.msra.mxu0 %v6051
  %6089 = vmatpush.msra.mxu0 %v6050
  %6090 = vmatpush.msra.mxu0 %v6049
  %6091 = vmatpush.msra.mxu0 %v6048
  %6092 = vmatpush.msra.mxu0 %v6047
  %6093 = vmatpush.msra.mxu0 %v6046
  %6094 = vmatmul.f32.gmra.mxu0 %v4271
  %v6095 = vpop.f32.mrf.mxu0
  %v6096 = vadd.f32 0.0, %v6095
  %6097 = vdwg.mxu0
  %6098 = vmatpush.msra.mxu0 %v6077
  %6099 = vmatpush.msra.mxu0 %v6076
  %6100 = vmatpush.msra.mxu0 %v6075
  %6101 = vmatpush.msra.mxu0 %v6074
  %6102 = vmatpush.msra.mxu0 %v6073
  %6103 = vmatpush.msra.mxu0 %v6072
  %6104 = vmatpush.msra.mxu0 %v6071
  %6105 = vmatpush.msra.mxu0 %v6070
  %6106 = vmatpush.msra.mxu0 %v6069
  %6107 = vmatpush.msra.mxu0 %v6068
  %6108 = vmatpush.msra.mxu0 %v6067
  %6109 = vmatpush.msra.mxu0 %v6066
  %6110 = vmatpush.msra.mxu0 %v6065
  %6111 = vmatpush.msra.mxu0 %v6064
  %6112 = vmatpush.msra.mxu0 %v6063
  %6113 = vmatpush.msra.mxu0 %v6062
  %6114 = vmatmul.f32.gmra.mxu0 %v4272
  %v6115 = vpop.f32.mrf.mxu0
  %v6116 = vadd.f32 %v6096, %v6115
  %6117 = vdwg.mxu0
  %v6118 = vadd.f32 %v6043, %v6116
  %v6119 = vld [vmem:[#allocation2 + $0x1900] sm:$0xff]
  %v6120 = vld [vmem:[#allocation2 + $0x1908] sm:$0xff]
  %v6121 = vld [vmem:[#allocation2 + $0x1910] sm:$0xff]
  %v6122 = vld [vmem:[#allocation2 + $0x1918] sm:$0xff]
  %v6123 = vld [vmem:[#allocation2 + $0x1920] sm:$0xff]
  %v6124 = vld [vmem:[#allocation2 + $0x1928] sm:$0xff]
  %v6125 = vld [vmem:[#allocation2 + $0x1930] sm:$0xff]
  %v6126 = vld [vmem:[#allocation2 + $0x1938] sm:$0xff]
  %v6127 = vld [vmem:[#allocation2 + $0x1940] sm:$0xff]
  %v6128 = vld [vmem:[#allocation2 + $0x1948] sm:$0xff]
  %v6129 = vld [vmem:[#allocation2 + $0x1950] sm:$0xff]
  %v6130 = vld [vmem:[#allocation2 + $0x1958] sm:$0xff]
  %v6131 = vld [vmem:[#allocation2 + $0x1960] sm:$0xff]
  %v6132 = vld [vmem:[#allocation2 + $0x1968] sm:$0xff]
  %v6133 = vld [vmem:[#allocation2 + $0x1970] sm:$0xff]
  %v6134 = vld [vmem:[#allocation2 + $0x1978] sm:$0xff]
  %v6135 = vld [vmem:[#allocation2 + $0x1980] sm:$0xff]
  %v6136 = vld [vmem:[#allocation2 + $0x1988] sm:$0xff]
  %v6137 = vld [vmem:[#allocation2 + $0x1990] sm:$0xff]
  %v6138 = vld [vmem:[#allocation2 + $0x1998] sm:$0xff]
  %v6139 = vld [vmem:[#allocation2 + $0x19a0] sm:$0xff]
  %v6140 = vld [vmem:[#allocation2 + $0x19a8] sm:$0xff]
  %v6141 = vld [vmem:[#allocation2 + $0x19b0] sm:$0xff]
  %v6142 = vld [vmem:[#allocation2 + $0x19b8] sm:$0xff]
  %v6143 = vld [vmem:[#allocation2 + $0x19c0] sm:$0xff]
  %v6144 = vld [vmem:[#allocation2 + $0x19c8] sm:$0xff]
  %v6145 = vld [vmem:[#allocation2 + $0x19d0] sm:$0xff]
  %v6146 = vld [vmem:[#allocation2 + $0x19d8] sm:$0xff]
  %v6147 = vld [vmem:[#allocation2 + $0x19e0] sm:$0xff]
  %v6148 = vld [vmem:[#allocation2 + $0x19e8] sm:$0xff]
  %v6149 = vld [vmem:[#allocation2 + $0x19f0] sm:$0xff]
  %v6150 = vld [vmem:[#allocation2 + $0x19f8] sm:$0xff]
  %6151 = vmatpush.msra.mxu0 %v6134
  %6152 = vmatpush.msra.mxu0 %v6133
  %6153 = vmatpush.msra.mxu0 %v6132
  %6154 = vmatpush.msra.mxu0 %v6131
  %6155 = vmatpush.msra.mxu0 %v6130
  %6156 = vmatpush.msra.mxu0 %v6129
  %6157 = vmatpush.msra.mxu0 %v6128
  %6158 = vmatpush.msra.mxu0 %v6127
  %6159 = vmatpush.msra.mxu0 %v6126
  %6160 = vmatpush.msra.mxu0 %v6125
  %6161 = vmatpush.msra.mxu0 %v6124
  %6162 = vmatpush.msra.mxu0 %v6123
  %6163 = vmatpush.msra.mxu0 %v6122
  %6164 = vmatpush.msra.mxu0 %v6121
  %6165 = vmatpush.msra.mxu0 %v6120
  %6166 = vmatpush.msra.mxu0 %v6119
  %6167 = vmatmul.f32.gmra.mxu0 %v4273
  %v6168 = vpop.f32.mrf.mxu0
  %v6169 = vadd.f32 0.0, %v6168
  %6170 = vdwg.mxu0
  %6171 = vmatpush.msra.mxu0 %v6150
  %6172 = vmatpush.msra.mxu0 %v6149
  %6173 = vmatpush.msra.mxu0 %v6148
  %6174 = vmatpush.msra.mxu0 %v6147
  %6175 = vmatpush.msra.mxu0 %v6146
  %6176 = vmatpush.msra.mxu0 %v6145
  %6177 = vmatpush.msra.mxu0 %v6144
  %6178 = vmatpush.msra.mxu0 %v6143
  %6179 = vmatpush.msra.mxu0 %v6142
  %6180 = vmatpush.msra.mxu0 %v6141
  %6181 = vmatpush.msra.mxu0 %v6140
  %6182 = vmatpush.msra.mxu0 %v6139
  %6183 = vmatpush.msra.mxu0 %v6138
  %6184 = vmatpush.msra.mxu0 %v6137
  %6185 = vmatpush.msra.mxu0 %v6136
  %6186 = vmatpush.msra.mxu0 %v6135
  %6187 = vmatmul.f32.gmra.mxu0 %v4274
  %v6188 = vpop.f32.mrf.mxu0
  %v6189 = vadd.f32 %v6169, %v6188
  %6190 = vdwg.mxu0
  %v6191 = vadd.f32 %v6118, %v6189
  %v6192 = vld [vmem:[#allocation2 + $0x1a00] sm:$0xff]
  %v6193 = vld [vmem:[#allocation2 + $0x1a08] sm:$0xff]
  %v6194 = vld [vmem:[#allocation2 + $0x1a10] sm:$0xff]
  %v6195 = vld [vmem:[#allocation2 + $0x1a18] sm:$0xff]
  %v6196 = vld [vmem:[#allocation2 + $0x1a20] sm:$0xff]
  %v6197 = vld [vmem:[#allocation2 + $0x1a28] sm:$0xff]
  %v6198 = vld [vmem:[#allocation2 + $0x1a30] sm:$0xff]
  %v6199 = vld [vmem:[#allocation2 + $0x1a38] sm:$0xff]
  %v6200 = vld [vmem:[#allocation2 + $0x1a40] sm:$0xff]
  %v6201 = vld [vmem:[#allocation2 + $0x1a48] sm:$0xff]
  %v6202 = vld [vmem:[#allocation2 + $0x1a50] sm:$0xff]
  %v6203 = vld [vmem:[#allocation2 + $0x1a58] sm:$0xff]
  %v6204 = vld [vmem:[#allocation2 + $0x1a60] sm:$0xff]
  %v6205 = vld [vmem:[#allocation2 + $0x1a68] sm:$0xff]
  %v6206 = vld [vmem:[#allocation2 + $0x1a70] sm:$0xff]
  %v6207 = vld [vmem:[#allocation2 + $0x1a78] sm:$0xff]
  %v6208 = vld [vmem:[#allocation2 + $0x1a80] sm:$0xff]
  %v6209 = vld [vmem:[#allocation2 + $0x1a88] sm:$0xff]
  %v6210 = vld [vmem:[#allocation2 + $0x1a90] sm:$0xff]
  %v6211 = vld [vmem:[#allocation2 + $0x1a98] sm:$0xff]
  %v6212 = vld [vmem:[#allocation2 + $0x1aa0] sm:$0xff]
  %v6213 = vld [vmem:[#allocation2 + $0x1aa8] sm:$0xff]
  %v6214 = vld [vmem:[#allocation2 + $0x1ab0] sm:$0xff]
  %v6215 = vld [vmem:[#allocation2 + $0x1ab8] sm:$0xff]
  %v6216 = vld [vmem:[#allocation2 + $0x1ac0] sm:$0xff]
  %v6217 = vld [vmem:[#allocation2 + $0x1ac8] sm:$0xff]
  %v6218 = vld [vmem:[#allocation2 + $0x1ad0] sm:$0xff]
  %v6219 = vld [vmem:[#allocation2 + $0x1ad8] sm:$0xff]
  %v6220 = vld [vmem:[#allocation2 + $0x1ae0] sm:$0xff]
  %v6221 = vld [vmem:[#allocation2 + $0x1ae8] sm:$0xff]
  %v6222 = vld [vmem:[#allocation2 + $0x1af0] sm:$0xff]
  %v6223 = vld [vmem:[#allocation2 + $0x1af8] sm:$0xff]
  %6224 = vmatpush.msra.mxu0 %v6207
  %6225 = vmatpush.msra.mxu0 %v6206
  %6226 = vmatpush.msra.mxu0 %v6205
  %6227 = vmatpush.msra.mxu0 %v6204
  %6228 = vmatpush.msra.mxu0 %v6203
  %6229 = vmatpush.msra.mxu0 %v6202
  %6230 = vmatpush.msra.mxu0 %v6201
  %6231 = vmatpush.msra.mxu0 %v6200
  %6232 = vmatpush.msra.mxu0 %v6199
  %6233 = vmatpush.msra.mxu0 %v6198
  %6234 = vmatpush.msra.mxu0 %v6197
  %6235 = vmatpush.msra.mxu0 %v6196
  %6236 = vmatpush.msra.mxu0 %v6195
  %6237 = vmatpush.msra.mxu0 %v6194
  %6238 = vmatpush.msra.mxu0 %v6193
  %6239 = vmatpush.msra.mxu0 %v6192
  %6240 = vmatmul.f32.gmra.mxu0 %v4275
  %v6241 = vpop.f32.mrf.mxu0
  %v6242 = vadd.f32 0.0, %v6241
  %6243 = vdwg.mxu0
  %6244 = vmatpush.msra.mxu0 %v6223
  %6245 = vmatpush.msra.mxu0 %v6222
  %6246 = vmatpush.msra.mxu0 %v6221
  %6247 = vmatpush.msra.mxu0 %v6220
  %6248 = vmatpush.msra.mxu0 %v6219
  %6249 = vmatpush.msra.mxu0 %v6218
  %6250 = vmatpush.msra.mxu0 %v6217
  %6251 = vmatpush.msra.mxu0 %v6216
  %6252 = vmatpush.msra.mxu0 %v6215
  %6253 = vmatpush.msra.mxu0 %v6214
  %6254 = vmatpush.msra.mxu0 %v6213
  %6255 = vmatpush.msra.mxu0 %v6212
  %6256 = vmatpush.msra.mxu0 %v6211
  %6257 = vmatpush.msra.mxu0 %v6210
  %6258 = vmatpush.msra.mxu0 %v6209
  %6259 = vmatpush.msra.mxu0 %v6208
  %6260 = vmatmul.f32.gmra.mxu0 %v4276
  %v6261 = vpop.f32.mrf.mxu0
  %v6262 = vadd.f32 %v6242, %v6261
  %6263 = vdwg.mxu0
  %v6264 = vadd.f32 %v6191, %v6262
  %v6265 = vld [vmem:[#allocation2 + $0x1b00] sm:$0xff]
  %v6266 = vld [vmem:[#allocation2 + $0x1b08] sm:$0xff]
  %v6267 = vld [vmem:[#allocation2 + $0x1b10] sm:$0xff]
  %v6268 = vld [vmem:[#allocation2 + $0x1b18] sm:$0xff]
  %v6269 = vld [vmem:[#allocation2 + $0x1b20] sm:$0xff]
  %v6270 = vld [vmem:[#allocation2 + $0x1b28] sm:$0xff]
  %v6271 = vld [vmem:[#allocation2 + $0x1b30] sm:$0xff]
  %v6272 = vld [vmem:[#allocation2 + $0x1b38] sm:$0xff]
  %v6273 = vld [vmem:[#allocation2 + $0x1b40] sm:$0xff]
  %v6274 = vld [vmem:[#allocation2 + $0x1b48] sm:$0xff]
  %v6275 = vld [vmem:[#allocation2 + $0x1b50] sm:$0xff]
  %v6276 = vld [vmem:[#allocation2 + $0x1b58] sm:$0xff]
  %v6277 = vld [vmem:[#allocation2 + $0x1b60] sm:$0xff]
  %v6278 = vld [vmem:[#allocation2 + $0x1b68] sm:$0xff]
  %v6279 = vld [vmem:[#allocation2 + $0x1b70] sm:$0xff]
  %v6280 = vld [vmem:[#allocation2 + $0x1b78] sm:$0xff]
  %v6281 = vld [vmem:[#allocation2 + $0x1b80] sm:$0xff]
  %v6282 = vld [vmem:[#allocation2 + $0x1b88] sm:$0xff]
  %v6283 = vld [vmem:[#allocation2 + $0x1b90] sm:$0xff]
  %v6284 = vld [vmem:[#allocation2 + $0x1b98] sm:$0xff]
  %v6285 = vld [vmem:[#allocation2 + $0x1ba0] sm:$0xff]
  %v6286 = vld [vmem:[#allocation2 + $0x1ba8] sm:$0xff]
  %v6287 = vld [vmem:[#allocation2 + $0x1bb0] sm:$0xff]
  %v6288 = vld [vmem:[#allocation2 + $0x1bb8] sm:$0xff]
  %v6289 = vld [vmem:[#allocation2 + $0x1bc0] sm:$0xff]
  %v6290 = vld [vmem:[#allocation2 + $0x1bc8] sm:$0xff]
  %v6291 = vld [vmem:[#allocation2 + $0x1bd0] sm:$0xff]
  %v6292 = vld [vmem:[#allocation2 + $0x1bd8] sm:$0xff]
  %v6293 = vld [vmem:[#allocation2 + $0x1be0] sm:$0xff]
  %v6294 = vld [vmem:[#allocation2 + $0x1be8] sm:$0xff]
  %v6295 = vld [vmem:[#allocation2 + $0x1bf0] sm:$0xff]
  %v6296 = vld [vmem:[#allocation2 + $0x1bf8] sm:$0xff]
  %6297 = vmatpush.msra.mxu0 %v6280
  %6298 = vmatpush.msra.mxu0 %v6279
  %6299 = vmatpush.msra.mxu0 %v6278
  %6300 = vmatpush.msra.mxu0 %v6277
  %6301 = vmatpush.msra.mxu0 %v6276
  %6302 = vmatpush.msra.mxu0 %v6275
  %6303 = vmatpush.msra.mxu0 %v6274
  %6304 = vmatpush.msra.mxu0 %v6273
  %6305 = vmatpush.msra.mxu0 %v6272
  %6306 = vmatpush.msra.mxu0 %v6271
  %6307 = vmatpush.msra.mxu0 %v6270
  %6308 = vmatpush.msra.mxu0 %v6269
  %6309 = vmatpush.msra.mxu0 %v6268
  %6310 = vmatpush.msra.mxu0 %v6267
  %6311 = vmatpush.msra.mxu0 %v6266
  %6312 = vmatpush.msra.mxu0 %v6265
  %6313 = vmatmul.f32.gmra.mxu0 %v4277
  %v6314 = vpop.f32.mrf.mxu0
  %v6315 = vadd.f32 0.0, %v6314
  %6316 = vdwg.mxu0
  %6317 = vmatpush.msra.mxu0 %v6296
  %6318 = vmatpush.msra.mxu0 %v6295
  %6319 = vmatpush.msra.mxu0 %v6294
  %6320 = vmatpush.msra.mxu0 %v6293
  %6321 = vmatpush.msra.mxu0 %v6292
  %6322 = vmatpush.msra.mxu0 %v6291
  %6323 = vmatpush.msra.mxu0 %v6290
  %6324 = vmatpush.msra.mxu0 %v6289
  %6325 = vmatpush.msra.mxu0 %v6288
  %6326 = vmatpush.msra.mxu0 %v6287
  %6327 = vmatpush.msra.mxu0 %v6286
  %6328 = vmatpush.msra.mxu0 %v6285
  %6329 = vmatpush.msra.mxu0 %v6284
  %6330 = vmatpush.msra.mxu0 %v6283
  %6331 = vmatpush.msra.mxu0 %v6282
  %6332 = vmatpush.msra.mxu0 %v6281
  %6333 = vmatmul.f32.gmra.mxu0 %v4278
  %v6334 = vpop.f32.mrf.mxu0
  %v6335 = vadd.f32 %v6315, %v6334
  %6336 = vdwg.mxu0
  %v6337 = vadd.f32 %v6264, %v6335
  %v6338 = vld [vmem:[#allocation2 + $0x1c00] sm:$0xff]
  %v6339 = vld [vmem:[#allocation2 + $0x1c08] sm:$0xff]
  %v6340 = vld [vmem:[#allocation2 + $0x1c10] sm:$0xff]
  %v6341 = vld [vmem:[#allocation2 + $0x1c18] sm:$0xff]
  %v6342 = vld [vmem:[#allocation2 + $0x1c20] sm:$0xff]
  %v6343 = vld [vmem:[#allocation2 + $0x1c28] sm:$0xff]
  %v6344 = vld [vmem:[#allocation2 + $0x1c30] sm:$0xff]
  %v6345 = vld [vmem:[#allocation2 + $0x1c38] sm:$0xff]
  %v6346 = vld [vmem:[#allocation2 + $0x1c40] sm:$0xff]
  %v6347 = vld [vmem:[#allocation2 + $0x1c48] sm:$0xff]
  %v6348 = vld [vmem:[#allocation2 + $0x1c50] sm:$0xff]
  %v6349 = vld [vmem:[#allocation2 + $0x1c58] sm:$0xff]
  %v6350 = vld [vmem:[#allocation2 + $0x1c60] sm:$0xff]
  %v6351 = vld [vmem:[#allocation2 + $0x1c68] sm:$0xff]
  %v6352 = vld [vmem:[#allocation2 + $0x1c70] sm:$0xff]
  %v6353 = vld [vmem:[#allocation2 + $0x1c78] sm:$0xff]
  %v6354 = vld [vmem:[#allocation2 + $0x1c80] sm:$0xff]
  %v6355 = vld [vmem:[#allocation2 + $0x1c88] sm:$0xff]
  %v6356 = vld [vmem:[#allocation2 + $0x1c90] sm:$0xff]
  %v6357 = vld [vmem:[#allocation2 + $0x1c98] sm:$0xff]
  %v6358 = vld [vmem:[#allocation2 + $0x1ca0] sm:$0xff]
  %v6359 = vld [vmem:[#allocation2 + $0x1ca8] sm:$0xff]
  %v6360 = vld [vmem:[#allocation2 + $0x1cb0] sm:$0xff]
  %v6361 = vld [vmem:[#allocation2 + $0x1cb8] sm:$0xff]
  %v6362 = vld [vmem:[#allocation2 + $0x1cc0] sm:$0xff]
  %v6363 = vld [vmem:[#allocation2 + $0x1cc8] sm:$0xff]
  %v6364 = vld [vmem:[#allocation2 + $0x1cd0] sm:$0xff]
  %v6365 = vld [vmem:[#allocation2 + $0x1cd8] sm:$0xff]
  %v6366 = vld [vmem:[#allocation2 + $0x1ce0] sm:$0xff]
  %v6367 = vld [vmem:[#allocation2 + $0x1ce8] sm:$0xff]
  %v6368 = vld [vmem:[#allocation2 + $0x1cf0] sm:$0xff]
  %v6369 = vld [vmem:[#allocation2 + $0x1cf8] sm:$0xff]
  %6370 = vmatpush.msra.mxu0 %v6353
  %6371 = vmatpush.msra.mxu0 %v6352
  %6372 = vmatpush.msra.mxu0 %v6351
  %6373 = vmatpush.msra.mxu0 %v6350
  %6374 = vmatpush.msra.mxu0 %v6349
  %6375 = vmatpush.msra.mxu0 %v6348
  %6376 = vmatpush.msra.mxu0 %v6347
  %6377 = vmatpush.msra.mxu0 %v6346
  %6378 = vmatpush.msra.mxu0 %v6345
  %6379 = vmatpush.msra.mxu0 %v6344
  %6380 = vmatpush.msra.mxu0 %v6343
  %6381 = vmatpush.msra.mxu0 %v6342
  %6382 = vmatpush.msra.mxu0 %v6341
  %6383 = vmatpush.msra.mxu0 %v6340
  %6384 = vmatpush.msra.mxu0 %v6339
  %6385 = vmatpush.msra.mxu0 %v6338
  %6386 = vmatmul.f32.gmra.mxu0 %v4279
  %v6387 = vpop.f32.mrf.mxu0
  %v6388 = vadd.f32 0.0, %v6387
  %6389 = vdwg.mxu0
  %6390 = vmatpush.msra.mxu0 %v6369
  %6391 = vmatpush.msra.mxu0 %v6368
  %6392 = vmatpush.msra.mxu0 %v6367
  %6393 = vmatpush.msra.mxu0 %v6366
  %6394 = vmatpush.msra.mxu0 %v6365
  %6395 = vmatpush.msra.mxu0 %v6364
  %6396 = vmatpush.msra.mxu0 %v6363
  %6397 = vmatpush.msra.mxu0 %v6362
  %6398 = vmatpush.msra.mxu0 %v6361
  %6399 = vmatpush.msra.mxu0 %v6360
  %6400 = vmatpush.msra.mxu0 %v6359
  %6401 = vmatpush.msra.mxu0 %v6358
  %6402 = vmatpush.msra.mxu0 %v6357
  %6403 = vmatpush.msra.mxu0 %v6356
  %6404 = vmatpush.msra.mxu0 %v6355
  %6405 = vmatpush.msra.mxu0 %v6354
  %6406 = vmatmul.f32.gmra.mxu0 %v4280
  %v6407 = vpop.f32.mrf.mxu0
  %v6408 = vadd.f32 %v6388, %v6407
  %6409 = vdwg.mxu0
  %v6410 = vadd.f32 %v6337, %v6408
  %v6411 = vld [vmem:[#allocation2 + $0x1d00] sm:$0xff]
  %v6412 = vld [vmem:[#allocation2 + $0x1d08] sm:$0xff]
  %v6413 = vld [vmem:[#allocation2 + $0x1d10] sm:$0xff]
  %v6414 = vld [vmem:[#allocation2 + $0x1d18] sm:$0xff]
  %v6415 = vld [vmem:[#allocation2 + $0x1d20] sm:$0xff]
  %v6416 = vld [vmem:[#allocation2 + $0x1d28] sm:$0xff]
  %v6417 = vld [vmem:[#allocation2 + $0x1d30] sm:$0xff]
  %v6418 = vld [vmem:[#allocation2 + $0x1d38] sm:$0xff]
  %v6419 = vld [vmem:[#allocation2 + $0x1d40] sm:$0xff]
  %v6420 = vld [vmem:[#allocation2 + $0x1d48] sm:$0xff]
  %v6421 = vld [vmem:[#allocation2 + $0x1d50] sm:$0xff]
  %v6422 = vld [vmem:[#allocation2 + $0x1d58] sm:$0xff]
  %v6423 = vld [vmem:[#allocation2 + $0x1d60] sm:$0xff]
  %v6424 = vld [vmem:[#allocation2 + $0x1d68] sm:$0xff]
  %v6425 = vld [vmem:[#allocation2 + $0x1d70] sm:$0xff]
  %v6426 = vld [vmem:[#allocation2 + $0x1d78] sm:$0xff]
  %v6427 = vld [vmem:[#allocation2 + $0x1d80] sm:$0xff]
  %v6428 = vld [vmem:[#allocation2 + $0x1d88] sm:$0xff]
  %v6429 = vld [vmem:[#allocation2 + $0x1d90] sm:$0xff]
  %v6430 = vld [vmem:[#allocation2 + $0x1d98] sm:$0xff]
  %v6431 = vld [vmem:[#allocation2 + $0x1da0] sm:$0xff]
  %v6432 = vld [vmem:[#allocation2 + $0x1da8] sm:$0xff]
  %v6433 = vld [vmem:[#allocation2 + $0x1db0] sm:$0xff]
  %v6434 = vld [vmem:[#allocation2 + $0x1db8] sm:$0xff]
  %v6435 = vld [vmem:[#allocation2 + $0x1dc0] sm:$0xff]
  %v6436 = vld [vmem:[#allocation2 + $0x1dc8] sm:$0xff]
  %v6437 = vld [vmem:[#allocation2 + $0x1dd0] sm:$0xff]
  %v6438 = vld [vmem:[#allocation2 + $0x1dd8] sm:$0xff]
  %v6439 = vld [vmem:[#allocation2 + $0x1de0] sm:$0xff]
  %v6440 = vld [vmem:[#allocation2 + $0x1de8] sm:$0xff]
  %v6441 = vld [vmem:[#allocation2 + $0x1df0] sm:$0xff]
  %v6442 = vld [vmem:[#allocation2 + $0x1df8] sm:$0xff]
  %6443 = vmatpush.msra.mxu0 %v6426
  %6444 = vmatpush.msra.mxu0 %v6425
  %6445 = vmatpush.msra.mxu0 %v6424
  %6446 = vmatpush.msra.mxu0 %v6423
  %6447 = vmatpush.msra.mxu0 %v6422
  %6448 = vmatpush.msra.mxu0 %v6421
  %6449 = vmatpush.msra.mxu0 %v6420
  %6450 = vmatpush.msra.mxu0 %v6419
  %6451 = vmatpush.msra.mxu0 %v6418
  %6452 = vmatpush.msra.mxu0 %v6417
  %6453 = vmatpush.msra.mxu0 %v6416
  %6454 = vmatpush.msra.mxu0 %v6415
  %6455 = vmatpush.msra.mxu0 %v6414
  %6456 = vmatpush.msra.mxu0 %v6413
  %6457 = vmatpush.msra.mxu0 %v6412
  %6458 = vmatpush.msra.mxu0 %v6411
  %6459 = vmatmul.f32.gmra.mxu0 %v4281
  %v6460 = vpop.f32.mrf.mxu0
  %v6461 = vadd.f32 0.0, %v6460
  %6462 = vdwg.mxu0
  %6463 = vmatpush.msra.mxu0 %v6442
  %6464 = vmatpush.msra.mxu0 %v6441
  %6465 = vmatpush.msra.mxu0 %v6440
  %6466 = vmatpush.msra.mxu0 %v6439
  %6467 = vmatpush.msra.mxu0 %v6438
  %6468 = vmatpush.msra.mxu0 %v6437
  %6469 = vmatpush.msra.mxu0 %v6436
  %6470 = vmatpush.msra.mxu0 %v6435
  %6471 = vmatpush.msra.mxu0 %v6434
  %6472 = vmatpush.msra.mxu0 %v6433
  %6473 = vmatpush.msra.mxu0 %v6432
  %6474 = vmatpush.msra.mxu0 %v6431
  %6475 = vmatpush.msra.mxu0 %v6430
  %6476 = vmatpush.msra.mxu0 %v6429
  %6477 = vmatpush.msra.mxu0 %v6428
  %6478 = vmatpush.msra.mxu0 %v6427
  %6479 = vmatmul.f32.gmra.mxu0 %v4282
  %v6480 = vpop.f32.mrf.mxu0
  %v6481 = vadd.f32 %v6461, %v6480
  %6482 = vdwg.mxu0
  %v6483 = vadd.f32 %v6410, %v6481
  %v6484 = vld [vmem:[#allocation2 + $0x1e00] sm:$0xff]
  %v6485 = vld [vmem:[#allocation2 + $0x1e08] sm:$0xff]
  %v6486 = vld [vmem:[#allocation2 + $0x1e10] sm:$0xff]
  %v6487 = vld [vmem:[#allocation2 + $0x1e18] sm:$0xff]
  %v6488 = vld [vmem:[#allocation2 + $0x1e20] sm:$0xff]
  %v6489 = vld [vmem:[#allocation2 + $0x1e28] sm:$0xff]
  %v6490 = vld [vmem:[#allocation2 + $0x1e30] sm:$0xff]
  %v6491 = vld [vmem:[#allocation2 + $0x1e38] sm:$0xff]
  %v6492 = vld [vmem:[#allocation2 + $0x1e40] sm:$0xff]
  %v6493 = vld [vmem:[#allocation2 + $0x1e48] sm:$0xff]
  %v6494 = vld [vmem:[#allocation2 + $0x1e50] sm:$0xff]
  %v6495 = vld [vmem:[#allocation2 + $0x1e58] sm:$0xff]
  %v6496 = vld [vmem:[#allocation2 + $0x1e60] sm:$0xff]
  %v6497 = vld [vmem:[#allocation2 + $0x1e68] sm:$0xff]
  %v6498 = vld [vmem:[#allocation2 + $0x1e70] sm:$0xff]
  %v6499 = vld [vmem:[#allocation2 + $0x1e78] sm:$0xff]
  %v6500 = vld [vmem:[#allocation2 + $0x1e80] sm:$0xff]
  %v6501 = vld [vmem:[#allocation2 + $0x1e88] sm:$0xff]
  %v6502 = vld [vmem:[#allocation2 + $0x1e90] sm:$0xff]
  %v6503 = vld [vmem:[#allocation2 + $0x1e98] sm:$0xff]
  %v6504 = vld [vmem:[#allocation2 + $0x1ea0] sm:$0xff]
  %v6505 = vld [vmem:[#allocation2 + $0x1ea8] sm:$0xff]
  %v6506 = vld [vmem:[#allocation2 + $0x1eb0] sm:$0xff]
  %v6507 = vld [vmem:[#allocation2 + $0x1eb8] sm:$0xff]
  %v6508 = vld [vmem:[#allocation2 + $0x1ec0] sm:$0xff]
  %v6509 = vld [vmem:[#allocation2 + $0x1ec8] sm:$0xff]
  %v6510 = vld [vmem:[#allocation2 + $0x1ed0] sm:$0xff]
  %v6511 = vld [vmem:[#allocation2 + $0x1ed8] sm:$0xff]
  %v6512 = vld [vmem:[#allocation2 + $0x1ee0] sm:$0xff]
  %v6513 = vld [vmem:[#allocation2 + $0x1ee8] sm:$0xff]
  %v6514 = vld [vmem:[#allocation2 + $0x1ef0] sm:$0xff]
  %v6515 = vld [vmem:[#allocation2 + $0x1ef8] sm:$0xff]
  %6516 = vmatpush.msra.mxu0 %v6499
  %6517 = vmatpush.msra.mxu0 %v6498
  %6518 = vmatpush.msra.mxu0 %v6497
  %6519 = vmatpush.msra.mxu0 %v6496
  %6520 = vmatpush.msra.mxu0 %v6495
  %6521 = vmatpush.msra.mxu0 %v6494
  %6522 = vmatpush.msra.mxu0 %v6493
  %6523 = vmatpush.msra.mxu0 %v6492
  %6524 = vmatpush.msra.mxu0 %v6491
  %6525 = vmatpush.msra.mxu0 %v6490
  %6526 = vmatpush.msra.mxu0 %v6489
  %6527 = vmatpush.msra.mxu0 %v6488
  %6528 = vmatpush.msra.mxu0 %v6487
  %6529 = vmatpush.msra.mxu0 %v6486
  %6530 = vmatpush.msra.mxu0 %v6485
  %6531 = vmatpush.msra.mxu0 %v6484
  %6532 = vmatmul.f32.gmra.mxu0 %v4283
  %v6533 = vpop.f32.mrf.mxu0
  %v6534 = vadd.f32 0.0, %v6533
  %6535 = vdwg.mxu0
  %6536 = vmatpush.msra.mxu0 %v6515
  %6537 = vmatpush.msra.mxu0 %v6514
  %6538 = vmatpush.msra.mxu0 %v6513
  %6539 = vmatpush.msra.mxu0 %v6512
  %6540 = vmatpush.msra.mxu0 %v6511
  %6541 = vmatpush.msra.mxu0 %v6510
  %6542 = vmatpush.msra.mxu0 %v6509
  %6543 = vmatpush.msra.mxu0 %v6508
  %6544 = vmatpush.msra.mxu0 %v6507
  %6545 = vmatpush.msra.mxu0 %v6506
  %6546 = vmatpush.msra.mxu0 %v6505
  %6547 = vmatpush.msra.mxu0 %v6504
  %6548 = vmatpush.msra.mxu0 %v6503
  %6549 = vmatpush.msra.mxu0 %v6502
  %6550 = vmatpush.msra.mxu0 %v6501
  %6551 = vmatpush.msra.mxu0 %v6500
  %6552 = vmatmul.f32.gmra.mxu0 %v4284
  %v6553 = vpop.f32.mrf.mxu0
  %v6554 = vadd.f32 %v6534, %v6553
  %6555 = vdwg.mxu0
  %v6556 = vadd.f32 %v6483, %v6554
  %v6557 = vld [vmem:[#allocation2 + $0x1f00] sm:$0xff]
  %v6558 = vld [vmem:[#allocation2 + $0x1f08] sm:$0xff]
  %v6559 = vld [vmem:[#allocation2 + $0x1f10] sm:$0xff]
  %v6560 = vld [vmem:[#allocation2 + $0x1f18] sm:$0xff]
  %v6561 = vld [vmem:[#allocation2 + $0x1f20] sm:$0xff]
  %v6562 = vld [vmem:[#allocation2 + $0x1f28] sm:$0xff]
  %v6563 = vld [vmem:[#allocation2 + $0x1f30] sm:$0xff]
  %v6564 = vld [vmem:[#allocation2 + $0x1f38] sm:$0xff]
  %v6565 = vld [vmem:[#allocation2 + $0x1f40] sm:$0xff]
  %v6566 = vld [vmem:[#allocation2 + $0x1f48] sm:$0xff]
  %v6567 = vld [vmem:[#allocation2 + $0x1f50] sm:$0xff]
  %v6568 = vld [vmem:[#allocation2 + $0x1f58] sm:$0xff]
  %v6569 = vld [vmem:[#allocation2 + $0x1f60] sm:$0xff]
  %v6570 = vld [vmem:[#allocation2 + $0x1f68] sm:$0xff]
  %v6571 = vld [vmem:[#allocation2 + $0x1f70] sm:$0xff]
  %v6572 = vld [vmem:[#allocation2 + $0x1f78] sm:$0xff]
  %v6573 = vld [vmem:[#allocation2 + $0x1f80] sm:$0xff]
  %v6574 = vld [vmem:[#allocation2 + $0x1f88] sm:$0xff]
  %v6575 = vld [vmem:[#allocation2 + $0x1f90] sm:$0xff]
  %v6576 = vld [vmem:[#allocation2 + $0x1f98] sm:$0xff]
  %v6577 = vld [vmem:[#allocation2 + $0x1fa0] sm:$0xff]
  %v6578 = vld [vmem:[#allocation2 + $0x1fa8] sm:$0xff]
  %v6579 = vld [vmem:[#allocation2 + $0x1fb0] sm:$0xff]
  %v6580 = vld [vmem:[#allocation2 + $0x1fb8] sm:$0xff]
  %v6581 = vld [vmem:[#allocation2 + $0x1fc0] sm:$0xff]
  %v6582 = vld [vmem:[#allocation2 + $0x1fc8] sm:$0xff]
  %v6583 = vld [vmem:[#allocation2 + $0x1fd0] sm:$0xff]
  %v6584 = vld [vmem:[#allocation2 + $0x1fd8] sm:$0xff]
  %v6585 = vld [vmem:[#allocation2 + $0x1fe0] sm:$0xff]
  %v6586 = vld [vmem:[#allocation2 + $0x1fe8] sm:$0xff]
  %v6587 = vld [vmem:[#allocation2 + $0x1ff0] sm:$0xff]
  %v6588 = vld [vmem:[#allocation2 + $0x1ff8] sm:$0xff]
  %6589 = vmatpush.msra.mxu0 %v6572
  %6590 = vmatpush.msra.mxu0 %v6571
  %6591 = vmatpush.msra.mxu0 %v6570
  %6592 = vmatpush.msra.mxu0 %v6569
  %6593 = vmatpush.msra.mxu0 %v6568
  %6594 = vmatpush.msra.mxu0 %v6567
  %6595 = vmatpush.msra.mxu0 %v6566
  %6596 = vmatpush.msra.mxu0 %v6565
  %6597 = vmatpush.msra.mxu0 %v6564
  %6598 = vmatpush.msra.mxu0 %v6563
  %6599 = vmatpush.msra.mxu0 %v6562
  %6600 = vmatpush.msra.mxu0 %v6561
  %6601 = vmatpush.msra.mxu0 %v6560
  %6602 = vmatpush.msra.mxu0 %v6559
  %6603 = vmatpush.msra.mxu0 %v6558
  %6604 = vmatpush.msra.mxu0 %v6557
  %6605 = vmatmul.f32.gmra.mxu0 %v4285
  %v6606 = vpop.f32.mrf.mxu0
  %v6607 = vadd.f32 0.0, %v6606
  %6608 = vdwg.mxu0
  %6609 = vmatpush.msra.mxu0 %v6588
  %6610 = vmatpush.msra.mxu0 %v6587
  %6611 = vmatpush.msra.mxu0 %v6586
  %6612 = vmatpush.msra.mxu0 %v6585
  %6613 = vmatpush.msra.mxu0 %v6584
  %6614 = vmatpush.msra.mxu0 %v6583
  %6615 = vmatpush.msra.mxu0 %v6582
  %6616 = vmatpush.msra.mxu0 %v6581
  %6617 = vmatpush.msra.mxu0 %v6580
  %6618 = vmatpush.msra.mxu0 %v6579
  %6619 = vmatpush.msra.mxu0 %v6578
  %6620 = vmatpush.msra.mxu0 %v6577
  %6621 = vmatpush.msra.mxu0 %v6576
  %6622 = vmatpush.msra.mxu0 %v6575
  %6623 = vmatpush.msra.mxu0 %v6574
  %6624 = vmatpush.msra.mxu0 %v6573
  %6625 = vmatmul.f32.gmra.mxu0 %v4286
  %v6626 = vpop.f32.mrf.mxu0
  %v6627 = vadd.f32 %v6607, %v6626
  %6628 = vdwg.mxu0
  %v6629 = vadd.f32 %v6556, %v6627
  %v6630 = vld [vmem:[%s14] sm:$0x1]
  %v6632 = vperm.slane %v6630, 0
  %v6634 = vadd.f32 %v6629, %v6632
  %6635 = vst.msk [vmem:[%s15] sm:$0xff] %vm2769, %v6634
  // Predicated region
  $region134: #{cnn_encoder_forward.1} parent=0 // pred_check
    _
  $region135: #{cnn_encoder_forward.1} parent=0 // pred_check_branch
    %6637 = sbr.rel (0) target = $region137
  $region136: #{cnn_encoder_forward.1} parent=0 // pred_region
    _
  $region137: #{cnn_encoder_forward.1} parent=0 // pred_fallthru
    _
  // Predicated region
  $region138: #{cnn_encoder_forward.1} parent=0 // pred_check
    _
  $region139: #{cnn_encoder_forward.1} parent=0 // pred_check_branch
    %6639 = sbr.rel (0) target = $region141
  $region140: #{cnn_encoder_forward.1} parent=0 // pred_region
    _
  $region141: #{cnn_encoder_forward.1} parent=0 // pred_fallthru
    _
  %6640 = vsyncmov [#allocation3]
  %s6641 = vpop.sfrf %6640
  %p6642 = scmp.eq.s32.totalorder %s6641, 0
  %p6643 = pneg %p6642
  %6645 = shalt.err (%p6643)
  %s6646 = scalar_lea.sflag [#allocation3], 1
  %6647 = vsyncmov %s6646
  %s6648 = vpop.sfrf %6647
  %p6649 = scmp.eq.s32.totalorder %s6648, 0
  %p6650 = pneg %p6649
  %6652 = shalt.err (%p6650)
  %s6653 = scalar_lea.sflag [#allocation3], 2
  %6654 = vsyncmov %s6653
  %s6655 = vpop.sfrf %6654
  %p6656 = scmp.eq.s32.totalorder %s6655, 0
  %p6657 = pneg %p6656
  %6659 = shalt.err (%p6657)
  %s6660 = scalar_lea.sflag [#allocation3], 3
  %6661 = vsyncmov %s6660
  %s6662 = vpop.sfrf %6661
  %p6663 = scmp.eq.s32.totalorder %s6662, 0
  %p6664 = pneg %p6663
  %6666 = shalt.err (%p6664)

</llo_original>
